<compile_context>
chip_gen: v5e
topology: v5e:2x2
jax: 0.10.0
libtpu: 0.0.40
codegen_flags: <defaults>
</compile_context>

<pallas_src>
import functools

import jax
import jax.numpy as jnp
from jax.experimental import pallas as pl
from jax.experimental.pallas import tpu as pltpu


def _round_up(x, m):
    return ((x + m - 1) // m) * m


# ---------------------------------------------------------------------------
# Fused forward kernel: one batch tile per grid step, all layers fused.
# ---------------------------------------------------------------------------

def _fused_forward_kernel(*refs, use_dropout):
    if use_dropout:
        (x_ref, a1_ref, b1_ref, a2_ref, b2_ref, cmask_ref,
         wl1_ref, bl1_ref, dmask_ref, wl2_ref, bl2_ref, out_ref) = refs
    else:
        (x_ref, a1_ref, b1_ref, a2_ref, b2_ref,
         wl1_ref, bl1_ref, wl2_ref, bl2_ref, out_ref) = refs
        cmask_ref = dmask_ref = None

    f32, bf16 = jnp.float32, jnp.bfloat16
    xb = x_ref[...]                                            # (TN, H*W*Cin) bf16

    # conv1 (+ bias, fused 2x2 max-pool, relu): 4 parity matmuls + elementwise max
    p = jnp.dot(xb, a1_ref[0], preferred_element_type=f32)
    for k in range(1, 4):
        p = jnp.maximum(p, jnp.dot(xb, a1_ref[k], preferred_element_type=f32))
    p1 = jnp.maximum(p + b1_ref[...], 0.0).astype(bf16)        # (TN, H1p*W1p*C1)

    # conv2 (+ bias, dropout2d channel mask, fused 2x2 max-pool, relu)
    q = jnp.dot(p1, a2_ref[0], preferred_element_type=f32)
    for k in range(1, 4):
        q = jnp.maximum(q, jnp.dot(p1, a2_ref[k], preferred_element_type=f32))
    feat = jnp.maximum(q + b2_ref[...], 0.0)                   # (TN, n_flat)
    if use_dropout:
        feat = feat * cmask_ref[...]

    # linear1 + relu + dropout
    h = jnp.dot(feat.astype(bf16), wl1_ref[...], preferred_element_type=f32)
    h = jnp.maximum(h + bl1_ref[...], 0.0)
    if use_dropout:
        h = h * dmask_ref[...]

    # linear2 + log_softmax
    logits = jnp.dot(h.astype(bf16), wl2_ref[...], preferred_element_type=f32)
    logits = logits + bl2_ref[...]
    m = jnp.max(logits, axis=-1, keepdims=True)
    s = logits - m
    out_ref[...] = s - jnp.log(jnp.sum(jnp.exp(s), axis=-1, keepdims=True))


# ---------------------------------------------------------------------------
# Wrapper-side weight plumbing (tiny, per-forward, plain XLA).
# ---------------------------------------------------------------------------

def _conv_pool_parity_mats(w_oihw, h_in, w_in, out_order):
    """Dense matrices D (4, K, F) such that for a single image flattened
    channels-last with order (h, w, ci) into a row vector v (len K =
    h_in*w_in*Cin):   v @ D[p]  ==  conv2d(img, w, VALID)[:, rp::2, cp::2]
    flattened with `out_order` ('hwc' -> (hp, wp, co), 'chw' -> torch flatten
    order (co, hp, wp)).  Pooling 2x2 is then max over the 4 parities p."""
    c_out, c_in, kh, kw = w_oihw.shape
    h_out, w_out = h_in - kh + 1, w_in - kw + 1
    hp, wp = h_out // 2, w_out // 2
    k = h_in * w_in * c_in
    basis = jnp.eye(k, dtype=jnp.float32).reshape(k, h_in, w_in, c_in)
    basis = basis.transpose(0, 3, 1, 2)                       # (K, Cin, H, W)
    y = jax.lax.conv_general_dilated(
        basis, w_oihw.astype(jnp.float32), (1, 1), 'VALID',
        dimension_numbers=('NCHW', 'OIHW', 'NCHW'),
        precision=jax.lax.Precision.HIGHEST)                  # (K, Cout, Hout, Wout)
    mats = []
    for rp in range(2):
        for cp in range(2):
            m = y[:, :, rp::2, cp::2]                         # (K, Cout, hp, wp)
            if out_order == 'hwc':
                m = m.transpose(0, 2, 3, 1)                   # (K, hp, wp, Cout)
            mats.append(m.reshape(k, hp * wp * c_out))
    return jnp.stack(mats, axis=0)                            # (4, K, hp*wp*Cout)


# ---------------------------------------------------------------------------
# Parameters (mirrors the torch __init__ shapes, deterministic init).
# ---------------------------------------------------------------------------

def init_params(key, in_channels=3, input_size=(16, 16), hidden_dim=32,
                num_classes=10, init_prior_sigma_scale=1e-7,
                conv_w_sigma=1.0, conv_b_sigma=5.0,
                lin_w_sigma=1.0, lin_b_sigma=5.0):
    H, W = input_size
    h1p, w1p = (H - 4) // 2, (W - 4) // 2
    h2p, w2p = (h1p - 4) // 2, (w1p - 4) // 2
    n_flat = 32 * h2p * w2p

    keys = jax.random.split(key, 8)

    def u(k, shape):
        return jax.random.uniform(k, shape, jnp.float32) - 0.5  # rand(...) - 0.5

    def layer(kw_, kb_, w_shape, b_shape, wsig, bsig):
        return dict(
            w_mean=u(kw_, w_shape),
            lw_sigma=jnp.full(w_shape, jnp.log(init_prior_sigma_scale * wsig),
                              jnp.float32),
            b_mean=u(kb_, b_shape),
            lb_sigma=jnp.full(b_shape, jnp.log(init_prior_sigma_scale * bsig),
                              jnp.float32),
        )

    params = {
        'conv1': layer(keys[0], keys[1], (16, in_channels, 5, 5), (16,),
                       conv_w_sigma, conv_b_sigma),
        'conv2': layer(keys[2], keys[3], (32, 16, 5, 5), (32,),
                       conv_w_sigma, conv_b_sigma),
        'linear1': layer(keys[4], keys[5], (hidden_dim, n_flat), (hidden_dim,),
                         lin_w_sigma, lin_b_sigma),
        'linear2': layer(keys[6], keys[7], (num_classes, hidden_dim),
                         (num_classes,), lin_w_sigma, lin_b_sigma),
    }
    return params, n_flat


def _sample(layer, key, stochastic):
    # sampleTransform: w = mean + exp(log_sigma) * N(0,1)   (per forward call)
    kw, kb = jax.random.split(key)
    if stochastic:
        w = layer['w_mean'] + jnp.exp(layer['lw_sigma']) * jax.random.normal(
            kw, layer['w_mean'].shape, jnp.float32)
        b = layer['b_mean'] + jnp.exp(layer['lb_sigma']) * jax.random.normal(
            kb, layer['b_mean'].shape, jnp.float32)
    else:
        w, b = layer['w_mean'], layer['b_mean']
    return w, b


# ---------------------------------------------------------------------------
# Forward pass (== BayesianMnistNet.forward)
# ---------------------------------------------------------------------------

def bayesian_mnist_forward(x_nchw, params, key, stochastic=True,
                           p_mc_dropout=0.5, batch_tile=256):
    N, Cin, H, W = x_nchw.shape
    KH = KW = 5
    C1 = params['conv1']['w_mean'].shape[0]
    C2 = params['conv2']['w_mean'].shape[0]
    H1, W1 = H - KH + 1, W - KW + 1
    H1p, W1p = H1 // 2, W1 // 2
    H2, W2 = H1p - KH + 1, W1p - KW + 1
    H2p, W2p = H2 // 2, W2 // 2
    hidden = params['linear1']['w_mean'].shape[0]
    classes = params['linear2']['w_mean'].shape[0]
    n_flat = C2 * H2p * W2p
    k1 = H * W * Cin
    p1_cols = H1p * W1p * C1
    assert H1 % 2 == 0 and W1 % 2 == 0 and H2 % 2 == 0 and W2 % 2 == 0
    assert params['linear1']['w_mean'].shape[1] == n_flat

    kc1, kc2, kl1, kl2, kd1, kd2 = jax.random.split(key, 6)
    w1, b1 = _sample(params['conv1'], kc1, stochastic)
    w2, b2 = _sample(params['conv2'], kc2, stochastic)
    wl1, bl1 = _sample(params['linear1'], kl1, stochastic)
    wl2, bl2 = _sample(params['linear2'], kl2, stochastic)

    # Batch tile: large enough to feed the MXU at real batch sizes, padded to
    # a sublane multiple for tiny batches; the grid handles the rest.
    TN = batch_tile if N >= batch_tile else _round_up(max(N, 1), 8)
    Np = _round_up(N, TN)

    # Flatten input channels-last (h, w, ci) and cast to bf16 ONCE.
    xf = x_nchw.transpose(0, 2, 3, 1).reshape(N, k1).astype(jnp.bfloat16)
    xf = jnp.pad(xf, ((0, Np - N), (0, 0)))

    # Dense per-(row,col)-parity conv matrices built from the sampled weights.
    A1 = _conv_pool_parity_mats(w1, H, W, 'hwc').astype(jnp.bfloat16)       # (4, k1, p1_cols)
    A2 = _conv_pool_parity_mats(w2, H1p, W1p, 'chw').astype(jnp.bfloat16)   # (4, p1_cols, n_flat)
    b1row = jnp.tile(b1, H1p * W1p).reshape(1, p1_cols).astype(jnp.float32)
    b2row = jnp.repeat(b2, H2p * W2p).reshape(1, n_flat).astype(jnp.float32)
    wl1k = wl1.T.astype(jnp.bfloat16)                                        # (n_flat, hidden)
    wl2k = wl2.T.astype(jnp.bfloat16)                                        # (hidden, classes)
    bl1row = bl1.reshape(1, hidden).astype(jnp.float32)
    bl2row = bl2.reshape(1, classes).astype(jnp.float32)

    use_dropout = (p_mc_dropout is not None) and stochastic

    args, in_specs = [], []

    def add(arr, spec):
        args.append(arr)
        in_specs.append(spec)

    const3 = lambda b: (0, 0, 0)
    const2 = lambda b: (0, 0)
    batch2 = lambda b: (b, 0)

    add(xf, pl.BlockSpec((TN, k1), batch2))
    add(A1, pl.BlockSpec((4, k1, p1_cols), const3))
    add(b1row, pl.BlockSpec((1, p1_cols), const2))
    add(A2, pl.BlockSpec((4, p1_cols, n_flat), const3))
    add(b2row, pl.BlockSpec((1, n_flat), const2))
    if use_dropout:
        keep = 1.0 - p_mc_dropout
        cmask = jax.random.bernoulli(kd1, keep, (N, C2)).astype(jnp.float32) / keep
        cmask = jnp.repeat(cmask, H2p * W2p, axis=1)            # (N, n_flat), (c,h,w) order
        cmask = jnp.pad(cmask, ((0, Np - N), (0, 0)), constant_values=1.0)
        add(cmask, pl.BlockSpec((TN, n_flat), batch2))
    add(wl1k, pl.BlockSpec((n_flat, hidden), const2))
    add(bl1row, pl.BlockSpec((1, hidden), const2))
    if use_dropout:
        dmask = jax.random.bernoulli(kd2, keep, (N, hidden)).astype(jnp.float32) / keep
        dmask = jnp.pad(dmask, ((0, Np - N), (0, 0)), constant_values=1.0)
        add(dmask, pl.BlockSpec((TN, hidden), batch2))
    add(wl2k, pl.BlockSpec((hidden, classes), const2))
    add(bl2row, pl.BlockSpec((1, classes), const2))

    out = pl.pallas_call(
        functools.partial(_fused_forward_kernel, use_dropout=use_dropout),
        grid=(Np // TN,),
        out_shape=jax.ShapeDtypeStruct((Np, classes), jnp.float32),
        in_specs=in_specs,
        out_specs=pl.BlockSpec((TN, classes), batch2),
        compiler_params=pltpu.CompilerParams(
            dimension_semantics=("parallel",),
            vmem_limit_bytes=32 * 1024 * 1024),
    )(*args)
    return out[:N]


# ---------------------------------------------------------------------------
# Pure-JAX reference (same jax.random draws; bf16-rounded at the same points
# as the kernel so the two agree up to f32 accumulation-order differences).
# ---------------------------------------------------------------------------

def _round_bf16(a):
    return a.astype(jnp.bfloat16).astype(jnp.float32)


def reference_forward(x_nchw, params, key, stochastic=True, p_mc_dropout=0.5,
                      simulate_bf16=True):
    N = x_nchw.shape[0]
    rnd = _round_bf16 if simulate_bf16 else (lambda a: a)
    hp = jax.lax.Precision.HIGHEST
    k1, k2, k3, k4, kd1, kd2 = jax.random.split(key, 6)
    w1, b1 = _sample(params['conv1'], k1, stochastic)
    w2, b2 = _sample(params['conv2'], k2, stochastic)
    wl1, bl1 = _sample(params['linear1'], k3, stochastic)
    wl2, bl2 = _sample(params['linear2'], k4, stochastic)
    use_dropout = (p_mc_dropout is not None) and stochastic
    keep = (1.0 - p_mc_dropout) if use_dropout else None

    def conv(a, w, b):
        y = jax.lax.conv_general_dilated(
            rnd(a), rnd(w), (1, 1), 'VALID',
            dimension_numbers=('NCHW', 'OIHW', 'NCHW'), precision=hp)
        return y + b[None, :, None, None]

    def pool_relu(a):
        y = jax.lax.reduce_window(a, -jnp.inf, jax.lax.max,
                                  (1, 1, 2, 2), (1, 1, 2, 2), 'VALID')
        return jnp.maximum(y, 0.0)

    x = pool_relu(conv(x_nchw.astype(jnp.float32), w1, b1))
    x = conv(x, w2, b2)
    if use_dropout:
        cmask = jax.random.bernoulli(kd1, keep, (N, w2.shape[0])).astype(jnp.float32) / keep
        x = x * cmask[:, :, None, None]
    x = pool_relu(x)
    x = x.reshape(N, -1)
    x = jnp.dot(rnd(x), rnd(wl1).T, precision=hp) + bl1
    x = jnp.maximum(x, 0.0)
    if use_dropout:
        dmask = jax.random.bernoulli(kd2, keep, x.shape).astype(jnp.float32) / keep
        x = x * dmask
    x = jnp.dot(rnd(x), rnd(wl2).T, precision=hp) + bl2
    return jax.nn.log_softmax(x, axis=-1)


# ---------------------------------------------------------------------------

if __name__ == "__main__":
    key = jax.random.PRNGKey(0)
    kp, kx, kf = jax.random.split(key, 3)

    # small shapes consistent with the module: batch=2, C=3, 16x16 input
    params, n_flat = init_params(kp, in_channels=3, input_size=(16, 16),
                                 hidden_dim=32, num_classes=10)
    x = jax.random.normal(kx, (2, 3, 16, 16), jnp.float32)

    # stochastic forward (weight noise + MC dropout)
    fwd = jax.jit(functools.partial(bayesian_mnist_forward,
                                    stochastic=True, p_mc_dropout=0.5))
    out = jax.block_until_ready(fwd(x, params, kf))
    assert out.shape == (2, 10)
    assert bool(jnp.all(jnp.isfinite(out)))
    # rows of a log_softmax must exp-sum to 1
    assert bool(jnp.allclose(jnp.sum(jnp.exp(out), axis=-1), 1.0, atol=1e-3))

    ref = jax.jit(functools.partial(reference_forward,
                                    stochastic=True, p_mc_dropout=0.5))(x, params, kf)
    err = float(jnp.max(jnp.abs(out - ref)))
    assert err < 5e-2, f"stochastic kernel vs reference mismatch: max|diff|={err}"

    # deterministic forward (posterior means, dropout disabled by training flag)
    fwd_det = jax.jit(functools.partial(bayesian_mnist_forward,
                                        stochastic=False, p_mc_dropout=0.5))
    out_det = jax.block_until_ready(fwd_det(x, params, kf))
    ref_det = jax.jit(functools.partial(reference_forward,
                                        stochastic=False, p_mc_dropout=0.5))(x, params, kf)
    err_det = float(jnp.max(jnp.abs(out_det - ref_det)))
    assert err_det < 5e-2, f"deterministic kernel vs reference mismatch: max|diff|={err_det}"

    print("KERNEL_OK")
</pallas_src>

<mosaic_0001>
module attributes {stable_mosaic.version = 11 : i64} {
  func.func @_fused_forward_kernel(%arg0: i32, %arg1: memref<8x768xbf16, #tpu.memory_space<vmem>>, %arg2: memref<4x768x576xbf16, #tpu.memory_space<vmem>>, %arg3: memref<1x576xf32, #tpu.memory_space<vmem>>, %arg4: memref<4x576x32xbf16, #tpu.memory_space<vmem>>, %arg5: memref<1x32xf32, #tpu.memory_space<vmem>>, %arg6: memref<8x32xf32, #tpu.memory_space<vmem>>, %arg7: memref<32x32xbf16, #tpu.memory_space<vmem>>, %arg8: memref<1x32xf32, #tpu.memory_space<vmem>>, %arg9: memref<8x32xf32, #tpu.memory_space<vmem>>, %arg10: memref<32x10xbf16, #tpu.memory_space<vmem>>, %arg11: memref<1x10xf32, #tpu.memory_space<vmem>>, %arg12: memref<8x10xf32, #tpu.memory_space<vmem>>) attributes {dimension_semantics = [#tpu.dimension_semantics<parallel>], iteration_bounds = array<i64: 1>, scalar_prefetch = 0 : i64, scratch_operands = 0 : i64, tpu.core_type = #tpu.core_type<tc>, window_params = [{transform_indices = @transform_0, window_bounds = array<i64: 8, 768>}, {pipeline_mode = #tpu.pipeline_mode<synchronous>, transform_indices = @transform_1, window_bounds = array<i64: 4, 768, 576>}, {pipeline_mode = #tpu.pipeline_mode<synchronous>, transform_indices = @transform_2, window_bounds = array<i64: 1, 576>}, {pipeline_mode = #tpu.pipeline_mode<synchronous>, transform_indices = @transform_3, window_bounds = array<i64: 4, 576, 32>}, {pipeline_mode = #tpu.pipeline_mode<synchronous>, transform_indices = @transform_4, window_bounds = array<i64: 1, 32>}, {transform_indices = @transform_5, window_bounds = array<i64: 8, 32>}, {pipeline_mode = #tpu.pipeline_mode<synchronous>, transform_indices = @transform_6, window_bounds = array<i64: 32, 32>}, {pipeline_mode = #tpu.pipeline_mode<synchronous>, transform_indices = @transform_7, window_bounds = array<i64: 1, 32>}, {transform_indices = @transform_8, window_bounds = array<i64: 8, 32>}, {pipeline_mode = #tpu.pipeline_mode<synchronous>, transform_indices = @transform_9, window_bounds = array<i64: 32, 10>}, {pipeline_mode = #tpu.pipeline_mode<synchronous>, transform_indices = @transform_10, window_bounds = array<i64: 1, 10>}, {transform_indices = @transform_11, window_bounds = array<i64: 8, 10>}]} {
    %c0 = arith.constant 0 : index
    %c0_0 = arith.constant 0 : index
    %0 = vector.load %arg1[%c0, %c0_0] : memref<8x768xbf16, #tpu.memory_space<vmem>>, vector<8x768xbf16>
    %c0_1 = arith.constant 0 : index
    %c0_2 = arith.constant 0 : index
    %c0_3 = arith.constant 0 : index
    %1 = vector.load %arg2[%c0_1, %c0_2, %c0_3] : memref<4x768x576xbf16, #tpu.memory_space<vmem>>, vector<1x768x576xbf16>
    %2 = vector.shape_cast %1 : vector<1x768x576xbf16> to vector<768x576xbf16>
    %cst = arith.constant dense<0.000000e+00> : vector<8x576xf32>
    %3 = tpu.matmul %0, %2, %cst {dimension_numbers = #tpu.dot_dimension_numbers<[1], [0], [0], [1], [0, 0, 1, 1], [], []>} : vector<8x768xbf16>, vector<768x576xbf16>, vector<8x576xf32> -> vector<8x576xf32>
    %c1 = arith.constant 1 : index
    %c0_4 = arith.constant 0 : index
    %c0_5 = arith.constant 0 : index
    %4 = vector.load %arg2[%c1, %c0_4, %c0_5] : memref<4x768x576xbf16, #tpu.memory_space<vmem>>, vector<1x768x576xbf16>
    %5 = vector.shape_cast %4 : vector<1x768x576xbf16> to vector<768x576xbf16>
    %cst_6 = arith.constant dense<0.000000e+00> : vector<8x576xf32>
    %6 = tpu.matmul %0, %5, %cst_6 {dimension_numbers = #tpu.dot_dimension_numbers<[1], [0], [0], [1], [0, 0, 1, 1], [], []>} : vector<8x768xbf16>, vector<768x576xbf16>, vector<8x576xf32> -> vector<8x576xf32>
    %7 = arith.maximumf %3, %6 : vector<8x576xf32>
    %c2 = arith.constant 2 : index
    %c0_7 = arith.constant 0 : index
    %c0_8 = arith.constant 0 : index
    %8 = vector.load %arg2[%c2, %c0_7, %c0_8] : memref<4x768x576xbf16, #tpu.memory_space<vmem>>, vector<1x768x576xbf16>
    %9 = vector.shape_cast %8 : vector<1x768x576xbf16> to vector<768x576xbf16>
    %cst_9 = arith.constant dense<0.000000e+00> : vector<8x576xf32>
    %10 = tpu.matmul %0, %9, %cst_9 {dimension_numbers = #tpu.dot_dimension_numbers<[1], [0], [0], [1], [0, 0, 1, 1], [], []>} : vector<8x768xbf16>, vector<768x576xbf16>, vector<8x576xf32> -> vector<8x576xf32>
    %11 = arith.maximumf %7, %10 : vector<8x576xf32>
    %c3 = arith.constant 3 : index
    %c0_10 = arith.constant 0 : index
    %c0_11 = arith.constant 0 : index
    %12 = vector.load %arg2[%c3, %c0_10, %c0_11] : memref<4x768x576xbf16, #tpu.memory_space<vmem>>, vector<1x768x576xbf16>
    %13 = vector.shape_cast %12 : vector<1x768x576xbf16> to vector<768x576xbf16>
    %cst_12 = arith.constant dense<0.000000e+00> : vector<8x576xf32>
    %14 = tpu.matmul %0, %13, %cst_12 {dimension_numbers = #tpu.dot_dimension_numbers<[1], [0], [0], [1], [0, 0, 1, 1], [], []>} : vector<8x768xbf16>, vector<768x576xbf16>, vector<8x576xf32> -> vector<8x576xf32>
    %15 = arith.maximumf %11, %14 : vector<8x576xf32>
    %c0_13 = arith.constant 0 : index
    %c0_14 = arith.constant 0 : index
    %16 = vector.load %arg3[%c0_13, %c0_14] : memref<1x576xf32, #tpu.memory_space<vmem>>, vector<1x576xf32>
    %17 = vector.broadcast %16 : vector<1x576xf32> to vector<8x576xf32>
    %18 = arith.addf %15, %17 : vector<8x576xf32>
    %cst_15 = arith.constant 0.000000e+00 : f32
    %19 = vector.broadcast %cst_15 : f32 to vector<8x576xf32>
    %20 = arith.maximumf %18, %19 : vector<8x576xf32>
    %21 = arith.truncf %20 : vector<8x576xf32> to vector<8x576xbf16>
    %c0_16 = arith.constant 0 : index
    %c0_17 = arith.constant 0 : index
    %c0_18 = arith.constant 0 : index
    %22 = vector.load %arg4[%c0_16, %c0_17, %c0_18] : memref<4x576x32xbf16, #tpu.memory_space<vmem>>, vector<1x576x32xbf16>
    %23 = vector.shape_cast %22 : vector<1x576x32xbf16> to vector<576x32xbf16>
    %cst_19 = arith.constant dense<0.000000e+00> : vector<8x32xf32>
    %24 = tpu.matmul %21, %23, %cst_19 {dimension_numbers = #tpu.dot_dimension_numbers<[1], [0], [0], [1], [0, 0, 1, 1], [], []>} : vector<8x576xbf16>, vector<576x32xbf16>, vector<8x32xf32> -> vector<8x32xf32>
    %c1_20 = arith.constant 1 : index
    %c0_21 = arith.constant 0 : index
    %c0_22 = arith.constant 0 : index
    %25 = vector.load %arg4[%c1_20, %c0_21, %c0_22] : memref<4x576x32xbf16, #tpu.memory_space<vmem>>, vector<1x576x32xbf16>
    %26 = vector.shape_cast %25 : vector<1x576x32xbf16> to vector<576x32xbf16>
    %cst_23 = arith.constant dense<0.000000e+00> : vector<8x32xf32>
    %27 = tpu.matmul %21, %26, %cst_23 {dimension_numbers = #tpu.dot_dimension_numbers<[1], [0], [0], [1], [0, 0, 1, 1], [], []>} : vector<8x576xbf16>, vector<576x32xbf16>, vector<8x32xf32> -> vector<8x32xf32>
    %28 = arith.maximumf %24, %27 : vector<8x32xf32>
    %c2_24 = arith.constant 2 : index
    %c0_25 = arith.constant 0 : index
    %c0_26 = arith.constant 0 : index
    %29 = vector.load %arg4[%c2_24, %c0_25, %c0_26] : memref<4x576x32xbf16, #tpu.memory_space<vmem>>, vector<1x576x32xbf16>
    %30 = vector.shape_cast %29 : vector<1x576x32xbf16> to vector<576x32xbf16>
    %cst_27 = arith.constant dense<0.000000e+00> : vector<8x32xf32>
    %31 = tpu.matmul %21, %30, %cst_27 {dimension_numbers = #tpu.dot_dimension_numbers<[1], [0], [0], [1], [0, 0, 1, 1], [], []>} : vector<8x576xbf16>, vector<576x32xbf16>, vector<8x32xf32> -> vector<8x32xf32>
    %32 = arith.maximumf %28, %31 : vector<8x32xf32>
    %c3_28 = arith.constant 3 : index
    %c0_29 = arith.constant 0 : index
    %c0_30 = arith.constant 0 : index
    %33 = vector.load %arg4[%c3_28, %c0_29, %c0_30] : memref<4x576x32xbf16, #tpu.memory_space<vmem>>, vector<1x576x32xbf16>
    %34 = vector.shape_cast %33 : vector<1x576x32xbf16> to vector<576x32xbf16>
    %cst_31 = arith.constant dense<0.000000e+00> : vector<8x32xf32>
    %35 = tpu.matmul %21, %34, %cst_31 {dimension_numbers = #tpu.dot_dimension_numbers<[1], [0], [0], [1], [0, 0, 1, 1], [], []>} : vector<8x576xbf16>, vector<576x32xbf16>, vector<8x32xf32> -> vector<8x32xf32>
    %36 = arith.maximumf %32, %35 : vector<8x32xf32>
    %c0_32 = arith.constant 0 : index
    %c0_33 = arith.constant 0 : index
    %37 = vector.load %arg5[%c0_32, %c0_33] : memref<1x32xf32, #tpu.memory_space<vmem>>, vector<1x32xf32>
    %38 = vector.broadcast %37 : vector<1x32xf32> to vector<8x32xf32>
    %39 = arith.addf %36, %38 : vector<8x32xf32>
    %cst_34 = arith.constant 0.000000e+00 : f32
    %40 = vector.broadcast %cst_34 : f32 to vector<8x32xf32>
    %41 = arith.maximumf %39, %40 : vector<8x32xf32>
    %c0_35 = arith.constant 0 : index
    %c0_36 = arith.constant 0 : index
    %42 = vector.load %arg6[%c0_35, %c0_36] : memref<8x32xf32, #tpu.memory_space<vmem>>, vector<8x32xf32>
    %43 = arith.mulf %41, %42 : vector<8x32xf32>
    %44 = arith.truncf %43 : vector<8x32xf32> to vector<8x32xbf16>
    %c0_37 = arith.constant 0 : index
    %c0_38 = arith.constant 0 : index
    %45 = vector.load %arg7[%c0_37, %c0_38] : memref<32x32xbf16, #tpu.memory_space<vmem>>, vector<32x32xbf16>
    %cst_39 = arith.constant dense<0.000000e+00> : vector<8x32xf32>
    %46 = tpu.matmul %44, %45, %cst_39 {dimension_numbers = #tpu.dot_dimension_numbers<[1], [0], [0], [1], [0, 0, 1, 1], [], []>} : vector<8x32xbf16>, vector<32x32xbf16>, vector<8x32xf32> -> vector<8x32xf32>
    %c0_40 = arith.constant 0 : index
    %c0_41 = arith.constant 0 : index
    %47 = vector.load %arg8[%c0_40, %c0_41] : memref<1x32xf32, #tpu.memory_space<vmem>>, vector<1x32xf32>
    %48 = vector.broadcast %47 : vector<1x32xf32> to vector<8x32xf32>
    %49 = arith.addf %46, %48 : vector<8x32xf32>
    %cst_42 = arith.constant 0.000000e+00 : f32
    %50 = vector.broadcast %cst_42 : f32 to vector<8x32xf32>
    %51 = arith.maximumf %49, %50 : vector<8x32xf32>
    %c0_43 = arith.constant 0 : index
    %c0_44 = arith.constant 0 : index
    %52 = vector.load %arg9[%c0_43, %c0_44] : memref<8x32xf32, #tpu.memory_space<vmem>>, vector<8x32xf32>
    %53 = arith.mulf %51, %52 : vector<8x32xf32>
    %54 = arith.truncf %53 : vector<8x32xf32> to vector<8x32xbf16>
    %c0_45 = arith.constant 0 : index
    %c0_46 = arith.constant 0 : index
    %55 = vector.load %arg10[%c0_45, %c0_46] : memref<32x10xbf16, #tpu.memory_space<vmem>>, vector<32x10xbf16>
    %cst_47 = arith.constant dense<0.000000e+00> : vector<8x10xf32>
    %56 = tpu.matmul %54, %55, %cst_47 {dimension_numbers = #tpu.dot_dimension_numbers<[1], [0], [0], [1], [0, 0, 1, 1], [], []>} : vector<8x32xbf16>, vector<32x10xbf16>, vector<8x10xf32> -> vector<8x10xf32>
    %c0_48 = arith.constant 0 : index
    %c0_49 = arith.constant 0 : index
    %57 = vector.load %arg11[%c0_48, %c0_49] : memref<1x10xf32, #tpu.memory_space<vmem>>, vector<1x10xf32>
    %58 = vector.broadcast %57 : vector<1x10xf32> to vector<8x10xf32>
    %59 = arith.addf %56, %58 : vector<8x10xf32>
    %cst_50 = arith.constant dense<0xFF800000> : vector<8xf32>
    %60 = vector.multi_reduction <maximumf>, %59, %cst_50 [1] : vector<8x10xf32> to vector<8xf32>
    %61 = vector.shape_cast %60 : vector<8xf32> to vector<8x1xf32>
    %62 = vector.broadcast %61 : vector<8x1xf32> to vector<8x10xf32>
    %63 = arith.subf %59, %62 : vector<8x10xf32>
    %64 = math.exp %63 : vector<8x10xf32>
    %cst_51 = arith.constant dense<0.000000e+00> : vector<8xf32>
    %65 = vector.multi_reduction <add>, %64, %cst_51 [1] : vector<8x10xf32> to vector<8xf32>
    %66 = vector.shape_cast %65 : vector<8xf32> to vector<8x1xf32>
    %67 = math.log %66 : vector<8x1xf32>
    %68 = vector.broadcast %67 : vector<8x1xf32> to vector<8x10xf32>
    %69 = arith.subf %63, %68 : vector<8x10xf32>
    %c0_52 = arith.constant 0 : index
    %c0_53 = arith.constant 0 : index
    %70 = vector.load %arg12[%c0_52, %c0_53] : memref<8x10xf32, #tpu.memory_space<vmem>>, vector<8x10xf32>
    tpu.vector_store %arg12[%c0_52, %c0_53], %69 {strides = array<i32>} : memref<8x10xf32, #tpu.memory_space<vmem>>, vector<8x10xf32>,
    return
  }
  func.func @transform_0(%arg0: i32) -> (i32, i32) {
    %c0_i32 = arith.constant 0 : i32
    %c0_i32_0 = arith.constant 0 : i32
    return %arg0, %c0_i32 : i32, i32
  }
  func.func @transform_1(%arg0: i32) -> (i32, i32, i32) {
    %c0_i32 = arith.constant 0 : i32
    %c0_i32_0 = arith.constant 0 : i32
    %c0_i32_1 = arith.constant 0 : i32
    %c0_i32_2 = arith.constant 0 : i32
    return %c0_i32, %c0_i32_0, %c0_i32_1 : i32, i32, i32
  }
  func.func @transform_2(%arg0: i32) -> (i32, i32) {
    %c0_i32 = arith.constant 0 : i32
    %c0_i32_0 = arith.constant 0 : i32
    %c0_i32_1 = arith.constant 0 : i32
    return %c0_i32, %c0_i32_0 : i32, i32
  }
  func.func @transform_3(%arg0: i32) -> (i32, i32, i32) {
    %c0_i32 = arith.constant 0 : i32
    %c0_i32_0 = arith.constant 0 : i32
    %c0_i32_1 = arith.constant 0 : i32
    %c0_i32_2 = arith.constant 0 : i32
    return %c0_i32, %c0_i32_0, %c0_i32_1 : i32, i32, i32
  }
  func.func @transform_4(%arg0: i32) -> (i32, i32) {
    %c0_i32 = arith.constant 0 : i32
    %c0_i32_0 = arith.constant 0 : i32
    %c0_i32_1 = arith.constant 0 : i32
    return %c0_i32, %c0_i32_0 : i32, i32
  }
  func.func @transform_5(%arg0: i32) -> (i32, i32) {
    %c0_i32 = arith.constant 0 : i32
    %c0_i32_0 = arith.constant 0 : i32
    return %arg0, %c0_i32 : i32, i32
  }
  func.func @transform_6(%arg0: i32) -> (i32, i32) {
    %c0_i32 = arith.constant 0 : i32
    %c0_i32_0 = arith.constant 0 : i32
    %c0_i32_1 = arith.constant 0 : i32
    return %c0_i32, %c0_i32_0 : i32, i32
  }
  func.func @transform_7(%arg0: i32) -> (i32, i32) {
    %c0_i32 = arith.constant 0 : i32
    %c0_i32_0 = arith.constant 0 : i32
    %c0_i32_1 = arith.constant 0 : i32
    return %c0_i32, %c0_i32_0 : i32, i32
  }
  func.func @transform_8(%arg0: i32) -> (i32, i32) {
    %c0_i32 = arith.constant 0 : i32
    %c0_i32_0 = arith.constant 0 : i32
    return %arg0, %c0_i32 : i32, i32
  }
  func.func @transform_9(%arg0: i32) -> (i32, i32) {
    %c0_i32 = arith.constant 0 : i32
    %c0_i32_0 = arith.constant 0 : i32
    %c0_i32_1 = arith.constant 0 : i32
    return %c0_i32, %c0_i32_0 : i32, i32
  }
  func.func @transform_10(%arg0: i32) -> (i32, i32) {
    %c0_i32 = arith.constant 0 : i32
    %c0_i32_0 = arith.constant 0 : i32
    %c0_i32_1 = arith.constant 0 : i32
    return %c0_i32, %c0_i32_0 : i32, i32
  }
  func.func @transform_11(%arg0: i32) -> (i32, i32) {
    %c0_i32 = arith.constant 0 : i32
    %c0_i32_0 = arith.constant 0 : i32
    return %arg0, %c0_i32 : i32, i32
  }
}

</mosaic_0001>

<llo_original>
// kernel: tile.8
$region0: #{tile.8}
  #allocation0 [shape = 's32[1]{0}', space=sflag, size = 0x4, scoped, tag = 'scoped memory for tile.8']
  %s0 = inlined_call_operand.vmem [shape: f32[16], index: 0, kind: input, shape index: {}]
  %s1 = inlined_call_operand.vmem [shape: f32[36,16], index: 1, kind: output, shape index: {}]
  // Predicated region
  $region2: #{tile.8} parent=0 // pred_check
    _
  $region3: #{tile.8} parent=0 // pred_check_branch
    %3 = sbr.rel (0) target = $region5
  $region4: #{tile.8} parent=0 // pred_region
    _
  $region5: #{tile.8} parent=0 // pred_fallthru
    _
  %v4 = vld [vmem:[%s0] ss:$0 sm:$0xff]
  %5 = vst [vmem:[%s1] sm:$0xff] %v4
  %s6 = scalar_lea.vmem %s1, 8
  %7 = vst [vmem:[%s6] sm:$0xff] %v4
  %s8 = scalar_lea.vmem %s1, 16
  %9 = vst [vmem:[%s8] sm:$0xff] %v4
  %s10 = scalar_lea.vmem %s1, 24
  %11 = vst [vmem:[%s10] sm:$0xff] %v4
  %s12 = scalar_lea.vmem %s1, 32
  %13 = vst [vmem:[%s12] sm:$0xff] %v4

// kernel: tile.9
$region0: #{tile.9}
  %s0 = inlined_call_operand.vmem [shape: f32[36,16], index: 0, kind: input, shape index: {}]
  %s1 = inlined_call_operand.vmem [shape: f32[1,576], index: 1, kind: output, shape index: {}]
  $region1: #{tile.9} parent=0
    #allocation0 [shape = 'u8[20480]{0}', space=vmem, size = 0x5000, scoped, tag = 'scoped mem for output reshape']
    %v2 = vld [vmem:[%s0] ss:$8 sm:$0xf]
    %s3 = scalar_lea.vmem %s0, 28
    %v4 = vld [vmem:[%s3] sm:$0x10]
    %vm5 = vcmask 1044484
    %v6 = vsel %vm5, %v4, %v2
    %vm7 = vcmask 130048
    %8 = vst.msk [vmem:[#allocation0] ss:$8 sm:$0xf] %vm7, %v6
    %s9 = scalar_lea.vmem [#allocation0], 28
    %10 = vst.msk [vmem:[%s9] sm:$0x10] %vm7, %v6
    %s11 = scalar_lea.vmem %s0, 7
    %v12 = vld [vmem:[%s11] ss:$8 sm:$0xf]
    %13 = vrot.lane.b32.xlu0 %v12, 112
    %v14 = vpop.permute.xlu0 %13
    %vm15 = vcmask 1048448
    %16 = vst.msk [vmem:[#allocation0] ss:$8 sm:$0xf] %vm15, %v14
    %s17 = scalar_lea.vmem %s0, 6
    %v18 = vld [vmem:[%s17] ss:$8 sm:$0xf]
    %19 = vrot.lane.b32.xlu0 %v18, 96
    %v20 = vpop.permute.xlu0 %19
    %vm21 = vcmask 917248
    %22 = vst.msk [vmem:[#allocation0] ss:$8 sm:$0xf] %vm21, %v20
    %s23 = scalar_lea.vmem %s0, 5
    %v24 = vld [vmem:[%s23] ss:$8 sm:$0xf]
    %25 = vrot.lane.b32.xlu0 %v24, 80
    %v26 = vpop.permute.xlu0 %25
    %vm27 = vcmask 786048
    %28 = vst.msk [vmem:[#allocation0] ss:$8 sm:$0xf] %vm27, %v26
    %s29 = scalar_lea.vmem %s0, 4
    %v30 = vld [vmem:[%s29] ss:$8 sm:$0xf]
    %31 = vrot.lane.b32.xlu0 %v30, 64
    %v32 = vpop.permute.xlu0 %31
    %vm33 = vcmask 654848
    %34 = vst.msk [vmem:[#allocation0] ss:$8 sm:$0xf] %vm33, %v32
    %s35 = scalar_lea.vmem %s0, 3
    %v36 = vld [vmem:[%s35] ss:$8 sm:$0xf]
    %s37 = scalar_lea.vmem %s0, 31
    %v38 = vld [vmem:[%s37] sm:$0x10]
    %vm39 = vcmask 1044484
    %v40 = vsel %vm39, %v38, %v36
    %41 = vrot.lane.b32.xlu0 %v40, 48
    %v42 = vpop.permute.xlu0 %41
    %vm43 = vcmask 523648
    %44 = vst.msk [vmem:[#allocation0] ss:$8 sm:$0xf] %vm43, %v42
    %s45 = scalar_lea.vmem [#allocation0], 28
    %46 = vst.msk [vmem:[%s45] sm:$0x10] %vm43, %v42
    %s47 = scalar_lea.vmem %s0, 2
    %v48 = vld [vmem:[%s47] ss:$8 sm:$0xf]
    %s49 = scalar_lea.vmem %s0, 30
    %v50 = vld [vmem:[%s49] sm:$0x10]
    %vm51 = vcmask 1044484
    %v52 = vsel %vm51, %v50, %v48
    %53 = vrot.lane.b32.xlu0 %v52, 32
    %v54 = vpop.permute.xlu0 %53
    %vm55 = vcmask 392448
    %56 = vst.msk [vmem:[#allocation0] ss:$8 sm:$0xf] %vm55, %v54
    %s57 = scalar_lea.vmem [#allocation0], 28
    %58 = vst.msk [vmem:[%s57] sm:$0x10] %vm55, %v54
    %s59 = scalar_lea.vmem %s0, 1
    %v60 = vld [vmem:[%s59] ss:$8 sm:$0xf]
    %s61 = scalar_lea.vmem %s0, 29
    %v62 = vld [vmem:[%s61] sm:$0x10]
    %vm63 = vcmask 1044484
    %v64 = vsel %vm63, %v62, %v60
    %65 = vrot.lane.b32.xlu0 %v64, 16
    %v66 = vpop.permute.xlu0 %65
    %vm67 = vcmask 261248
    %68 = vst.msk [vmem:[#allocation0] ss:$8 sm:$0xf] %vm67, %v66
    %s69 = scalar_lea.vmem [#allocation0], 28
    %70 = vst.msk [vmem:[%s69] sm:$0x10] %vm67, %v66
    %s72 = ssub.s32 2, 1
    %v73 = vld [vmem:[#allocation0] sm:%s72]
    %s75 = ssub.s32 2, 1
    %76 = vst [vmem:[%s1] sm:%s75] %v73
    %s77 = scalar_lea.vmem [#allocation0], 8
    %v78 = vld [vmem:[%s77] sm:%s72]
    %s80 = ssub.s32 2, 1
    %s81 = scalar_lea.vmem %s1, 1
    %82 = vst [vmem:[%s81] sm:%s80] %v78
    %s83 = scalar_lea.vmem [#allocation0], 16
    %v84 = vld [vmem:[%s83] sm:%s72]
    %s86 = ssub.s32 2, 1
    %s87 = scalar_lea.vmem %s1, 2
    %88 = vst [vmem:[%s87] sm:%s86] %v84
    %s89 = scalar_lea.vmem [#allocation0], 24
    %v90 = vld [vmem:[%s89] sm:%s72]
    %s92 = ssub.s32 2, 1
    %s93 = scalar_lea.vmem %s1, 3
    %94 = vst [vmem:[%s93] sm:%s92] %v90
    %s95 = scalar_lea.vmem [#allocation0], 32
    %v96 = vld [vmem:[%s95] sm:%s72]
    %s98 = ssub.s32 2, 1
    %s99 = scalar_lea.vmem %s1, 4
    %100 = vst [vmem:[%s99] sm:%s98] %v96

// kernel: bayesian_mnist_forward.3
$region0: #{bayesian_mnist_forward.3}
  #allocation0 [shape = 'u32[]', space=smem, size = 0x4, offset = 0x4, fixed_abs, tag = 'smem constant byte address 0x4 - core index']
  #allocation1 [shape = 'u32[72,128]{1,0:T(1,128)}', space=vmem, size = 0x9000, scoped, tag = 'internal scratch']
  %s0 = inlined_call_operand.vmem [shape: bf16[8,768], index: 0, kind: input, shape index: {}]
  %s1 = inlined_call_operand.vmem [shape: bf16[4,768,576], index: 1, kind: input, shape index: {}]
  %s2 = inlined_call_operand.vmem [shape: f32[1,576], index: 2, kind: input, shape index: {}]
  %s3 = inlined_call_operand.vmem [shape: bf16[4,576,32], index: 3, kind: input, shape index: {}]
  %s4 = inlined_call_operand.vmem [shape: f32[1,32], index: 4, kind: input, shape index: {}]
  %s5 = inlined_call_operand.vmem [shape: f32[8,32], index: 5, kind: input, shape index: {}]
  %s6 = inlined_call_operand.vmem [shape: bf16[32,32], index: 6, kind: input, shape index: {}]
  %s7 = inlined_call_operand.vmem [shape: f32[1,32], index: 7, kind: input, shape index: {}]
  %s8 = inlined_call_operand.vmem [shape: f32[8,32], index: 8, kind: input, shape index: {}]
  %s9 = inlined_call_operand.vmem [shape: bf16[32,10], index: 9, kind: input, shape index: {}]
  %s10 = inlined_call_operand.vmem [shape: f32[1,10], index: 10, kind: input, shape index: {}]
  %s11 = inlined_call_operand.vmem [shape: f32[8,10], index: 11, kind: output, shape index: {}]
  %s12 = sld [smem:[#allocation0]]
  $region54: #{bayesian_mnist_forward.3} parent=0
    _
  %s14 = ssub.s32 1, %s12
  %s15 = scalar_select 0, %s14, %s12
  // Predicated region
  $region2: #{bayesian_mnist_forward.3} parent=0 // pred_check
    _
  $region3: #{bayesian_mnist_forward.3} parent=0 // pred_check_branch
    %17 = sbr.rel (0) target = $region5
  $region4: #{bayesian_mnist_forward.3} parent=0 // pred_region
    _
  $region5: #{bayesian_mnist_forward.3} parent=0 // pred_fallthru
    _
  // Predicated region
  $region6: #{bayesian_mnist_forward.3} parent=0 // pred_check
    _
  $region7: #{bayesian_mnist_forward.3} parent=0 // pred_check_branch
    %19 = sbr.rel (0) target = $region9
  $region8: #{bayesian_mnist_forward.3} parent=0 // pred_region
    _
  $region9: #{bayesian_mnist_forward.3} parent=0 // pred_fallthru
    _
  // Predicated region
  $region10: #{bayesian_mnist_forward.3} parent=0 // pred_check
    _
  $region11: #{bayesian_mnist_forward.3} parent=0 // pred_check_branch
    %21 = sbr.rel (0) target = $region13
  $region12: #{bayesian_mnist_forward.3} parent=0 // pred_region
    _
  $region13: #{bayesian_mnist_forward.3} parent=0 // pred_fallthru
    _
  // Predicated region
  $region14: #{bayesian_mnist_forward.3} parent=0 // pred_check
    _
  $region15: #{bayesian_mnist_forward.3} parent=0 // pred_check_branch
    %23 = sbr.rel (0) target = $region17
  $region16: #{bayesian_mnist_forward.3} parent=0 // pred_region
    _
  $region17: #{bayesian_mnist_forward.3} parent=0 // pred_fallthru
    _
  // Predicated region
  $region18: #{bayesian_mnist_forward.3} parent=0 // pred_check
    _
  $region19: #{bayesian_mnist_forward.3} parent=0 // pred_check_branch
    %25 = sbr.rel (0) target = $region21
  $region20: #{bayesian_mnist_forward.3} parent=0 // pred_region
    _
  $region21: #{bayesian_mnist_forward.3} parent=0 // pred_fallthru
    _
  // Predicated region
  $region22: #{bayesian_mnist_forward.3} parent=0 // pred_check
    _
  $region23: #{bayesian_mnist_forward.3} parent=0 // pred_check_branch
    %27 = sbr.rel (0) target = $region25
  $region24: #{bayesian_mnist_forward.3} parent=0 // pred_region
    _
  $region25: #{bayesian_mnist_forward.3} parent=0 // pred_fallthru
    _
  // Predicated region
  $region26: #{bayesian_mnist_forward.3} parent=0 // pred_check
    _
  $region27: #{bayesian_mnist_forward.3} parent=0 // pred_check_branch
    %29 = sbr.rel (0) target = $region29
  $region28: #{bayesian_mnist_forward.3} parent=0 // pred_region
    _
  $region29: #{bayesian_mnist_forward.3} parent=0 // pred_fallthru
    _
  // Predicated region
  $region30: #{bayesian_mnist_forward.3} parent=0 // pred_check
    _
  $region31: #{bayesian_mnist_forward.3} parent=0 // pred_check_branch
    %31 = sbr.rel (0) target = $region33
  $region32: #{bayesian_mnist_forward.3} parent=0 // pred_region
    _
  $region33: #{bayesian_mnist_forward.3} parent=0 // pred_fallthru
    _
  // Predicated region
  $region34: #{bayesian_mnist_forward.3} parent=0 // pred_check
    _
  $region35: #{bayesian_mnist_forward.3} parent=0 // pred_check_branch
    %33 = sbr.rel (0) target = $region37
  $region36: #{bayesian_mnist_forward.3} parent=0 // pred_region
    _
  $region37: #{bayesian_mnist_forward.3} parent=0 // pred_fallthru
    _
  // Predicated region
  $region38: #{bayesian_mnist_forward.3} parent=0 // pred_check
    _
  $region39: #{bayesian_mnist_forward.3} parent=0 // pred_check_branch
    %35 = sbr.rel (0) target = $region41
  $region40: #{bayesian_mnist_forward.3} parent=0 // pred_region
    _
  $region41: #{bayesian_mnist_forward.3} parent=0 // pred_fallthru
    _
  // Predicated region
  $region42: #{bayesian_mnist_forward.3} parent=0 // pred_check
    _
  $region43: #{bayesian_mnist_forward.3} parent=0 // pred_check_branch
    %37 = sbr.rel (0) target = $region45
  $region44: #{bayesian_mnist_forward.3} parent=0 // pred_region
    _
  $region45: #{bayesian_mnist_forward.3} parent=0 // pred_fallthru
    _
  %v39 = vld [vmem:[%s0] sm:$0xff]
  %v40 = vld [vmem:[%s0 + $0x8] sm:$0xff]
  %v41 = vld [vmem:[%s0 + $0x10] sm:$0xff]
  %v42 = vld [vmem:[%s1] sm:$0xff]
  %v43 = vld [vmem:[%s1 + $0x8] sm:$0xff]
  %v44 = vld [vmem:[%s1 + $0x10] sm:$0xf]
  %v45 = vld [vmem:[%s1 + $0x14] sm:$0xff]
  %v46 = vld [vmem:[%s1 + $0x1c] sm:$0xff]
  %v47 = vld [vmem:[%s1 + $0x24] sm:$0xf]
  %v48 = vld [vmem:[%s1 + $0x28] sm:$0xff]
  %v49 = vld [vmem:[%s1 + $0x30] sm:$0xff]
  %v50 = vld [vmem:[%s1 + $0x38] sm:$0xf]
  %v51 = vld [vmem:[%s1 + $0x3c] sm:$0xff]
  %v52 = vld [vmem:[%s1 + $0x44] sm:$0xff]
  %v53 = vld [vmem:[%s1 + $0x4c] sm:$0xf]
  %v54 = vld [vmem:[%s1 + $0x50] sm:$0xff]
  %v55 = vld [vmem:[%s1 + $0x58] sm:$0xff]
  %v56 = vld [vmem:[%s1 + $0x60] sm:$0xf]
  %v57 = vld [vmem:[%s1 + $0x64] sm:$0xff]
  %v58 = vld [vmem:[%s1 + $0x6c] sm:$0xff]
  %v59 = vld [vmem:[%s1 + $0x74] sm:$0xf]
  %v60 = vld [vmem:[%s1 + $0x78] sm:$0xff]
  %v61 = vld [vmem:[%s1 + $0x80] sm:$0xff]
  %v62 = vld [vmem:[%s1 + $0x88] sm:$0xf]
  %v63 = vld [vmem:[%s1 + $0x8c] sm:$0xff]
  %v64 = vld [vmem:[%s1 + $0x94] sm:$0xff]
  %v65 = vld [vmem:[%s1 + $0x9c] sm:$0xf]
  %v66 = vld [vmem:[%s1 + $0xa0] sm:$0xff]
  %v67 = vld [vmem:[%s1 + $0xa8] sm:$0xff]
  %v68 = vld [vmem:[%s1 + $0xb0] sm:$0xf]
  %v69 = vld [vmem:[%s1 + $0xb4] sm:$0xff]
  %v70 = vld [vmem:[%s1 + $0xbc] sm:$0xff]
  %v71 = vld [vmem:[%s1 + $0xc4] sm:$0xf]
  %v72 = vld [vmem:[%s1 + $0xc8] sm:$0xff]
  %v73 = vld [vmem:[%s1 + $0xd0] sm:$0xff]
  %v74 = vld [vmem:[%s1 + $0xd8] sm:$0xf]
  %v75 = vld [vmem:[%s1 + $0xdc] sm:$0xff]
  %v76 = vld [vmem:[%s1 + $0xe4] sm:$0xff]
  %v77 = vld [vmem:[%s1 + $0xec] sm:$0xf]
  %v78 = vld [vmem:[%s1 + $0xf0] sm:$0xff]
  %v79 = vld [vmem:[%s1 + $0xf8] sm:$0xff]
  %v80 = vld [vmem:[%s1 + $0x100] sm:$0xf]
  %v81 = vld [vmem:[%s1 + $0x104] sm:$0xff]
  %v82 = vld [vmem:[%s1 + $0x10c] sm:$0xff]
  %v83 = vld [vmem:[%s1 + $0x114] sm:$0xf]
  %v84 = vld [vmem:[%s1 + $0x118] sm:$0xff]
  %v85 = vld [vmem:[%s1 + $0x120] sm:$0xff]
  %v86 = vld [vmem:[%s1 + $0x128] sm:$0xf]
  %v87 = vld [vmem:[%s1 + $0x12c] sm:$0xff]
  %v88 = vld [vmem:[%s1 + $0x134] sm:$0xff]
  %v89 = vld [vmem:[%s1 + $0x13c] sm:$0xf]
  %v90 = vld [vmem:[%s1 + $0x140] sm:$0xff]
  %v91 = vld [vmem:[%s1 + $0x148] sm:$0xff]
  %v92 = vld [vmem:[%s1 + $0x150] sm:$0xf]
  %v93 = vld [vmem:[%s1 + $0x154] sm:$0xff]
  %v94 = vld [vmem:[%s1 + $0x15c] sm:$0xff]
  %v95 = vld [vmem:[%s1 + $0x164] sm:$0xf]
  %v96 = vld [vmem:[%s1 + $0x168] sm:$0xff]
  %v97 = vld [vmem:[%s1 + $0x170] sm:$0xff]
  %v98 = vld [vmem:[%s1 + $0x178] sm:$0xf]
  %v99 = vld [vmem:[%s1 + $0x17c] sm:$0xff]
  %v100 = vld [vmem:[%s1 + $0x184] sm:$0xff]
  %v101 = vld [vmem:[%s1 + $0x18c] sm:$0xf]
  %v102 = vld [vmem:[%s1 + $0x190] sm:$0xff]
  %v103 = vld [vmem:[%s1 + $0x198] sm:$0xff]
  %v104 = vld [vmem:[%s1 + $0x1a0] sm:$0xf]
  %v105 = vld [vmem:[%s1 + $0x1a4] sm:$0xff]
  %v106 = vld [vmem:[%s1 + $0x1ac] sm:$0xff]
  %v107 = vld [vmem:[%s1 + $0x1b4] sm:$0xf]
  %v108 = vld [vmem:[%s1 + $0x1b8] sm:$0xff]
  %v109 = vld [vmem:[%s1 + $0x1c0] sm:$0xff]
  %v110 = vld [vmem:[%s1 + $0x1c8] sm:$0xf]
  %v111 = vld [vmem:[%s1 + $0x1cc] sm:$0xff]
  %v112 = vld [vmem:[%s1 + $0x1d4] sm:$0xff]
  %v113 = vld [vmem:[%s1 + $0x1dc] sm:$0xf]
  %v114 = vld [vmem:[%s1 + $0x1e0] sm:$0xff]
  %v115 = vld [vmem:[%s1 + $0x1e8] sm:$0xff]
  %v116 = vld [vmem:[%s1 + $0x1f0] sm:$0xf]
  %v117 = vld [vmem:[%s1 + $0x1f4] sm:$0xff]
  %v118 = vld [vmem:[%s1 + $0x1fc] sm:$0xff]
  %v119 = vld [vmem:[%s1 + $0x204] sm:$0xf]
  %v120 = vld [vmem:[%s1 + $0x208] sm:$0xff]
  %v121 = vld [vmem:[%s1 + $0x210] sm:$0xff]
  %v122 = vld [vmem:[%s1 + $0x218] sm:$0xf]
  %v123 = vld [vmem:[%s1 + $0x21c] sm:$0xff]
  %v124 = vld [vmem:[%s1 + $0x224] sm:$0xff]
  %v125 = vld [vmem:[%s1 + $0x22c] sm:$0xf]
  %v126 = vld [vmem:[%s1 + $0x230] sm:$0xff]
  %v127 = vld [vmem:[%s1 + $0x238] sm:$0xff]
  %v128 = vld [vmem:[%s1 + $0x240] sm:$0xf]
  %v129 = vld [vmem:[%s1 + $0x244] sm:$0xff]
  %v130 = vld [vmem:[%s1 + $0x24c] sm:$0xff]
  %v131 = vld [vmem:[%s1 + $0x254] sm:$0xf]
  %v132 = vld [vmem:[%s1 + $0x258] sm:$0xff]
  %v133 = vld [vmem:[%s1 + $0x260] sm:$0xff]
  %v134 = vld [vmem:[%s1 + $0x268] sm:$0xf]
  %v135 = vld [vmem:[%s1 + $0x26c] sm:$0xff]
  %v136 = vld [vmem:[%s1 + $0x274] sm:$0xff]
  %v137 = vld [vmem:[%s1 + $0x27c] sm:$0xf]
  %v138 = vld [vmem:[%s1 + $0x280] sm:$0xff]
  %v139 = vld [vmem:[%s1 + $0x288] sm:$0xff]
  %v140 = vld [vmem:[%s1 + $0x290] sm:$0xf]
  %v141 = vld [vmem:[%s1 + $0x294] sm:$0xff]
  %v142 = vld [vmem:[%s1 + $0x29c] sm:$0xff]
  %v143 = vld [vmem:[%s1 + $0x2a4] sm:$0xf]
  %v144 = vld [vmem:[%s1 + $0x2a8] sm:$0xff]
  %v145 = vld [vmem:[%s1 + $0x2b0] sm:$0xff]
  %v146 = vld [vmem:[%s1 + $0x2b8] sm:$0xf]
  %v147 = vld [vmem:[%s1 + $0x2bc] sm:$0xff]
  %v148 = vld [vmem:[%s1 + $0x2c4] sm:$0xff]
  %v149 = vld [vmem:[%s1 + $0x2cc] sm:$0xf]
  %v150 = vld [vmem:[%s1 + $0x2d0] sm:$0xff]
  %v151 = vld [vmem:[%s1 + $0x2d8] sm:$0xff]
  %v152 = vld [vmem:[%s1 + $0x2e0] sm:$0xf]
  %v153 = vld [vmem:[%s1 + $0x2e4] sm:$0xff]
  %v154 = vld [vmem:[%s1 + $0x2ec] sm:$0xff]
  %v155 = vld [vmem:[%s1 + $0x2f4] sm:$0xf]
  %v156 = vld [vmem:[%s1 + $0x2f8] sm:$0xff]
  %v157 = vld [vmem:[%s1 + $0x300] sm:$0xff]
  %v158 = vld [vmem:[%s1 + $0x308] sm:$0xf]
  %v159 = vld [vmem:[%s1 + $0x30c] sm:$0xff]
  %v160 = vld [vmem:[%s1 + $0x314] sm:$0xff]
  %v161 = vld [vmem:[%s1 + $0x31c] sm:$0xf]
  %v162 = vld [vmem:[%s1 + $0x320] sm:$0xff]
  %v163 = vld [vmem:[%s1 + $0x328] sm:$0xff]
  %v164 = vld [vmem:[%s1 + $0x330] sm:$0xf]
  %v165 = vld [vmem:[%s1 + $0x334] sm:$0xff]
  %v166 = vld [vmem:[%s1 + $0x33c] sm:$0xff]
  %v167 = vld [vmem:[%s1 + $0x344] sm:$0xf]
  %v168 = vld [vmem:[%s1 + $0x348] sm:$0xff]
  %v169 = vld [vmem:[%s1 + $0x350] sm:$0xff]
  %v170 = vld [vmem:[%s1 + $0x358] sm:$0xf]
  %v171 = vld [vmem:[%s1 + $0x35c] sm:$0xff]
  %v172 = vld [vmem:[%s1 + $0x364] sm:$0xff]
  %v173 = vld [vmem:[%s1 + $0x36c] sm:$0xf]
  %v174 = vld [vmem:[%s1 + $0x370] sm:$0xff]
  %v175 = vld [vmem:[%s1 + $0x378] sm:$0xff]
  %v176 = vld [vmem:[%s1 + $0x380] sm:$0xf]
  %v177 = vld [vmem:[%s1 + $0x384] sm:$0xff]
  %v178 = vld [vmem:[%s1 + $0x38c] sm:$0xff]
  %v179 = vld [vmem:[%s1 + $0x394] sm:$0xf]
  %v180 = vld [vmem:[%s1 + $0x398] sm:$0xff]
  %v181 = vld [vmem:[%s1 + $0x3a0] sm:$0xff]
  %v182 = vld [vmem:[%s1 + $0x3a8] sm:$0xf]
  %v183 = vld [vmem:[%s1 + $0x3ac] sm:$0xff]
  %v184 = vld [vmem:[%s1 + $0x3b4] sm:$0xff]
  %v185 = vld [vmem:[%s1 + $0x3bc] sm:$0xf]
  %v186 = vld [vmem:[%s1 + $0x3c0] sm:$0xff]
  %v187 = vld [vmem:[%s1 + $0x3c8] sm:$0xff]
  %v188 = vld [vmem:[%s1 + $0x3d0] sm:$0xf]
  %v189 = vld [vmem:[%s1 + $0x3d4] sm:$0xff]
  %v190 = vld [vmem:[%s1 + $0x3dc] sm:$0xff]
  %v191 = vld [vmem:[%s1 + $0x3e4] sm:$0xf]
  %v192 = vld [vmem:[%s1 + $0x3e8] sm:$0xff]
  %v193 = vld [vmem:[%s1 + $0x3f0] sm:$0xff]
  %v194 = vld [vmem:[%s1 + $0x3f8] sm:$0xf]
  %v195 = vld [vmem:[%s1 + $0x3fc] sm:$0xff]
  %v196 = vld [vmem:[%s1 + $0x404] sm:$0xff]
  %v197 = vld [vmem:[%s1 + $0x40c] sm:$0xf]
  %v198 = vld [vmem:[%s1 + $0x410] sm:$0xff]
  %v199 = vld [vmem:[%s1 + $0x418] sm:$0xff]
  %v200 = vld [vmem:[%s1 + $0x420] sm:$0xf]
  %v201 = vld [vmem:[%s1 + $0x424] sm:$0xff]
  %v202 = vld [vmem:[%s1 + $0x42c] sm:$0xff]
  %v203 = vld [vmem:[%s1 + $0x434] sm:$0xf]
  %v204 = vld [vmem:[%s1 + $0x438] sm:$0xff]
  %v205 = vld [vmem:[%s1 + $0x440] sm:$0xff]
  %v206 = vld [vmem:[%s1 + $0x448] sm:$0xf]
  %v207 = vld [vmem:[%s1 + $0x44c] sm:$0xff]
  %v208 = vld [vmem:[%s1 + $0x454] sm:$0xff]
  %v209 = vld [vmem:[%s1 + $0x45c] sm:$0xf]
  %v210 = vld [vmem:[%s1 + $0x460] sm:$0xff]
  %v211 = vld [vmem:[%s1 + $0x468] sm:$0xff]
  %v212 = vld [vmem:[%s1 + $0x470] sm:$0xf]
  %v213 = vld [vmem:[%s1 + $0x474] sm:$0xff]
  %v214 = vld [vmem:[%s1 + $0x47c] sm:$0xff]
  %v215 = vld [vmem:[%s1 + $0x484] sm:$0xf]
  %v216 = vld [vmem:[%s1 + $0x488] sm:$0xff]
  %v217 = vld [vmem:[%s1 + $0x490] sm:$0xff]
  %v218 = vld [vmem:[%s1 + $0x498] sm:$0xf]
  %v219 = vld [vmem:[%s1 + $0x49c] sm:$0xff]
  %v220 = vld [vmem:[%s1 + $0x4a4] sm:$0xff]
  %v221 = vld [vmem:[%s1 + $0x4ac] sm:$0xf]
  %v222 = vld [vmem:[%s1 + $0x4b0] sm:$0xff]
  %v223 = vld [vmem:[%s1 + $0x4b8] sm:$0xff]
  %v224 = vld [vmem:[%s1 + $0x4c0] sm:$0xf]
  %v225 = vld [vmem:[%s1 + $0x4c4] sm:$0xff]
  %v226 = vld [vmem:[%s1 + $0x4cc] sm:$0xff]
  %v227 = vld [vmem:[%s1 + $0x4d4] sm:$0xf]
  %v228 = vld [vmem:[%s1 + $0x4d8] sm:$0xff]
  %v229 = vld [vmem:[%s1 + $0x4e0] sm:$0xff]
  %v230 = vld [vmem:[%s1 + $0x4e8] sm:$0xf]
  %v231 = vld [vmem:[%s1 + $0x4ec] sm:$0xff]
  %v232 = vld [vmem:[%s1 + $0x4f4] sm:$0xff]
  %v233 = vld [vmem:[%s1 + $0x4fc] sm:$0xf]
  %v234 = vld [vmem:[%s1 + $0x500] sm:$0xff]
  %v235 = vld [vmem:[%s1 + $0x508] sm:$0xff]
  %v236 = vld [vmem:[%s1 + $0x510] sm:$0xf]
  %v237 = vld [vmem:[%s1 + $0x514] sm:$0xff]
  %v238 = vld [vmem:[%s1 + $0x51c] sm:$0xff]
  %v239 = vld [vmem:[%s1 + $0x524] sm:$0xf]
  %v240 = vld [vmem:[%s1 + $0x528] sm:$0xff]
  %v241 = vld [vmem:[%s1 + $0x530] sm:$0xff]
  %v242 = vld [vmem:[%s1 + $0x538] sm:$0xf]
  %v243 = vld [vmem:[%s1 + $0x53c] sm:$0xff]
  %v244 = vld [vmem:[%s1 + $0x544] sm:$0xff]
  %v245 = vld [vmem:[%s1 + $0x54c] sm:$0xf]
  %v246 = vld [vmem:[%s1 + $0x550] sm:$0xff]
  %v247 = vld [vmem:[%s1 + $0x558] sm:$0xff]
  %v248 = vld [vmem:[%s1 + $0x560] sm:$0xf]
  %v249 = vld [vmem:[%s1 + $0x564] sm:$0xff]
  %v250 = vld [vmem:[%s1 + $0x56c] sm:$0xff]
  %v251 = vld [vmem:[%s1 + $0x574] sm:$0xf]
  %v252 = vld [vmem:[%s1 + $0x578] sm:$0xff]
  %v253 = vld [vmem:[%s1 + $0x580] sm:$0xff]
  %v254 = vld [vmem:[%s1 + $0x588] sm:$0xf]
  %v255 = vld [vmem:[%s1 + $0x58c] sm:$0xff]
  %v256 = vld [vmem:[%s1 + $0x594] sm:$0xff]
  %v257 = vld [vmem:[%s1 + $0x59c] sm:$0xf]
  %v258 = vld [vmem:[%s1 + $0x5a0] sm:$0xff]
  %v259 = vld [vmem:[%s1 + $0x5a8] sm:$0xff]
  %v260 = vld [vmem:[%s1 + $0x5b0] sm:$0xf]
  %v261 = vld [vmem:[%s1 + $0x5b4] sm:$0xff]
  %v262 = vld [vmem:[%s1 + $0x5bc] sm:$0xff]
  %v263 = vld [vmem:[%s1 + $0x5c4] sm:$0xf]
  %v264 = vld [vmem:[%s1 + $0x5c8] sm:$0xff]
  %v265 = vld [vmem:[%s1 + $0x5d0] sm:$0xff]
  %v266 = vld [vmem:[%s1 + $0x5d8] sm:$0xf]
  %v267 = vld [vmem:[%s1 + $0x5dc] sm:$0xff]
  %v268 = vld [vmem:[%s1 + $0x5e4] sm:$0xff]
  %v269 = vld [vmem:[%s1 + $0x5ec] sm:$0xf]
  %v270 = vld [vmem:[%s1 + $0x5f0] sm:$0xff]
  %v271 = vld [vmem:[%s1 + $0x5f8] sm:$0xff]
  %v272 = vld [vmem:[%s1 + $0x600] sm:$0xf]
  %v273 = vld [vmem:[%s1 + $0x604] sm:$0xff]
  %v274 = vld [vmem:[%s1 + $0x60c] sm:$0xff]
  %v275 = vld [vmem:[%s1 + $0x614] sm:$0xf]
  %v276 = vld [vmem:[%s1 + $0x618] sm:$0xff]
  %v277 = vld [vmem:[%s1 + $0x620] sm:$0xff]
  %v278 = vld [vmem:[%s1 + $0x628] sm:$0xf]
  %v279 = vld [vmem:[%s1 + $0x62c] sm:$0xff]
  %v280 = vld [vmem:[%s1 + $0x634] sm:$0xff]
  %v281 = vld [vmem:[%s1 + $0x63c] sm:$0xf]
  %v282 = vld [vmem:[%s1 + $0x640] sm:$0xff]
  %v283 = vld [vmem:[%s1 + $0x648] sm:$0xff]
  %v284 = vld [vmem:[%s1 + $0x650] sm:$0xf]
  %v285 = vld [vmem:[%s1 + $0x654] sm:$0xff]
  %v286 = vld [vmem:[%s1 + $0x65c] sm:$0xff]
  %v287 = vld [vmem:[%s1 + $0x664] sm:$0xf]
  %v288 = vld [vmem:[%s1 + $0x668] sm:$0xff]
  %v289 = vld [vmem:[%s1 + $0x670] sm:$0xff]
  %v290 = vld [vmem:[%s1 + $0x678] sm:$0xf]
  %v291 = vld [vmem:[%s1 + $0x67c] sm:$0xff]
  %v292 = vld [vmem:[%s1 + $0x684] sm:$0xff]
  %v293 = vld [vmem:[%s1 + $0x68c] sm:$0xf]
  %v294 = vld [vmem:[%s1 + $0x690] sm:$0xff]
  %v295 = vld [vmem:[%s1 + $0x698] sm:$0xff]
  %v296 = vld [vmem:[%s1 + $0x6a0] sm:$0xf]
  %v297 = vld [vmem:[%s1 + $0x6a4] sm:$0xff]
  %v298 = vld [vmem:[%s1 + $0x6ac] sm:$0xff]
  %v299 = vld [vmem:[%s1 + $0x6b4] sm:$0xf]
  %v300 = vld [vmem:[%s1 + $0x6b8] sm:$0xff]
  %v301 = vld [vmem:[%s1 + $0x6c0] sm:$0xff]
  %v302 = vld [vmem:[%s1 + $0x6c8] sm:$0xf]
  %v303 = vld [vmem:[%s1 + $0x6cc] sm:$0xff]
  %v304 = vld [vmem:[%s1 + $0x6d4] sm:$0xff]
  %v305 = vld [vmem:[%s1 + $0x6dc] sm:$0xf]
  %v306 = vld [vmem:[%s1 + $0x6e0] sm:$0xff]
  %v307 = vld [vmem:[%s1 + $0x6e8] sm:$0xff]
  %v308 = vld [vmem:[%s1 + $0x6f0] sm:$0xf]
  %v309 = vld [vmem:[%s1 + $0x6f4] sm:$0xff]
  %v310 = vld [vmem:[%s1 + $0x6fc] sm:$0xff]
  %v311 = vld [vmem:[%s1 + $0x704] sm:$0xf]
  %v312 = vld [vmem:[%s1 + $0x708] sm:$0xff]
  %v313 = vld [vmem:[%s1 + $0x710] sm:$0xff]
  %v314 = vld [vmem:[%s1 + $0x718] sm:$0xf]
  %v315 = vld [vmem:[%s1 + $0x71c] sm:$0xff]
  %v316 = vld [vmem:[%s1 + $0x724] sm:$0xff]
  %v317 = vld [vmem:[%s1 + $0x72c] sm:$0xf]
  %v318 = vld [vmem:[%s1 + $0x730] sm:$0xff]
  %v319 = vld [vmem:[%s1 + $0x738] sm:$0xff]
  %v320 = vld [vmem:[%s1 + $0x740] sm:$0xf]
  %v321 = vld [vmem:[%s1 + $0x744] sm:$0xff]
  %v322 = vld [vmem:[%s1 + $0x74c] sm:$0xff]
  %v323 = vld [vmem:[%s1 + $0x754] sm:$0xf]
  %v324 = vld [vmem:[%s1 + $0x758] sm:$0xff]
  %v325 = vld [vmem:[%s1 + $0x760] sm:$0xff]
  %v326 = vld [vmem:[%s1 + $0x768] sm:$0xf]
  %v327 = vld [vmem:[%s1 + $0x76c] sm:$0xff]
  %v328 = vld [vmem:[%s1 + $0x774] sm:$0xff]
  %v329 = vld [vmem:[%s1 + $0x77c] sm:$0xf]
  %v333 = vunpack.c.l.b16 %v39
  %v334 = vunpack.c.h.b16 %v39
  %v335 = vunpack.c.l.b16 %v40
  %v336 = vunpack.c.h.b16 %v40
  %v337 = vunpack.c.l.b16 %v41
  %v338 = vunpack.c.h.b16 %v41
  %v339 = vpack.c.b16 %v333, %v333
  %v340 = vpack.c.b16 %v334, %v334
  %v341 = vpack.c.b16 %v335, %v335
  %v342 = vpack.c.b16 %v336, %v336
  %v343 = vpack.c.b16 %v337, %v337
  %v344 = vpack.c.b16 %v338, %v338
  %v639 = vunpack.c.l.b16 %v42
  %v640 = vunpack.c.h.b16 %v42
  %v641 = vunpack.c.l.b16 %v43
  %v642 = vunpack.c.h.b16 %v43
  %v643 = vunpack.c.l.b16 %v44
  %v644 = vunpack.c.l.b16 %v45
  %v645 = vunpack.c.h.b16 %v45
  %v646 = vunpack.c.l.b16 %v46
  %v647 = vunpack.c.h.b16 %v46
  %v648 = vunpack.c.l.b16 %v47
  %v649 = vunpack.c.l.b16 %v48
  %v650 = vunpack.c.h.b16 %v48
  %v651 = vunpack.c.l.b16 %v49
  %v652 = vunpack.c.h.b16 %v49
  %v653 = vunpack.c.l.b16 %v50
  %v654 = vunpack.c.l.b16 %v51
  %v655 = vunpack.c.h.b16 %v51
  %v656 = vunpack.c.l.b16 %v52
  %v657 = vunpack.c.h.b16 %v52
  %v658 = vunpack.c.l.b16 %v53
  %v659 = vunpack.c.l.b16 %v54
  %v660 = vunpack.c.h.b16 %v54
  %v661 = vunpack.c.l.b16 %v55
  %v662 = vunpack.c.h.b16 %v55
  %v663 = vunpack.c.l.b16 %v56
  %v664 = vunpack.c.l.b16 %v57
  %v665 = vunpack.c.h.b16 %v57
  %v666 = vunpack.c.l.b16 %v58
  %v667 = vunpack.c.h.b16 %v58
  %v668 = vunpack.c.l.b16 %v59
  %v669 = vunpack.c.l.b16 %v60
  %v670 = vunpack.c.h.b16 %v60
  %v671 = vunpack.c.l.b16 %v61
  %v672 = vunpack.c.h.b16 %v61
  %v673 = vunpack.c.l.b16 %v62
  %v674 = vunpack.c.l.b16 %v63
  %v675 = vunpack.c.h.b16 %v63
  %v676 = vunpack.c.l.b16 %v64
  %v677 = vunpack.c.h.b16 %v64
  %v678 = vunpack.c.l.b16 %v65
  %v679 = vunpack.c.l.b16 %v66
  %v680 = vunpack.c.h.b16 %v66
  %v681 = vunpack.c.l.b16 %v67
  %v682 = vunpack.c.h.b16 %v67
  %v683 = vunpack.c.l.b16 %v68
  %v684 = vunpack.c.l.b16 %v69
  %v685 = vunpack.c.h.b16 %v69
  %v686 = vunpack.c.l.b16 %v70
  %v687 = vunpack.c.h.b16 %v70
  %v688 = vunpack.c.l.b16 %v71
  %v689 = vunpack.c.l.b16 %v72
  %v690 = vunpack.c.h.b16 %v72
  %v691 = vunpack.c.l.b16 %v73
  %v692 = vunpack.c.h.b16 %v73
  %v693 = vunpack.c.l.b16 %v74
  %v694 = vunpack.c.l.b16 %v75
  %v695 = vunpack.c.h.b16 %v75
  %v696 = vunpack.c.l.b16 %v76
  %v697 = vunpack.c.h.b16 %v76
  %v698 = vunpack.c.l.b16 %v77
  %v699 = vunpack.c.l.b16 %v78
  %v700 = vunpack.c.h.b16 %v78
  %v701 = vunpack.c.l.b16 %v79
  %v702 = vunpack.c.h.b16 %v79
  %v703 = vunpack.c.l.b16 %v80
  %v704 = vunpack.c.l.b16 %v81
  %v705 = vunpack.c.h.b16 %v81
  %v706 = vunpack.c.l.b16 %v82
  %v707 = vunpack.c.h.b16 %v82
  %v708 = vunpack.c.l.b16 %v83
  %v709 = vunpack.c.l.b16 %v84
  %v710 = vunpack.c.h.b16 %v84
  %v711 = vunpack.c.l.b16 %v85
  %v712 = vunpack.c.h.b16 %v85
  %v713 = vunpack.c.l.b16 %v86
  %v714 = vunpack.c.l.b16 %v87
  %v715 = vunpack.c.h.b16 %v87
  %v716 = vunpack.c.l.b16 %v88
  %v717 = vunpack.c.h.b16 %v88
  %v718 = vunpack.c.l.b16 %v89
  %v719 = vunpack.c.l.b16 %v90
  %v720 = vunpack.c.h.b16 %v90
  %v721 = vunpack.c.l.b16 %v91
  %v722 = vunpack.c.h.b16 %v91
  %v723 = vunpack.c.l.b16 %v92
  %v724 = vunpack.c.l.b16 %v93
  %v725 = vunpack.c.h.b16 %v93
  %v726 = vunpack.c.l.b16 %v94
  %v727 = vunpack.c.h.b16 %v94
  %v728 = vunpack.c.l.b16 %v95
  %v729 = vunpack.c.l.b16 %v96
  %v730 = vunpack.c.h.b16 %v96
  %v731 = vunpack.c.l.b16 %v97
  %v732 = vunpack.c.h.b16 %v97
  %v733 = vunpack.c.l.b16 %v98
  %v734 = vunpack.c.l.b16 %v99
  %v735 = vunpack.c.h.b16 %v99
  %v736 = vunpack.c.l.b16 %v100
  %v737 = vunpack.c.h.b16 %v100
  %v738 = vunpack.c.l.b16 %v101
  %v739 = vunpack.c.l.b16 %v102
  %v740 = vunpack.c.h.b16 %v102
  %v741 = vunpack.c.l.b16 %v103
  %v742 = vunpack.c.h.b16 %v103
  %v743 = vunpack.c.l.b16 %v104
  %v744 = vunpack.c.l.b16 %v105
  %v745 = vunpack.c.h.b16 %v105
  %v746 = vunpack.c.l.b16 %v106
  %v747 = vunpack.c.h.b16 %v106
  %v748 = vunpack.c.l.b16 %v107
  %v749 = vunpack.c.l.b16 %v108
  %v750 = vunpack.c.h.b16 %v108
  %v751 = vunpack.c.l.b16 %v109
  %v752 = vunpack.c.h.b16 %v109
  %v753 = vunpack.c.l.b16 %v110
  %v754 = vunpack.c.l.b16 %v111
  %v755 = vunpack.c.h.b16 %v111
  %v756 = vunpack.c.l.b16 %v112
  %v757 = vunpack.c.h.b16 %v112
  %v758 = vunpack.c.l.b16 %v113
  %v759 = vunpack.c.l.b16 %v114
  %v760 = vunpack.c.h.b16 %v114
  %v761 = vunpack.c.l.b16 %v115
  %v762 = vunpack.c.h.b16 %v115
  %v763 = vunpack.c.l.b16 %v116
  %v764 = vunpack.c.l.b16 %v117
  %v765 = vunpack.c.h.b16 %v117
  %v766 = vunpack.c.l.b16 %v118
  %v767 = vunpack.c.h.b16 %v118
  %v768 = vunpack.c.l.b16 %v119
  %v769 = vunpack.c.l.b16 %v120
  %v770 = vunpack.c.h.b16 %v120
  %v771 = vunpack.c.l.b16 %v121
  %v772 = vunpack.c.h.b16 %v121
  %v773 = vunpack.c.l.b16 %v122
  %v774 = vunpack.c.l.b16 %v123
  %v775 = vunpack.c.h.b16 %v123
  %v776 = vunpack.c.l.b16 %v124
  %v777 = vunpack.c.h.b16 %v124
  %v778 = vunpack.c.l.b16 %v125
  %v779 = vunpack.c.l.b16 %v126
  %v780 = vunpack.c.h.b16 %v126
  %v781 = vunpack.c.l.b16 %v127
  %v782 = vunpack.c.h.b16 %v127
  %v783 = vunpack.c.l.b16 %v128
  %v784 = vunpack.c.l.b16 %v129
  %v785 = vunpack.c.h.b16 %v129
  %v786 = vunpack.c.l.b16 %v130
  %v787 = vunpack.c.h.b16 %v130
  %v788 = vunpack.c.l.b16 %v131
  %v789 = vunpack.c.l.b16 %v132
  %v790 = vunpack.c.h.b16 %v132
  %v791 = vunpack.c.l.b16 %v133
  %v792 = vunpack.c.h.b16 %v133
  %v793 = vunpack.c.l.b16 %v134
  %v794 = vunpack.c.l.b16 %v135
  %v795 = vunpack.c.h.b16 %v135
  %v796 = vunpack.c.l.b16 %v136
  %v797 = vunpack.c.h.b16 %v136
  %v798 = vunpack.c.l.b16 %v137
  %v799 = vunpack.c.l.b16 %v138
  %v800 = vunpack.c.h.b16 %v138
  %v801 = vunpack.c.l.b16 %v139
  %v802 = vunpack.c.h.b16 %v139
  %v803 = vunpack.c.l.b16 %v140
  %v804 = vunpack.c.l.b16 %v141
  %v805 = vunpack.c.h.b16 %v141
  %v806 = vunpack.c.l.b16 %v142
  %v807 = vunpack.c.h.b16 %v142
  %v808 = vunpack.c.l.b16 %v143
  %v809 = vunpack.c.l.b16 %v144
  %v810 = vunpack.c.h.b16 %v144
  %v811 = vunpack.c.l.b16 %v145
  %v812 = vunpack.c.h.b16 %v145
  %v813 = vunpack.c.l.b16 %v146
  %v814 = vunpack.c.l.b16 %v147
  %v815 = vunpack.c.h.b16 %v147
  %v816 = vunpack.c.l.b16 %v148
  %v817 = vunpack.c.h.b16 %v148
  %v818 = vunpack.c.l.b16 %v149
  %v819 = vunpack.c.l.b16 %v150
  %v820 = vunpack.c.h.b16 %v150
  %v821 = vunpack.c.l.b16 %v151
  %v822 = vunpack.c.h.b16 %v151
  %v823 = vunpack.c.l.b16 %v152
  %v824 = vunpack.c.l.b16 %v153
  %v825 = vunpack.c.h.b16 %v153
  %v826 = vunpack.c.l.b16 %v154
  %v827 = vunpack.c.h.b16 %v154
  %v828 = vunpack.c.l.b16 %v155
  %v829 = vunpack.c.l.b16 %v156
  %v830 = vunpack.c.h.b16 %v156
  %v831 = vunpack.c.l.b16 %v157
  %v832 = vunpack.c.h.b16 %v157
  %v833 = vunpack.c.l.b16 %v158
  %v834 = vunpack.c.l.b16 %v159
  %v835 = vunpack.c.h.b16 %v159
  %v836 = vunpack.c.l.b16 %v160
  %v837 = vunpack.c.h.b16 %v160
  %v838 = vunpack.c.l.b16 %v161
  %v839 = vunpack.c.l.b16 %v162
  %v840 = vunpack.c.h.b16 %v162
  %v841 = vunpack.c.l.b16 %v163
  %v842 = vunpack.c.h.b16 %v163
  %v843 = vunpack.c.l.b16 %v164
  %v844 = vunpack.c.l.b16 %v165
  %v845 = vunpack.c.h.b16 %v165
  %v846 = vunpack.c.l.b16 %v166
  %v847 = vunpack.c.h.b16 %v166
  %v848 = vunpack.c.l.b16 %v167
  %v849 = vunpack.c.l.b16 %v168
  %v850 = vunpack.c.h.b16 %v168
  %v851 = vunpack.c.l.b16 %v169
  %v852 = vunpack.c.h.b16 %v169
  %v853 = vunpack.c.l.b16 %v170
  %v854 = vunpack.c.l.b16 %v171
  %v855 = vunpack.c.h.b16 %v171
  %v856 = vunpack.c.l.b16 %v172
  %v857 = vunpack.c.h.b16 %v172
  %v858 = vunpack.c.l.b16 %v173
  %v859 = vunpack.c.l.b16 %v174
  %v860 = vunpack.c.h.b16 %v174
  %v861 = vunpack.c.l.b16 %v175
  %v862 = vunpack.c.h.b16 %v175
  %v863 = vunpack.c.l.b16 %v176
  %v864 = vunpack.c.l.b16 %v177
  %v865 = vunpack.c.h.b16 %v177
  %v866 = vunpack.c.l.b16 %v178
  %v867 = vunpack.c.h.b16 %v178
  %v868 = vunpack.c.l.b16 %v179
  %v869 = vunpack.c.l.b16 %v180
  %v870 = vunpack.c.h.b16 %v180
  %v871 = vunpack.c.l.b16 %v181
  %v872 = vunpack.c.h.b16 %v181
  %v873 = vunpack.c.l.b16 %v182
  %v874 = vunpack.c.l.b16 %v183
  %v875 = vunpack.c.h.b16 %v183
  %v876 = vunpack.c.l.b16 %v184
  %v877 = vunpack.c.h.b16 %v184
  %v878 = vunpack.c.l.b16 %v185
  %v879 = vunpack.c.l.b16 %v186
  %v880 = vunpack.c.h.b16 %v186
  %v881 = vunpack.c.l.b16 %v187
  %v882 = vunpack.c.h.b16 %v187
  %v883 = vunpack.c.l.b16 %v188
  %v884 = vunpack.c.l.b16 %v189
  %v885 = vunpack.c.h.b16 %v189
  %v886 = vunpack.c.l.b16 %v190
  %v887 = vunpack.c.h.b16 %v190
  %v888 = vunpack.c.l.b16 %v191
  %v889 = vunpack.c.l.b16 %v192
  %v890 = vunpack.c.h.b16 %v192
  %v891 = vunpack.c.l.b16 %v193
  %v892 = vunpack.c.h.b16 %v193
  %v893 = vunpack.c.l.b16 %v194
  %v894 = vunpack.c.l.b16 %v195
  %v895 = vunpack.c.h.b16 %v195
  %v896 = vunpack.c.l.b16 %v196
  %v897 = vunpack.c.h.b16 %v196
  %v898 = vunpack.c.l.b16 %v197
  %v899 = vunpack.c.l.b16 %v198
  %v900 = vunpack.c.h.b16 %v198
  %v901 = vunpack.c.l.b16 %v199
  %v902 = vunpack.c.h.b16 %v199
  %v903 = vunpack.c.l.b16 %v200
  %v904 = vunpack.c.l.b16 %v201
  %v905 = vunpack.c.h.b16 %v201
  %v906 = vunpack.c.l.b16 %v202
  %v907 = vunpack.c.h.b16 %v202
  %v908 = vunpack.c.l.b16 %v203
  %v909 = vunpack.c.l.b16 %v204
  %v910 = vunpack.c.h.b16 %v204
  %v911 = vunpack.c.l.b16 %v205
  %v912 = vunpack.c.h.b16 %v205
  %v913 = vunpack.c.l.b16 %v206
  %v914 = vunpack.c.l.b16 %v207
  %v915 = vunpack.c.h.b16 %v207
  %v916 = vunpack.c.l.b16 %v208
  %v917 = vunpack.c.h.b16 %v208
  %v918 = vunpack.c.l.b16 %v209
  %v919 = vunpack.c.l.b16 %v210
  %v920 = vunpack.c.h.b16 %v210
  %v921 = vunpack.c.l.b16 %v211
  %v922 = vunpack.c.h.b16 %v211
  %v923 = vunpack.c.l.b16 %v212
  %v924 = vunpack.c.l.b16 %v213
  %v925 = vunpack.c.h.b16 %v213
  %v926 = vunpack.c.l.b16 %v214
  %v927 = vunpack.c.h.b16 %v214
  %v928 = vunpack.c.l.b16 %v215
  %v929 = vunpack.c.l.b16 %v216
  %v930 = vunpack.c.h.b16 %v216
  %v931 = vunpack.c.l.b16 %v217
  %v932 = vunpack.c.h.b16 %v217
  %v933 = vunpack.c.l.b16 %v218
  %v934 = vunpack.c.l.b16 %v219
  %v935 = vunpack.c.h.b16 %v219
  %v936 = vunpack.c.l.b16 %v220
  %v937 = vunpack.c.h.b16 %v220
  %v938 = vunpack.c.l.b16 %v221
  %v939 = vunpack.c.l.b16 %v222
  %v940 = vunpack.c.h.b16 %v222
  %v941 = vunpack.c.l.b16 %v223
  %v942 = vunpack.c.h.b16 %v223
  %v943 = vunpack.c.l.b16 %v224
  %v944 = vunpack.c.l.b16 %v225
  %v945 = vunpack.c.h.b16 %v225
  %v946 = vunpack.c.l.b16 %v226
  %v947 = vunpack.c.h.b16 %v226
  %v948 = vunpack.c.l.b16 %v227
  %v949 = vunpack.c.l.b16 %v228
  %v950 = vunpack.c.h.b16 %v228
  %v951 = vunpack.c.l.b16 %v229
  %v952 = vunpack.c.h.b16 %v229
  %v953 = vunpack.c.l.b16 %v230
  %v954 = vunpack.c.l.b16 %v231
  %v955 = vunpack.c.h.b16 %v231
  %v956 = vunpack.c.l.b16 %v232
  %v957 = vunpack.c.h.b16 %v232
  %v958 = vunpack.c.l.b16 %v233
  %v959 = vunpack.c.l.b16 %v234
  %v960 = vunpack.c.h.b16 %v234
  %v961 = vunpack.c.l.b16 %v235
  %v962 = vunpack.c.h.b16 %v235
  %v963 = vunpack.c.l.b16 %v236
  %v964 = vunpack.c.l.b16 %v237
  %v965 = vunpack.c.h.b16 %v237
  %v966 = vunpack.c.l.b16 %v238
  %v967 = vunpack.c.h.b16 %v238
  %v968 = vunpack.c.l.b16 %v239
  %v969 = vunpack.c.l.b16 %v240
  %v970 = vunpack.c.h.b16 %v240
  %v971 = vunpack.c.l.b16 %v241
  %v972 = vunpack.c.h.b16 %v241
  %v973 = vunpack.c.l.b16 %v242
  %v974 = vunpack.c.l.b16 %v243
  %v975 = vunpack.c.h.b16 %v243
  %v976 = vunpack.c.l.b16 %v244
  %v977 = vunpack.c.h.b16 %v244
  %v978 = vunpack.c.l.b16 %v245
  %v979 = vunpack.c.l.b16 %v246
  %v980 = vunpack.c.h.b16 %v246
  %v981 = vunpack.c.l.b16 %v247
  %v982 = vunpack.c.h.b16 %v247
  %v983 = vunpack.c.l.b16 %v248
  %v984 = vunpack.c.l.b16 %v249
  %v985 = vunpack.c.h.b16 %v249
  %v986 = vunpack.c.l.b16 %v250
  %v987 = vunpack.c.h.b16 %v250
  %v988 = vunpack.c.l.b16 %v251
  %v989 = vunpack.c.l.b16 %v252
  %v990 = vunpack.c.h.b16 %v252
  %v991 = vunpack.c.l.b16 %v253
  %v992 = vunpack.c.h.b16 %v253
  %v993 = vunpack.c.l.b16 %v254
  %v994 = vunpack.c.l.b16 %v255
  %v995 = vunpack.c.h.b16 %v255
  %v996 = vunpack.c.l.b16 %v256
  %v997 = vunpack.c.h.b16 %v256
  %v998 = vunpack.c.l.b16 %v257
  %v999 = vunpack.c.l.b16 %v258
  %v1000 = vunpack.c.h.b16 %v258
  %v1001 = vunpack.c.l.b16 %v259
  %v1002 = vunpack.c.h.b16 %v259
  %v1003 = vunpack.c.l.b16 %v260
  %v1004 = vunpack.c.l.b16 %v261
  %v1005 = vunpack.c.h.b16 %v261
  %v1006 = vunpack.c.l.b16 %v262
  %v1007 = vunpack.c.h.b16 %v262
  %v1008 = vunpack.c.l.b16 %v263
  %v1009 = vunpack.c.l.b16 %v264
  %v1010 = vunpack.c.h.b16 %v264
  %v1011 = vunpack.c.l.b16 %v265
  %v1012 = vunpack.c.h.b16 %v265
  %v1013 = vunpack.c.l.b16 %v266
  %v1014 = vunpack.c.l.b16 %v267
  %v1015 = vunpack.c.h.b16 %v267
  %v1016 = vunpack.c.l.b16 %v268
  %v1017 = vunpack.c.h.b16 %v268
  %v1018 = vunpack.c.l.b16 %v269
  %v1019 = vunpack.c.l.b16 %v270
  %v1020 = vunpack.c.h.b16 %v270
  %v1021 = vunpack.c.l.b16 %v271
  %v1022 = vunpack.c.h.b16 %v271
  %v1023 = vunpack.c.l.b16 %v272
  %v1024 = vunpack.c.l.b16 %v273
  %v1025 = vunpack.c.h.b16 %v273
  %v1026 = vunpack.c.l.b16 %v274
  %v1027 = vunpack.c.h.b16 %v274
  %v1028 = vunpack.c.l.b16 %v275
  %v1029 = vunpack.c.l.b16 %v276
  %v1030 = vunpack.c.h.b16 %v276
  %v1031 = vunpack.c.l.b16 %v277
  %v1032 = vunpack.c.h.b16 %v277
  %v1033 = vunpack.c.l.b16 %v278
  %v1034 = vunpack.c.l.b16 %v279
  %v1035 = vunpack.c.h.b16 %v279
  %v1036 = vunpack.c.l.b16 %v280
  %v1037 = vunpack.c.h.b16 %v280
  %v1038 = vunpack.c.l.b16 %v281
  %v1039 = vunpack.c.l.b16 %v282
  %v1040 = vunpack.c.h.b16 %v282
  %v1041 = vunpack.c.l.b16 %v283
  %v1042 = vunpack.c.h.b16 %v283
  %v1043 = vunpack.c.l.b16 %v284
  %v1044 = vunpack.c.l.b16 %v285
  %v1045 = vunpack.c.h.b16 %v285
  %v1046 = vunpack.c.l.b16 %v286
  %v1047 = vunpack.c.h.b16 %v286
  %v1048 = vunpack.c.l.b16 %v287
  %v1049 = vunpack.c.l.b16 %v288
  %v1050 = vunpack.c.h.b16 %v288
  %v1051 = vunpack.c.l.b16 %v289
  %v1052 = vunpack.c.h.b16 %v289
  %v1053 = vunpack.c.l.b16 %v290
  %v1054 = vunpack.c.l.b16 %v291
  %v1055 = vunpack.c.h.b16 %v291
  %v1056 = vunpack.c.l.b16 %v292
  %v1057 = vunpack.c.h.b16 %v292
  %v1058 = vunpack.c.l.b16 %v293
  %v1059 = vunpack.c.l.b16 %v294
  %v1060 = vunpack.c.h.b16 %v294
  %v1061 = vunpack.c.l.b16 %v295
  %v1062 = vunpack.c.h.b16 %v295
  %v1063 = vunpack.c.l.b16 %v296
  %v1064 = vunpack.c.l.b16 %v297
  %v1065 = vunpack.c.h.b16 %v297
  %v1066 = vunpack.c.l.b16 %v298
  %v1067 = vunpack.c.h.b16 %v298
  %v1068 = vunpack.c.l.b16 %v299
  %v1069 = vunpack.c.l.b16 %v300
  %v1070 = vunpack.c.h.b16 %v300
  %v1071 = vunpack.c.l.b16 %v301
  %v1072 = vunpack.c.h.b16 %v301
  %v1073 = vunpack.c.l.b16 %v302
  %v1074 = vunpack.c.l.b16 %v303
  %v1075 = vunpack.c.h.b16 %v303
  %v1076 = vunpack.c.l.b16 %v304
  %v1077 = vunpack.c.h.b16 %v304
  %v1078 = vunpack.c.l.b16 %v305
  %v1079 = vunpack.c.l.b16 %v306
  %v1080 = vunpack.c.h.b16 %v306
  %v1081 = vunpack.c.l.b16 %v307
  %v1082 = vunpack.c.h.b16 %v307
  %v1083 = vunpack.c.l.b16 %v308
  %v1084 = vunpack.c.l.b16 %v309
  %v1085 = vunpack.c.h.b16 %v309
  %v1086 = vunpack.c.l.b16 %v310
  %v1087 = vunpack.c.h.b16 %v310
  %v1088 = vunpack.c.l.b16 %v311
  %v1089 = vunpack.c.l.b16 %v312
  %v1090 = vunpack.c.h.b16 %v312
  %v1091 = vunpack.c.l.b16 %v313
  %v1092 = vunpack.c.h.b16 %v313
  %v1093 = vunpack.c.l.b16 %v314
  %v1094 = vunpack.c.l.b16 %v315
  %v1095 = vunpack.c.h.b16 %v315
  %v1096 = vunpack.c.l.b16 %v316
  %v1097 = vunpack.c.h.b16 %v316
  %v1098 = vunpack.c.l.b16 %v317
  %v1099 = vunpack.c.l.b16 %v318
  %v1100 = vunpack.c.h.b16 %v318
  %v1101 = vunpack.c.l.b16 %v319
  %v1102 = vunpack.c.h.b16 %v319
  %v1103 = vunpack.c.l.b16 %v320
  %v1104 = vunpack.c.l.b16 %v321
  %v1105 = vunpack.c.h.b16 %v321
  %v1106 = vunpack.c.l.b16 %v322
  %v1107 = vunpack.c.h.b16 %v322
  %v1108 = vunpack.c.l.b16 %v323
  %v1109 = vunpack.c.l.b16 %v324
  %v1110 = vunpack.c.h.b16 %v324
  %v1111 = vunpack.c.l.b16 %v325
  %v1112 = vunpack.c.h.b16 %v325
  %v1113 = vunpack.c.l.b16 %v326
  %v1114 = vunpack.c.l.b16 %v327
  %v1115 = vunpack.c.h.b16 %v327
  %v1116 = vunpack.c.l.b16 %v328
  %v1117 = vunpack.c.h.b16 %v328
  %v1118 = vunpack.c.l.b16 %v329
  %v1119 = vpack.c.b16 %v644, %v639
  %v1120 = vpack.c.b16 %v645, %v640
  %v1121 = vpack.c.b16 %v646, %v641
  %v1122 = vpack.c.b16 %v647, %v642
  %v1123 = vpack.c.b16 %v648, %v643
  %v1124 = vpack.c.b16 %v654, %v649
  %v1125 = vpack.c.b16 %v655, %v650
  %v1126 = vpack.c.b16 %v656, %v651
  %v1127 = vpack.c.b16 %v657, %v652
  %v1128 = vpack.c.b16 %v658, %v653
  %v1129 = vpack.c.b16 %v664, %v659
  %v1130 = vpack.c.b16 %v665, %v660
  %v1131 = vpack.c.b16 %v666, %v661
  %v1132 = vpack.c.b16 %v667, %v662
  %v1133 = vpack.c.b16 %v668, %v663
  %v1134 = vpack.c.b16 %v674, %v669
  %v1135 = vpack.c.b16 %v675, %v670
  %v1136 = vpack.c.b16 %v676, %v671
  %v1137 = vpack.c.b16 %v677, %v672
  %v1138 = vpack.c.b16 %v678, %v673
  %v1139 = vpack.c.b16 %v684, %v679
  %v1140 = vpack.c.b16 %v685, %v680
  %v1141 = vpack.c.b16 %v686, %v681
  %v1142 = vpack.c.b16 %v687, %v682
  %v1143 = vpack.c.b16 %v688, %v683
  %v1144 = vpack.c.b16 %v694, %v689
  %v1145 = vpack.c.b16 %v695, %v690
  %v1146 = vpack.c.b16 %v696, %v691
  %v1147 = vpack.c.b16 %v697, %v692
  %v1148 = vpack.c.b16 %v698, %v693
  %v1149 = vpack.c.b16 %v704, %v699
  %v1150 = vpack.c.b16 %v705, %v700
  %v1151 = vpack.c.b16 %v706, %v701
  %v1152 = vpack.c.b16 %v707, %v702
  %v1153 = vpack.c.b16 %v708, %v703
  %v1154 = vpack.c.b16 %v714, %v709
  %v1155 = vpack.c.b16 %v715, %v710
  %v1156 = vpack.c.b16 %v716, %v711
  %v1157 = vpack.c.b16 %v717, %v712
  %v1158 = vpack.c.b16 %v718, %v713
  %v1159 = vpack.c.b16 %v724, %v719
  %v1160 = vpack.c.b16 %v725, %v720
  %v1161 = vpack.c.b16 %v726, %v721
  %v1162 = vpack.c.b16 %v727, %v722
  %v1163 = vpack.c.b16 %v728, %v723
  %v1164 = vpack.c.b16 %v734, %v729
  %v1165 = vpack.c.b16 %v735, %v730
  %v1166 = vpack.c.b16 %v736, %v731
  %v1167 = vpack.c.b16 %v737, %v732
  %v1168 = vpack.c.b16 %v738, %v733
  %v1169 = vpack.c.b16 %v744, %v739
  %v1170 = vpack.c.b16 %v745, %v740
  %v1171 = vpack.c.b16 %v746, %v741
  %v1172 = vpack.c.b16 %v747, %v742
  %v1173 = vpack.c.b16 %v748, %v743
  %v1174 = vpack.c.b16 %v754, %v749
  %v1175 = vpack.c.b16 %v755, %v750
  %v1176 = vpack.c.b16 %v756, %v751
  %v1177 = vpack.c.b16 %v757, %v752
  %v1178 = vpack.c.b16 %v758, %v753
  %v1179 = vpack.c.b16 %v764, %v759
  %v1180 = vpack.c.b16 %v765, %v760
  %v1181 = vpack.c.b16 %v766, %v761
  %v1182 = vpack.c.b16 %v767, %v762
  %v1183 = vpack.c.b16 %v768, %v763
  %v1184 = vpack.c.b16 %v774, %v769
  %v1185 = vpack.c.b16 %v775, %v770
  %v1186 = vpack.c.b16 %v776, %v771
  %v1187 = vpack.c.b16 %v777, %v772
  %v1188 = vpack.c.b16 %v778, %v773
  %v1189 = vpack.c.b16 %v784, %v779
  %v1190 = vpack.c.b16 %v785, %v780
  %v1191 = vpack.c.b16 %v786, %v781
  %v1192 = vpack.c.b16 %v787, %v782
  %v1193 = vpack.c.b16 %v788, %v783
  %v1194 = vpack.c.b16 %v794, %v789
  %v1195 = vpack.c.b16 %v795, %v790
  %v1196 = vpack.c.b16 %v796, %v791
  %v1197 = vpack.c.b16 %v797, %v792
  %v1198 = vpack.c.b16 %v798, %v793
  %v1199 = vpack.c.b16 %v804, %v799
  %v1200 = vpack.c.b16 %v805, %v800
  %v1201 = vpack.c.b16 %v806, %v801
  %v1202 = vpack.c.b16 %v807, %v802
  %v1203 = vpack.c.b16 %v808, %v803
  %v1204 = vpack.c.b16 %v814, %v809
  %v1205 = vpack.c.b16 %v815, %v810
  %v1206 = vpack.c.b16 %v816, %v811
  %v1207 = vpack.c.b16 %v817, %v812
  %v1208 = vpack.c.b16 %v818, %v813
  %v1209 = vpack.c.b16 %v824, %v819
  %v1210 = vpack.c.b16 %v825, %v820
  %v1211 = vpack.c.b16 %v826, %v821
  %v1212 = vpack.c.b16 %v827, %v822
  %v1213 = vpack.c.b16 %v828, %v823
  %v1214 = vpack.c.b16 %v834, %v829
  %v1215 = vpack.c.b16 %v835, %v830
  %v1216 = vpack.c.b16 %v836, %v831
  %v1217 = vpack.c.b16 %v837, %v832
  %v1218 = vpack.c.b16 %v838, %v833
  %v1219 = vpack.c.b16 %v844, %v839
  %v1220 = vpack.c.b16 %v845, %v840
  %v1221 = vpack.c.b16 %v846, %v841
  %v1222 = vpack.c.b16 %v847, %v842
  %v1223 = vpack.c.b16 %v848, %v843
  %v1224 = vpack.c.b16 %v854, %v849
  %v1225 = vpack.c.b16 %v855, %v850
  %v1226 = vpack.c.b16 %v856, %v851
  %v1227 = vpack.c.b16 %v857, %v852
  %v1228 = vpack.c.b16 %v858, %v853
  %v1229 = vpack.c.b16 %v864, %v859
  %v1230 = vpack.c.b16 %v865, %v860
  %v1231 = vpack.c.b16 %v866, %v861
  %v1232 = vpack.c.b16 %v867, %v862
  %v1233 = vpack.c.b16 %v868, %v863
  %v1234 = vpack.c.b16 %v874, %v869
  %v1235 = vpack.c.b16 %v875, %v870
  %v1236 = vpack.c.b16 %v876, %v871
  %v1237 = vpack.c.b16 %v877, %v872
  %v1238 = vpack.c.b16 %v878, %v873
  %v1239 = vpack.c.b16 %v884, %v879
  %v1240 = vpack.c.b16 %v885, %v880
  %v1241 = vpack.c.b16 %v886, %v881
  %v1242 = vpack.c.b16 %v887, %v882
  %v1243 = vpack.c.b16 %v888, %v883
  %v1244 = vpack.c.b16 %v894, %v889
  %v1245 = vpack.c.b16 %v895, %v890
  %v1246 = vpack.c.b16 %v896, %v891
  %v1247 = vpack.c.b16 %v897, %v892
  %v1248 = vpack.c.b16 %v898, %v893
  %v1249 = vpack.c.b16 %v904, %v899
  %v1250 = vpack.c.b16 %v905, %v900
  %v1251 = vpack.c.b16 %v906, %v901
  %v1252 = vpack.c.b16 %v907, %v902
  %v1253 = vpack.c.b16 %v908, %v903
  %v1254 = vpack.c.b16 %v914, %v909
  %v1255 = vpack.c.b16 %v915, %v910
  %v1256 = vpack.c.b16 %v916, %v911
  %v1257 = vpack.c.b16 %v917, %v912
  %v1258 = vpack.c.b16 %v918, %v913
  %v1259 = vpack.c.b16 %v924, %v919
  %v1260 = vpack.c.b16 %v925, %v920
  %v1261 = vpack.c.b16 %v926, %v921
  %v1262 = vpack.c.b16 %v927, %v922
  %v1263 = vpack.c.b16 %v928, %v923
  %v1264 = vpack.c.b16 %v934, %v929
  %v1265 = vpack.c.b16 %v935, %v930
  %v1266 = vpack.c.b16 %v936, %v931
  %v1267 = vpack.c.b16 %v937, %v932
  %v1268 = vpack.c.b16 %v938, %v933
  %v1269 = vpack.c.b16 %v944, %v939
  %v1270 = vpack.c.b16 %v945, %v940
  %v1271 = vpack.c.b16 %v946, %v941
  %v1272 = vpack.c.b16 %v947, %v942
  %v1273 = vpack.c.b16 %v948, %v943
  %v1274 = vpack.c.b16 %v954, %v949
  %v1275 = vpack.c.b16 %v955, %v950
  %v1276 = vpack.c.b16 %v956, %v951
  %v1277 = vpack.c.b16 %v957, %v952
  %v1278 = vpack.c.b16 %v958, %v953
  %v1279 = vpack.c.b16 %v964, %v959
  %v1280 = vpack.c.b16 %v965, %v960
  %v1281 = vpack.c.b16 %v966, %v961
  %v1282 = vpack.c.b16 %v967, %v962
  %v1283 = vpack.c.b16 %v968, %v963
  %v1284 = vpack.c.b16 %v974, %v969
  %v1285 = vpack.c.b16 %v975, %v970
  %v1286 = vpack.c.b16 %v976, %v971
  %v1287 = vpack.c.b16 %v977, %v972
  %v1288 = vpack.c.b16 %v978, %v973
  %v1289 = vpack.c.b16 %v984, %v979
  %v1290 = vpack.c.b16 %v985, %v980
  %v1291 = vpack.c.b16 %v986, %v981
  %v1292 = vpack.c.b16 %v987, %v982
  %v1293 = vpack.c.b16 %v988, %v983
  %v1294 = vpack.c.b16 %v994, %v989
  %v1295 = vpack.c.b16 %v995, %v990
  %v1296 = vpack.c.b16 %v996, %v991
  %v1297 = vpack.c.b16 %v997, %v992
  %v1298 = vpack.c.b16 %v998, %v993
  %v1299 = vpack.c.b16 %v1004, %v999
  %v1300 = vpack.c.b16 %v1005, %v1000
  %v1301 = vpack.c.b16 %v1006, %v1001
  %v1302 = vpack.c.b16 %v1007, %v1002
  %v1303 = vpack.c.b16 %v1008, %v1003
  %v1304 = vpack.c.b16 %v1014, %v1009
  %v1305 = vpack.c.b16 %v1015, %v1010
  %v1306 = vpack.c.b16 %v1016, %v1011
  %v1307 = vpack.c.b16 %v1017, %v1012
  %v1308 = vpack.c.b16 %v1018, %v1013
  %v1309 = vpack.c.b16 %v1024, %v1019
  %v1310 = vpack.c.b16 %v1025, %v1020
  %v1311 = vpack.c.b16 %v1026, %v1021
  %v1312 = vpack.c.b16 %v1027, %v1022
  %v1313 = vpack.c.b16 %v1028, %v1023
  %v1314 = vpack.c.b16 %v1034, %v1029
  %v1315 = vpack.c.b16 %v1035, %v1030
  %v1316 = vpack.c.b16 %v1036, %v1031
  %v1317 = vpack.c.b16 %v1037, %v1032
  %v1318 = vpack.c.b16 %v1038, %v1033
  %v1319 = vpack.c.b16 %v1044, %v1039
  %v1320 = vpack.c.b16 %v1045, %v1040
  %v1321 = vpack.c.b16 %v1046, %v1041
  %v1322 = vpack.c.b16 %v1047, %v1042
  %v1323 = vpack.c.b16 %v1048, %v1043
  %v1324 = vpack.c.b16 %v1054, %v1049
  %v1325 = vpack.c.b16 %v1055, %v1050
  %v1326 = vpack.c.b16 %v1056, %v1051
  %v1327 = vpack.c.b16 %v1057, %v1052
  %v1328 = vpack.c.b16 %v1058, %v1053
  %v1329 = vpack.c.b16 %v1064, %v1059
  %v1330 = vpack.c.b16 %v1065, %v1060
  %v1331 = vpack.c.b16 %v1066, %v1061
  %v1332 = vpack.c.b16 %v1067, %v1062
  %v1333 = vpack.c.b16 %v1068, %v1063
  %v1334 = vpack.c.b16 %v1074, %v1069
  %v1335 = vpack.c.b16 %v1075, %v1070
  %v1336 = vpack.c.b16 %v1076, %v1071
  %v1337 = vpack.c.b16 %v1077, %v1072
  %v1338 = vpack.c.b16 %v1078, %v1073
  %v1339 = vpack.c.b16 %v1084, %v1079
  %v1340 = vpack.c.b16 %v1085, %v1080
  %v1341 = vpack.c.b16 %v1086, %v1081
  %v1342 = vpack.c.b16 %v1087, %v1082
  %v1343 = vpack.c.b16 %v1088, %v1083
  %v1344 = vpack.c.b16 %v1094, %v1089
  %v1345 = vpack.c.b16 %v1095, %v1090
  %v1346 = vpack.c.b16 %v1096, %v1091
  %v1347 = vpack.c.b16 %v1097, %v1092
  %v1348 = vpack.c.b16 %v1098, %v1093
  %v1349 = vpack.c.b16 %v1104, %v1099
  %v1350 = vpack.c.b16 %v1105, %v1100
  %v1351 = vpack.c.b16 %v1106, %v1101
  %v1352 = vpack.c.b16 %v1107, %v1102
  %v1353 = vpack.c.b16 %v1108, %v1103
  %v1354 = vpack.c.b16 %v1114, %v1109
  %v1355 = vpack.c.b16 %v1115, %v1110
  %v1356 = vpack.c.b16 %v1116, %v1111
  %v1357 = vpack.c.b16 %v1117, %v1112
  %v1358 = vpack.c.b16 %v1118, %v1113
  %1599 = vmatpush.bf16.msra.mxu0 %v1154
  %1600 = vmatpush.bf16.msra.mxu0 %v1149
  %1601 = vmatpush.bf16.msra.mxu0 %v1144
  %1602 = vmatpush.bf16.msra.mxu0 %v1139
  %1603 = vmatpush.bf16.msra.mxu0 %v1134
  %1604 = vmatpush.bf16.msra.mxu0 %v1129
  %1605 = vmatpush.bf16.msra.mxu0 %v1124
  %1606 = vmatpush.bf16.msra.mxu0 %v1119
  %1607 = vmatmul.bf16.gmra.mxu0 %v339
  %v1608 = vpop.f32.mrf.mxu0
  %v1609 = vadd.f32 0.0, %v1608
  %v1610 = vpop.f32.mrf.mxu0
  %1611 = vdwg.mxu0
  %1612 = vmatpush.bf16.msra.mxu0 %v1194
  %1613 = vmatpush.bf16.msra.mxu0 %v1189
  %1614 = vmatpush.bf16.msra.mxu0 %v1184
  %1615 = vmatpush.bf16.msra.mxu0 %v1179
  %1616 = vmatpush.bf16.msra.mxu0 %v1174
  %1617 = vmatpush.bf16.msra.mxu0 %v1169
  %1618 = vmatpush.bf16.msra.mxu0 %v1164
  %1619 = vmatpush.bf16.msra.mxu0 %v1159
  %1620 = vmatmul.bf16.gmra.mxu0 %v340
  %v1621 = vpop.f32.mrf.mxu0
  %v1622 = vadd.f32 %v1609, %v1621
  %v1623 = vpop.f32.mrf.mxu0
  %1624 = vdwg.mxu0
  %1625 = vmatpush.bf16.msra.mxu0 %v1234
  %1626 = vmatpush.bf16.msra.mxu0 %v1229
  %1627 = vmatpush.bf16.msra.mxu0 %v1224
  %1628 = vmatpush.bf16.msra.mxu0 %v1219
  %1629 = vmatpush.bf16.msra.mxu0 %v1214
  %1630 = vmatpush.bf16.msra.mxu0 %v1209
  %1631 = vmatpush.bf16.msra.mxu0 %v1204
  %1632 = vmatpush.bf16.msra.mxu0 %v1199
  %1633 = vmatmul.bf16.gmra.mxu0 %v341
  %v1634 = vpop.f32.mrf.mxu0
  %v1635 = vadd.f32 %v1622, %v1634
  %v1636 = vpop.f32.mrf.mxu0
  %1637 = vdwg.mxu0
  %1638 = vmatpush.bf16.msra.mxu0 %v1274
  %1639 = vmatpush.bf16.msra.mxu0 %v1269
  %1640 = vmatpush.bf16.msra.mxu0 %v1264
  %1641 = vmatpush.bf16.msra.mxu0 %v1259
  %1642 = vmatpush.bf16.msra.mxu0 %v1254
  %1643 = vmatpush.bf16.msra.mxu0 %v1249
  %1644 = vmatpush.bf16.msra.mxu0 %v1244
  %1645 = vmatpush.bf16.msra.mxu0 %v1239
  %1646 = vmatmul.bf16.gmra.mxu0 %v342
  %v1647 = vpop.f32.mrf.mxu0
  %v1648 = vadd.f32 %v1635, %v1647
  %v1649 = vpop.f32.mrf.mxu0
  %1650 = vdwg.mxu0
  %1651 = vmatpush.bf16.msra.mxu0 %v1314
  %1652 = vmatpush.bf16.msra.mxu0 %v1309
  %1653 = vmatpush.bf16.msra.mxu0 %v1304
  %1654 = vmatpush.bf16.msra.mxu0 %v1299
  %1655 = vmatpush.bf16.msra.mxu0 %v1294
  %1656 = vmatpush.bf16.msra.mxu0 %v1289
  %1657 = vmatpush.bf16.msra.mxu0 %v1284
  %1658 = vmatpush.bf16.msra.mxu0 %v1279
  %1659 = vmatmul.bf16.gmra.mxu0 %v343
  %v1660 = vpop.f32.mrf.mxu0
  %v1661 = vadd.f32 %v1648, %v1660
  %v1662 = vpop.f32.mrf.mxu0
  %1663 = vdwg.mxu0
  %1664 = vmatpush.bf16.msra.mxu0 %v1354
  %1665 = vmatpush.bf16.msra.mxu0 %v1349
  %1666 = vmatpush.bf16.msra.mxu0 %v1344
  %1667 = vmatpush.bf16.msra.mxu0 %v1339
  %1668 = vmatpush.bf16.msra.mxu0 %v1334
  %1669 = vmatpush.bf16.msra.mxu0 %v1329
  %1670 = vmatpush.bf16.msra.mxu0 %v1324
  %1671 = vmatpush.bf16.msra.mxu0 %v1319
  %1672 = vmatmul.bf16.gmra.mxu0 %v344
  %v1673 = vpop.f32.mrf.mxu0
  %v1674 = vadd.f32 %v1661, %v1673
  %v1675 = vpop.f32.mrf.mxu0
  %1676 = vdwg.mxu0
  %1677 = vmatpush.bf16.msra.mxu0 %v1155
  %1678 = vmatpush.bf16.msra.mxu0 %v1150
  %1679 = vmatpush.bf16.msra.mxu0 %v1145
  %1680 = vmatpush.bf16.msra.mxu0 %v1140
  %1681 = vmatpush.bf16.msra.mxu0 %v1135
  %1682 = vmatpush.bf16.msra.mxu0 %v1130
  %1683 = vmatpush.bf16.msra.mxu0 %v1125
  %1684 = vmatpush.bf16.msra.mxu0 %v1120
  %1685 = vmatmul.bf16.gmra.mxu0 %v339
  %v1686 = vpop.f32.mrf.mxu0
  %v1687 = vadd.f32 0.0, %v1686
  %v1688 = vpop.f32.mrf.mxu0
  %1689 = vdwg.mxu0
  %1690 = vmatpush.bf16.msra.mxu0 %v1195
  %1691 = vmatpush.bf16.msra.mxu0 %v1190
  %1692 = vmatpush.bf16.msra.mxu0 %v1185
  %1693 = vmatpush.bf16.msra.mxu0 %v1180
  %1694 = vmatpush.bf16.msra.mxu0 %v1175
  %1695 = vmatpush.bf16.msra.mxu0 %v1170
  %1696 = vmatpush.bf16.msra.mxu0 %v1165
  %1697 = vmatpush.bf16.msra.mxu0 %v1160
  %1698 = vmatmul.bf16.gmra.mxu0 %v340
  %v1699 = vpop.f32.mrf.mxu0
  %v1700 = vadd.f32 %v1687, %v1699
  %v1701 = vpop.f32.mrf.mxu0
  %1702 = vdwg.mxu0
  %1703 = vmatpush.bf16.msra.mxu0 %v1235
  %1704 = vmatpush.bf16.msra.mxu0 %v1230
  %1705 = vmatpush.bf16.msra.mxu0 %v1225
  %1706 = vmatpush.bf16.msra.mxu0 %v1220
  %1707 = vmatpush.bf16.msra.mxu0 %v1215
  %1708 = vmatpush.bf16.msra.mxu0 %v1210
  %1709 = vmatpush.bf16.msra.mxu0 %v1205
  %1710 = vmatpush.bf16.msra.mxu0 %v1200
  %1711 = vmatmul.bf16.gmra.mxu0 %v341
  %v1712 = vpop.f32.mrf.mxu0
  %v1713 = vadd.f32 %v1700, %v1712
  %v1714 = vpop.f32.mrf.mxu0
  %1715 = vdwg.mxu0
  %1716 = vmatpush.bf16.msra.mxu0 %v1275
  %1717 = vmatpush.bf16.msra.mxu0 %v1270
  %1718 = vmatpush.bf16.msra.mxu0 %v1265
  %1719 = vmatpush.bf16.msra.mxu0 %v1260
  %1720 = vmatpush.bf16.msra.mxu0 %v1255
  %1721 = vmatpush.bf16.msra.mxu0 %v1250
  %1722 = vmatpush.bf16.msra.mxu0 %v1245
  %1723 = vmatpush.bf16.msra.mxu0 %v1240
  %1724 = vmatmul.bf16.gmra.mxu0 %v342
  %v1725 = vpop.f32.mrf.mxu0
  %v1726 = vadd.f32 %v1713, %v1725
  %v1727 = vpop.f32.mrf.mxu0
  %1728 = vdwg.mxu0
  %1729 = vmatpush.bf16.msra.mxu0 %v1315
  %1730 = vmatpush.bf16.msra.mxu0 %v1310
  %1731 = vmatpush.bf16.msra.mxu0 %v1305
  %1732 = vmatpush.bf16.msra.mxu0 %v1300
  %1733 = vmatpush.bf16.msra.mxu0 %v1295
  %1734 = vmatpush.bf16.msra.mxu0 %v1290
  %1735 = vmatpush.bf16.msra.mxu0 %v1285
  %1736 = vmatpush.bf16.msra.mxu0 %v1280
  %1737 = vmatmul.bf16.gmra.mxu0 %v343
  %v1738 = vpop.f32.mrf.mxu0
  %v1739 = vadd.f32 %v1726, %v1738
  %v1740 = vpop.f32.mrf.mxu0
  %1741 = vdwg.mxu0
  %1742 = vmatpush.bf16.msra.mxu0 %v1355
  %1743 = vmatpush.bf16.msra.mxu0 %v1350
  %1744 = vmatpush.bf16.msra.mxu0 %v1345
  %1745 = vmatpush.bf16.msra.mxu0 %v1340
  %1746 = vmatpush.bf16.msra.mxu0 %v1335
  %1747 = vmatpush.bf16.msra.mxu0 %v1330
  %1748 = vmatpush.bf16.msra.mxu0 %v1325
  %1749 = vmatpush.bf16.msra.mxu0 %v1320
  %1750 = vmatmul.bf16.gmra.mxu0 %v344
  %v1751 = vpop.f32.mrf.mxu0
  %v1752 = vadd.f32 %v1739, %v1751
  %v1753 = vpop.f32.mrf.mxu0
  %1754 = vdwg.mxu0
  %1755 = vmatpush.bf16.msra.mxu0 %v1156
  %1756 = vmatpush.bf16.msra.mxu0 %v1151
  %1757 = vmatpush.bf16.msra.mxu0 %v1146
  %1758 = vmatpush.bf16.msra.mxu0 %v1141
  %1759 = vmatpush.bf16.msra.mxu0 %v1136
  %1760 = vmatpush.bf16.msra.mxu0 %v1131
  %1761 = vmatpush.bf16.msra.mxu0 %v1126
  %1762 = vmatpush.bf16.msra.mxu0 %v1121
  %1763 = vmatmul.bf16.gmra.mxu0 %v339
  %v1764 = vpop.f32.mrf.mxu0
  %v1765 = vadd.f32 0.0, %v1764
  %v1766 = vpop.f32.mrf.mxu0
  %1767 = vdwg.mxu0
  %1768 = vmatpush.bf16.msra.mxu0 %v1196
  %1769 = vmatpush.bf16.msra.mxu0 %v1191
  %1770 = vmatpush.bf16.msra.mxu0 %v1186
  %1771 = vmatpush.bf16.msra.mxu0 %v1181
  %1772 = vmatpush.bf16.msra.mxu0 %v1176
  %1773 = vmatpush.bf16.msra.mxu0 %v1171
  %1774 = vmatpush.bf16.msra.mxu0 %v1166
  %1775 = vmatpush.bf16.msra.mxu0 %v1161
  %1776 = vmatmul.bf16.gmra.mxu0 %v340
  %v1777 = vpop.f32.mrf.mxu0
  %v1778 = vadd.f32 %v1765, %v1777
  %v1779 = vpop.f32.mrf.mxu0
  %1780 = vdwg.mxu0
  %1781 = vmatpush.bf16.msra.mxu0 %v1236
  %1782 = vmatpush.bf16.msra.mxu0 %v1231
  %1783 = vmatpush.bf16.msra.mxu0 %v1226
  %1784 = vmatpush.bf16.msra.mxu0 %v1221
  %1785 = vmatpush.bf16.msra.mxu0 %v1216
  %1786 = vmatpush.bf16.msra.mxu0 %v1211
  %1787 = vmatpush.bf16.msra.mxu0 %v1206
  %1788 = vmatpush.bf16.msra.mxu0 %v1201
  %1789 = vmatmul.bf16.gmra.mxu0 %v341
  %v1790 = vpop.f32.mrf.mxu0
  %v1791 = vadd.f32 %v1778, %v1790
  %v1792 = vpop.f32.mrf.mxu0
  %1793 = vdwg.mxu0
  %1794 = vmatpush.bf16.msra.mxu0 %v1276
  %1795 = vmatpush.bf16.msra.mxu0 %v1271
  %1796 = vmatpush.bf16.msra.mxu0 %v1266
  %1797 = vmatpush.bf16.msra.mxu0 %v1261
  %1798 = vmatpush.bf16.msra.mxu0 %v1256
  %1799 = vmatpush.bf16.msra.mxu0 %v1251
  %1800 = vmatpush.bf16.msra.mxu0 %v1246
  %1801 = vmatpush.bf16.msra.mxu0 %v1241
  %1802 = vmatmul.bf16.gmra.mxu0 %v342
  %v1803 = vpop.f32.mrf.mxu0
  %v1804 = vadd.f32 %v1791, %v1803
  %v1805 = vpop.f32.mrf.mxu0
  %1806 = vdwg.mxu0
  %1807 = vmatpush.bf16.msra.mxu0 %v1316
  %1808 = vmatpush.bf16.msra.mxu0 %v1311
  %1809 = vmatpush.bf16.msra.mxu0 %v1306
  %1810 = vmatpush.bf16.msra.mxu0 %v1301
  %1811 = vmatpush.bf16.msra.mxu0 %v1296
  %1812 = vmatpush.bf16.msra.mxu0 %v1291
  %1813 = vmatpush.bf16.msra.mxu0 %v1286
  %1814 = vmatpush.bf16.msra.mxu0 %v1281
  %1815 = vmatmul.bf16.gmra.mxu0 %v343
  %v1816 = vpop.f32.mrf.mxu0
  %v1817 = vadd.f32 %v1804, %v1816
  %v1818 = vpop.f32.mrf.mxu0
  %1819 = vdwg.mxu0
  %1820 = vmatpush.bf16.msra.mxu0 %v1356
  %1821 = vmatpush.bf16.msra.mxu0 %v1351
  %1822 = vmatpush.bf16.msra.mxu0 %v1346
  %1823 = vmatpush.bf16.msra.mxu0 %v1341
  %1824 = vmatpush.bf16.msra.mxu0 %v1336
  %1825 = vmatpush.bf16.msra.mxu0 %v1331
  %1826 = vmatpush.bf16.msra.mxu0 %v1326
  %1827 = vmatpush.bf16.msra.mxu0 %v1321
  %1828 = vmatmul.bf16.gmra.mxu0 %v344
  %v1829 = vpop.f32.mrf.mxu0
  %v1830 = vadd.f32 %v1817, %v1829
  %v1831 = vpop.f32.mrf.mxu0
  %1832 = vdwg.mxu0
  %1833 = vmatpush.bf16.msra.mxu0 %v1157
  %1834 = vmatpush.bf16.msra.mxu0 %v1152
  %1835 = vmatpush.bf16.msra.mxu0 %v1147
  %1836 = vmatpush.bf16.msra.mxu0 %v1142
  %1837 = vmatpush.bf16.msra.mxu0 %v1137
  %1838 = vmatpush.bf16.msra.mxu0 %v1132
  %1839 = vmatpush.bf16.msra.mxu0 %v1127
  %1840 = vmatpush.bf16.msra.mxu0 %v1122
  %1841 = vmatmul.bf16.gmra.mxu0 %v339
  %v1842 = vpop.f32.mrf.mxu0
  %v1843 = vadd.f32 0.0, %v1842
  %v1844 = vpop.f32.mrf.mxu0
  %1845 = vdwg.mxu0
  %1846 = vmatpush.bf16.msra.mxu0 %v1197
  %1847 = vmatpush.bf16.msra.mxu0 %v1192
  %1848 = vmatpush.bf16.msra.mxu0 %v1187
  %1849 = vmatpush.bf16.msra.mxu0 %v1182
  %1850 = vmatpush.bf16.msra.mxu0 %v1177
  %1851 = vmatpush.bf16.msra.mxu0 %v1172
  %1852 = vmatpush.bf16.msra.mxu0 %v1167
  %1853 = vmatpush.bf16.msra.mxu0 %v1162
  %1854 = vmatmul.bf16.gmra.mxu0 %v340
  %v1855 = vpop.f32.mrf.mxu0
  %v1856 = vadd.f32 %v1843, %v1855
  %v1857 = vpop.f32.mrf.mxu0
  %1858 = vdwg.mxu0
  %1859 = vmatpush.bf16.msra.mxu0 %v1237
  %1860 = vmatpush.bf16.msra.mxu0 %v1232
  %1861 = vmatpush.bf16.msra.mxu0 %v1227
  %1862 = vmatpush.bf16.msra.mxu0 %v1222
  %1863 = vmatpush.bf16.msra.mxu0 %v1217
  %1864 = vmatpush.bf16.msra.mxu0 %v1212
  %1865 = vmatpush.bf16.msra.mxu0 %v1207
  %1866 = vmatpush.bf16.msra.mxu0 %v1202
  %1867 = vmatmul.bf16.gmra.mxu0 %v341
  %v1868 = vpop.f32.mrf.mxu0
  %v1869 = vadd.f32 %v1856, %v1868
  %v1870 = vpop.f32.mrf.mxu0
  %1871 = vdwg.mxu0
  %1872 = vmatpush.bf16.msra.mxu0 %v1277
  %1873 = vmatpush.bf16.msra.mxu0 %v1272
  %1874 = vmatpush.bf16.msra.mxu0 %v1267
  %1875 = vmatpush.bf16.msra.mxu0 %v1262
  %1876 = vmatpush.bf16.msra.mxu0 %v1257
  %1877 = vmatpush.bf16.msra.mxu0 %v1252
  %1878 = vmatpush.bf16.msra.mxu0 %v1247
  %1879 = vmatpush.bf16.msra.mxu0 %v1242
  %1880 = vmatmul.bf16.gmra.mxu0 %v342
  %v1881 = vpop.f32.mrf.mxu0
  %v1882 = vadd.f32 %v1869, %v1881
  %v1883 = vpop.f32.mrf.mxu0
  %1884 = vdwg.mxu0
  %1885 = vmatpush.bf16.msra.mxu0 %v1317
  %1886 = vmatpush.bf16.msra.mxu0 %v1312
  %1887 = vmatpush.bf16.msra.mxu0 %v1307
  %1888 = vmatpush.bf16.msra.mxu0 %v1302
  %1889 = vmatpush.bf16.msra.mxu0 %v1297
  %1890 = vmatpush.bf16.msra.mxu0 %v1292
  %1891 = vmatpush.bf16.msra.mxu0 %v1287
  %1892 = vmatpush.bf16.msra.mxu0 %v1282
  %1893 = vmatmul.bf16.gmra.mxu0 %v343
  %v1894 = vpop.f32.mrf.mxu0
  %v1895 = vadd.f32 %v1882, %v1894
  %v1896 = vpop.f32.mrf.mxu0
  %1897 = vdwg.mxu0
  %1898 = vmatpush.bf16.msra.mxu0 %v1357
  %1899 = vmatpush.bf16.msra.mxu0 %v1352
  %1900 = vmatpush.bf16.msra.mxu0 %v1347
  %1901 = vmatpush.bf16.msra.mxu0 %v1342
  %1902 = vmatpush.bf16.msra.mxu0 %v1337
  %1903 = vmatpush.bf16.msra.mxu0 %v1332
  %1904 = vmatpush.bf16.msra.mxu0 %v1327
  %1905 = vmatpush.bf16.msra.mxu0 %v1322
  %1906 = vmatmul.bf16.gmra.mxu0 %v344
  %v1907 = vpop.f32.mrf.mxu0
  %v1908 = vadd.f32 %v1895, %v1907
  %v1909 = vpop.f32.mrf.mxu0
  %1910 = vdwg.mxu0
  %1911 = vmatpush.bf16.msra.mxu0 %v1158
  %1912 = vmatpush.bf16.msra.mxu0 %v1153
  %1913 = vmatpush.bf16.msra.mxu0 %v1148
  %1914 = vmatpush.bf16.msra.mxu0 %v1143
  %1915 = vmatpush.bf16.msra.mxu0 %v1138
  %1916 = vmatpush.bf16.msra.mxu0 %v1133
  %1917 = vmatpush.bf16.msra.mxu0 %v1128
  %1918 = vmatpush.bf16.msra.mxu0 %v1123
  %1919 = vmatmul.bf16.gmra.mxu0 %v339
  %v1920 = vpop.f32.mrf.mxu0
  %v1921 = vadd.f32 0.0, %v1920
  %v1922 = vpop.f32.mrf.mxu0
  %1923 = vdwg.mxu0
  %1924 = vmatpush.bf16.msra.mxu0 %v1198
  %1925 = vmatpush.bf16.msra.mxu0 %v1193
  %1926 = vmatpush.bf16.msra.mxu0 %v1188
  %1927 = vmatpush.bf16.msra.mxu0 %v1183
  %1928 = vmatpush.bf16.msra.mxu0 %v1178
  %1929 = vmatpush.bf16.msra.mxu0 %v1173
  %1930 = vmatpush.bf16.msra.mxu0 %v1168
  %1931 = vmatpush.bf16.msra.mxu0 %v1163
  %1932 = vmatmul.bf16.gmra.mxu0 %v340
  %v1933 = vpop.f32.mrf.mxu0
  %v1934 = vadd.f32 %v1921, %v1933
  %v1935 = vpop.f32.mrf.mxu0
  %1936 = vdwg.mxu0
  %1937 = vmatpush.bf16.msra.mxu0 %v1238
  %1938 = vmatpush.bf16.msra.mxu0 %v1233
  %1939 = vmatpush.bf16.msra.mxu0 %v1228
  %1940 = vmatpush.bf16.msra.mxu0 %v1223
  %1941 = vmatpush.bf16.msra.mxu0 %v1218
  %1942 = vmatpush.bf16.msra.mxu0 %v1213
  %1943 = vmatpush.bf16.msra.mxu0 %v1208
  %1944 = vmatpush.bf16.msra.mxu0 %v1203
  %1945 = vmatmul.bf16.gmra.mxu0 %v341
  %v1946 = vpop.f32.mrf.mxu0
  %v1947 = vadd.f32 %v1934, %v1946
  %v1948 = vpop.f32.mrf.mxu0
  %1949 = vdwg.mxu0
  %1950 = vmatpush.bf16.msra.mxu0 %v1278
  %1951 = vmatpush.bf16.msra.mxu0 %v1273
  %1952 = vmatpush.bf16.msra.mxu0 %v1268
  %1953 = vmatpush.bf16.msra.mxu0 %v1263
  %1954 = vmatpush.bf16.msra.mxu0 %v1258
  %1955 = vmatpush.bf16.msra.mxu0 %v1253
  %1956 = vmatpush.bf16.msra.mxu0 %v1248
  %1957 = vmatpush.bf16.msra.mxu0 %v1243
  %1958 = vmatmul.bf16.gmra.mxu0 %v342
  %v1959 = vpop.f32.mrf.mxu0
  %v1960 = vadd.f32 %v1947, %v1959
  %v1961 = vpop.f32.mrf.mxu0
  %1962 = vdwg.mxu0
  %1963 = vmatpush.bf16.msra.mxu0 %v1318
  %1964 = vmatpush.bf16.msra.mxu0 %v1313
  %1965 = vmatpush.bf16.msra.mxu0 %v1308
  %1966 = vmatpush.bf16.msra.mxu0 %v1303
  %1967 = vmatpush.bf16.msra.mxu0 %v1298
  %1968 = vmatpush.bf16.msra.mxu0 %v1293
  %1969 = vmatpush.bf16.msra.mxu0 %v1288
  %1970 = vmatpush.bf16.msra.mxu0 %v1283
  %1971 = vmatmul.bf16.gmra.mxu0 %v343
  %v1972 = vpop.f32.mrf.mxu0
  %v1973 = vadd.f32 %v1960, %v1972
  %v1974 = vpop.f32.mrf.mxu0
  %1975 = vdwg.mxu0
  %1976 = vmatpush.bf16.msra.mxu0 %v1358
  %1977 = vmatpush.bf16.msra.mxu0 %v1353
  %1978 = vmatpush.bf16.msra.mxu0 %v1348
  %1979 = vmatpush.bf16.msra.mxu0 %v1343
  %1980 = vmatpush.bf16.msra.mxu0 %v1338
  %1981 = vmatpush.bf16.msra.mxu0 %v1333
  %1982 = vmatpush.bf16.msra.mxu0 %v1328
  %1983 = vmatpush.bf16.msra.mxu0 %v1323
  %1984 = vmatmul.bf16.gmra.mxu0 %v344
  %v1985 = vpop.f32.mrf.mxu0
  %v1986 = vadd.f32 %v1973, %v1985
  %v1987 = vpop.f32.mrf.mxu0
  %1988 = vdwg.mxu0
  %s1989 = scalar_lea.vmem %s1, 1920
  %v1990 = vld [vmem:[%s1989] sm:$0xff]
  %v1991 = vld [vmem:[%s1989 + $0x8] sm:$0xff]
  %v1992 = vld [vmem:[%s1989 + $0x10] sm:$0xf]
  %v1993 = vld [vmem:[%s1989 + $0x14] sm:$0xff]
  %v1994 = vld [vmem:[%s1989 + $0x1c] sm:$0xff]
  %v1995 = vld [vmem:[%s1989 + $0x24] sm:$0xf]
  %v1996 = vld [vmem:[%s1989 + $0x28] sm:$0xff]
  %v1997 = vld [vmem:[%s1989 + $0x30] sm:$0xff]
  %v1998 = vld [vmem:[%s1989 + $0x38] sm:$0xf]
  %v1999 = vld [vmem:[%s1989 + $0x3c] sm:$0xff]
  %v2000 = vld [vmem:[%s1989 + $0x44] sm:$0xff]
  %v2001 = vld [vmem:[%s1989 + $0x4c] sm:$0xf]
  %v2002 = vld [vmem:[%s1989 + $0x50] sm:$0xff]
  %v2003 = vld [vmem:[%s1989 + $0x58] sm:$0xff]
  %v2004 = vld [vmem:[%s1989 + $0x60] sm:$0xf]
  %v2005 = vld [vmem:[%s1989 + $0x64] sm:$0xff]
  %v2006 = vld [vmem:[%s1989 + $0x6c] sm:$0xff]
  %v2007 = vld [vmem:[%s1989 + $0x74] sm:$0xf]
  %v2008 = vld [vmem:[%s1989 + $0x78] sm:$0xff]
  %v2009 = vld [vmem:[%s1989 + $0x80] sm:$0xff]
  %v2010 = vld [vmem:[%s1989 + $0x88] sm:$0xf]
  %v2011 = vld [vmem:[%s1989 + $0x8c] sm:$0xff]
  %v2012 = vld [vmem:[%s1989 + $0x94] sm:$0xff]
  %v2013 = vld [vmem:[%s1989 + $0x9c] sm:$0xf]
  %v2014 = vld [vmem:[%s1989 + $0xa0] sm:$0xff]
  %v2015 = vld [vmem:[%s1989 + $0xa8] sm:$0xff]
  %v2016 = vld [vmem:[%s1989 + $0xb0] sm:$0xf]
  %v2017 = vld [vmem:[%s1989 + $0xb4] sm:$0xff]
  %v2018 = vld [vmem:[%s1989 + $0xbc] sm:$0xff]
  %v2019 = vld [vmem:[%s1989 + $0xc4] sm:$0xf]
  %v2020 = vld [vmem:[%s1989 + $0xc8] sm:$0xff]
  %v2021 = vld [vmem:[%s1989 + $0xd0] sm:$0xff]
  %v2022 = vld [vmem:[%s1989 + $0xd8] sm:$0xf]
  %v2023 = vld [vmem:[%s1989 + $0xdc] sm:$0xff]
  %v2024 = vld [vmem:[%s1989 + $0xe4] sm:$0xff]
  %v2025 = vld [vmem:[%s1989 + $0xec] sm:$0xf]
  %v2026 = vld [vmem:[%s1989 + $0xf0] sm:$0xff]
  %v2027 = vld [vmem:[%s1989 + $0xf8] sm:$0xff]
  %v2028 = vld [vmem:[%s1989 + $0x100] sm:$0xf]
  %v2029 = vld [vmem:[%s1989 + $0x104] sm:$0xff]
  %v2030 = vld [vmem:[%s1989 + $0x10c] sm:$0xff]
  %v2031 = vld [vmem:[%s1989 + $0x114] sm:$0xf]
  %v2032 = vld [vmem:[%s1989 + $0x118] sm:$0xff]
  %v2033 = vld [vmem:[%s1989 + $0x120] sm:$0xff]
  %v2034 = vld [vmem:[%s1989 + $0x128] sm:$0xf]
  %v2035 = vld [vmem:[%s1989 + $0x12c] sm:$0xff]
  %v2036 = vld [vmem:[%s1989 + $0x134] sm:$0xff]
  %v2037 = vld [vmem:[%s1989 + $0x13c] sm:$0xf]
  %v2038 = vld [vmem:[%s1989 + $0x140] sm:$0xff]
  %v2039 = vld [vmem:[%s1989 + $0x148] sm:$0xff]
  %v2040 = vld [vmem:[%s1989 + $0x150] sm:$0xf]
  %v2041 = vld [vmem:[%s1989 + $0x154] sm:$0xff]
  %v2042 = vld [vmem:[%s1989 + $0x15c] sm:$0xff]
  %v2043 = vld [vmem:[%s1989 + $0x164] sm:$0xf]
  %v2044 = vld [vmem:[%s1989 + $0x168] sm:$0xff]
  %v2045 = vld [vmem:[%s1989 + $0x170] sm:$0xff]
  %v2046 = vld [vmem:[%s1989 + $0x178] sm:$0xf]
  %v2047 = vld [vmem:[%s1989 + $0x17c] sm:$0xff]
  %v2048 = vld [vmem:[%s1989 + $0x184] sm:$0xff]
  %v2049 = vld [vmem:[%s1989 + $0x18c] sm:$0xf]
  %v2050 = vld [vmem:[%s1989 + $0x190] sm:$0xff]
  %v2051 = vld [vmem:[%s1989 + $0x198] sm:$0xff]
  %v2052 = vld [vmem:[%s1989 + $0x1a0] sm:$0xf]
  %v2053 = vld [vmem:[%s1989 + $0x1a4] sm:$0xff]
  %v2054 = vld [vmem:[%s1989 + $0x1ac] sm:$0xff]
  %v2055 = vld [vmem:[%s1989 + $0x1b4] sm:$0xf]
  %v2056 = vld [vmem:[%s1989 + $0x1b8] sm:$0xff]
  %v2057 = vld [vmem:[%s1989 + $0x1c0] sm:$0xff]
  %v2058 = vld [vmem:[%s1989 + $0x1c8] sm:$0xf]
  %v2059 = vld [vmem:[%s1989 + $0x1cc] sm:$0xff]
  %v2060 = vld [vmem:[%s1989 + $0x1d4] sm:$0xff]
  %v2061 = vld [vmem:[%s1989 + $0x1dc] sm:$0xf]
  %v2062 = vld [vmem:[%s1989 + $0x1e0] sm:$0xff]
  %v2063 = vld [vmem:[%s1989 + $0x1e8] sm:$0xff]
  %v2064 = vld [vmem:[%s1989 + $0x1f0] sm:$0xf]
  %v2065 = vld [vmem:[%s1989 + $0x1f4] sm:$0xff]
  %v2066 = vld [vmem:[%s1989 + $0x1fc] sm:$0xff]
  %v2067 = vld [vmem:[%s1989 + $0x204] sm:$0xf]
  %v2068 = vld [vmem:[%s1989 + $0x208] sm:$0xff]
  %v2069 = vld [vmem:[%s1989 + $0x210] sm:$0xff]
  %v2070 = vld [vmem:[%s1989 + $0x218] sm:$0xf]
  %v2071 = vld [vmem:[%s1989 + $0x21c] sm:$0xff]
  %v2072 = vld [vmem:[%s1989 + $0x224] sm:$0xff]
  %v2073 = vld [vmem:[%s1989 + $0x22c] sm:$0xf]
  %v2074 = vld [vmem:[%s1989 + $0x230] sm:$0xff]
  %v2075 = vld [vmem:[%s1989 + $0x238] sm:$0xff]
  %v2076 = vld [vmem:[%s1989 + $0x240] sm:$0xf]
  %v2077 = vld [vmem:[%s1989 + $0x244] sm:$0xff]
  %v2078 = vld [vmem:[%s1989 + $0x24c] sm:$0xff]
  %v2079 = vld [vmem:[%s1989 + $0x254] sm:$0xf]
  %v2080 = vld [vmem:[%s1989 + $0x258] sm:$0xff]
  %v2081 = vld [vmem:[%s1989 + $0x260] sm:$0xff]
  %v2082 = vld [vmem:[%s1989 + $0x268] sm:$0xf]
  %v2083 = vld [vmem:[%s1989 + $0x26c] sm:$0xff]
  %v2084 = vld [vmem:[%s1989 + $0x274] sm:$0xff]
  %v2085 = vld [vmem:[%s1989 + $0x27c] sm:$0xf]
  %v2086 = vld [vmem:[%s1989 + $0x280] sm:$0xff]
  %v2087 = vld [vmem:[%s1989 + $0x288] sm:$0xff]
  %v2088 = vld [vmem:[%s1989 + $0x290] sm:$0xf]
  %v2089 = vld [vmem:[%s1989 + $0x294] sm:$0xff]
  %v2090 = vld [vmem:[%s1989 + $0x29c] sm:$0xff]
  %v2091 = vld [vmem:[%s1989 + $0x2a4] sm:$0xf]
  %v2092 = vld [vmem:[%s1989 + $0x2a8] sm:$0xff]
  %v2093 = vld [vmem:[%s1989 + $0x2b0] sm:$0xff]
  %v2094 = vld [vmem:[%s1989 + $0x2b8] sm:$0xf]
  %v2095 = vld [vmem:[%s1989 + $0x2bc] sm:$0xff]
  %v2096 = vld [vmem:[%s1989 + $0x2c4] sm:$0xff]
  %v2097 = vld [vmem:[%s1989 + $0x2cc] sm:$0xf]
  %v2098 = vld [vmem:[%s1989 + $0x2d0] sm:$0xff]
  %v2099 = vld [vmem:[%s1989 + $0x2d8] sm:$0xff]
  %v2100 = vld [vmem:[%s1989 + $0x2e0] sm:$0xf]
  %v2101 = vld [vmem:[%s1989 + $0x2e4] sm:$0xff]
  %v2102 = vld [vmem:[%s1989 + $0x2ec] sm:$0xff]
  %v2103 = vld [vmem:[%s1989 + $0x2f4] sm:$0xf]
  %v2104 = vld [vmem:[%s1989 + $0x2f8] sm:$0xff]
  %v2105 = vld [vmem:[%s1989 + $0x300] sm:$0xff]
  %v2106 = vld [vmem:[%s1989 + $0x308] sm:$0xf]
  %v2107 = vld [vmem:[%s1989 + $0x30c] sm:$0xff]
  %v2108 = vld [vmem:[%s1989 + $0x314] sm:$0xff]
  %v2109 = vld [vmem:[%s1989 + $0x31c] sm:$0xf]
  %v2110 = vld [vmem:[%s1989 + $0x320] sm:$0xff]
  %v2111 = vld [vmem:[%s1989 + $0x328] sm:$0xff]
  %v2112 = vld [vmem:[%s1989 + $0x330] sm:$0xf]
  %v2113 = vld [vmem:[%s1989 + $0x334] sm:$0xff]
  %v2114 = vld [vmem:[%s1989 + $0x33c] sm:$0xff]
  %v2115 = vld [vmem:[%s1989 + $0x344] sm:$0xf]
  %v2116 = vld [vmem:[%s1989 + $0x348] sm:$0xff]
  %v2117 = vld [vmem:[%s1989 + $0x350] sm:$0xff]
  %v2118 = vld [vmem:[%s1989 + $0x358] sm:$0xf]
  %v2119 = vld [vmem:[%s1989 + $0x35c] sm:$0xff]
  %v2120 = vld [vmem:[%s1989 + $0x364] sm:$0xff]
  %v2121 = vld [vmem:[%s1989 + $0x36c] sm:$0xf]
  %v2122 = vld [vmem:[%s1989 + $0x370] sm:$0xff]
  %v2123 = vld [vmem:[%s1989 + $0x378] sm:$0xff]
  %v2124 = vld [vmem:[%s1989 + $0x380] sm:$0xf]
  %v2125 = vld [vmem:[%s1989 + $0x384] sm:$0xff]
  %v2126 = vld [vmem:[%s1989 + $0x38c] sm:$0xff]
  %v2127 = vld [vmem:[%s1989 + $0x394] sm:$0xf]
  %v2128 = vld [vmem:[%s1989 + $0x398] sm:$0xff]
  %v2129 = vld [vmem:[%s1989 + $0x3a0] sm:$0xff]
  %v2130 = vld [vmem:[%s1989 + $0x3a8] sm:$0xf]
  %v2131 = vld [vmem:[%s1989 + $0x3ac] sm:$0xff]
  %v2132 = vld [vmem:[%s1989 + $0x3b4] sm:$0xff]
  %v2133 = vld [vmem:[%s1989 + $0x3bc] sm:$0xf]
  %v2134 = vld [vmem:[%s1989 + $0x3c0] sm:$0xff]
  %v2135 = vld [vmem:[%s1989 + $0x3c8] sm:$0xff]
  %v2136 = vld [vmem:[%s1989 + $0x3d0] sm:$0xf]
  %v2137 = vld [vmem:[%s1989 + $0x3d4] sm:$0xff]
  %v2138 = vld [vmem:[%s1989 + $0x3dc] sm:$0xff]
  %v2139 = vld [vmem:[%s1989 + $0x3e4] sm:$0xf]
  %v2140 = vld [vmem:[%s1989 + $0x3e8] sm:$0xff]
  %v2141 = vld [vmem:[%s1989 + $0x3f0] sm:$0xff]
  %v2142 = vld [vmem:[%s1989 + $0x3f8] sm:$0xf]
  %v2143 = vld [vmem:[%s1989 + $0x3fc] sm:$0xff]
  %v2144 = vld [vmem:[%s1989 + $0x404] sm:$0xff]
  %v2145 = vld [vmem:[%s1989 + $0x40c] sm:$0xf]
  %v2146 = vld [vmem:[%s1989 + $0x410] sm:$0xff]
  %v2147 = vld [vmem:[%s1989 + $0x418] sm:$0xff]
  %v2148 = vld [vmem:[%s1989 + $0x420] sm:$0xf]
  %v2149 = vld [vmem:[%s1989 + $0x424] sm:$0xff]
  %v2150 = vld [vmem:[%s1989 + $0x42c] sm:$0xff]
  %v2151 = vld [vmem:[%s1989 + $0x434] sm:$0xf]
  %v2152 = vld [vmem:[%s1989 + $0x438] sm:$0xff]
  %v2153 = vld [vmem:[%s1989 + $0x440] sm:$0xff]
  %v2154 = vld [vmem:[%s1989 + $0x448] sm:$0xf]
  %v2155 = vld [vmem:[%s1989 + $0x44c] sm:$0xff]
  %v2156 = vld [vmem:[%s1989 + $0x454] sm:$0xff]
  %v2157 = vld [vmem:[%s1989 + $0x45c] sm:$0xf]
  %v2158 = vld [vmem:[%s1989 + $0x460] sm:$0xff]
  %v2159 = vld [vmem:[%s1989 + $0x468] sm:$0xff]
  %v2160 = vld [vmem:[%s1989 + $0x470] sm:$0xf]
  %v2161 = vld [vmem:[%s1989 + $0x474] sm:$0xff]
  %v2162 = vld [vmem:[%s1989 + $0x47c] sm:$0xff]
  %v2163 = vld [vmem:[%s1989 + $0x484] sm:$0xf]
  %v2164 = vld [vmem:[%s1989 + $0x488] sm:$0xff]
  %v2165 = vld [vmem:[%s1989 + $0x490] sm:$0xff]
  %v2166 = vld [vmem:[%s1989 + $0x498] sm:$0xf]
  %v2167 = vld [vmem:[%s1989 + $0x49c] sm:$0xff]
  %v2168 = vld [vmem:[%s1989 + $0x4a4] sm:$0xff]
  %v2169 = vld [vmem:[%s1989 + $0x4ac] sm:$0xf]
  %v2170 = vld [vmem:[%s1989 + $0x4b0] sm:$0xff]
  %v2171 = vld [vmem:[%s1989 + $0x4b8] sm:$0xff]
  %v2172 = vld [vmem:[%s1989 + $0x4c0] sm:$0xf]
  %v2173 = vld [vmem:[%s1989 + $0x4c4] sm:$0xff]
  %v2174 = vld [vmem:[%s1989 + $0x4cc] sm:$0xff]
  %v2175 = vld [vmem:[%s1989 + $0x4d4] sm:$0xf]
  %v2176 = vld [vmem:[%s1989 + $0x4d8] sm:$0xff]
  %v2177 = vld [vmem:[%s1989 + $0x4e0] sm:$0xff]
  %v2178 = vld [vmem:[%s1989 + $0x4e8] sm:$0xf]
  %v2179 = vld [vmem:[%s1989 + $0x4ec] sm:$0xff]
  %v2180 = vld [vmem:[%s1989 + $0x4f4] sm:$0xff]
  %v2181 = vld [vmem:[%s1989 + $0x4fc] sm:$0xf]
  %v2182 = vld [vmem:[%s1989 + $0x500] sm:$0xff]
  %v2183 = vld [vmem:[%s1989 + $0x508] sm:$0xff]
  %v2184 = vld [vmem:[%s1989 + $0x510] sm:$0xf]
  %v2185 = vld [vmem:[%s1989 + $0x514] sm:$0xff]
  %v2186 = vld [vmem:[%s1989 + $0x51c] sm:$0xff]
  %v2187 = vld [vmem:[%s1989 + $0x524] sm:$0xf]
  %v2188 = vld [vmem:[%s1989 + $0x528] sm:$0xff]
  %v2189 = vld [vmem:[%s1989 + $0x530] sm:$0xff]
  %v2190 = vld [vmem:[%s1989 + $0x538] sm:$0xf]
  %v2191 = vld [vmem:[%s1989 + $0x53c] sm:$0xff]
  %v2192 = vld [vmem:[%s1989 + $0x544] sm:$0xff]
  %v2193 = vld [vmem:[%s1989 + $0x54c] sm:$0xf]
  %v2194 = vld [vmem:[%s1989 + $0x550] sm:$0xff]
  %v2195 = vld [vmem:[%s1989 + $0x558] sm:$0xff]
  %v2196 = vld [vmem:[%s1989 + $0x560] sm:$0xf]
  %v2197 = vld [vmem:[%s1989 + $0x564] sm:$0xff]
  %v2198 = vld [vmem:[%s1989 + $0x56c] sm:$0xff]
  %v2199 = vld [vmem:[%s1989 + $0x574] sm:$0xf]
  %v2200 = vld [vmem:[%s1989 + $0x578] sm:$0xff]
  %v2201 = vld [vmem:[%s1989 + $0x580] sm:$0xff]
  %v2202 = vld [vmem:[%s1989 + $0x588] sm:$0xf]
  %v2203 = vld [vmem:[%s1989 + $0x58c] sm:$0xff]
  %v2204 = vld [vmem:[%s1989 + $0x594] sm:$0xff]
  %v2205 = vld [vmem:[%s1989 + $0x59c] sm:$0xf]
  %v2206 = vld [vmem:[%s1989 + $0x5a0] sm:$0xff]
  %v2207 = vld [vmem:[%s1989 + $0x5a8] sm:$0xff]
  %v2208 = vld [vmem:[%s1989 + $0x5b0] sm:$0xf]
  %v2209 = vld [vmem:[%s1989 + $0x5b4] sm:$0xff]
  %v2210 = vld [vmem:[%s1989 + $0x5bc] sm:$0xff]
  %v2211 = vld [vmem:[%s1989 + $0x5c4] sm:$0xf]
  %v2212 = vld [vmem:[%s1989 + $0x5c8] sm:$0xff]
  %v2213 = vld [vmem:[%s1989 + $0x5d0] sm:$0xff]
  %v2214 = vld [vmem:[%s1989 + $0x5d8] sm:$0xf]
  %v2215 = vld [vmem:[%s1989 + $0x5dc] sm:$0xff]
  %v2216 = vld [vmem:[%s1989 + $0x5e4] sm:$0xff]
  %v2217 = vld [vmem:[%s1989 + $0x5ec] sm:$0xf]
  %v2218 = vld [vmem:[%s1989 + $0x5f0] sm:$0xff]
  %v2219 = vld [vmem:[%s1989 + $0x5f8] sm:$0xff]
  %v2220 = vld [vmem:[%s1989 + $0x600] sm:$0xf]
  %v2221 = vld [vmem:[%s1989 + $0x604] sm:$0xff]
  %v2222 = vld [vmem:[%s1989 + $0x60c] sm:$0xff]
  %v2223 = vld [vmem:[%s1989 + $0x614] sm:$0xf]
  %v2224 = vld [vmem:[%s1989 + $0x618] sm:$0xff]
  %v2225 = vld [vmem:[%s1989 + $0x620] sm:$0xff]
  %v2226 = vld [vmem:[%s1989 + $0x628] sm:$0xf]
  %v2227 = vld [vmem:[%s1989 + $0x62c] sm:$0xff]
  %v2228 = vld [vmem:[%s1989 + $0x634] sm:$0xff]
  %v2229 = vld [vmem:[%s1989 + $0x63c] sm:$0xf]
  %v2230 = vld [vmem:[%s1989 + $0x640] sm:$0xff]
  %v2231 = vld [vmem:[%s1989 + $0x648] sm:$0xff]
  %v2232 = vld [vmem:[%s1989 + $0x650] sm:$0xf]
  %v2233 = vld [vmem:[%s1989 + $0x654] sm:$0xff]
  %v2234 = vld [vmem:[%s1989 + $0x65c] sm:$0xff]
  %v2235 = vld [vmem:[%s1989 + $0x664] sm:$0xf]
  %v2236 = vld [vmem:[%s1989 + $0x668] sm:$0xff]
  %v2237 = vld [vmem:[%s1989 + $0x670] sm:$0xff]
  %v2238 = vld [vmem:[%s1989 + $0x678] sm:$0xf]
  %v2239 = vld [vmem:[%s1989 + $0x67c] sm:$0xff]
  %v2240 = vld [vmem:[%s1989 + $0x684] sm:$0xff]
  %v2241 = vld [vmem:[%s1989 + $0x68c] sm:$0xf]
  %v2242 = vld [vmem:[%s1989 + $0x690] sm:$0xff]
  %v2243 = vld [vmem:[%s1989 + $0x698] sm:$0xff]
  %v2244 = vld [vmem:[%s1989 + $0x6a0] sm:$0xf]
  %v2245 = vld [vmem:[%s1989 + $0x6a4] sm:$0xff]
  %v2246 = vld [vmem:[%s1989 + $0x6ac] sm:$0xff]
  %v2247 = vld [vmem:[%s1989 + $0x6b4] sm:$0xf]
  %v2248 = vld [vmem:[%s1989 + $0x6b8] sm:$0xff]
  %v2249 = vld [vmem:[%s1989 + $0x6c0] sm:$0xff]
  %v2250 = vld [vmem:[%s1989 + $0x6c8] sm:$0xf]
  %v2251 = vld [vmem:[%s1989 + $0x6cc] sm:$0xff]
  %v2252 = vld [vmem:[%s1989 + $0x6d4] sm:$0xff]
  %v2253 = vld [vmem:[%s1989 + $0x6dc] sm:$0xf]
  %v2254 = vld [vmem:[%s1989 + $0x6e0] sm:$0xff]
  %v2255 = vld [vmem:[%s1989 + $0x6e8] sm:$0xff]
  %v2256 = vld [vmem:[%s1989 + $0x6f0] sm:$0xf]
  %v2257 = vld [vmem:[%s1989 + $0x6f4] sm:$0xff]
  %v2258 = vld [vmem:[%s1989 + $0x6fc] sm:$0xff]
  %v2259 = vld [vmem:[%s1989 + $0x704] sm:$0xf]
  %v2260 = vld [vmem:[%s1989 + $0x708] sm:$0xff]
  %v2261 = vld [vmem:[%s1989 + $0x710] sm:$0xff]
  %v2262 = vld [vmem:[%s1989 + $0x718] sm:$0xf]
  %v2263 = vld [vmem:[%s1989 + $0x71c] sm:$0xff]
  %v2264 = vld [vmem:[%s1989 + $0x724] sm:$0xff]
  %v2265 = vld [vmem:[%s1989 + $0x72c] sm:$0xf]
  %v2266 = vld [vmem:[%s1989 + $0x730] sm:$0xff]
  %v2267 = vld [vmem:[%s1989 + $0x738] sm:$0xff]
  %v2268 = vld [vmem:[%s1989 + $0x740] sm:$0xf]
  %v2269 = vld [vmem:[%s1989 + $0x744] sm:$0xff]
  %v2270 = vld [vmem:[%s1989 + $0x74c] sm:$0xff]
  %v2271 = vld [vmem:[%s1989 + $0x754] sm:$0xf]
  %v2272 = vld [vmem:[%s1989 + $0x758] sm:$0xff]
  %v2273 = vld [vmem:[%s1989 + $0x760] sm:$0xff]
  %v2274 = vld [vmem:[%s1989 + $0x768] sm:$0xf]
  %v2275 = vld [vmem:[%s1989 + $0x76c] sm:$0xff]
  %v2276 = vld [vmem:[%s1989 + $0x774] sm:$0xff]
  %v2277 = vld [vmem:[%s1989 + $0x77c] sm:$0xf]
  %v2566 = vunpack.c.l.b16 %v1990
  %v2567 = vunpack.c.h.b16 %v1990
  %v2568 = vunpack.c.l.b16 %v1991
  %v2569 = vunpack.c.h.b16 %v1991
  %v2570 = vunpack.c.l.b16 %v1992
  %v2571 = vunpack.c.l.b16 %v1993
  %v2572 = vunpack.c.h.b16 %v1993
  %v2573 = vunpack.c.l.b16 %v1994
  %v2574 = vunpack.c.h.b16 %v1994
  %v2575 = vunpack.c.l.b16 %v1995
  %v2576 = vunpack.c.l.b16 %v1996
  %v2577 = vunpack.c.h.b16 %v1996
  %v2578 = vunpack.c.l.b16 %v1997
  %v2579 = vunpack.c.h.b16 %v1997
  %v2580 = vunpack.c.l.b16 %v1998
  %v2581 = vunpack.c.l.b16 %v1999
  %v2582 = vunpack.c.h.b16 %v1999
  %v2583 = vunpack.c.l.b16 %v2000
  %v2584 = vunpack.c.h.b16 %v2000
  %v2585 = vunpack.c.l.b16 %v2001
  %v2586 = vunpack.c.l.b16 %v2002
  %v2587 = vunpack.c.h.b16 %v2002
  %v2588 = vunpack.c.l.b16 %v2003
  %v2589 = vunpack.c.h.b16 %v2003
  %v2590 = vunpack.c.l.b16 %v2004
  %v2591 = vunpack.c.l.b16 %v2005
  %v2592 = vunpack.c.h.b16 %v2005
  %v2593 = vunpack.c.l.b16 %v2006
  %v2594 = vunpack.c.h.b16 %v2006
  %v2595 = vunpack.c.l.b16 %v2007
  %v2596 = vunpack.c.l.b16 %v2008
  %v2597 = vunpack.c.h.b16 %v2008
  %v2598 = vunpack.c.l.b16 %v2009
  %v2599 = vunpack.c.h.b16 %v2009
  %v2600 = vunpack.c.l.b16 %v2010
  %v2601 = vunpack.c.l.b16 %v2011
  %v2602 = vunpack.c.h.b16 %v2011
  %v2603 = vunpack.c.l.b16 %v2012
  %v2604 = vunpack.c.h.b16 %v2012
  %v2605 = vunpack.c.l.b16 %v2013
  %v2606 = vunpack.c.l.b16 %v2014
  %v2607 = vunpack.c.h.b16 %v2014
  %v2608 = vunpack.c.l.b16 %v2015
  %v2609 = vunpack.c.h.b16 %v2015
  %v2610 = vunpack.c.l.b16 %v2016
  %v2611 = vunpack.c.l.b16 %v2017
  %v2612 = vunpack.c.h.b16 %v2017
  %v2613 = vunpack.c.l.b16 %v2018
  %v2614 = vunpack.c.h.b16 %v2018
  %v2615 = vunpack.c.l.b16 %v2019
  %v2616 = vunpack.c.l.b16 %v2020
  %v2617 = vunpack.c.h.b16 %v2020
  %v2618 = vunpack.c.l.b16 %v2021
  %v2619 = vunpack.c.h.b16 %v2021
  %v2620 = vunpack.c.l.b16 %v2022
  %v2621 = vunpack.c.l.b16 %v2023
  %v2622 = vunpack.c.h.b16 %v2023
  %v2623 = vunpack.c.l.b16 %v2024
  %v2624 = vunpack.c.h.b16 %v2024
  %v2625 = vunpack.c.l.b16 %v2025
  %v2626 = vunpack.c.l.b16 %v2026
  %v2627 = vunpack.c.h.b16 %v2026
  %v2628 = vunpack.c.l.b16 %v2027
  %v2629 = vunpack.c.h.b16 %v2027
  %v2630 = vunpack.c.l.b16 %v2028
  %v2631 = vunpack.c.l.b16 %v2029
  %v2632 = vunpack.c.h.b16 %v2029
  %v2633 = vunpack.c.l.b16 %v2030
  %v2634 = vunpack.c.h.b16 %v2030
  %v2635 = vunpack.c.l.b16 %v2031
  %v2636 = vunpack.c.l.b16 %v2032
  %v2637 = vunpack.c.h.b16 %v2032
  %v2638 = vunpack.c.l.b16 %v2033
  %v2639 = vunpack.c.h.b16 %v2033
  %v2640 = vunpack.c.l.b16 %v2034
  %v2641 = vunpack.c.l.b16 %v2035
  %v2642 = vunpack.c.h.b16 %v2035
  %v2643 = vunpack.c.l.b16 %v2036
  %v2644 = vunpack.c.h.b16 %v2036
  %v2645 = vunpack.c.l.b16 %v2037
  %v2646 = vunpack.c.l.b16 %v2038
  %v2647 = vunpack.c.h.b16 %v2038
  %v2648 = vunpack.c.l.b16 %v2039
  %v2649 = vunpack.c.h.b16 %v2039
  %v2650 = vunpack.c.l.b16 %v2040
  %v2651 = vunpack.c.l.b16 %v2041
  %v2652 = vunpack.c.h.b16 %v2041
  %v2653 = vunpack.c.l.b16 %v2042
  %v2654 = vunpack.c.h.b16 %v2042
  %v2655 = vunpack.c.l.b16 %v2043
  %v2656 = vunpack.c.l.b16 %v2044
  %v2657 = vunpack.c.h.b16 %v2044
  %v2658 = vunpack.c.l.b16 %v2045
  %v2659 = vunpack.c.h.b16 %v2045
  %v2660 = vunpack.c.l.b16 %v2046
  %v2661 = vunpack.c.l.b16 %v2047
  %v2662 = vunpack.c.h.b16 %v2047
  %v2663 = vunpack.c.l.b16 %v2048
  %v2664 = vunpack.c.h.b16 %v2048
  %v2665 = vunpack.c.l.b16 %v2049
  %v2666 = vunpack.c.l.b16 %v2050
  %v2667 = vunpack.c.h.b16 %v2050
  %v2668 = vunpack.c.l.b16 %v2051
  %v2669 = vunpack.c.h.b16 %v2051
  %v2670 = vunpack.c.l.b16 %v2052
  %v2671 = vunpack.c.l.b16 %v2053
  %v2672 = vunpack.c.h.b16 %v2053
  %v2673 = vunpack.c.l.b16 %v2054
  %v2674 = vunpack.c.h.b16 %v2054
  %v2675 = vunpack.c.l.b16 %v2055
  %v2676 = vunpack.c.l.b16 %v2056
  %v2677 = vunpack.c.h.b16 %v2056
  %v2678 = vunpack.c.l.b16 %v2057
  %v2679 = vunpack.c.h.b16 %v2057
  %v2680 = vunpack.c.l.b16 %v2058
  %v2681 = vunpack.c.l.b16 %v2059
  %v2682 = vunpack.c.h.b16 %v2059
  %v2683 = vunpack.c.l.b16 %v2060
  %v2684 = vunpack.c.h.b16 %v2060
  %v2685 = vunpack.c.l.b16 %v2061
  %v2686 = vunpack.c.l.b16 %v2062
  %v2687 = vunpack.c.h.b16 %v2062
  %v2688 = vunpack.c.l.b16 %v2063
  %v2689 = vunpack.c.h.b16 %v2063
  %v2690 = vunpack.c.l.b16 %v2064
  %v2691 = vunpack.c.l.b16 %v2065
  %v2692 = vunpack.c.h.b16 %v2065
  %v2693 = vunpack.c.l.b16 %v2066
  %v2694 = vunpack.c.h.b16 %v2066
  %v2695 = vunpack.c.l.b16 %v2067
  %v2696 = vunpack.c.l.b16 %v2068
  %v2697 = vunpack.c.h.b16 %v2068
  %v2698 = vunpack.c.l.b16 %v2069
  %v2699 = vunpack.c.h.b16 %v2069
  %v2700 = vunpack.c.l.b16 %v2070
  %v2701 = vunpack.c.l.b16 %v2071
  %v2702 = vunpack.c.h.b16 %v2071
  %v2703 = vunpack.c.l.b16 %v2072
  %v2704 = vunpack.c.h.b16 %v2072
  %v2705 = vunpack.c.l.b16 %v2073
  %v2706 = vunpack.c.l.b16 %v2074
  %v2707 = vunpack.c.h.b16 %v2074
  %v2708 = vunpack.c.l.b16 %v2075
  %v2709 = vunpack.c.h.b16 %v2075
  %v2710 = vunpack.c.l.b16 %v2076
  %v2711 = vunpack.c.l.b16 %v2077
  %v2712 = vunpack.c.h.b16 %v2077
  %v2713 = vunpack.c.l.b16 %v2078
  %v2714 = vunpack.c.h.b16 %v2078
  %v2715 = vunpack.c.l.b16 %v2079
  %v2716 = vunpack.c.l.b16 %v2080
  %v2717 = vunpack.c.h.b16 %v2080
  %v2718 = vunpack.c.l.b16 %v2081
  %v2719 = vunpack.c.h.b16 %v2081
  %v2720 = vunpack.c.l.b16 %v2082
  %v2721 = vunpack.c.l.b16 %v2083
  %v2722 = vunpack.c.h.b16 %v2083
  %v2723 = vunpack.c.l.b16 %v2084
  %v2724 = vunpack.c.h.b16 %v2084
  %v2725 = vunpack.c.l.b16 %v2085
  %v2726 = vunpack.c.l.b16 %v2086
  %v2727 = vunpack.c.h.b16 %v2086
  %v2728 = vunpack.c.l.b16 %v2087
  %v2729 = vunpack.c.h.b16 %v2087
  %v2730 = vunpack.c.l.b16 %v2088
  %v2731 = vunpack.c.l.b16 %v2089
  %v2732 = vunpack.c.h.b16 %v2089
  %v2733 = vunpack.c.l.b16 %v2090
  %v2734 = vunpack.c.h.b16 %v2090
  %v2735 = vunpack.c.l.b16 %v2091
  %v2736 = vunpack.c.l.b16 %v2092
  %v2737 = vunpack.c.h.b16 %v2092
  %v2738 = vunpack.c.l.b16 %v2093
  %v2739 = vunpack.c.h.b16 %v2093
  %v2740 = vunpack.c.l.b16 %v2094
  %v2741 = vunpack.c.l.b16 %v2095
  %v2742 = vunpack.c.h.b16 %v2095
  %v2743 = vunpack.c.l.b16 %v2096
  %v2744 = vunpack.c.h.b16 %v2096
  %v2745 = vunpack.c.l.b16 %v2097
  %v2746 = vunpack.c.l.b16 %v2098
  %v2747 = vunpack.c.h.b16 %v2098
  %v2748 = vunpack.c.l.b16 %v2099
  %v2749 = vunpack.c.h.b16 %v2099
  %v2750 = vunpack.c.l.b16 %v2100
  %v2751 = vunpack.c.l.b16 %v2101
  %v2752 = vunpack.c.h.b16 %v2101
  %v2753 = vunpack.c.l.b16 %v2102
  %v2754 = vunpack.c.h.b16 %v2102
  %v2755 = vunpack.c.l.b16 %v2103
  %v2756 = vunpack.c.l.b16 %v2104
  %v2757 = vunpack.c.h.b16 %v2104
  %v2758 = vunpack.c.l.b16 %v2105
  %v2759 = vunpack.c.h.b16 %v2105
  %v2760 = vunpack.c.l.b16 %v2106
  %v2761 = vunpack.c.l.b16 %v2107
  %v2762 = vunpack.c.h.b16 %v2107
  %v2763 = vunpack.c.l.b16 %v2108
  %v2764 = vunpack.c.h.b16 %v2108
  %v2765 = vunpack.c.l.b16 %v2109
  %v2766 = vunpack.c.l.b16 %v2110
  %v2767 = vunpack.c.h.b16 %v2110
  %v2768 = vunpack.c.l.b16 %v2111
  %v2769 = vunpack.c.h.b16 %v2111
  %v2770 = vunpack.c.l.b16 %v2112
  %v2771 = vunpack.c.l.b16 %v2113
  %v2772 = vunpack.c.h.b16 %v2113
  %v2773 = vunpack.c.l.b16 %v2114
  %v2774 = vunpack.c.h.b16 %v2114
  %v2775 = vunpack.c.l.b16 %v2115
  %v2776 = vunpack.c.l.b16 %v2116
  %v2777 = vunpack.c.h.b16 %v2116
  %v2778 = vunpack.c.l.b16 %v2117
  %v2779 = vunpack.c.h.b16 %v2117
  %v2780 = vunpack.c.l.b16 %v2118
  %v2781 = vunpack.c.l.b16 %v2119
  %v2782 = vunpack.c.h.b16 %v2119
  %v2783 = vunpack.c.l.b16 %v2120
  %v2784 = vunpack.c.h.b16 %v2120
  %v2785 = vunpack.c.l.b16 %v2121
  %v2786 = vunpack.c.l.b16 %v2122
  %v2787 = vunpack.c.h.b16 %v2122
  %v2788 = vunpack.c.l.b16 %v2123
  %v2789 = vunpack.c.h.b16 %v2123
  %v2790 = vunpack.c.l.b16 %v2124
  %v2791 = vunpack.c.l.b16 %v2125
  %v2792 = vunpack.c.h.b16 %v2125
  %v2793 = vunpack.c.l.b16 %v2126
  %v2794 = vunpack.c.h.b16 %v2126
  %v2795 = vunpack.c.l.b16 %v2127
  %v2796 = vunpack.c.l.b16 %v2128
  %v2797 = vunpack.c.h.b16 %v2128
  %v2798 = vunpack.c.l.b16 %v2129
  %v2799 = vunpack.c.h.b16 %v2129
  %v2800 = vunpack.c.l.b16 %v2130
  %v2801 = vunpack.c.l.b16 %v2131
  %v2802 = vunpack.c.h.b16 %v2131
  %v2803 = vunpack.c.l.b16 %v2132
  %v2804 = vunpack.c.h.b16 %v2132
  %v2805 = vunpack.c.l.b16 %v2133
  %v2806 = vunpack.c.l.b16 %v2134
  %v2807 = vunpack.c.h.b16 %v2134
  %v2808 = vunpack.c.l.b16 %v2135
  %v2809 = vunpack.c.h.b16 %v2135
  %v2810 = vunpack.c.l.b16 %v2136
  %v2811 = vunpack.c.l.b16 %v2137
  %v2812 = vunpack.c.h.b16 %v2137
  %v2813 = vunpack.c.l.b16 %v2138
  %v2814 = vunpack.c.h.b16 %v2138
  %v2815 = vunpack.c.l.b16 %v2139
  %v2816 = vunpack.c.l.b16 %v2140
  %v2817 = vunpack.c.h.b16 %v2140
  %v2818 = vunpack.c.l.b16 %v2141
  %v2819 = vunpack.c.h.b16 %v2141
  %v2820 = vunpack.c.l.b16 %v2142
  %v2821 = vunpack.c.l.b16 %v2143
  %v2822 = vunpack.c.h.b16 %v2143
  %v2823 = vunpack.c.l.b16 %v2144
  %v2824 = vunpack.c.h.b16 %v2144
  %v2825 = vunpack.c.l.b16 %v2145
  %v2826 = vunpack.c.l.b16 %v2146
  %v2827 = vunpack.c.h.b16 %v2146
  %v2828 = vunpack.c.l.b16 %v2147
  %v2829 = vunpack.c.h.b16 %v2147
  %v2830 = vunpack.c.l.b16 %v2148
  %v2831 = vunpack.c.l.b16 %v2149
  %v2832 = vunpack.c.h.b16 %v2149
  %v2833 = vunpack.c.l.b16 %v2150
  %v2834 = vunpack.c.h.b16 %v2150
  %v2835 = vunpack.c.l.b16 %v2151
  %v2836 = vunpack.c.l.b16 %v2152
  %v2837 = vunpack.c.h.b16 %v2152
  %v2838 = vunpack.c.l.b16 %v2153
  %v2839 = vunpack.c.h.b16 %v2153
  %v2840 = vunpack.c.l.b16 %v2154
  %v2841 = vunpack.c.l.b16 %v2155
  %v2842 = vunpack.c.h.b16 %v2155
  %v2843 = vunpack.c.l.b16 %v2156
  %v2844 = vunpack.c.h.b16 %v2156
  %v2845 = vunpack.c.l.b16 %v2157
  %v2846 = vunpack.c.l.b16 %v2158
  %v2847 = vunpack.c.h.b16 %v2158
  %v2848 = vunpack.c.l.b16 %v2159
  %v2849 = vunpack.c.h.b16 %v2159
  %v2850 = vunpack.c.l.b16 %v2160
  %v2851 = vunpack.c.l.b16 %v2161
  %v2852 = vunpack.c.h.b16 %v2161
  %v2853 = vunpack.c.l.b16 %v2162
  %v2854 = vunpack.c.h.b16 %v2162
  %v2855 = vunpack.c.l.b16 %v2163
  %v2856 = vunpack.c.l.b16 %v2164
  %v2857 = vunpack.c.h.b16 %v2164
  %v2858 = vunpack.c.l.b16 %v2165
  %v2859 = vunpack.c.h.b16 %v2165
  %v2860 = vunpack.c.l.b16 %v2166
  %v2861 = vunpack.c.l.b16 %v2167
  %v2862 = vunpack.c.h.b16 %v2167
  %v2863 = vunpack.c.l.b16 %v2168
  %v2864 = vunpack.c.h.b16 %v2168
  %v2865 = vunpack.c.l.b16 %v2169
  %v2866 = vunpack.c.l.b16 %v2170
  %v2867 = vunpack.c.h.b16 %v2170
  %v2868 = vunpack.c.l.b16 %v2171
  %v2869 = vunpack.c.h.b16 %v2171
  %v2870 = vunpack.c.l.b16 %v2172
  %v2871 = vunpack.c.l.b16 %v2173
  %v2872 = vunpack.c.h.b16 %v2173
  %v2873 = vunpack.c.l.b16 %v2174
  %v2874 = vunpack.c.h.b16 %v2174
  %v2875 = vunpack.c.l.b16 %v2175
  %v2876 = vunpack.c.l.b16 %v2176
  %v2877 = vunpack.c.h.b16 %v2176
  %v2878 = vunpack.c.l.b16 %v2177
  %v2879 = vunpack.c.h.b16 %v2177
  %v2880 = vunpack.c.l.b16 %v2178
  %v2881 = vunpack.c.l.b16 %v2179
  %v2882 = vunpack.c.h.b16 %v2179
  %v2883 = vunpack.c.l.b16 %v2180
  %v2884 = vunpack.c.h.b16 %v2180
  %v2885 = vunpack.c.l.b16 %v2181
  %v2886 = vunpack.c.l.b16 %v2182
  %v2887 = vunpack.c.h.b16 %v2182
  %v2888 = vunpack.c.l.b16 %v2183
  %v2889 = vunpack.c.h.b16 %v2183
  %v2890 = vunpack.c.l.b16 %v2184
  %v2891 = vunpack.c.l.b16 %v2185
  %v2892 = vunpack.c.h.b16 %v2185
  %v2893 = vunpack.c.l.b16 %v2186
  %v2894 = vunpack.c.h.b16 %v2186
  %v2895 = vunpack.c.l.b16 %v2187
  %v2896 = vunpack.c.l.b16 %v2188
  %v2897 = vunpack.c.h.b16 %v2188
  %v2898 = vunpack.c.l.b16 %v2189
  %v2899 = vunpack.c.h.b16 %v2189
  %v2900 = vunpack.c.l.b16 %v2190
  %v2901 = vunpack.c.l.b16 %v2191
  %v2902 = vunpack.c.h.b16 %v2191
  %v2903 = vunpack.c.l.b16 %v2192
  %v2904 = vunpack.c.h.b16 %v2192
  %v2905 = vunpack.c.l.b16 %v2193
  %v2906 = vunpack.c.l.b16 %v2194
  %v2907 = vunpack.c.h.b16 %v2194
  %v2908 = vunpack.c.l.b16 %v2195
  %v2909 = vunpack.c.h.b16 %v2195
  %v2910 = vunpack.c.l.b16 %v2196
  %v2911 = vunpack.c.l.b16 %v2197
  %v2912 = vunpack.c.h.b16 %v2197
  %v2913 = vunpack.c.l.b16 %v2198
  %v2914 = vunpack.c.h.b16 %v2198
  %v2915 = vunpack.c.l.b16 %v2199
  %v2916 = vunpack.c.l.b16 %v2200
  %v2917 = vunpack.c.h.b16 %v2200
  %v2918 = vunpack.c.l.b16 %v2201
  %v2919 = vunpack.c.h.b16 %v2201
  %v2920 = vunpack.c.l.b16 %v2202
  %v2921 = vunpack.c.l.b16 %v2203
  %v2922 = vunpack.c.h.b16 %v2203
  %v2923 = vunpack.c.l.b16 %v2204
  %v2924 = vunpack.c.h.b16 %v2204
  %v2925 = vunpack.c.l.b16 %v2205
  %v2926 = vunpack.c.l.b16 %v2206
  %v2927 = vunpack.c.h.b16 %v2206
  %v2928 = vunpack.c.l.b16 %v2207
  %v2929 = vunpack.c.h.b16 %v2207
  %v2930 = vunpack.c.l.b16 %v2208
  %v2931 = vunpack.c.l.b16 %v2209
  %v2932 = vunpack.c.h.b16 %v2209
  %v2933 = vunpack.c.l.b16 %v2210
  %v2934 = vunpack.c.h.b16 %v2210
  %v2935 = vunpack.c.l.b16 %v2211
  %v2936 = vunpack.c.l.b16 %v2212
  %v2937 = vunpack.c.h.b16 %v2212
  %v2938 = vunpack.c.l.b16 %v2213
  %v2939 = vunpack.c.h.b16 %v2213
  %v2940 = vunpack.c.l.b16 %v2214
  %v2941 = vunpack.c.l.b16 %v2215
  %v2942 = vunpack.c.h.b16 %v2215
  %v2943 = vunpack.c.l.b16 %v2216
  %v2944 = vunpack.c.h.b16 %v2216
  %v2945 = vunpack.c.l.b16 %v2217
  %v2946 = vunpack.c.l.b16 %v2218
  %v2947 = vunpack.c.h.b16 %v2218
  %v2948 = vunpack.c.l.b16 %v2219
  %v2949 = vunpack.c.h.b16 %v2219
  %v2950 = vunpack.c.l.b16 %v2220
  %v2951 = vunpack.c.l.b16 %v2221
  %v2952 = vunpack.c.h.b16 %v2221
  %v2953 = vunpack.c.l.b16 %v2222
  %v2954 = vunpack.c.h.b16 %v2222
  %v2955 = vunpack.c.l.b16 %v2223
  %v2956 = vunpack.c.l.b16 %v2224
  %v2957 = vunpack.c.h.b16 %v2224
  %v2958 = vunpack.c.l.b16 %v2225
  %v2959 = vunpack.c.h.b16 %v2225
  %v2960 = vunpack.c.l.b16 %v2226
  %v2961 = vunpack.c.l.b16 %v2227
  %v2962 = vunpack.c.h.b16 %v2227
  %v2963 = vunpack.c.l.b16 %v2228
  %v2964 = vunpack.c.h.b16 %v2228
  %v2965 = vunpack.c.l.b16 %v2229
  %v2966 = vunpack.c.l.b16 %v2230
  %v2967 = vunpack.c.h.b16 %v2230
  %v2968 = vunpack.c.l.b16 %v2231
  %v2969 = vunpack.c.h.b16 %v2231
  %v2970 = vunpack.c.l.b16 %v2232
  %v2971 = vunpack.c.l.b16 %v2233
  %v2972 = vunpack.c.h.b16 %v2233
  %v2973 = vunpack.c.l.b16 %v2234
  %v2974 = vunpack.c.h.b16 %v2234
  %v2975 = vunpack.c.l.b16 %v2235
  %v2976 = vunpack.c.l.b16 %v2236
  %v2977 = vunpack.c.h.b16 %v2236
  %v2978 = vunpack.c.l.b16 %v2237
  %v2979 = vunpack.c.h.b16 %v2237
  %v2980 = vunpack.c.l.b16 %v2238
  %v2981 = vunpack.c.l.b16 %v2239
  %v2982 = vunpack.c.h.b16 %v2239
  %v2983 = vunpack.c.l.b16 %v2240
  %v2984 = vunpack.c.h.b16 %v2240
  %v2985 = vunpack.c.l.b16 %v2241
  %v2986 = vunpack.c.l.b16 %v2242
  %v2987 = vunpack.c.h.b16 %v2242
  %v2988 = vunpack.c.l.b16 %v2243
  %v2989 = vunpack.c.h.b16 %v2243
  %v2990 = vunpack.c.l.b16 %v2244
  %v2991 = vunpack.c.l.b16 %v2245
  %v2992 = vunpack.c.h.b16 %v2245
  %v2993 = vunpack.c.l.b16 %v2246
  %v2994 = vunpack.c.h.b16 %v2246
  %v2995 = vunpack.c.l.b16 %v2247
  %v2996 = vunpack.c.l.b16 %v2248
  %v2997 = vunpack.c.h.b16 %v2248
  %v2998 = vunpack.c.l.b16 %v2249
  %v2999 = vunpack.c.h.b16 %v2249
  %v3000 = vunpack.c.l.b16 %v2250
  %v3001 = vunpack.c.l.b16 %v2251
  %v3002 = vunpack.c.h.b16 %v2251
  %v3003 = vunpack.c.l.b16 %v2252
  %v3004 = vunpack.c.h.b16 %v2252
  %v3005 = vunpack.c.l.b16 %v2253
  %v3006 = vunpack.c.l.b16 %v2254
  %v3007 = vunpack.c.h.b16 %v2254
  %v3008 = vunpack.c.l.b16 %v2255
  %v3009 = vunpack.c.h.b16 %v2255
  %v3010 = vunpack.c.l.b16 %v2256
  %v3011 = vunpack.c.l.b16 %v2257
  %v3012 = vunpack.c.h.b16 %v2257
  %v3013 = vunpack.c.l.b16 %v2258
  %v3014 = vunpack.c.h.b16 %v2258
  %v3015 = vunpack.c.l.b16 %v2259
  %v3016 = vunpack.c.l.b16 %v2260
  %v3017 = vunpack.c.h.b16 %v2260
  %v3018 = vunpack.c.l.b16 %v2261
  %v3019 = vunpack.c.h.b16 %v2261
  %v3020 = vunpack.c.l.b16 %v2262
  %v3021 = vunpack.c.l.b16 %v2263
  %v3022 = vunpack.c.h.b16 %v2263
  %v3023 = vunpack.c.l.b16 %v2264
  %v3024 = vunpack.c.h.b16 %v2264
  %v3025 = vunpack.c.l.b16 %v2265
  %v3026 = vunpack.c.l.b16 %v2266
  %v3027 = vunpack.c.h.b16 %v2266
  %v3028 = vunpack.c.l.b16 %v2267
  %v3029 = vunpack.c.h.b16 %v2267
  %v3030 = vunpack.c.l.b16 %v2268
  %v3031 = vunpack.c.l.b16 %v2269
  %v3032 = vunpack.c.h.b16 %v2269
  %v3033 = vunpack.c.l.b16 %v2270
  %v3034 = vunpack.c.h.b16 %v2270
  %v3035 = vunpack.c.l.b16 %v2271
  %v3036 = vunpack.c.l.b16 %v2272
  %v3037 = vunpack.c.h.b16 %v2272
  %v3038 = vunpack.c.l.b16 %v2273
  %v3039 = vunpack.c.h.b16 %v2273
  %v3040 = vunpack.c.l.b16 %v2274
  %v3041 = vunpack.c.l.b16 %v2275
  %v3042 = vunpack.c.h.b16 %v2275
  %v3043 = vunpack.c.l.b16 %v2276
  %v3044 = vunpack.c.h.b16 %v2276
  %v3045 = vunpack.c.l.b16 %v2277
  %v3046 = vpack.c.b16 %v2571, %v2566
  %v3047 = vpack.c.b16 %v2572, %v2567
  %v3048 = vpack.c.b16 %v2573, %v2568
  %v3049 = vpack.c.b16 %v2574, %v2569
  %v3050 = vpack.c.b16 %v2575, %v2570
  %v3051 = vpack.c.b16 %v2581, %v2576
  %v3052 = vpack.c.b16 %v2582, %v2577
  %v3053 = vpack.c.b16 %v2583, %v2578
  %v3054 = vpack.c.b16 %v2584, %v2579
  %v3055 = vpack.c.b16 %v2585, %v2580
  %v3056 = vpack.c.b16 %v2591, %v2586
  %v3057 = vpack.c.b16 %v2592, %v2587
  %v3058 = vpack.c.b16 %v2593, %v2588
  %v3059 = vpack.c.b16 %v2594, %v2589
  %v3060 = vpack.c.b16 %v2595, %v2590
  %v3061 = vpack.c.b16 %v2601, %v2596
  %v3062 = vpack.c.b16 %v2602, %v2597
  %v3063 = vpack.c.b16 %v2603, %v2598
  %v3064 = vpack.c.b16 %v2604, %v2599
  %v3065 = vpack.c.b16 %v2605, %v2600
  %v3066 = vpack.c.b16 %v2611, %v2606
  %v3067 = vpack.c.b16 %v2612, %v2607
  %v3068 = vpack.c.b16 %v2613, %v2608
  %v3069 = vpack.c.b16 %v2614, %v2609
  %v3070 = vpack.c.b16 %v2615, %v2610
  %v3071 = vpack.c.b16 %v2621, %v2616
  %v3072 = vpack.c.b16 %v2622, %v2617
  %v3073 = vpack.c.b16 %v2623, %v2618
  %v3074 = vpack.c.b16 %v2624, %v2619
  %v3075 = vpack.c.b16 %v2625, %v2620
  %v3076 = vpack.c.b16 %v2631, %v2626
  %v3077 = vpack.c.b16 %v2632, %v2627
  %v3078 = vpack.c.b16 %v2633, %v2628
  %v3079 = vpack.c.b16 %v2634, %v2629
  %v3080 = vpack.c.b16 %v2635, %v2630
  %v3081 = vpack.c.b16 %v2641, %v2636
  %v3082 = vpack.c.b16 %v2642, %v2637
  %v3083 = vpack.c.b16 %v2643, %v2638
  %v3084 = vpack.c.b16 %v2644, %v2639
  %v3085 = vpack.c.b16 %v2645, %v2640
  %v3086 = vpack.c.b16 %v2651, %v2646
  %v3087 = vpack.c.b16 %v2652, %v2647
  %v3088 = vpack.c.b16 %v2653, %v2648
  %v3089 = vpack.c.b16 %v2654, %v2649
  %v3090 = vpack.c.b16 %v2655, %v2650
  %v3091 = vpack.c.b16 %v2661, %v2656
  %v3092 = vpack.c.b16 %v2662, %v2657
  %v3093 = vpack.c.b16 %v2663, %v2658
  %v3094 = vpack.c.b16 %v2664, %v2659
  %v3095 = vpack.c.b16 %v2665, %v2660
  %v3096 = vpack.c.b16 %v2671, %v2666
  %v3097 = vpack.c.b16 %v2672, %v2667
  %v3098 = vpack.c.b16 %v2673, %v2668
  %v3099 = vpack.c.b16 %v2674, %v2669
  %v3100 = vpack.c.b16 %v2675, %v2670
  %v3101 = vpack.c.b16 %v2681, %v2676
  %v3102 = vpack.c.b16 %v2682, %v2677
  %v3103 = vpack.c.b16 %v2683, %v2678
  %v3104 = vpack.c.b16 %v2684, %v2679
  %v3105 = vpack.c.b16 %v2685, %v2680
  %v3106 = vpack.c.b16 %v2691, %v2686
  %v3107 = vpack.c.b16 %v2692, %v2687
  %v3108 = vpack.c.b16 %v2693, %v2688
  %v3109 = vpack.c.b16 %v2694, %v2689
  %v3110 = vpack.c.b16 %v2695, %v2690
  %v3111 = vpack.c.b16 %v2701, %v2696
  %v3112 = vpack.c.b16 %v2702, %v2697
  %v3113 = vpack.c.b16 %v2703, %v2698
  %v3114 = vpack.c.b16 %v2704, %v2699
  %v3115 = vpack.c.b16 %v2705, %v2700
  %v3116 = vpack.c.b16 %v2711, %v2706
  %v3117 = vpack.c.b16 %v2712, %v2707
  %v3118 = vpack.c.b16 %v2713, %v2708
  %v3119 = vpack.c.b16 %v2714, %v2709
  %v3120 = vpack.c.b16 %v2715, %v2710
  %v3121 = vpack.c.b16 %v2721, %v2716
  %v3122 = vpack.c.b16 %v2722, %v2717
  %v3123 = vpack.c.b16 %v2723, %v2718
  %v3124 = vpack.c.b16 %v2724, %v2719
  %v3125 = vpack.c.b16 %v2725, %v2720
  %v3126 = vpack.c.b16 %v2731, %v2726
  %v3127 = vpack.c.b16 %v2732, %v2727
  %v3128 = vpack.c.b16 %v2733, %v2728
  %v3129 = vpack.c.b16 %v2734, %v2729
  %v3130 = vpack.c.b16 %v2735, %v2730
  %v3131 = vpack.c.b16 %v2741, %v2736
  %v3132 = vpack.c.b16 %v2742, %v2737
  %v3133 = vpack.c.b16 %v2743, %v2738
  %v3134 = vpack.c.b16 %v2744, %v2739
  %v3135 = vpack.c.b16 %v2745, %v2740
  %v3136 = vpack.c.b16 %v2751, %v2746
  %v3137 = vpack.c.b16 %v2752, %v2747
  %v3138 = vpack.c.b16 %v2753, %v2748
  %v3139 = vpack.c.b16 %v2754, %v2749
  %v3140 = vpack.c.b16 %v2755, %v2750
  %v3141 = vpack.c.b16 %v2761, %v2756
  %v3142 = vpack.c.b16 %v2762, %v2757
  %v3143 = vpack.c.b16 %v2763, %v2758
  %v3144 = vpack.c.b16 %v2764, %v2759
  %v3145 = vpack.c.b16 %v2765, %v2760
  %v3146 = vpack.c.b16 %v2771, %v2766
  %v3147 = vpack.c.b16 %v2772, %v2767
  %v3148 = vpack.c.b16 %v2773, %v2768
  %v3149 = vpack.c.b16 %v2774, %v2769
  %v3150 = vpack.c.b16 %v2775, %v2770
  %v3151 = vpack.c.b16 %v2781, %v2776
  %v3152 = vpack.c.b16 %v2782, %v2777
  %v3153 = vpack.c.b16 %v2783, %v2778
  %v3154 = vpack.c.b16 %v2784, %v2779
  %v3155 = vpack.c.b16 %v2785, %v2780
  %v3156 = vpack.c.b16 %v2791, %v2786
  %v3157 = vpack.c.b16 %v2792, %v2787
  %v3158 = vpack.c.b16 %v2793, %v2788
  %v3159 = vpack.c.b16 %v2794, %v2789
  %v3160 = vpack.c.b16 %v2795, %v2790
  %v3161 = vpack.c.b16 %v2801, %v2796
  %v3162 = vpack.c.b16 %v2802, %v2797
  %v3163 = vpack.c.b16 %v2803, %v2798
  %v3164 = vpack.c.b16 %v2804, %v2799
  %v3165 = vpack.c.b16 %v2805, %v2800
  %v3166 = vpack.c.b16 %v2811, %v2806
  %v3167 = vpack.c.b16 %v2812, %v2807
  %v3168 = vpack.c.b16 %v2813, %v2808
  %v3169 = vpack.c.b16 %v2814, %v2809
  %v3170 = vpack.c.b16 %v2815, %v2810
  %v3171 = vpack.c.b16 %v2821, %v2816
  %v3172 = vpack.c.b16 %v2822, %v2817
  %v3173 = vpack.c.b16 %v2823, %v2818
  %v3174 = vpack.c.b16 %v2824, %v2819
  %v3175 = vpack.c.b16 %v2825, %v2820
  %v3176 = vpack.c.b16 %v2831, %v2826
  %v3177 = vpack.c.b16 %v2832, %v2827
  %v3178 = vpack.c.b16 %v2833, %v2828
  %v3179 = vpack.c.b16 %v2834, %v2829
  %v3180 = vpack.c.b16 %v2835, %v2830
  %v3181 = vpack.c.b16 %v2841, %v2836
  %v3182 = vpack.c.b16 %v2842, %v2837
  %v3183 = vpack.c.b16 %v2843, %v2838
  %v3184 = vpack.c.b16 %v2844, %v2839
  %v3185 = vpack.c.b16 %v2845, %v2840
  %v3186 = vpack.c.b16 %v2851, %v2846
  %v3187 = vpack.c.b16 %v2852, %v2847
  %v3188 = vpack.c.b16 %v2853, %v2848
  %v3189 = vpack.c.b16 %v2854, %v2849
  %v3190 = vpack.c.b16 %v2855, %v2850
  %v3191 = vpack.c.b16 %v2861, %v2856
  %v3192 = vpack.c.b16 %v2862, %v2857
  %v3193 = vpack.c.b16 %v2863, %v2858
  %v3194 = vpack.c.b16 %v2864, %v2859
  %v3195 = vpack.c.b16 %v2865, %v2860
  %v3196 = vpack.c.b16 %v2871, %v2866
  %v3197 = vpack.c.b16 %v2872, %v2867
  %v3198 = vpack.c.b16 %v2873, %v2868
  %v3199 = vpack.c.b16 %v2874, %v2869
  %v3200 = vpack.c.b16 %v2875, %v2870
  %v3201 = vpack.c.b16 %v2881, %v2876
  %v3202 = vpack.c.b16 %v2882, %v2877
  %v3203 = vpack.c.b16 %v2883, %v2878
  %v3204 = vpack.c.b16 %v2884, %v2879
  %v3205 = vpack.c.b16 %v2885, %v2880
  %v3206 = vpack.c.b16 %v2891, %v2886
  %v3207 = vpack.c.b16 %v2892, %v2887
  %v3208 = vpack.c.b16 %v2893, %v2888
  %v3209 = vpack.c.b16 %v2894, %v2889
  %v3210 = vpack.c.b16 %v2895, %v2890
  %v3211 = vpack.c.b16 %v2901, %v2896
  %v3212 = vpack.c.b16 %v2902, %v2897
  %v3213 = vpack.c.b16 %v2903, %v2898
  %v3214 = vpack.c.b16 %v2904, %v2899
  %v3215 = vpack.c.b16 %v2905, %v2900
  %v3216 = vpack.c.b16 %v2911, %v2906
  %v3217 = vpack.c.b16 %v2912, %v2907
  %v3218 = vpack.c.b16 %v2913, %v2908
  %v3219 = vpack.c.b16 %v2914, %v2909
  %v3220 = vpack.c.b16 %v2915, %v2910
  %v3221 = vpack.c.b16 %v2921, %v2916
  %v3222 = vpack.c.b16 %v2922, %v2917
  %v3223 = vpack.c.b16 %v2923, %v2918
  %v3224 = vpack.c.b16 %v2924, %v2919
  %v3225 = vpack.c.b16 %v2925, %v2920
  %v3226 = vpack.c.b16 %v2931, %v2926
  %v3227 = vpack.c.b16 %v2932, %v2927
  %v3228 = vpack.c.b16 %v2933, %v2928
  %v3229 = vpack.c.b16 %v2934, %v2929
  %v3230 = vpack.c.b16 %v2935, %v2930
  %v3231 = vpack.c.b16 %v2941, %v2936
  %v3232 = vpack.c.b16 %v2942, %v2937
  %v3233 = vpack.c.b16 %v2943, %v2938
  %v3234 = vpack.c.b16 %v2944, %v2939
  %v3235 = vpack.c.b16 %v2945, %v2940
  %v3236 = vpack.c.b16 %v2951, %v2946
  %v3237 = vpack.c.b16 %v2952, %v2947
  %v3238 = vpack.c.b16 %v2953, %v2948
  %v3239 = vpack.c.b16 %v2954, %v2949
  %v3240 = vpack.c.b16 %v2955, %v2950
  %v3241 = vpack.c.b16 %v2961, %v2956
  %v3242 = vpack.c.b16 %v2962, %v2957
  %v3243 = vpack.c.b16 %v2963, %v2958
  %v3244 = vpack.c.b16 %v2964, %v2959
  %v3245 = vpack.c.b16 %v2965, %v2960
  %v3246 = vpack.c.b16 %v2971, %v2966
  %v3247 = vpack.c.b16 %v2972, %v2967
  %v3248 = vpack.c.b16 %v2973, %v2968
  %v3249 = vpack.c.b16 %v2974, %v2969
  %v3250 = vpack.c.b16 %v2975, %v2970
  %v3251 = vpack.c.b16 %v2981, %v2976
  %v3252 = vpack.c.b16 %v2982, %v2977
  %v3253 = vpack.c.b16 %v2983, %v2978
  %v3254 = vpack.c.b16 %v2984, %v2979
  %v3255 = vpack.c.b16 %v2985, %v2980
  %v3256 = vpack.c.b16 %v2991, %v2986
  %v3257 = vpack.c.b16 %v2992, %v2987
  %v3258 = vpack.c.b16 %v2993, %v2988
  %v3259 = vpack.c.b16 %v2994, %v2989
  %v3260 = vpack.c.b16 %v2995, %v2990
  %v3261 = vpack.c.b16 %v3001, %v2996
  %v3262 = vpack.c.b16 %v3002, %v2997
  %v3263 = vpack.c.b16 %v3003, %v2998
  %v3264 = vpack.c.b16 %v3004, %v2999
  %v3265 = vpack.c.b16 %v3005, %v3000
  %v3266 = vpack.c.b16 %v3011, %v3006
  %v3267 = vpack.c.b16 %v3012, %v3007
  %v3268 = vpack.c.b16 %v3013, %v3008
  %v3269 = vpack.c.b16 %v3014, %v3009
  %v3270 = vpack.c.b16 %v3015, %v3010
  %v3271 = vpack.c.b16 %v3021, %v3016
  %v3272 = vpack.c.b16 %v3022, %v3017
  %v3273 = vpack.c.b16 %v3023, %v3018
  %v3274 = vpack.c.b16 %v3024, %v3019
  %v3275 = vpack.c.b16 %v3025, %v3020
  %v3276 = vpack.c.b16 %v3031, %v3026
  %v3277 = vpack.c.b16 %v3032, %v3027
  %v3278 = vpack.c.b16 %v3033, %v3028
  %v3279 = vpack.c.b16 %v3034, %v3029
  %v3280 = vpack.c.b16 %v3035, %v3030
  %v3281 = vpack.c.b16 %v3041, %v3036
  %v3282 = vpack.c.b16 %v3042, %v3037
  %v3283 = vpack.c.b16 %v3043, %v3038
  %v3284 = vpack.c.b16 %v3044, %v3039
  %v3285 = vpack.c.b16 %v3045, %v3040
  %3526 = vmatpush.bf16.msra.mxu0 %v3081
  %3527 = vmatpush.bf16.msra.mxu0 %v3076
  %3528 = vmatpush.bf16.msra.mxu0 %v3071
  %3529 = vmatpush.bf16.msra.mxu0 %v3066
  %3530 = vmatpush.bf16.msra.mxu0 %v3061
  %3531 = vmatpush.bf16.msra.mxu0 %v3056
  %3532 = vmatpush.bf16.msra.mxu0 %v3051
  %3533 = vmatpush.bf16.msra.mxu0 %v3046
  %3534 = vmatmul.bf16.gmra.mxu0 %v339
  %v3535 = vpop.f32.mrf.mxu0
  %v3536 = vadd.f32 0.0, %v3535
  %v3537 = vpop.f32.mrf.mxu0
  %3538 = vdwg.mxu0
  %3539 = vmatpush.bf16.msra.mxu0 %v3121
  %3540 = vmatpush.bf16.msra.mxu0 %v3116
  %3541 = vmatpush.bf16.msra.mxu0 %v3111
  %3542 = vmatpush.bf16.msra.mxu0 %v3106
  %3543 = vmatpush.bf16.msra.mxu0 %v3101
  %3544 = vmatpush.bf16.msra.mxu0 %v3096
  %3545 = vmatpush.bf16.msra.mxu0 %v3091
  %3546 = vmatpush.bf16.msra.mxu0 %v3086
  %3547 = vmatmul.bf16.gmra.mxu0 %v340
  %v3548 = vpop.f32.mrf.mxu0
  %v3549 = vadd.f32 %v3536, %v3548
  %v3550 = vpop.f32.mrf.mxu0
  %3551 = vdwg.mxu0
  %3552 = vmatpush.bf16.msra.mxu0 %v3161
  %3553 = vmatpush.bf16.msra.mxu0 %v3156
  %3554 = vmatpush.bf16.msra.mxu0 %v3151
  %3555 = vmatpush.bf16.msra.mxu0 %v3146
  %3556 = vmatpush.bf16.msra.mxu0 %v3141
  %3557 = vmatpush.bf16.msra.mxu0 %v3136
  %3558 = vmatpush.bf16.msra.mxu0 %v3131
  %3559 = vmatpush.bf16.msra.mxu0 %v3126
  %3560 = vmatmul.bf16.gmra.mxu0 %v341
  %v3561 = vpop.f32.mrf.mxu0
  %v3562 = vadd.f32 %v3549, %v3561
  %v3563 = vpop.f32.mrf.mxu0
  %3564 = vdwg.mxu0
  %3565 = vmatpush.bf16.msra.mxu0 %v3201
  %3566 = vmatpush.bf16.msra.mxu0 %v3196
  %3567 = vmatpush.bf16.msra.mxu0 %v3191
  %3568 = vmatpush.bf16.msra.mxu0 %v3186
  %3569 = vmatpush.bf16.msra.mxu0 %v3181
  %3570 = vmatpush.bf16.msra.mxu0 %v3176
  %3571 = vmatpush.bf16.msra.mxu0 %v3171
  %3572 = vmatpush.bf16.msra.mxu0 %v3166
  %3573 = vmatmul.bf16.gmra.mxu0 %v342
  %v3574 = vpop.f32.mrf.mxu0
  %v3575 = vadd.f32 %v3562, %v3574
  %v3576 = vpop.f32.mrf.mxu0
  %3577 = vdwg.mxu0
  %3578 = vmatpush.bf16.msra.mxu0 %v3241
  %3579 = vmatpush.bf16.msra.mxu0 %v3236
  %3580 = vmatpush.bf16.msra.mxu0 %v3231
  %3581 = vmatpush.bf16.msra.mxu0 %v3226
  %3582 = vmatpush.bf16.msra.mxu0 %v3221
  %3583 = vmatpush.bf16.msra.mxu0 %v3216
  %3584 = vmatpush.bf16.msra.mxu0 %v3211
  %3585 = vmatpush.bf16.msra.mxu0 %v3206
  %3586 = vmatmul.bf16.gmra.mxu0 %v343
  %v3587 = vpop.f32.mrf.mxu0
  %v3588 = vadd.f32 %v3575, %v3587
  %v3589 = vpop.f32.mrf.mxu0
  %3590 = vdwg.mxu0
  %3591 = vmatpush.bf16.msra.mxu0 %v3281
  %3592 = vmatpush.bf16.msra.mxu0 %v3276
  %3593 = vmatpush.bf16.msra.mxu0 %v3271
  %3594 = vmatpush.bf16.msra.mxu0 %v3266
  %3595 = vmatpush.bf16.msra.mxu0 %v3261
  %3596 = vmatpush.bf16.msra.mxu0 %v3256
  %3597 = vmatpush.bf16.msra.mxu0 %v3251
  %3598 = vmatpush.bf16.msra.mxu0 %v3246
  %3599 = vmatmul.bf16.gmra.mxu0 %v344
  %v3600 = vpop.f32.mrf.mxu0
  %v3601 = vadd.f32 %v3588, %v3600
  %v3602 = vpop.f32.mrf.mxu0
  %3603 = vdwg.mxu0
  %3604 = vmatpush.bf16.msra.mxu0 %v3082
  %3605 = vmatpush.bf16.msra.mxu0 %v3077
  %3606 = vmatpush.bf16.msra.mxu0 %v3072
  %3607 = vmatpush.bf16.msra.mxu0 %v3067
  %3608 = vmatpush.bf16.msra.mxu0 %v3062
  %3609 = vmatpush.bf16.msra.mxu0 %v3057
  %3610 = vmatpush.bf16.msra.mxu0 %v3052
  %3611 = vmatpush.bf16.msra.mxu0 %v3047
  %3612 = vmatmul.bf16.gmra.mxu0 %v339
  %v3613 = vpop.f32.mrf.mxu0
  %v3614 = vadd.f32 0.0, %v3613
  %v3615 = vpop.f32.mrf.mxu0
  %3616 = vdwg.mxu0
  %3617 = vmatpush.bf16.msra.mxu0 %v3122
  %3618 = vmatpush.bf16.msra.mxu0 %v3117
  %3619 = vmatpush.bf16.msra.mxu0 %v3112
  %3620 = vmatpush.bf16.msra.mxu0 %v3107
  %3621 = vmatpush.bf16.msra.mxu0 %v3102
  %3622 = vmatpush.bf16.msra.mxu0 %v3097
  %3623 = vmatpush.bf16.msra.mxu0 %v3092
  %3624 = vmatpush.bf16.msra.mxu0 %v3087
  %3625 = vmatmul.bf16.gmra.mxu0 %v340
  %v3626 = vpop.f32.mrf.mxu0
  %v3627 = vadd.f32 %v3614, %v3626
  %v3628 = vpop.f32.mrf.mxu0
  %3629 = vdwg.mxu0
  %3630 = vmatpush.bf16.msra.mxu0 %v3162
  %3631 = vmatpush.bf16.msra.mxu0 %v3157
  %3632 = vmatpush.bf16.msra.mxu0 %v3152
  %3633 = vmatpush.bf16.msra.mxu0 %v3147
  %3634 = vmatpush.bf16.msra.mxu0 %v3142
  %3635 = vmatpush.bf16.msra.mxu0 %v3137
  %3636 = vmatpush.bf16.msra.mxu0 %v3132
  %3637 = vmatpush.bf16.msra.mxu0 %v3127
  %3638 = vmatmul.bf16.gmra.mxu0 %v341
  %v3639 = vpop.f32.mrf.mxu0
  %v3640 = vadd.f32 %v3627, %v3639
  %v3641 = vpop.f32.mrf.mxu0
  %3642 = vdwg.mxu0
  %3643 = vmatpush.bf16.msra.mxu0 %v3202
  %3644 = vmatpush.bf16.msra.mxu0 %v3197
  %3645 = vmatpush.bf16.msra.mxu0 %v3192
  %3646 = vmatpush.bf16.msra.mxu0 %v3187
  %3647 = vmatpush.bf16.msra.mxu0 %v3182
  %3648 = vmatpush.bf16.msra.mxu0 %v3177
  %3649 = vmatpush.bf16.msra.mxu0 %v3172
  %3650 = vmatpush.bf16.msra.mxu0 %v3167
  %3651 = vmatmul.bf16.gmra.mxu0 %v342
  %v3652 = vpop.f32.mrf.mxu0
  %v3653 = vadd.f32 %v3640, %v3652
  %v3654 = vpop.f32.mrf.mxu0
  %3655 = vdwg.mxu0
  %3656 = vmatpush.bf16.msra.mxu0 %v3242
  %3657 = vmatpush.bf16.msra.mxu0 %v3237
  %3658 = vmatpush.bf16.msra.mxu0 %v3232
  %3659 = vmatpush.bf16.msra.mxu0 %v3227
  %3660 = vmatpush.bf16.msra.mxu0 %v3222
  %3661 = vmatpush.bf16.msra.mxu0 %v3217
  %3662 = vmatpush.bf16.msra.mxu0 %v3212
  %3663 = vmatpush.bf16.msra.mxu0 %v3207
  %3664 = vmatmul.bf16.gmra.mxu0 %v343
  %v3665 = vpop.f32.mrf.mxu0
  %v3666 = vadd.f32 %v3653, %v3665
  %v3667 = vpop.f32.mrf.mxu0
  %3668 = vdwg.mxu0
  %3669 = vmatpush.bf16.msra.mxu0 %v3282
  %3670 = vmatpush.bf16.msra.mxu0 %v3277
  %3671 = vmatpush.bf16.msra.mxu0 %v3272
  %3672 = vmatpush.bf16.msra.mxu0 %v3267
  %3673 = vmatpush.bf16.msra.mxu0 %v3262
  %3674 = vmatpush.bf16.msra.mxu0 %v3257
  %3675 = vmatpush.bf16.msra.mxu0 %v3252
  %3676 = vmatpush.bf16.msra.mxu0 %v3247
  %3677 = vmatmul.bf16.gmra.mxu0 %v344
  %v3678 = vpop.f32.mrf.mxu0
  %v3679 = vadd.f32 %v3666, %v3678
  %v3680 = vpop.f32.mrf.mxu0
  %3681 = vdwg.mxu0
  %3682 = vmatpush.bf16.msra.mxu0 %v3083
  %3683 = vmatpush.bf16.msra.mxu0 %v3078
  %3684 = vmatpush.bf16.msra.mxu0 %v3073
  %3685 = vmatpush.bf16.msra.mxu0 %v3068
  %3686 = vmatpush.bf16.msra.mxu0 %v3063
  %3687 = vmatpush.bf16.msra.mxu0 %v3058
  %3688 = vmatpush.bf16.msra.mxu0 %v3053
  %3689 = vmatpush.bf16.msra.mxu0 %v3048
  %3690 = vmatmul.bf16.gmra.mxu0 %v339
  %v3691 = vpop.f32.mrf.mxu0
  %v3692 = vadd.f32 0.0, %v3691
  %v3693 = vpop.f32.mrf.mxu0
  %3694 = vdwg.mxu0
  %3695 = vmatpush.bf16.msra.mxu0 %v3123
  %3696 = vmatpush.bf16.msra.mxu0 %v3118
  %3697 = vmatpush.bf16.msra.mxu0 %v3113
  %3698 = vmatpush.bf16.msra.mxu0 %v3108
  %3699 = vmatpush.bf16.msra.mxu0 %v3103
  %3700 = vmatpush.bf16.msra.mxu0 %v3098
  %3701 = vmatpush.bf16.msra.mxu0 %v3093
  %3702 = vmatpush.bf16.msra.mxu0 %v3088
  %3703 = vmatmul.bf16.gmra.mxu0 %v340
  %v3704 = vpop.f32.mrf.mxu0
  %v3705 = vadd.f32 %v3692, %v3704
  %v3706 = vpop.f32.mrf.mxu0
  %3707 = vdwg.mxu0
  %3708 = vmatpush.bf16.msra.mxu0 %v3163
  %3709 = vmatpush.bf16.msra.mxu0 %v3158
  %3710 = vmatpush.bf16.msra.mxu0 %v3153
  %3711 = vmatpush.bf16.msra.mxu0 %v3148
  %3712 = vmatpush.bf16.msra.mxu0 %v3143
  %3713 = vmatpush.bf16.msra.mxu0 %v3138
  %3714 = vmatpush.bf16.msra.mxu0 %v3133
  %3715 = vmatpush.bf16.msra.mxu0 %v3128
  %3716 = vmatmul.bf16.gmra.mxu0 %v341
  %v3717 = vpop.f32.mrf.mxu0
  %v3718 = vadd.f32 %v3705, %v3717
  %v3719 = vpop.f32.mrf.mxu0
  %3720 = vdwg.mxu0
  %3721 = vmatpush.bf16.msra.mxu0 %v3203
  %3722 = vmatpush.bf16.msra.mxu0 %v3198
  %3723 = vmatpush.bf16.msra.mxu0 %v3193
  %3724 = vmatpush.bf16.msra.mxu0 %v3188
  %3725 = vmatpush.bf16.msra.mxu0 %v3183
  %3726 = vmatpush.bf16.msra.mxu0 %v3178
  %3727 = vmatpush.bf16.msra.mxu0 %v3173
  %3728 = vmatpush.bf16.msra.mxu0 %v3168
  %3729 = vmatmul.bf16.gmra.mxu0 %v342
  %v3730 = vpop.f32.mrf.mxu0
  %v3731 = vadd.f32 %v3718, %v3730
  %v3732 = vpop.f32.mrf.mxu0
  %3733 = vdwg.mxu0
  %3734 = vmatpush.bf16.msra.mxu0 %v3243
  %3735 = vmatpush.bf16.msra.mxu0 %v3238
  %3736 = vmatpush.bf16.msra.mxu0 %v3233
  %3737 = vmatpush.bf16.msra.mxu0 %v3228
  %3738 = vmatpush.bf16.msra.mxu0 %v3223
  %3739 = vmatpush.bf16.msra.mxu0 %v3218
  %3740 = vmatpush.bf16.msra.mxu0 %v3213
  %3741 = vmatpush.bf16.msra.mxu0 %v3208
  %3742 = vmatmul.bf16.gmra.mxu0 %v343
  %v3743 = vpop.f32.mrf.mxu0
  %v3744 = vadd.f32 %v3731, %v3743
  %v3745 = vpop.f32.mrf.mxu0
  %3746 = vdwg.mxu0
  %3747 = vmatpush.bf16.msra.mxu0 %v3283
  %3748 = vmatpush.bf16.msra.mxu0 %v3278
  %3749 = vmatpush.bf16.msra.mxu0 %v3273
  %3750 = vmatpush.bf16.msra.mxu0 %v3268
  %3751 = vmatpush.bf16.msra.mxu0 %v3263
  %3752 = vmatpush.bf16.msra.mxu0 %v3258
  %3753 = vmatpush.bf16.msra.mxu0 %v3253
  %3754 = vmatpush.bf16.msra.mxu0 %v3248
  %3755 = vmatmul.bf16.gmra.mxu0 %v344
  %v3756 = vpop.f32.mrf.mxu0
  %v3757 = vadd.f32 %v3744, %v3756
  %v3758 = vpop.f32.mrf.mxu0
  %3759 = vdwg.mxu0
  %3760 = vmatpush.bf16.msra.mxu0 %v3084
  %3761 = vmatpush.bf16.msra.mxu0 %v3079
  %3762 = vmatpush.bf16.msra.mxu0 %v3074
  %3763 = vmatpush.bf16.msra.mxu0 %v3069
  %3764 = vmatpush.bf16.msra.mxu0 %v3064
  %3765 = vmatpush.bf16.msra.mxu0 %v3059
  %3766 = vmatpush.bf16.msra.mxu0 %v3054
  %3767 = vmatpush.bf16.msra.mxu0 %v3049
  %3768 = vmatmul.bf16.gmra.mxu0 %v339
  %v3769 = vpop.f32.mrf.mxu0
  %v3770 = vadd.f32 0.0, %v3769
  %v3771 = vpop.f32.mrf.mxu0
  %3772 = vdwg.mxu0
  %3773 = vmatpush.bf16.msra.mxu0 %v3124
  %3774 = vmatpush.bf16.msra.mxu0 %v3119
  %3775 = vmatpush.bf16.msra.mxu0 %v3114
  %3776 = vmatpush.bf16.msra.mxu0 %v3109
  %3777 = vmatpush.bf16.msra.mxu0 %v3104
  %3778 = vmatpush.bf16.msra.mxu0 %v3099
  %3779 = vmatpush.bf16.msra.mxu0 %v3094
  %3780 = vmatpush.bf16.msra.mxu0 %v3089
  %3781 = vmatmul.bf16.gmra.mxu0 %v340
  %v3782 = vpop.f32.mrf.mxu0
  %v3783 = vadd.f32 %v3770, %v3782
  %v3784 = vpop.f32.mrf.mxu0
  %3785 = vdwg.mxu0
  %3786 = vmatpush.bf16.msra.mxu0 %v3164
  %3787 = vmatpush.bf16.msra.mxu0 %v3159
  %3788 = vmatpush.bf16.msra.mxu0 %v3154
  %3789 = vmatpush.bf16.msra.mxu0 %v3149
  %3790 = vmatpush.bf16.msra.mxu0 %v3144
  %3791 = vmatpush.bf16.msra.mxu0 %v3139
  %3792 = vmatpush.bf16.msra.mxu0 %v3134
  %3793 = vmatpush.bf16.msra.mxu0 %v3129
  %3794 = vmatmul.bf16.gmra.mxu0 %v341
  %v3795 = vpop.f32.mrf.mxu0
  %v3796 = vadd.f32 %v3783, %v3795
  %v3797 = vpop.f32.mrf.mxu0
  %3798 = vdwg.mxu0
  %3799 = vmatpush.bf16.msra.mxu0 %v3204
  %3800 = vmatpush.bf16.msra.mxu0 %v3199
  %3801 = vmatpush.bf16.msra.mxu0 %v3194
  %3802 = vmatpush.bf16.msra.mxu0 %v3189
  %3803 = vmatpush.bf16.msra.mxu0 %v3184
  %3804 = vmatpush.bf16.msra.mxu0 %v3179
  %3805 = vmatpush.bf16.msra.mxu0 %v3174
  %3806 = vmatpush.bf16.msra.mxu0 %v3169
  %3807 = vmatmul.bf16.gmra.mxu0 %v342
  %v3808 = vpop.f32.mrf.mxu0
  %v3809 = vadd.f32 %v3796, %v3808
  %v3810 = vpop.f32.mrf.mxu0
  %3811 = vdwg.mxu0
  %3812 = vmatpush.bf16.msra.mxu0 %v3244
  %3813 = vmatpush.bf16.msra.mxu0 %v3239
  %3814 = vmatpush.bf16.msra.mxu0 %v3234
  %3815 = vmatpush.bf16.msra.mxu0 %v3229
  %3816 = vmatpush.bf16.msra.mxu0 %v3224
  %3817 = vmatpush.bf16.msra.mxu0 %v3219
  %3818 = vmatpush.bf16.msra.mxu0 %v3214
  %3819 = vmatpush.bf16.msra.mxu0 %v3209
  %3820 = vmatmul.bf16.gmra.mxu0 %v343
  %v3821 = vpop.f32.mrf.mxu0
  %v3822 = vadd.f32 %v3809, %v3821
  %v3823 = vpop.f32.mrf.mxu0
  %3824 = vdwg.mxu0
  %3825 = vmatpush.bf16.msra.mxu0 %v3284
  %3826 = vmatpush.bf16.msra.mxu0 %v3279
  %3827 = vmatpush.bf16.msra.mxu0 %v3274
  %3828 = vmatpush.bf16.msra.mxu0 %v3269
  %3829 = vmatpush.bf16.msra.mxu0 %v3264
  %3830 = vmatpush.bf16.msra.mxu0 %v3259
  %3831 = vmatpush.bf16.msra.mxu0 %v3254
  %3832 = vmatpush.bf16.msra.mxu0 %v3249
  %3833 = vmatmul.bf16.gmra.mxu0 %v344
  %v3834 = vpop.f32.mrf.mxu0
  %v3835 = vadd.f32 %v3822, %v3834
  %v3836 = vpop.f32.mrf.mxu0
  %3837 = vdwg.mxu0
  %3838 = vmatpush.bf16.msra.mxu0 %v3085
  %3839 = vmatpush.bf16.msra.mxu0 %v3080
  %3840 = vmatpush.bf16.msra.mxu0 %v3075
  %3841 = vmatpush.bf16.msra.mxu0 %v3070
  %3842 = vmatpush.bf16.msra.mxu0 %v3065
  %3843 = vmatpush.bf16.msra.mxu0 %v3060
  %3844 = vmatpush.bf16.msra.mxu0 %v3055
  %3845 = vmatpush.bf16.msra.mxu0 %v3050
  %3846 = vmatmul.bf16.gmra.mxu0 %v339
  %v3847 = vpop.f32.mrf.mxu0
  %v3848 = vadd.f32 0.0, %v3847
  %v3849 = vpop.f32.mrf.mxu0
  %3850 = vdwg.mxu0
  %3851 = vmatpush.bf16.msra.mxu0 %v3125
  %3852 = vmatpush.bf16.msra.mxu0 %v3120
  %3853 = vmatpush.bf16.msra.mxu0 %v3115
  %3854 = vmatpush.bf16.msra.mxu0 %v3110
  %3855 = vmatpush.bf16.msra.mxu0 %v3105
  %3856 = vmatpush.bf16.msra.mxu0 %v3100
  %3857 = vmatpush.bf16.msra.mxu0 %v3095
  %3858 = vmatpush.bf16.msra.mxu0 %v3090
  %3859 = vmatmul.bf16.gmra.mxu0 %v340
  %v3860 = vpop.f32.mrf.mxu0
  %v3861 = vadd.f32 %v3848, %v3860
  %v3862 = vpop.f32.mrf.mxu0
  %3863 = vdwg.mxu0
  %3864 = vmatpush.bf16.msra.mxu0 %v3165
  %3865 = vmatpush.bf16.msra.mxu0 %v3160
  %3866 = vmatpush.bf16.msra.mxu0 %v3155
  %3867 = vmatpush.bf16.msra.mxu0 %v3150
  %3868 = vmatpush.bf16.msra.mxu0 %v3145
  %3869 = vmatpush.bf16.msra.mxu0 %v3140
  %3870 = vmatpush.bf16.msra.mxu0 %v3135
  %3871 = vmatpush.bf16.msra.mxu0 %v3130
  %3872 = vmatmul.bf16.gmra.mxu0 %v341
  %v3873 = vpop.f32.mrf.mxu0
  %v3874 = vadd.f32 %v3861, %v3873
  %v3875 = vpop.f32.mrf.mxu0
  %3876 = vdwg.mxu0
  %3877 = vmatpush.bf16.msra.mxu0 %v3205
  %3878 = vmatpush.bf16.msra.mxu0 %v3200
  %3879 = vmatpush.bf16.msra.mxu0 %v3195
  %3880 = vmatpush.bf16.msra.mxu0 %v3190
  %3881 = vmatpush.bf16.msra.mxu0 %v3185
  %3882 = vmatpush.bf16.msra.mxu0 %v3180
  %3883 = vmatpush.bf16.msra.mxu0 %v3175
  %3884 = vmatpush.bf16.msra.mxu0 %v3170
  %3885 = vmatmul.bf16.gmra.mxu0 %v342
  %v3886 = vpop.f32.mrf.mxu0
  %v3887 = vadd.f32 %v3874, %v3886
  %v3888 = vpop.f32.mrf.mxu0
  %3889 = vdwg.mxu0
  %3890 = vmatpush.bf16.msra.mxu0 %v3245
  %3891 = vmatpush.bf16.msra.mxu0 %v3240
  %3892 = vmatpush.bf16.msra.mxu0 %v3235
  %3893 = vmatpush.bf16.msra.mxu0 %v3230
  %3894 = vmatpush.bf16.msra.mxu0 %v3225
  %3895 = vmatpush.bf16.msra.mxu0 %v3220
  %3896 = vmatpush.bf16.msra.mxu0 %v3215
  %3897 = vmatpush.bf16.msra.mxu0 %v3210
  %3898 = vmatmul.bf16.gmra.mxu0 %v343
  %v3899 = vpop.f32.mrf.mxu0
  %v3900 = vadd.f32 %v3887, %v3899
  %v3901 = vpop.f32.mrf.mxu0
  %3902 = vdwg.mxu0
  %3903 = vmatpush.bf16.msra.mxu0 %v3285
  %3904 = vmatpush.bf16.msra.mxu0 %v3280
  %3905 = vmatpush.bf16.msra.mxu0 %v3275
  %3906 = vmatpush.bf16.msra.mxu0 %v3270
  %3907 = vmatpush.bf16.msra.mxu0 %v3265
  %3908 = vmatpush.bf16.msra.mxu0 %v3260
  %3909 = vmatpush.bf16.msra.mxu0 %v3255
  %3910 = vmatpush.bf16.msra.mxu0 %v3250
  %3911 = vmatmul.bf16.gmra.mxu0 %v344
  %v3912 = vpop.f32.mrf.mxu0
  %v3913 = vadd.f32 %v3900, %v3912
  %v3914 = vpop.f32.mrf.mxu0
  %3915 = vdwg.mxu0
  %v3916 = vmax.f32 %v1674, %v3601
  %v3917 = vmax.f32 %v1752, %v3679
  %v3918 = vmax.f32 %v1830, %v3757
  %v3919 = vmax.f32 %v1908, %v3835
  %v3920 = vmax.f32 %v1986, %v3913
  %s3921 = scalar_lea.vmem %s1, 3840
  %v3922 = vld [vmem:[%s3921] sm:$0xff]
  %v3923 = vld [vmem:[%s3921 + $0x8] sm:$0xff]
  %v3924 = vld [vmem:[%s3921 + $0x10] sm:$0xf]
  %v3925 = vld [vmem:[%s3921 + $0x14] sm:$0xff]
  %v3926 = vld [vmem:[%s3921 + $0x1c] sm:$0xff]
  %v3927 = vld [vmem:[%s3921 + $0x24] sm:$0xf]
  %v3928 = vld [vmem:[%s3921 + $0x28] sm:$0xff]
  %v3929 = vld [vmem:[%s3921 + $0x30] sm:$0xff]
  %v3930 = vld [vmem:[%s3921 + $0x38] sm:$0xf]
  %v3931 = vld [vmem:[%s3921 + $0x3c] sm:$0xff]
  %v3932 = vld [vmem:[%s3921 + $0x44] sm:$0xff]
  %v3933 = vld [vmem:[%s3921 + $0x4c] sm:$0xf]
  %v3934 = vld [vmem:[%s3921 + $0x50] sm:$0xff]
  %v3935 = vld [vmem:[%s3921 + $0x58] sm:$0xff]
  %v3936 = vld [vmem:[%s3921 + $0x60] sm:$0xf]
  %v3937 = vld [vmem:[%s3921 + $0x64] sm:$0xff]
  %v3938 = vld [vmem:[%s3921 + $0x6c] sm:$0xff]
  %v3939 = vld [vmem:[%s3921 + $0x74] sm:$0xf]
  %v3940 = vld [vmem:[%s3921 + $0x78] sm:$0xff]
  %v3941 = vld [vmem:[%s3921 + $0x80] sm:$0xff]
  %v3942 = vld [vmem:[%s3921 + $0x88] sm:$0xf]
  %v3943 = vld [vmem:[%s3921 + $0x8c] sm:$0xff]
  %v3944 = vld [vmem:[%s3921 + $0x94] sm:$0xff]
  %v3945 = vld [vmem:[%s3921 + $0x9c] sm:$0xf]
  %v3946 = vld [vmem:[%s3921 + $0xa0] sm:$0xff]
  %v3947 = vld [vmem:[%s3921 + $0xa8] sm:$0xff]
  %v3948 = vld [vmem:[%s3921 + $0xb0] sm:$0xf]
  %v3949 = vld [vmem:[%s3921 + $0xb4] sm:$0xff]
  %v3950 = vld [vmem:[%s3921 + $0xbc] sm:$0xff]
  %v3951 = vld [vmem:[%s3921 + $0xc4] sm:$0xf]
  %v3952 = vld [vmem:[%s3921 + $0xc8] sm:$0xff]
  %v3953 = vld [vmem:[%s3921 + $0xd0] sm:$0xff]
  %v3954 = vld [vmem:[%s3921 + $0xd8] sm:$0xf]
  %v3955 = vld [vmem:[%s3921 + $0xdc] sm:$0xff]
  %v3956 = vld [vmem:[%s3921 + $0xe4] sm:$0xff]
  %v3957 = vld [vmem:[%s3921 + $0xec] sm:$0xf]
  %v3958 = vld [vmem:[%s3921 + $0xf0] sm:$0xff]
  %v3959 = vld [vmem:[%s3921 + $0xf8] sm:$0xff]
  %v3960 = vld [vmem:[%s3921 + $0x100] sm:$0xf]
  %v3961 = vld [vmem:[%s3921 + $0x104] sm:$0xff]
  %v3962 = vld [vmem:[%s3921 + $0x10c] sm:$0xff]
  %v3963 = vld [vmem:[%s3921 + $0x114] sm:$0xf]
  %v3964 = vld [vmem:[%s3921 + $0x118] sm:$0xff]
  %v3965 = vld [vmem:[%s3921 + $0x120] sm:$0xff]
  %v3966 = vld [vmem:[%s3921 + $0x128] sm:$0xf]
  %v3967 = vld [vmem:[%s3921 + $0x12c] sm:$0xff]
  %v3968 = vld [vmem:[%s3921 + $0x134] sm:$0xff]
  %v3969 = vld [vmem:[%s3921 + $0x13c] sm:$0xf]
  %v3970 = vld [vmem:[%s3921 + $0x140] sm:$0xff]
  %v3971 = vld [vmem:[%s3921 + $0x148] sm:$0xff]
  %v3972 = vld [vmem:[%s3921 + $0x150] sm:$0xf]
  %v3973 = vld [vmem:[%s3921 + $0x154] sm:$0xff]
  %v3974 = vld [vmem:[%s3921 + $0x15c] sm:$0xff]
  %v3975 = vld [vmem:[%s3921 + $0x164] sm:$0xf]
  %v3976 = vld [vmem:[%s3921 + $0x168] sm:$0xff]
  %v3977 = vld [vmem:[%s3921 + $0x170] sm:$0xff]
  %v3978 = vld [vmem:[%s3921 + $0x178] sm:$0xf]
  %v3979 = vld [vmem:[%s3921 + $0x17c] sm:$0xff]
  %v3980 = vld [vmem:[%s3921 + $0x184] sm:$0xff]
  %v3981 = vld [vmem:[%s3921 + $0x18c] sm:$0xf]
  %v3982 = vld [vmem:[%s3921 + $0x190] sm:$0xff]
  %v3983 = vld [vmem:[%s3921 + $0x198] sm:$0xff]
  %v3984 = vld [vmem:[%s3921 + $0x1a0] sm:$0xf]
  %v3985 = vld [vmem:[%s3921 + $0x1a4] sm:$0xff]
  %v3986 = vld [vmem:[%s3921 + $0x1ac] sm:$0xff]
  %v3987 = vld [vmem:[%s3921 + $0x1b4] sm:$0xf]
  %v3988 = vld [vmem:[%s3921 + $0x1b8] sm:$0xff]
  %v3989 = vld [vmem:[%s3921 + $0x1c0] sm:$0xff]
  %v3990 = vld [vmem:[%s3921 + $0x1c8] sm:$0xf]
  %v3991 = vld [vmem:[%s3921 + $0x1cc] sm:$0xff]
  %v3992 = vld [vmem:[%s3921 + $0x1d4] sm:$0xff]
  %v3993 = vld [vmem:[%s3921 + $0x1dc] sm:$0xf]
  %v3994 = vld [vmem:[%s3921 + $0x1e0] sm:$0xff]
  %v3995 = vld [vmem:[%s3921 + $0x1e8] sm:$0xff]
  %v3996 = vld [vmem:[%s3921 + $0x1f0] sm:$0xf]
  %v3997 = vld [vmem:[%s3921 + $0x1f4] sm:$0xff]
  %v3998 = vld [vmem:[%s3921 + $0x1fc] sm:$0xff]
  %v3999 = vld [vmem:[%s3921 + $0x204] sm:$0xf]
  %v4000 = vld [vmem:[%s3921 + $0x208] sm:$0xff]
  %v4001 = vld [vmem:[%s3921 + $0x210] sm:$0xff]
  %v4002 = vld [vmem:[%s3921 + $0x218] sm:$0xf]
  %v4003 = vld [vmem:[%s3921 + $0x21c] sm:$0xff]
  %v4004 = vld [vmem:[%s3921 + $0x224] sm:$0xff]
  %v4005 = vld [vmem:[%s3921 + $0x22c] sm:$0xf]
  %v4006 = vld [vmem:[%s3921 + $0x230] sm:$0xff]
  %v4007 = vld [vmem:[%s3921 + $0x238] sm:$0xff]
  %v4008 = vld [vmem:[%s3921 + $0x240] sm:$0xf]
  %v4009 = vld [vmem:[%s3921 + $0x244] sm:$0xff]
  %v4010 = vld [vmem:[%s3921 + $0x24c] sm:$0xff]
  %v4011 = vld [vmem:[%s3921 + $0x254] sm:$0xf]
  %v4012 = vld [vmem:[%s3921 + $0x258] sm:$0xff]
  %v4013 = vld [vmem:[%s3921 + $0x260] sm:$0xff]
  %v4014 = vld [vmem:[%s3921 + $0x268] sm:$0xf]
  %v4015 = vld [vmem:[%s3921 + $0x26c] sm:$0xff]
  %v4016 = vld [vmem:[%s3921 + $0x274] sm:$0xff]
  %v4017 = vld [vmem:[%s3921 + $0x27c] sm:$0xf]
  %v4018 = vld [vmem:[%s3921 + $0x280] sm:$0xff]
  %v4019 = vld [vmem:[%s3921 + $0x288] sm:$0xff]
  %v4020 = vld [vmem:[%s3921 + $0x290] sm:$0xf]
  %v4021 = vld [vmem:[%s3921 + $0x294] sm:$0xff]
  %v4022 = vld [vmem:[%s3921 + $0x29c] sm:$0xff]
  %v4023 = vld [vmem:[%s3921 + $0x2a4] sm:$0xf]
  %v4024 = vld [vmem:[%s3921 + $0x2a8] sm:$0xff]
  %v4025 = vld [vmem:[%s3921 + $0x2b0] sm:$0xff]
  %v4026 = vld [vmem:[%s3921 + $0x2b8] sm:$0xf]
  %v4027 = vld [vmem:[%s3921 + $0x2bc] sm:$0xff]
  %v4028 = vld [vmem:[%s3921 + $0x2c4] sm:$0xff]
  %v4029 = vld [vmem:[%s3921 + $0x2cc] sm:$0xf]
  %v4030 = vld [vmem:[%s3921 + $0x2d0] sm:$0xff]
  %v4031 = vld [vmem:[%s3921 + $0x2d8] sm:$0xff]
  %v4032 = vld [vmem:[%s3921 + $0x2e0] sm:$0xf]
  %v4033 = vld [vmem:[%s3921 + $0x2e4] sm:$0xff]
  %v4034 = vld [vmem:[%s3921 + $0x2ec] sm:$0xff]
  %v4035 = vld [vmem:[%s3921 + $0x2f4] sm:$0xf]
  %v4036 = vld [vmem:[%s3921 + $0x2f8] sm:$0xff]
  %v4037 = vld [vmem:[%s3921 + $0x300] sm:$0xff]
  %v4038 = vld [vmem:[%s3921 + $0x308] sm:$0xf]
  %v4039 = vld [vmem:[%s3921 + $0x30c] sm:$0xff]
  %v4040 = vld [vmem:[%s3921 + $0x314] sm:$0xff]
  %v4041 = vld [vmem:[%s3921 + $0x31c] sm:$0xf]
  %v4042 = vld [vmem:[%s3921 + $0x320] sm:$0xff]
  %v4043 = vld [vmem:[%s3921 + $0x328] sm:$0xff]
  %v4044 = vld [vmem:[%s3921 + $0x330] sm:$0xf]
  %v4045 = vld [vmem:[%s3921 + $0x334] sm:$0xff]
  %v4046 = vld [vmem:[%s3921 + $0x33c] sm:$0xff]
  %v4047 = vld [vmem:[%s3921 + $0x344] sm:$0xf]
  %v4048 = vld [vmem:[%s3921 + $0x348] sm:$0xff]
  %v4049 = vld [vmem:[%s3921 + $0x350] sm:$0xff]
  %v4050 = vld [vmem:[%s3921 + $0x358] sm:$0xf]
  %v4051 = vld [vmem:[%s3921 + $0x35c] sm:$0xff]
  %v4052 = vld [vmem:[%s3921 + $0x364] sm:$0xff]
  %v4053 = vld [vmem:[%s3921 + $0x36c] sm:$0xf]
  %v4054 = vld [vmem:[%s3921 + $0x370] sm:$0xff]
  %v4055 = vld [vmem:[%s3921 + $0x378] sm:$0xff]
  %v4056 = vld [vmem:[%s3921 + $0x380] sm:$0xf]
  %v4057 = vld [vmem:[%s3921 + $0x384] sm:$0xff]
  %v4058 = vld [vmem:[%s3921 + $0x38c] sm:$0xff]
  %v4059 = vld [vmem:[%s3921 + $0x394] sm:$0xf]
  %v4060 = vld [vmem:[%s3921 + $0x398] sm:$0xff]
  %v4061 = vld [vmem:[%s3921 + $0x3a0] sm:$0xff]
  %v4062 = vld [vmem:[%s3921 + $0x3a8] sm:$0xf]
  %v4063 = vld [vmem:[%s3921 + $0x3ac] sm:$0xff]
  %v4064 = vld [vmem:[%s3921 + $0x3b4] sm:$0xff]
  %v4065 = vld [vmem:[%s3921 + $0x3bc] sm:$0xf]
  %v4066 = vld [vmem:[%s3921 + $0x3c0] sm:$0xff]
  %v4067 = vld [vmem:[%s3921 + $0x3c8] sm:$0xff]
  %v4068 = vld [vmem:[%s3921 + $0x3d0] sm:$0xf]
  %v4069 = vld [vmem:[%s3921 + $0x3d4] sm:$0xff]
  %v4070 = vld [vmem:[%s3921 + $0x3dc] sm:$0xff]
  %v4071 = vld [vmem:[%s3921 + $0x3e4] sm:$0xf]
  %v4072 = vld [vmem:[%s3921 + $0x3e8] sm:$0xff]
  %v4073 = vld [vmem:[%s3921 + $0x3f0] sm:$0xff]
  %v4074 = vld [vmem:[%s3921 + $0x3f8] sm:$0xf]
  %v4075 = vld [vmem:[%s3921 + $0x3fc] sm:$0xff]
  %v4076 = vld [vmem:[%s3921 + $0x404] sm:$0xff]
  %v4077 = vld [vmem:[%s3921 + $0x40c] sm:$0xf]
  %v4078 = vld [vmem:[%s3921 + $0x410] sm:$0xff]
  %v4079 = vld [vmem:[%s3921 + $0x418] sm:$0xff]
  %v4080 = vld [vmem:[%s3921 + $0x420] sm:$0xf]
  %v4081 = vld [vmem:[%s3921 + $0x424] sm:$0xff]
  %v4082 = vld [vmem:[%s3921 + $0x42c] sm:$0xff]
  %v4083 = vld [vmem:[%s3921 + $0x434] sm:$0xf]
  %v4084 = vld [vmem:[%s3921 + $0x438] sm:$0xff]
  %v4085 = vld [vmem:[%s3921 + $0x440] sm:$0xff]
  %v4086 = vld [vmem:[%s3921 + $0x448] sm:$0xf]
  %v4087 = vld [vmem:[%s3921 + $0x44c] sm:$0xff]
  %v4088 = vld [vmem:[%s3921 + $0x454] sm:$0xff]
  %v4089 = vld [vmem:[%s3921 + $0x45c] sm:$0xf]
  %v4090 = vld [vmem:[%s3921 + $0x460] sm:$0xff]
  %v4091 = vld [vmem:[%s3921 + $0x468] sm:$0xff]
  %v4092 = vld [vmem:[%s3921 + $0x470] sm:$0xf]
  %v4093 = vld [vmem:[%s3921 + $0x474] sm:$0xff]
  %v4094 = vld [vmem:[%s3921 + $0x47c] sm:$0xff]
  %v4095 = vld [vmem:[%s3921 + $0x484] sm:$0xf]
  %v4096 = vld [vmem:[%s3921 + $0x488] sm:$0xff]
  %v4097 = vld [vmem:[%s3921 + $0x490] sm:$0xff]
  %v4098 = vld [vmem:[%s3921 + $0x498] sm:$0xf]
  %v4099 = vld [vmem:[%s3921 + $0x49c] sm:$0xff]
  %v4100 = vld [vmem:[%s3921 + $0x4a4] sm:$0xff]
  %v4101 = vld [vmem:[%s3921 + $0x4ac] sm:$0xf]
  %v4102 = vld [vmem:[%s3921 + $0x4b0] sm:$0xff]
  %v4103 = vld [vmem:[%s3921 + $0x4b8] sm:$0xff]
  %v4104 = vld [vmem:[%s3921 + $0x4c0] sm:$0xf]
  %v4105 = vld [vmem:[%s3921 + $0x4c4] sm:$0xff]
  %v4106 = vld [vmem:[%s3921 + $0x4cc] sm:$0xff]
  %v4107 = vld [vmem:[%s3921 + $0x4d4] sm:$0xf]
  %v4108 = vld [vmem:[%s3921 + $0x4d8] sm:$0xff]
  %v4109 = vld [vmem:[%s3921 + $0x4e0] sm:$0xff]
  %v4110 = vld [vmem:[%s3921 + $0x4e8] sm:$0xf]
  %v4111 = vld [vmem:[%s3921 + $0x4ec] sm:$0xff]
  %v4112 = vld [vmem:[%s3921 + $0x4f4] sm:$0xff]
  %v4113 = vld [vmem:[%s3921 + $0x4fc] sm:$0xf]
  %v4114 = vld [vmem:[%s3921 + $0x500] sm:$0xff]
  %v4115 = vld [vmem:[%s3921 + $0x508] sm:$0xff]
  %v4116 = vld [vmem:[%s3921 + $0x510] sm:$0xf]
  %v4117 = vld [vmem:[%s3921 + $0x514] sm:$0xff]
  %v4118 = vld [vmem:[%s3921 + $0x51c] sm:$0xff]
  %v4119 = vld [vmem:[%s3921 + $0x524] sm:$0xf]
  %v4120 = vld [vmem:[%s3921 + $0x528] sm:$0xff]
  %v4121 = vld [vmem:[%s3921 + $0x530] sm:$0xff]
  %v4122 = vld [vmem:[%s3921 + $0x538] sm:$0xf]
  %v4123 = vld [vmem:[%s3921 + $0x53c] sm:$0xff]
  %v4124 = vld [vmem:[%s3921 + $0x544] sm:$0xff]
  %v4125 = vld [vmem:[%s3921 + $0x54c] sm:$0xf]
  %v4126 = vld [vmem:[%s3921 + $0x550] sm:$0xff]
  %v4127 = vld [vmem:[%s3921 + $0x558] sm:$0xff]
  %v4128 = vld [vmem:[%s3921 + $0x560] sm:$0xf]
  %v4129 = vld [vmem:[%s3921 + $0x564] sm:$0xff]
  %v4130 = vld [vmem:[%s3921 + $0x56c] sm:$0xff]
  %v4131 = vld [vmem:[%s3921 + $0x574] sm:$0xf]
  %v4132 = vld [vmem:[%s3921 + $0x578] sm:$0xff]
  %v4133 = vld [vmem:[%s3921 + $0x580] sm:$0xff]
  %v4134 = vld [vmem:[%s3921 + $0x588] sm:$0xf]
  %v4135 = vld [vmem:[%s3921 + $0x58c] sm:$0xff]
  %v4136 = vld [vmem:[%s3921 + $0x594] sm:$0xff]
  %v4137 = vld [vmem:[%s3921 + $0x59c] sm:$0xf]
  %v4138 = vld [vmem:[%s3921 + $0x5a0] sm:$0xff]
  %v4139 = vld [vmem:[%s3921 + $0x5a8] sm:$0xff]
  %v4140 = vld [vmem:[%s3921 + $0x5b0] sm:$0xf]
  %v4141 = vld [vmem:[%s3921 + $0x5b4] sm:$0xff]
  %v4142 = vld [vmem:[%s3921 + $0x5bc] sm:$0xff]
  %v4143 = vld [vmem:[%s3921 + $0x5c4] sm:$0xf]
  %v4144 = vld [vmem:[%s3921 + $0x5c8] sm:$0xff]
  %v4145 = vld [vmem:[%s3921 + $0x5d0] sm:$0xff]
  %v4146 = vld [vmem:[%s3921 + $0x5d8] sm:$0xf]
  %v4147 = vld [vmem:[%s3921 + $0x5dc] sm:$0xff]
  %v4148 = vld [vmem:[%s3921 + $0x5e4] sm:$0xff]
  %v4149 = vld [vmem:[%s3921 + $0x5ec] sm:$0xf]
  %v4150 = vld [vmem:[%s3921 + $0x5f0] sm:$0xff]
  %v4151 = vld [vmem:[%s3921 + $0x5f8] sm:$0xff]
  %v4152 = vld [vmem:[%s3921 + $0x600] sm:$0xf]
  %v4153 = vld [vmem:[%s3921 + $0x604] sm:$0xff]
  %v4154 = vld [vmem:[%s3921 + $0x60c] sm:$0xff]
  %v4155 = vld [vmem:[%s3921 + $0x614] sm:$0xf]
  %v4156 = vld [vmem:[%s3921 + $0x618] sm:$0xff]
  %v4157 = vld [vmem:[%s3921 + $0x620] sm:$0xff]
  %v4158 = vld [vmem:[%s3921 + $0x628] sm:$0xf]
  %v4159 = vld [vmem:[%s3921 + $0x62c] sm:$0xff]
  %v4160 = vld [vmem:[%s3921 + $0x634] sm:$0xff]
  %v4161 = vld [vmem:[%s3921 + $0x63c] sm:$0xf]
  %v4162 = vld [vmem:[%s3921 + $0x640] sm:$0xff]
  %v4163 = vld [vmem:[%s3921 + $0x648] sm:$0xff]
  %v4164 = vld [vmem:[%s3921 + $0x650] sm:$0xf]
  %v4165 = vld [vmem:[%s3921 + $0x654] sm:$0xff]
  %v4166 = vld [vmem:[%s3921 + $0x65c] sm:$0xff]
  %v4167 = vld [vmem:[%s3921 + $0x664] sm:$0xf]
  %v4168 = vld [vmem:[%s3921 + $0x668] sm:$0xff]
  %v4169 = vld [vmem:[%s3921 + $0x670] sm:$0xff]
  %v4170 = vld [vmem:[%s3921 + $0x678] sm:$0xf]
  %v4171 = vld [vmem:[%s3921 + $0x67c] sm:$0xff]
  %v4172 = vld [vmem:[%s3921 + $0x684] sm:$0xff]
  %v4173 = vld [vmem:[%s3921 + $0x68c] sm:$0xf]
  %v4174 = vld [vmem:[%s3921 + $0x690] sm:$0xff]
  %v4175 = vld [vmem:[%s3921 + $0x698] sm:$0xff]
  %v4176 = vld [vmem:[%s3921 + $0x6a0] sm:$0xf]
  %v4177 = vld [vmem:[%s3921 + $0x6a4] sm:$0xff]
  %v4178 = vld [vmem:[%s3921 + $0x6ac] sm:$0xff]
  %v4179 = vld [vmem:[%s3921 + $0x6b4] sm:$0xf]
  %v4180 = vld [vmem:[%s3921 + $0x6b8] sm:$0xff]
  %v4181 = vld [vmem:[%s3921 + $0x6c0] sm:$0xff]
  %v4182 = vld [vmem:[%s3921 + $0x6c8] sm:$0xf]
  %v4183 = vld [vmem:[%s3921 + $0x6cc] sm:$0xff]
  %v4184 = vld [vmem:[%s3921 + $0x6d4] sm:$0xff]
  %v4185 = vld [vmem:[%s3921 + $0x6dc] sm:$0xf]
  %v4186 = vld [vmem:[%s3921 + $0x6e0] sm:$0xff]
  %v4187 = vld [vmem:[%s3921 + $0x6e8] sm:$0xff]
  %v4188 = vld [vmem:[%s3921 + $0x6f0] sm:$0xf]
  %v4189 = vld [vmem:[%s3921 + $0x6f4] sm:$0xff]
  %v4190 = vld [vmem:[%s3921 + $0x6fc] sm:$0xff]
  %v4191 = vld [vmem:[%s3921 + $0x704] sm:$0xf]
  %v4192 = vld [vmem:[%s3921 + $0x708] sm:$0xff]
  %v4193 = vld [vmem:[%s3921 + $0x710] sm:$0xff]
  %v4194 = vld [vmem:[%s3921 + $0x718] sm:$0xf]
  %v4195 = vld [vmem:[%s3921 + $0x71c] sm:$0xff]
  %v4196 = vld [vmem:[%s3921 + $0x724] sm:$0xff]
  %v4197 = vld [vmem:[%s3921 + $0x72c] sm:$0xf]
  %v4198 = vld [vmem:[%s3921 + $0x730] sm:$0xff]
  %v4199 = vld [vmem:[%s3921 + $0x738] sm:$0xff]
  %v4200 = vld [vmem:[%s3921 + $0x740] sm:$0xf]
  %v4201 = vld [vmem:[%s3921 + $0x744] sm:$0xff]
  %v4202 = vld [vmem:[%s3921 + $0x74c] sm:$0xff]
  %v4203 = vld [vmem:[%s3921 + $0x754] sm:$0xf]
  %v4204 = vld [vmem:[%s3921 + $0x758] sm:$0xff]
  %v4205 = vld [vmem:[%s3921 + $0x760] sm:$0xff]
  %v4206 = vld [vmem:[%s3921 + $0x768] sm:$0xf]
  %v4207 = vld [vmem:[%s3921 + $0x76c] sm:$0xff]
  %v4208 = vld [vmem:[%s3921 + $0x774] sm:$0xff]
  %v4209 = vld [vmem:[%s3921 + $0x77c] sm:$0xf]
  %v4498 = vunpack.c.l.b16 %v3922
  %v4499 = vunpack.c.h.b16 %v3922
  %v4500 = vunpack.c.l.b16 %v3923
  %v4501 = vunpack.c.h.b16 %v3923
  %v4502 = vunpack.c.l.b16 %v3924
  %v4503 = vunpack.c.l.b16 %v3925
  %v4504 = vunpack.c.h.b16 %v3925
  %v4505 = vunpack.c.l.b16 %v3926
  %v4506 = vunpack.c.h.b16 %v3926
  %v4507 = vunpack.c.l.b16 %v3927
  %v4508 = vunpack.c.l.b16 %v3928
  %v4509 = vunpack.c.h.b16 %v3928
  %v4510 = vunpack.c.l.b16 %v3929
  %v4511 = vunpack.c.h.b16 %v3929
  %v4512 = vunpack.c.l.b16 %v3930
  %v4513 = vunpack.c.l.b16 %v3931
  %v4514 = vunpack.c.h.b16 %v3931
  %v4515 = vunpack.c.l.b16 %v3932
  %v4516 = vunpack.c.h.b16 %v3932
  %v4517 = vunpack.c.l.b16 %v3933
  %v4518 = vunpack.c.l.b16 %v3934
  %v4519 = vunpack.c.h.b16 %v3934
  %v4520 = vunpack.c.l.b16 %v3935
  %v4521 = vunpack.c.h.b16 %v3935
  %v4522 = vunpack.c.l.b16 %v3936
  %v4523 = vunpack.c.l.b16 %v3937
  %v4524 = vunpack.c.h.b16 %v3937
  %v4525 = vunpack.c.l.b16 %v3938
  %v4526 = vunpack.c.h.b16 %v3938
  %v4527 = vunpack.c.l.b16 %v3939
  %v4528 = vunpack.c.l.b16 %v3940
  %v4529 = vunpack.c.h.b16 %v3940
  %v4530 = vunpack.c.l.b16 %v3941
  %v4531 = vunpack.c.h.b16 %v3941
  %v4532 = vunpack.c.l.b16 %v3942
  %v4533 = vunpack.c.l.b16 %v3943
  %v4534 = vunpack.c.h.b16 %v3943
  %v4535 = vunpack.c.l.b16 %v3944
  %v4536 = vunpack.c.h.b16 %v3944
  %v4537 = vunpack.c.l.b16 %v3945
  %v4538 = vunpack.c.l.b16 %v3946
  %v4539 = vunpack.c.h.b16 %v3946
  %v4540 = vunpack.c.l.b16 %v3947
  %v4541 = vunpack.c.h.b16 %v3947
  %v4542 = vunpack.c.l.b16 %v3948
  %v4543 = vunpack.c.l.b16 %v3949
  %v4544 = vunpack.c.h.b16 %v3949
  %v4545 = vunpack.c.l.b16 %v3950
  %v4546 = vunpack.c.h.b16 %v3950
  %v4547 = vunpack.c.l.b16 %v3951
  %v4548 = vunpack.c.l.b16 %v3952
  %v4549 = vunpack.c.h.b16 %v3952
  %v4550 = vunpack.c.l.b16 %v3953
  %v4551 = vunpack.c.h.b16 %v3953
  %v4552 = vunpack.c.l.b16 %v3954
  %v4553 = vunpack.c.l.b16 %v3955
  %v4554 = vunpack.c.h.b16 %v3955
  %v4555 = vunpack.c.l.b16 %v3956
  %v4556 = vunpack.c.h.b16 %v3956
  %v4557 = vunpack.c.l.b16 %v3957
  %v4558 = vunpack.c.l.b16 %v3958
  %v4559 = vunpack.c.h.b16 %v3958
  %v4560 = vunpack.c.l.b16 %v3959
  %v4561 = vunpack.c.h.b16 %v3959
  %v4562 = vunpack.c.l.b16 %v3960
  %v4563 = vunpack.c.l.b16 %v3961
  %v4564 = vunpack.c.h.b16 %v3961
  %v4565 = vunpack.c.l.b16 %v3962
  %v4566 = vunpack.c.h.b16 %v3962
  %v4567 = vunpack.c.l.b16 %v3963
  %v4568 = vunpack.c.l.b16 %v3964
  %v4569 = vunpack.c.h.b16 %v3964
  %v4570 = vunpack.c.l.b16 %v3965
  %v4571 = vunpack.c.h.b16 %v3965
  %v4572 = vunpack.c.l.b16 %v3966
  %v4573 = vunpack.c.l.b16 %v3967
  %v4574 = vunpack.c.h.b16 %v3967
  %v4575 = vunpack.c.l.b16 %v3968
  %v4576 = vunpack.c.h.b16 %v3968
  %v4577 = vunpack.c.l.b16 %v3969
  %v4578 = vunpack.c.l.b16 %v3970
  %v4579 = vunpack.c.h.b16 %v3970
  %v4580 = vunpack.c.l.b16 %v3971
  %v4581 = vunpack.c.h.b16 %v3971
  %v4582 = vunpack.c.l.b16 %v3972
  %v4583 = vunpack.c.l.b16 %v3973
  %v4584 = vunpack.c.h.b16 %v3973
  %v4585 = vunpack.c.l.b16 %v3974
  %v4586 = vunpack.c.h.b16 %v3974
  %v4587 = vunpack.c.l.b16 %v3975
  %v4588 = vunpack.c.l.b16 %v3976
  %v4589 = vunpack.c.h.b16 %v3976
  %v4590 = vunpack.c.l.b16 %v3977
  %v4591 = vunpack.c.h.b16 %v3977
  %v4592 = vunpack.c.l.b16 %v3978
  %v4593 = vunpack.c.l.b16 %v3979
  %v4594 = vunpack.c.h.b16 %v3979
  %v4595 = vunpack.c.l.b16 %v3980
  %v4596 = vunpack.c.h.b16 %v3980
  %v4597 = vunpack.c.l.b16 %v3981
  %v4598 = vunpack.c.l.b16 %v3982
  %v4599 = vunpack.c.h.b16 %v3982
  %v4600 = vunpack.c.l.b16 %v3983
  %v4601 = vunpack.c.h.b16 %v3983
  %v4602 = vunpack.c.l.b16 %v3984
  %v4603 = vunpack.c.l.b16 %v3985
  %v4604 = vunpack.c.h.b16 %v3985
  %v4605 = vunpack.c.l.b16 %v3986
  %v4606 = vunpack.c.h.b16 %v3986
  %v4607 = vunpack.c.l.b16 %v3987
  %v4608 = vunpack.c.l.b16 %v3988
  %v4609 = vunpack.c.h.b16 %v3988
  %v4610 = vunpack.c.l.b16 %v3989
  %v4611 = vunpack.c.h.b16 %v3989
  %v4612 = vunpack.c.l.b16 %v3990
  %v4613 = vunpack.c.l.b16 %v3991
  %v4614 = vunpack.c.h.b16 %v3991
  %v4615 = vunpack.c.l.b16 %v3992
  %v4616 = vunpack.c.h.b16 %v3992
  %v4617 = vunpack.c.l.b16 %v3993
  %v4618 = vunpack.c.l.b16 %v3994
  %v4619 = vunpack.c.h.b16 %v3994
  %v4620 = vunpack.c.l.b16 %v3995
  %v4621 = vunpack.c.h.b16 %v3995
  %v4622 = vunpack.c.l.b16 %v3996
  %v4623 = vunpack.c.l.b16 %v3997
  %v4624 = vunpack.c.h.b16 %v3997
  %v4625 = vunpack.c.l.b16 %v3998
  %v4626 = vunpack.c.h.b16 %v3998
  %v4627 = vunpack.c.l.b16 %v3999
  %v4628 = vunpack.c.l.b16 %v4000
  %v4629 = vunpack.c.h.b16 %v4000
  %v4630 = vunpack.c.l.b16 %v4001
  %v4631 = vunpack.c.h.b16 %v4001
  %v4632 = vunpack.c.l.b16 %v4002
  %v4633 = vunpack.c.l.b16 %v4003
  %v4634 = vunpack.c.h.b16 %v4003
  %v4635 = vunpack.c.l.b16 %v4004
  %v4636 = vunpack.c.h.b16 %v4004
  %v4637 = vunpack.c.l.b16 %v4005
  %v4638 = vunpack.c.l.b16 %v4006
  %v4639 = vunpack.c.h.b16 %v4006
  %v4640 = vunpack.c.l.b16 %v4007
  %v4641 = vunpack.c.h.b16 %v4007
  %v4642 = vunpack.c.l.b16 %v4008
  %v4643 = vunpack.c.l.b16 %v4009
  %v4644 = vunpack.c.h.b16 %v4009
  %v4645 = vunpack.c.l.b16 %v4010
  %v4646 = vunpack.c.h.b16 %v4010
  %v4647 = vunpack.c.l.b16 %v4011
  %v4648 = vunpack.c.l.b16 %v4012
  %v4649 = vunpack.c.h.b16 %v4012
  %v4650 = vunpack.c.l.b16 %v4013
  %v4651 = vunpack.c.h.b16 %v4013
  %v4652 = vunpack.c.l.b16 %v4014
  %v4653 = vunpack.c.l.b16 %v4015
  %v4654 = vunpack.c.h.b16 %v4015
  %v4655 = vunpack.c.l.b16 %v4016
  %v4656 = vunpack.c.h.b16 %v4016
  %v4657 = vunpack.c.l.b16 %v4017
  %v4658 = vunpack.c.l.b16 %v4018
  %v4659 = vunpack.c.h.b16 %v4018
  %v4660 = vunpack.c.l.b16 %v4019
  %v4661 = vunpack.c.h.b16 %v4019
  %v4662 = vunpack.c.l.b16 %v4020
  %v4663 = vunpack.c.l.b16 %v4021
  %v4664 = vunpack.c.h.b16 %v4021
  %v4665 = vunpack.c.l.b16 %v4022
  %v4666 = vunpack.c.h.b16 %v4022
  %v4667 = vunpack.c.l.b16 %v4023
  %v4668 = vunpack.c.l.b16 %v4024
  %v4669 = vunpack.c.h.b16 %v4024
  %v4670 = vunpack.c.l.b16 %v4025
  %v4671 = vunpack.c.h.b16 %v4025
  %v4672 = vunpack.c.l.b16 %v4026
  %v4673 = vunpack.c.l.b16 %v4027
  %v4674 = vunpack.c.h.b16 %v4027
  %v4675 = vunpack.c.l.b16 %v4028
  %v4676 = vunpack.c.h.b16 %v4028
  %v4677 = vunpack.c.l.b16 %v4029
  %v4678 = vunpack.c.l.b16 %v4030
  %v4679 = vunpack.c.h.b16 %v4030
  %v4680 = vunpack.c.l.b16 %v4031
  %v4681 = vunpack.c.h.b16 %v4031
  %v4682 = vunpack.c.l.b16 %v4032
  %v4683 = vunpack.c.l.b16 %v4033
  %v4684 = vunpack.c.h.b16 %v4033
  %v4685 = vunpack.c.l.b16 %v4034
  %v4686 = vunpack.c.h.b16 %v4034
  %v4687 = vunpack.c.l.b16 %v4035
  %v4688 = vunpack.c.l.b16 %v4036
  %v4689 = vunpack.c.h.b16 %v4036
  %v4690 = vunpack.c.l.b16 %v4037
  %v4691 = vunpack.c.h.b16 %v4037
  %v4692 = vunpack.c.l.b16 %v4038
  %v4693 = vunpack.c.l.b16 %v4039
  %v4694 = vunpack.c.h.b16 %v4039
  %v4695 = vunpack.c.l.b16 %v4040
  %v4696 = vunpack.c.h.b16 %v4040
  %v4697 = vunpack.c.l.b16 %v4041
  %v4698 = vunpack.c.l.b16 %v4042
  %v4699 = vunpack.c.h.b16 %v4042
  %v4700 = vunpack.c.l.b16 %v4043
  %v4701 = vunpack.c.h.b16 %v4043
  %v4702 = vunpack.c.l.b16 %v4044
  %v4703 = vunpack.c.l.b16 %v4045
  %v4704 = vunpack.c.h.b16 %v4045
  %v4705 = vunpack.c.l.b16 %v4046
  %v4706 = vunpack.c.h.b16 %v4046
  %v4707 = vunpack.c.l.b16 %v4047
  %v4708 = vunpack.c.l.b16 %v4048
  %v4709 = vunpack.c.h.b16 %v4048
  %v4710 = vunpack.c.l.b16 %v4049
  %v4711 = vunpack.c.h.b16 %v4049
  %v4712 = vunpack.c.l.b16 %v4050
  %v4713 = vunpack.c.l.b16 %v4051
  %v4714 = vunpack.c.h.b16 %v4051
  %v4715 = vunpack.c.l.b16 %v4052
  %v4716 = vunpack.c.h.b16 %v4052
  %v4717 = vunpack.c.l.b16 %v4053
  %v4718 = vunpack.c.l.b16 %v4054
  %v4719 = vunpack.c.h.b16 %v4054
  %v4720 = vunpack.c.l.b16 %v4055
  %v4721 = vunpack.c.h.b16 %v4055
  %v4722 = vunpack.c.l.b16 %v4056
  %v4723 = vunpack.c.l.b16 %v4057
  %v4724 = vunpack.c.h.b16 %v4057
  %v4725 = vunpack.c.l.b16 %v4058
  %v4726 = vunpack.c.h.b16 %v4058
  %v4727 = vunpack.c.l.b16 %v4059
  %v4728 = vunpack.c.l.b16 %v4060
  %v4729 = vunpack.c.h.b16 %v4060
  %v4730 = vunpack.c.l.b16 %v4061
  %v4731 = vunpack.c.h.b16 %v4061
  %v4732 = vunpack.c.l.b16 %v4062
  %v4733 = vunpack.c.l.b16 %v4063
  %v4734 = vunpack.c.h.b16 %v4063
  %v4735 = vunpack.c.l.b16 %v4064
  %v4736 = vunpack.c.h.b16 %v4064
  %v4737 = vunpack.c.l.b16 %v4065
  %v4738 = vunpack.c.l.b16 %v4066
  %v4739 = vunpack.c.h.b16 %v4066
  %v4740 = vunpack.c.l.b16 %v4067
  %v4741 = vunpack.c.h.b16 %v4067
  %v4742 = vunpack.c.l.b16 %v4068
  %v4743 = vunpack.c.l.b16 %v4069
  %v4744 = vunpack.c.h.b16 %v4069
  %v4745 = vunpack.c.l.b16 %v4070
  %v4746 = vunpack.c.h.b16 %v4070
  %v4747 = vunpack.c.l.b16 %v4071
  %v4748 = vunpack.c.l.b16 %v4072
  %v4749 = vunpack.c.h.b16 %v4072
  %v4750 = vunpack.c.l.b16 %v4073
  %v4751 = vunpack.c.h.b16 %v4073
  %v4752 = vunpack.c.l.b16 %v4074
  %v4753 = vunpack.c.l.b16 %v4075
  %v4754 = vunpack.c.h.b16 %v4075
  %v4755 = vunpack.c.l.b16 %v4076
  %v4756 = vunpack.c.h.b16 %v4076
  %v4757 = vunpack.c.l.b16 %v4077
  %v4758 = vunpack.c.l.b16 %v4078
  %v4759 = vunpack.c.h.b16 %v4078
  %v4760 = vunpack.c.l.b16 %v4079
  %v4761 = vunpack.c.h.b16 %v4079
  %v4762 = vunpack.c.l.b16 %v4080
  %v4763 = vunpack.c.l.b16 %v4081
  %v4764 = vunpack.c.h.b16 %v4081
  %v4765 = vunpack.c.l.b16 %v4082
  %v4766 = vunpack.c.h.b16 %v4082
  %v4767 = vunpack.c.l.b16 %v4083
  %v4768 = vunpack.c.l.b16 %v4084
  %v4769 = vunpack.c.h.b16 %v4084
  %v4770 = vunpack.c.l.b16 %v4085
  %v4771 = vunpack.c.h.b16 %v4085
  %v4772 = vunpack.c.l.b16 %v4086
  %v4773 = vunpack.c.l.b16 %v4087
  %v4774 = vunpack.c.h.b16 %v4087
  %v4775 = vunpack.c.l.b16 %v4088
  %v4776 = vunpack.c.h.b16 %v4088
  %v4777 = vunpack.c.l.b16 %v4089
  %v4778 = vunpack.c.l.b16 %v4090
  %v4779 = vunpack.c.h.b16 %v4090
  %v4780 = vunpack.c.l.b16 %v4091
  %v4781 = vunpack.c.h.b16 %v4091
  %v4782 = vunpack.c.l.b16 %v4092
  %v4783 = vunpack.c.l.b16 %v4093
  %v4784 = vunpack.c.h.b16 %v4093
  %v4785 = vunpack.c.l.b16 %v4094
  %v4786 = vunpack.c.h.b16 %v4094
  %v4787 = vunpack.c.l.b16 %v4095
  %v4788 = vunpack.c.l.b16 %v4096
  %v4789 = vunpack.c.h.b16 %v4096
  %v4790 = vunpack.c.l.b16 %v4097
  %v4791 = vunpack.c.h.b16 %v4097
  %v4792 = vunpack.c.l.b16 %v4098
  %v4793 = vunpack.c.l.b16 %v4099
  %v4794 = vunpack.c.h.b16 %v4099
  %v4795 = vunpack.c.l.b16 %v4100
  %v4796 = vunpack.c.h.b16 %v4100
  %v4797 = vunpack.c.l.b16 %v4101
  %v4798 = vunpack.c.l.b16 %v4102
  %v4799 = vunpack.c.h.b16 %v4102
  %v4800 = vunpack.c.l.b16 %v4103
  %v4801 = vunpack.c.h.b16 %v4103
  %v4802 = vunpack.c.l.b16 %v4104
  %v4803 = vunpack.c.l.b16 %v4105
  %v4804 = vunpack.c.h.b16 %v4105
  %v4805 = vunpack.c.l.b16 %v4106
  %v4806 = vunpack.c.h.b16 %v4106
  %v4807 = vunpack.c.l.b16 %v4107
  %v4808 = vunpack.c.l.b16 %v4108
  %v4809 = vunpack.c.h.b16 %v4108
  %v4810 = vunpack.c.l.b16 %v4109
  %v4811 = vunpack.c.h.b16 %v4109
  %v4812 = vunpack.c.l.b16 %v4110
  %v4813 = vunpack.c.l.b16 %v4111
  %v4814 = vunpack.c.h.b16 %v4111
  %v4815 = vunpack.c.l.b16 %v4112
  %v4816 = vunpack.c.h.b16 %v4112
  %v4817 = vunpack.c.l.b16 %v4113
  %v4818 = vunpack.c.l.b16 %v4114
  %v4819 = vunpack.c.h.b16 %v4114
  %v4820 = vunpack.c.l.b16 %v4115
  %v4821 = vunpack.c.h.b16 %v4115
  %v4822 = vunpack.c.l.b16 %v4116
  %v4823 = vunpack.c.l.b16 %v4117
  %v4824 = vunpack.c.h.b16 %v4117
  %v4825 = vunpack.c.l.b16 %v4118
  %v4826 = vunpack.c.h.b16 %v4118
  %v4827 = vunpack.c.l.b16 %v4119
  %v4828 = vunpack.c.l.b16 %v4120
  %v4829 = vunpack.c.h.b16 %v4120
  %v4830 = vunpack.c.l.b16 %v4121
  %v4831 = vunpack.c.h.b16 %v4121
  %v4832 = vunpack.c.l.b16 %v4122
  %v4833 = vunpack.c.l.b16 %v4123
  %v4834 = vunpack.c.h.b16 %v4123
  %v4835 = vunpack.c.l.b16 %v4124
  %v4836 = vunpack.c.h.b16 %v4124
  %v4837 = vunpack.c.l.b16 %v4125
  %v4838 = vunpack.c.l.b16 %v4126
  %v4839 = vunpack.c.h.b16 %v4126
  %v4840 = vunpack.c.l.b16 %v4127
  %v4841 = vunpack.c.h.b16 %v4127
  %v4842 = vunpack.c.l.b16 %v4128
  %v4843 = vunpack.c.l.b16 %v4129
  %v4844 = vunpack.c.h.b16 %v4129
  %v4845 = vunpack.c.l.b16 %v4130
  %v4846 = vunpack.c.h.b16 %v4130
  %v4847 = vunpack.c.l.b16 %v4131
  %v4848 = vunpack.c.l.b16 %v4132
  %v4849 = vunpack.c.h.b16 %v4132
  %v4850 = vunpack.c.l.b16 %v4133
  %v4851 = vunpack.c.h.b16 %v4133
  %v4852 = vunpack.c.l.b16 %v4134
  %v4853 = vunpack.c.l.b16 %v4135
  %v4854 = vunpack.c.h.b16 %v4135
  %v4855 = vunpack.c.l.b16 %v4136
  %v4856 = vunpack.c.h.b16 %v4136
  %v4857 = vunpack.c.l.b16 %v4137
  %v4858 = vunpack.c.l.b16 %v4138
  %v4859 = vunpack.c.h.b16 %v4138
  %v4860 = vunpack.c.l.b16 %v4139
  %v4861 = vunpack.c.h.b16 %v4139
  %v4862 = vunpack.c.l.b16 %v4140
  %v4863 = vunpack.c.l.b16 %v4141
  %v4864 = vunpack.c.h.b16 %v4141
  %v4865 = vunpack.c.l.b16 %v4142
  %v4866 = vunpack.c.h.b16 %v4142
  %v4867 = vunpack.c.l.b16 %v4143
  %v4868 = vunpack.c.l.b16 %v4144
  %v4869 = vunpack.c.h.b16 %v4144
  %v4870 = vunpack.c.l.b16 %v4145
  %v4871 = vunpack.c.h.b16 %v4145
  %v4872 = vunpack.c.l.b16 %v4146
  %v4873 = vunpack.c.l.b16 %v4147
  %v4874 = vunpack.c.h.b16 %v4147
  %v4875 = vunpack.c.l.b16 %v4148
  %v4876 = vunpack.c.h.b16 %v4148
  %v4877 = vunpack.c.l.b16 %v4149
  %v4878 = vunpack.c.l.b16 %v4150
  %v4879 = vunpack.c.h.b16 %v4150
  %v4880 = vunpack.c.l.b16 %v4151
  %v4881 = vunpack.c.h.b16 %v4151
  %v4882 = vunpack.c.l.b16 %v4152
  %v4883 = vunpack.c.l.b16 %v4153
  %v4884 = vunpack.c.h.b16 %v4153
  %v4885 = vunpack.c.l.b16 %v4154
  %v4886 = vunpack.c.h.b16 %v4154
  %v4887 = vunpack.c.l.b16 %v4155
  %v4888 = vunpack.c.l.b16 %v4156
  %v4889 = vunpack.c.h.b16 %v4156
  %v4890 = vunpack.c.l.b16 %v4157
  %v4891 = vunpack.c.h.b16 %v4157
  %v4892 = vunpack.c.l.b16 %v4158
  %v4893 = vunpack.c.l.b16 %v4159
  %v4894 = vunpack.c.h.b16 %v4159
  %v4895 = vunpack.c.l.b16 %v4160
  %v4896 = vunpack.c.h.b16 %v4160
  %v4897 = vunpack.c.l.b16 %v4161
  %v4898 = vunpack.c.l.b16 %v4162
  %v4899 = vunpack.c.h.b16 %v4162
  %v4900 = vunpack.c.l.b16 %v4163
  %v4901 = vunpack.c.h.b16 %v4163
  %v4902 = vunpack.c.l.b16 %v4164
  %v4903 = vunpack.c.l.b16 %v4165
  %v4904 = vunpack.c.h.b16 %v4165
  %v4905 = vunpack.c.l.b16 %v4166
  %v4906 = vunpack.c.h.b16 %v4166
  %v4907 = vunpack.c.l.b16 %v4167
  %v4908 = vunpack.c.l.b16 %v4168
  %v4909 = vunpack.c.h.b16 %v4168
  %v4910 = vunpack.c.l.b16 %v4169
  %v4911 = vunpack.c.h.b16 %v4169
  %v4912 = vunpack.c.l.b16 %v4170
  %v4913 = vunpack.c.l.b16 %v4171
  %v4914 = vunpack.c.h.b16 %v4171
  %v4915 = vunpack.c.l.b16 %v4172
  %v4916 = vunpack.c.h.b16 %v4172
  %v4917 = vunpack.c.l.b16 %v4173
  %v4918 = vunpack.c.l.b16 %v4174
  %v4919 = vunpack.c.h.b16 %v4174
  %v4920 = vunpack.c.l.b16 %v4175
  %v4921 = vunpack.c.h.b16 %v4175
  %v4922 = vunpack.c.l.b16 %v4176
  %v4923 = vunpack.c.l.b16 %v4177
  %v4924 = vunpack.c.h.b16 %v4177
  %v4925 = vunpack.c.l.b16 %v4178
  %v4926 = vunpack.c.h.b16 %v4178
  %v4927 = vunpack.c.l.b16 %v4179
  %v4928 = vunpack.c.l.b16 %v4180
  %v4929 = vunpack.c.h.b16 %v4180
  %v4930 = vunpack.c.l.b16 %v4181
  %v4931 = vunpack.c.h.b16 %v4181
  %v4932 = vunpack.c.l.b16 %v4182
  %v4933 = vunpack.c.l.b16 %v4183
  %v4934 = vunpack.c.h.b16 %v4183
  %v4935 = vunpack.c.l.b16 %v4184
  %v4936 = vunpack.c.h.b16 %v4184
  %v4937 = vunpack.c.l.b16 %v4185
  %v4938 = vunpack.c.l.b16 %v4186
  %v4939 = vunpack.c.h.b16 %v4186
  %v4940 = vunpack.c.l.b16 %v4187
  %v4941 = vunpack.c.h.b16 %v4187
  %v4942 = vunpack.c.l.b16 %v4188
  %v4943 = vunpack.c.l.b16 %v4189
  %v4944 = vunpack.c.h.b16 %v4189
  %v4945 = vunpack.c.l.b16 %v4190
  %v4946 = vunpack.c.h.b16 %v4190
  %v4947 = vunpack.c.l.b16 %v4191
  %v4948 = vunpack.c.l.b16 %v4192
  %v4949 = vunpack.c.h.b16 %v4192
  %v4950 = vunpack.c.l.b16 %v4193
  %v4951 = vunpack.c.h.b16 %v4193
  %v4952 = vunpack.c.l.b16 %v4194
  %v4953 = vunpack.c.l.b16 %v4195
  %v4954 = vunpack.c.h.b16 %v4195
  %v4955 = vunpack.c.l.b16 %v4196
  %v4956 = vunpack.c.h.b16 %v4196
  %v4957 = vunpack.c.l.b16 %v4197
  %v4958 = vunpack.c.l.b16 %v4198
  %v4959 = vunpack.c.h.b16 %v4198
  %v4960 = vunpack.c.l.b16 %v4199
  %v4961 = vunpack.c.h.b16 %v4199
  %v4962 = vunpack.c.l.b16 %v4200
  %v4963 = vunpack.c.l.b16 %v4201
  %v4964 = vunpack.c.h.b16 %v4201
  %v4965 = vunpack.c.l.b16 %v4202
  %v4966 = vunpack.c.h.b16 %v4202
  %v4967 = vunpack.c.l.b16 %v4203
  %v4968 = vunpack.c.l.b16 %v4204
  %v4969 = vunpack.c.h.b16 %v4204
  %v4970 = vunpack.c.l.b16 %v4205
  %v4971 = vunpack.c.h.b16 %v4205
  %v4972 = vunpack.c.l.b16 %v4206
  %v4973 = vunpack.c.l.b16 %v4207
  %v4974 = vunpack.c.h.b16 %v4207
  %v4975 = vunpack.c.l.b16 %v4208
  %v4976 = vunpack.c.h.b16 %v4208
  %v4977 = vunpack.c.l.b16 %v4209
  %v4978 = vpack.c.b16 %v4503, %v4498
  %v4979 = vpack.c.b16 %v4504, %v4499
  %v4980 = vpack.c.b16 %v4505, %v4500
  %v4981 = vpack.c.b16 %v4506, %v4501
  %v4982 = vpack.c.b16 %v4507, %v4502
  %v4983 = vpack.c.b16 %v4513, %v4508
  %v4984 = vpack.c.b16 %v4514, %v4509
  %v4985 = vpack.c.b16 %v4515, %v4510
  %v4986 = vpack.c.b16 %v4516, %v4511
  %v4987 = vpack.c.b16 %v4517, %v4512
  %v4988 = vpack.c.b16 %v4523, %v4518
  %v4989 = vpack.c.b16 %v4524, %v4519
  %v4990 = vpack.c.b16 %v4525, %v4520
  %v4991 = vpack.c.b16 %v4526, %v4521
  %v4992 = vpack.c.b16 %v4527, %v4522
  %v4993 = vpack.c.b16 %v4533, %v4528
  %v4994 = vpack.c.b16 %v4534, %v4529
  %v4995 = vpack.c.b16 %v4535, %v4530
  %v4996 = vpack.c.b16 %v4536, %v4531
  %v4997 = vpack.c.b16 %v4537, %v4532
  %v4998 = vpack.c.b16 %v4543, %v4538
  %v4999 = vpack.c.b16 %v4544, %v4539
  %v5000 = vpack.c.b16 %v4545, %v4540
  %v5001 = vpack.c.b16 %v4546, %v4541
  %v5002 = vpack.c.b16 %v4547, %v4542
  %v5003 = vpack.c.b16 %v4553, %v4548
  %v5004 = vpack.c.b16 %v4554, %v4549
  %v5005 = vpack.c.b16 %v4555, %v4550
  %v5006 = vpack.c.b16 %v4556, %v4551
  %v5007 = vpack.c.b16 %v4557, %v4552
  %v5008 = vpack.c.b16 %v4563, %v4558
  %v5009 = vpack.c.b16 %v4564, %v4559
  %v5010 = vpack.c.b16 %v4565, %v4560
  %v5011 = vpack.c.b16 %v4566, %v4561
  %v5012 = vpack.c.b16 %v4567, %v4562
  %v5013 = vpack.c.b16 %v4573, %v4568
  %v5014 = vpack.c.b16 %v4574, %v4569
  %v5015 = vpack.c.b16 %v4575, %v4570
  %v5016 = vpack.c.b16 %v4576, %v4571
  %v5017 = vpack.c.b16 %v4577, %v4572
  %v5018 = vpack.c.b16 %v4583, %v4578
  %v5019 = vpack.c.b16 %v4584, %v4579
  %v5020 = vpack.c.b16 %v4585, %v4580
  %v5021 = vpack.c.b16 %v4586, %v4581
  %v5022 = vpack.c.b16 %v4587, %v4582
  %v5023 = vpack.c.b16 %v4593, %v4588
  %v5024 = vpack.c.b16 %v4594, %v4589
  %v5025 = vpack.c.b16 %v4595, %v4590
  %v5026 = vpack.c.b16 %v4596, %v4591
  %v5027 = vpack.c.b16 %v4597, %v4592
  %v5028 = vpack.c.b16 %v4603, %v4598
  %v5029 = vpack.c.b16 %v4604, %v4599
  %v5030 = vpack.c.b16 %v4605, %v4600
  %v5031 = vpack.c.b16 %v4606, %v4601
  %v5032 = vpack.c.b16 %v4607, %v4602
  %v5033 = vpack.c.b16 %v4613, %v4608
  %v5034 = vpack.c.b16 %v4614, %v4609
  %v5035 = vpack.c.b16 %v4615, %v4610
  %v5036 = vpack.c.b16 %v4616, %v4611
  %v5037 = vpack.c.b16 %v4617, %v4612
  %v5038 = vpack.c.b16 %v4623, %v4618
  %v5039 = vpack.c.b16 %v4624, %v4619
  %v5040 = vpack.c.b16 %v4625, %v4620
  %v5041 = vpack.c.b16 %v4626, %v4621
  %v5042 = vpack.c.b16 %v4627, %v4622
  %v5043 = vpack.c.b16 %v4633, %v4628
  %v5044 = vpack.c.b16 %v4634, %v4629
  %v5045 = vpack.c.b16 %v4635, %v4630
  %v5046 = vpack.c.b16 %v4636, %v4631
  %v5047 = vpack.c.b16 %v4637, %v4632
  %v5048 = vpack.c.b16 %v4643, %v4638
  %v5049 = vpack.c.b16 %v4644, %v4639
  %v5050 = vpack.c.b16 %v4645, %v4640
  %v5051 = vpack.c.b16 %v4646, %v4641
  %v5052 = vpack.c.b16 %v4647, %v4642
  %v5053 = vpack.c.b16 %v4653, %v4648
  %v5054 = vpack.c.b16 %v4654, %v4649
  %v5055 = vpack.c.b16 %v4655, %v4650
  %v5056 = vpack.c.b16 %v4656, %v4651
  %v5057 = vpack.c.b16 %v4657, %v4652
  %v5058 = vpack.c.b16 %v4663, %v4658
  %v5059 = vpack.c.b16 %v4664, %v4659
  %v5060 = vpack.c.b16 %v4665, %v4660
  %v5061 = vpack.c.b16 %v4666, %v4661
  %v5062 = vpack.c.b16 %v4667, %v4662
  %v5063 = vpack.c.b16 %v4673, %v4668
  %v5064 = vpack.c.b16 %v4674, %v4669
  %v5065 = vpack.c.b16 %v4675, %v4670
  %v5066 = vpack.c.b16 %v4676, %v4671
  %v5067 = vpack.c.b16 %v4677, %v4672
  %v5068 = vpack.c.b16 %v4683, %v4678
  %v5069 = vpack.c.b16 %v4684, %v4679
  %v5070 = vpack.c.b16 %v4685, %v4680
  %v5071 = vpack.c.b16 %v4686, %v4681
  %v5072 = vpack.c.b16 %v4687, %v4682
  %v5073 = vpack.c.b16 %v4693, %v4688
  %v5074 = vpack.c.b16 %v4694, %v4689
  %v5075 = vpack.c.b16 %v4695, %v4690
  %v5076 = vpack.c.b16 %v4696, %v4691
  %v5077 = vpack.c.b16 %v4697, %v4692
  %v5078 = vpack.c.b16 %v4703, %v4698
  %v5079 = vpack.c.b16 %v4704, %v4699
  %v5080 = vpack.c.b16 %v4705, %v4700
  %v5081 = vpack.c.b16 %v4706, %v4701
  %v5082 = vpack.c.b16 %v4707, %v4702
  %v5083 = vpack.c.b16 %v4713, %v4708
  %v5084 = vpack.c.b16 %v4714, %v4709
  %v5085 = vpack.c.b16 %v4715, %v4710
  %v5086 = vpack.c.b16 %v4716, %v4711
  %v5087 = vpack.c.b16 %v4717, %v4712
  %v5088 = vpack.c.b16 %v4723, %v4718
  %v5089 = vpack.c.b16 %v4724, %v4719
  %v5090 = vpack.c.b16 %v4725, %v4720
  %v5091 = vpack.c.b16 %v4726, %v4721
  %v5092 = vpack.c.b16 %v4727, %v4722
  %v5093 = vpack.c.b16 %v4733, %v4728
  %v5094 = vpack.c.b16 %v4734, %v4729
  %v5095 = vpack.c.b16 %v4735, %v4730
  %v5096 = vpack.c.b16 %v4736, %v4731
  %v5097 = vpack.c.b16 %v4737, %v4732
  %v5098 = vpack.c.b16 %v4743, %v4738
  %v5099 = vpack.c.b16 %v4744, %v4739
  %v5100 = vpack.c.b16 %v4745, %v4740
  %v5101 = vpack.c.b16 %v4746, %v4741
  %v5102 = vpack.c.b16 %v4747, %v4742
  %v5103 = vpack.c.b16 %v4753, %v4748
  %v5104 = vpack.c.b16 %v4754, %v4749
  %v5105 = vpack.c.b16 %v4755, %v4750
  %v5106 = vpack.c.b16 %v4756, %v4751
  %v5107 = vpack.c.b16 %v4757, %v4752
  %v5108 = vpack.c.b16 %v4763, %v4758
  %v5109 = vpack.c.b16 %v4764, %v4759
  %v5110 = vpack.c.b16 %v4765, %v4760
  %v5111 = vpack.c.b16 %v4766, %v4761
  %v5112 = vpack.c.b16 %v4767, %v4762
  %v5113 = vpack.c.b16 %v4773, %v4768
  %v5114 = vpack.c.b16 %v4774, %v4769
  %v5115 = vpack.c.b16 %v4775, %v4770
  %v5116 = vpack.c.b16 %v4776, %v4771
  %v5117 = vpack.c.b16 %v4777, %v4772
  %v5118 = vpack.c.b16 %v4783, %v4778
  %v5119 = vpack.c.b16 %v4784, %v4779
  %v5120 = vpack.c.b16 %v4785, %v4780
  %v5121 = vpack.c.b16 %v4786, %v4781
  %v5122 = vpack.c.b16 %v4787, %v4782
  %v5123 = vpack.c.b16 %v4793, %v4788
  %v5124 = vpack.c.b16 %v4794, %v4789
  %v5125 = vpack.c.b16 %v4795, %v4790
  %v5126 = vpack.c.b16 %v4796, %v4791
  %v5127 = vpack.c.b16 %v4797, %v4792
  %v5128 = vpack.c.b16 %v4803, %v4798
  %v5129 = vpack.c.b16 %v4804, %v4799
  %v5130 = vpack.c.b16 %v4805, %v4800
  %v5131 = vpack.c.b16 %v4806, %v4801
  %v5132 = vpack.c.b16 %v4807, %v4802
  %v5133 = vpack.c.b16 %v4813, %v4808
  %v5134 = vpack.c.b16 %v4814, %v4809
  %v5135 = vpack.c.b16 %v4815, %v4810
  %v5136 = vpack.c.b16 %v4816, %v4811
  %v5137 = vpack.c.b16 %v4817, %v4812
  %v5138 = vpack.c.b16 %v4823, %v4818
  %v5139 = vpack.c.b16 %v4824, %v4819
  %v5140 = vpack.c.b16 %v4825, %v4820
  %v5141 = vpack.c.b16 %v4826, %v4821
  %v5142 = vpack.c.b16 %v4827, %v4822
  %v5143 = vpack.c.b16 %v4833, %v4828
  %v5144 = vpack.c.b16 %v4834, %v4829
  %v5145 = vpack.c.b16 %v4835, %v4830
  %v5146 = vpack.c.b16 %v4836, %v4831
  %v5147 = vpack.c.b16 %v4837, %v4832
  %v5148 = vpack.c.b16 %v4843, %v4838
  %v5149 = vpack.c.b16 %v4844, %v4839
  %v5150 = vpack.c.b16 %v4845, %v4840
  %v5151 = vpack.c.b16 %v4846, %v4841
  %v5152 = vpack.c.b16 %v4847, %v4842
  %v5153 = vpack.c.b16 %v4853, %v4848
  %v5154 = vpack.c.b16 %v4854, %v4849
  %v5155 = vpack.c.b16 %v4855, %v4850
  %v5156 = vpack.c.b16 %v4856, %v4851
  %v5157 = vpack.c.b16 %v4857, %v4852
  %v5158 = vpack.c.b16 %v4863, %v4858
  %v5159 = vpack.c.b16 %v4864, %v4859
  %v5160 = vpack.c.b16 %v4865, %v4860
  %v5161 = vpack.c.b16 %v4866, %v4861
  %v5162 = vpack.c.b16 %v4867, %v4862
  %v5163 = vpack.c.b16 %v4873, %v4868
  %v5164 = vpack.c.b16 %v4874, %v4869
  %v5165 = vpack.c.b16 %v4875, %v4870
  %v5166 = vpack.c.b16 %v4876, %v4871
  %v5167 = vpack.c.b16 %v4877, %v4872
  %v5168 = vpack.c.b16 %v4883, %v4878
  %v5169 = vpack.c.b16 %v4884, %v4879
  %v5170 = vpack.c.b16 %v4885, %v4880
  %v5171 = vpack.c.b16 %v4886, %v4881
  %v5172 = vpack.c.b16 %v4887, %v4882
  %v5173 = vpack.c.b16 %v4893, %v4888
  %v5174 = vpack.c.b16 %v4894, %v4889
  %v5175 = vpack.c.b16 %v4895, %v4890
  %v5176 = vpack.c.b16 %v4896, %v4891
  %v5177 = vpack.c.b16 %v4897, %v4892
  %v5178 = vpack.c.b16 %v4903, %v4898
  %v5179 = vpack.c.b16 %v4904, %v4899
  %v5180 = vpack.c.b16 %v4905, %v4900
  %v5181 = vpack.c.b16 %v4906, %v4901
  %v5182 = vpack.c.b16 %v4907, %v4902
  %v5183 = vpack.c.b16 %v4913, %v4908
  %v5184 = vpack.c.b16 %v4914, %v4909
  %v5185 = vpack.c.b16 %v4915, %v4910
  %v5186 = vpack.c.b16 %v4916, %v4911
  %v5187 = vpack.c.b16 %v4917, %v4912
  %v5188 = vpack.c.b16 %v4923, %v4918
  %v5189 = vpack.c.b16 %v4924, %v4919
  %v5190 = vpack.c.b16 %v4925, %v4920
  %v5191 = vpack.c.b16 %v4926, %v4921
  %v5192 = vpack.c.b16 %v4927, %v4922
  %v5193 = vpack.c.b16 %v4933, %v4928
  %v5194 = vpack.c.b16 %v4934, %v4929
  %v5195 = vpack.c.b16 %v4935, %v4930
  %v5196 = vpack.c.b16 %v4936, %v4931
  %v5197 = vpack.c.b16 %v4937, %v4932
  %v5198 = vpack.c.b16 %v4943, %v4938
  %v5199 = vpack.c.b16 %v4944, %v4939
  %v5200 = vpack.c.b16 %v4945, %v4940
  %v5201 = vpack.c.b16 %v4946, %v4941
  %v5202 = vpack.c.b16 %v4947, %v4942
  %v5203 = vpack.c.b16 %v4953, %v4948
  %v5204 = vpack.c.b16 %v4954, %v4949
  %v5205 = vpack.c.b16 %v4955, %v4950
  %v5206 = vpack.c.b16 %v4956, %v4951
  %v5207 = vpack.c.b16 %v4957, %v4952
  %v5208 = vpack.c.b16 %v4963, %v4958
  %v5209 = vpack.c.b16 %v4964, %v4959
  %v5210 = vpack.c.b16 %v4965, %v4960
  %v5211 = vpack.c.b16 %v4966, %v4961
  %v5212 = vpack.c.b16 %v4967, %v4962
  %v5213 = vpack.c.b16 %v4973, %v4968
  %v5214 = vpack.c.b16 %v4974, %v4969
  %v5215 = vpack.c.b16 %v4975, %v4970
  %v5216 = vpack.c.b16 %v4976, %v4971
  %v5217 = vpack.c.b16 %v4977, %v4972
  %5458 = vmatpush.bf16.msra.mxu0 %v5013
  %5459 = vmatpush.bf16.msra.mxu0 %v5008
  %5460 = vmatpush.bf16.msra.mxu0 %v5003
  %5461 = vmatpush.bf16.msra.mxu0 %v4998
  %5462 = vmatpush.bf16.msra.mxu0 %v4993
  %5463 = vmatpush.bf16.msra.mxu0 %v4988
  %5464 = vmatpush.bf16.msra.mxu0 %v4983
  %5465 = vmatpush.bf16.msra.mxu0 %v4978
  %5466 = vmatmul.bf16.gmra.mxu0 %v339
  %v5467 = vpop.f32.mrf.mxu0
  %v5468 = vadd.f32 0.0, %v5467
  %v5469 = vpop.f32.mrf.mxu0
  %5470 = vdwg.mxu0
  %5471 = vmatpush.bf16.msra.mxu0 %v5053
  %5472 = vmatpush.bf16.msra.mxu0 %v5048
  %5473 = vmatpush.bf16.msra.mxu0 %v5043
  %5474 = vmatpush.bf16.msra.mxu0 %v5038
  %5475 = vmatpush.bf16.msra.mxu0 %v5033
  %5476 = vmatpush.bf16.msra.mxu0 %v5028
  %5477 = vmatpush.bf16.msra.mxu0 %v5023
  %5478 = vmatpush.bf16.msra.mxu0 %v5018
  %5479 = vmatmul.bf16.gmra.mxu0 %v340
  %v5480 = vpop.f32.mrf.mxu0
  %v5481 = vadd.f32 %v5468, %v5480
  %v5482 = vpop.f32.mrf.mxu0
  %5483 = vdwg.mxu0
  %5484 = vmatpush.bf16.msra.mxu0 %v5093
  %5485 = vmatpush.bf16.msra.mxu0 %v5088
  %5486 = vmatpush.bf16.msra.mxu0 %v5083
  %5487 = vmatpush.bf16.msra.mxu0 %v5078
  %5488 = vmatpush.bf16.msra.mxu0 %v5073
  %5489 = vmatpush.bf16.msra.mxu0 %v5068
  %5490 = vmatpush.bf16.msra.mxu0 %v5063
  %5491 = vmatpush.bf16.msra.mxu0 %v5058
  %5492 = vmatmul.bf16.gmra.mxu0 %v341
  %v5493 = vpop.f32.mrf.mxu0
  %v5494 = vadd.f32 %v5481, %v5493
  %v5495 = vpop.f32.mrf.mxu0
  %5496 = vdwg.mxu0
  %5497 = vmatpush.bf16.msra.mxu0 %v5133
  %5498 = vmatpush.bf16.msra.mxu0 %v5128
  %5499 = vmatpush.bf16.msra.mxu0 %v5123
  %5500 = vmatpush.bf16.msra.mxu0 %v5118
  %5501 = vmatpush.bf16.msra.mxu0 %v5113
  %5502 = vmatpush.bf16.msra.mxu0 %v5108
  %5503 = vmatpush.bf16.msra.mxu0 %v5103
  %5504 = vmatpush.bf16.msra.mxu0 %v5098
  %5505 = vmatmul.bf16.gmra.mxu0 %v342
  %v5506 = vpop.f32.mrf.mxu0
  %v5507 = vadd.f32 %v5494, %v5506
  %v5508 = vpop.f32.mrf.mxu0
  %5509 = vdwg.mxu0
  %5510 = vmatpush.bf16.msra.mxu0 %v5173
  %5511 = vmatpush.bf16.msra.mxu0 %v5168
  %5512 = vmatpush.bf16.msra.mxu0 %v5163
  %5513 = vmatpush.bf16.msra.mxu0 %v5158
  %5514 = vmatpush.bf16.msra.mxu0 %v5153
  %5515 = vmatpush.bf16.msra.mxu0 %v5148
  %5516 = vmatpush.bf16.msra.mxu0 %v5143
  %5517 = vmatpush.bf16.msra.mxu0 %v5138
  %5518 = vmatmul.bf16.gmra.mxu0 %v343
  %v5519 = vpop.f32.mrf.mxu0
  %v5520 = vadd.f32 %v5507, %v5519
  %v5521 = vpop.f32.mrf.mxu0
  %5522 = vdwg.mxu0
  %5523 = vmatpush.bf16.msra.mxu0 %v5213
  %5524 = vmatpush.bf16.msra.mxu0 %v5208
  %5525 = vmatpush.bf16.msra.mxu0 %v5203
  %5526 = vmatpush.bf16.msra.mxu0 %v5198
  %5527 = vmatpush.bf16.msra.mxu0 %v5193
  %5528 = vmatpush.bf16.msra.mxu0 %v5188
  %5529 = vmatpush.bf16.msra.mxu0 %v5183
  %5530 = vmatpush.bf16.msra.mxu0 %v5178
  %5531 = vmatmul.bf16.gmra.mxu0 %v344
  %v5532 = vpop.f32.mrf.mxu0
  %v5533 = vadd.f32 %v5520, %v5532
  %v5534 = vpop.f32.mrf.mxu0
  %5535 = vdwg.mxu0
  %5536 = vmatpush.bf16.msra.mxu0 %v5014
  %5537 = vmatpush.bf16.msra.mxu0 %v5009
  %5538 = vmatpush.bf16.msra.mxu0 %v5004
  %5539 = vmatpush.bf16.msra.mxu0 %v4999
  %5540 = vmatpush.bf16.msra.mxu0 %v4994
  %5541 = vmatpush.bf16.msra.mxu0 %v4989
  %5542 = vmatpush.bf16.msra.mxu0 %v4984
  %5543 = vmatpush.bf16.msra.mxu0 %v4979
  %5544 = vmatmul.bf16.gmra.mxu0 %v339
  %v5545 = vpop.f32.mrf.mxu0
  %v5546 = vadd.f32 0.0, %v5545
  %v5547 = vpop.f32.mrf.mxu0
  %5548 = vdwg.mxu0
  %5549 = vmatpush.bf16.msra.mxu0 %v5054
  %5550 = vmatpush.bf16.msra.mxu0 %v5049
  %5551 = vmatpush.bf16.msra.mxu0 %v5044
  %5552 = vmatpush.bf16.msra.mxu0 %v5039
  %5553 = vmatpush.bf16.msra.mxu0 %v5034
  %5554 = vmatpush.bf16.msra.mxu0 %v5029
  %5555 = vmatpush.bf16.msra.mxu0 %v5024
  %5556 = vmatpush.bf16.msra.mxu0 %v5019
  %5557 = vmatmul.bf16.gmra.mxu0 %v340
  %v5558 = vpop.f32.mrf.mxu0
  %v5559 = vadd.f32 %v5546, %v5558
  %v5560 = vpop.f32.mrf.mxu0
  %5561 = vdwg.mxu0
  %5562 = vmatpush.bf16.msra.mxu0 %v5094
  %5563 = vmatpush.bf16.msra.mxu0 %v5089
  %5564 = vmatpush.bf16.msra.mxu0 %v5084
  %5565 = vmatpush.bf16.msra.mxu0 %v5079
  %5566 = vmatpush.bf16.msra.mxu0 %v5074
  %5567 = vmatpush.bf16.msra.mxu0 %v5069
  %5568 = vmatpush.bf16.msra.mxu0 %v5064
  %5569 = vmatpush.bf16.msra.mxu0 %v5059
  %5570 = vmatmul.bf16.gmra.mxu0 %v341
  %v5571 = vpop.f32.mrf.mxu0
  %v5572 = vadd.f32 %v5559, %v5571
  %v5573 = vpop.f32.mrf.mxu0
  %5574 = vdwg.mxu0
  %5575 = vmatpush.bf16.msra.mxu0 %v5134
  %5576 = vmatpush.bf16.msra.mxu0 %v5129
  %5577 = vmatpush.bf16.msra.mxu0 %v5124
  %5578 = vmatpush.bf16.msra.mxu0 %v5119
  %5579 = vmatpush.bf16.msra.mxu0 %v5114
  %5580 = vmatpush.bf16.msra.mxu0 %v5109
  %5581 = vmatpush.bf16.msra.mxu0 %v5104
  %5582 = vmatpush.bf16.msra.mxu0 %v5099
  %5583 = vmatmul.bf16.gmra.mxu0 %v342
  %v5584 = vpop.f32.mrf.mxu0
  %v5585 = vadd.f32 %v5572, %v5584
  %v5586 = vpop.f32.mrf.mxu0
  %5587 = vdwg.mxu0
  %5588 = vmatpush.bf16.msra.mxu0 %v5174
  %5589 = vmatpush.bf16.msra.mxu0 %v5169
  %5590 = vmatpush.bf16.msra.mxu0 %v5164
  %5591 = vmatpush.bf16.msra.mxu0 %v5159
  %5592 = vmatpush.bf16.msra.mxu0 %v5154
  %5593 = vmatpush.bf16.msra.mxu0 %v5149
  %5594 = vmatpush.bf16.msra.mxu0 %v5144
  %5595 = vmatpush.bf16.msra.mxu0 %v5139
  %5596 = vmatmul.bf16.gmra.mxu0 %v343
  %v5597 = vpop.f32.mrf.mxu0
  %v5598 = vadd.f32 %v5585, %v5597
  %v5599 = vpop.f32.mrf.mxu0
  %5600 = vdwg.mxu0
  %5601 = vmatpush.bf16.msra.mxu0 %v5214
  %5602 = vmatpush.bf16.msra.mxu0 %v5209
  %5603 = vmatpush.bf16.msra.mxu0 %v5204
  %5604 = vmatpush.bf16.msra.mxu0 %v5199
  %5605 = vmatpush.bf16.msra.mxu0 %v5194
  %5606 = vmatpush.bf16.msra.mxu0 %v5189
  %5607 = vmatpush.bf16.msra.mxu0 %v5184
  %5608 = vmatpush.bf16.msra.mxu0 %v5179
  %5609 = vmatmul.bf16.gmra.mxu0 %v344
  %v5610 = vpop.f32.mrf.mxu0
  %v5611 = vadd.f32 %v5598, %v5610
  %v5612 = vpop.f32.mrf.mxu0
  %5613 = vdwg.mxu0
  %5614 = vmatpush.bf16.msra.mxu0 %v5015
  %5615 = vmatpush.bf16.msra.mxu0 %v5010
  %5616 = vmatpush.bf16.msra.mxu0 %v5005
  %5617 = vmatpush.bf16.msra.mxu0 %v5000
  %5618 = vmatpush.bf16.msra.mxu0 %v4995
  %5619 = vmatpush.bf16.msra.mxu0 %v4990
  %5620 = vmatpush.bf16.msra.mxu0 %v4985
  %5621 = vmatpush.bf16.msra.mxu0 %v4980
  %5622 = vmatmul.bf16.gmra.mxu0 %v339
  %v5623 = vpop.f32.mrf.mxu0
  %v5624 = vadd.f32 0.0, %v5623
  %v5625 = vpop.f32.mrf.mxu0
  %5626 = vdwg.mxu0
  %5627 = vmatpush.bf16.msra.mxu0 %v5055
  %5628 = vmatpush.bf16.msra.mxu0 %v5050
  %5629 = vmatpush.bf16.msra.mxu0 %v5045
  %5630 = vmatpush.bf16.msra.mxu0 %v5040
  %5631 = vmatpush.bf16.msra.mxu0 %v5035
  %5632 = vmatpush.bf16.msra.mxu0 %v5030
  %5633 = vmatpush.bf16.msra.mxu0 %v5025
  %5634 = vmatpush.bf16.msra.mxu0 %v5020
  %5635 = vmatmul.bf16.gmra.mxu0 %v340
  %v5636 = vpop.f32.mrf.mxu0
  %v5637 = vadd.f32 %v5624, %v5636
  %v5638 = vpop.f32.mrf.mxu0
  %5639 = vdwg.mxu0
  %5640 = vmatpush.bf16.msra.mxu0 %v5095
  %5641 = vmatpush.bf16.msra.mxu0 %v5090
  %5642 = vmatpush.bf16.msra.mxu0 %v5085
  %5643 = vmatpush.bf16.msra.mxu0 %v5080
  %5644 = vmatpush.bf16.msra.mxu0 %v5075
  %5645 = vmatpush.bf16.msra.mxu0 %v5070
  %5646 = vmatpush.bf16.msra.mxu0 %v5065
  %5647 = vmatpush.bf16.msra.mxu0 %v5060
  %5648 = vmatmul.bf16.gmra.mxu0 %v341
  %v5649 = vpop.f32.mrf.mxu0
  %v5650 = vadd.f32 %v5637, %v5649
  %v5651 = vpop.f32.mrf.mxu0
  %5652 = vdwg.mxu0
  %5653 = vmatpush.bf16.msra.mxu0 %v5135
  %5654 = vmatpush.bf16.msra.mxu0 %v5130
  %5655 = vmatpush.bf16.msra.mxu0 %v5125
  %5656 = vmatpush.bf16.msra.mxu0 %v5120
  %5657 = vmatpush.bf16.msra.mxu0 %v5115
  %5658 = vmatpush.bf16.msra.mxu0 %v5110
  %5659 = vmatpush.bf16.msra.mxu0 %v5105
  %5660 = vmatpush.bf16.msra.mxu0 %v5100
  %5661 = vmatmul.bf16.gmra.mxu0 %v342
  %v5662 = vpop.f32.mrf.mxu0
  %v5663 = vadd.f32 %v5650, %v5662
  %v5664 = vpop.f32.mrf.mxu0
  %5665 = vdwg.mxu0
  %5666 = vmatpush.bf16.msra.mxu0 %v5175
  %5667 = vmatpush.bf16.msra.mxu0 %v5170
  %5668 = vmatpush.bf16.msra.mxu0 %v5165
  %5669 = vmatpush.bf16.msra.mxu0 %v5160
  %5670 = vmatpush.bf16.msra.mxu0 %v5155
  %5671 = vmatpush.bf16.msra.mxu0 %v5150
  %5672 = vmatpush.bf16.msra.mxu0 %v5145
  %5673 = vmatpush.bf16.msra.mxu0 %v5140
  %5674 = vmatmul.bf16.gmra.mxu0 %v343
  %v5675 = vpop.f32.mrf.mxu0
  %v5676 = vadd.f32 %v5663, %v5675
  %v5677 = vpop.f32.mrf.mxu0
  %5678 = vdwg.mxu0
  %5679 = vmatpush.bf16.msra.mxu0 %v5215
  %5680 = vmatpush.bf16.msra.mxu0 %v5210
  %5681 = vmatpush.bf16.msra.mxu0 %v5205
  %5682 = vmatpush.bf16.msra.mxu0 %v5200
  %5683 = vmatpush.bf16.msra.mxu0 %v5195
  %5684 = vmatpush.bf16.msra.mxu0 %v5190
  %5685 = vmatpush.bf16.msra.mxu0 %v5185
  %5686 = vmatpush.bf16.msra.mxu0 %v5180
  %5687 = vmatmul.bf16.gmra.mxu0 %v344
  %v5688 = vpop.f32.mrf.mxu0
  %v5689 = vadd.f32 %v5676, %v5688
  %v5690 = vpop.f32.mrf.mxu0
  %5691 = vdwg.mxu0
  %5692 = vmatpush.bf16.msra.mxu0 %v5016
  %5693 = vmatpush.bf16.msra.mxu0 %v5011
  %5694 = vmatpush.bf16.msra.mxu0 %v5006
  %5695 = vmatpush.bf16.msra.mxu0 %v5001
  %5696 = vmatpush.bf16.msra.mxu0 %v4996
  %5697 = vmatpush.bf16.msra.mxu0 %v4991
  %5698 = vmatpush.bf16.msra.mxu0 %v4986
  %5699 = vmatpush.bf16.msra.mxu0 %v4981
  %5700 = vmatmul.bf16.gmra.mxu0 %v339
  %v5701 = vpop.f32.mrf.mxu0
  %v5702 = vadd.f32 0.0, %v5701
  %v5703 = vpop.f32.mrf.mxu0
  %5704 = vdwg.mxu0
  %5705 = vmatpush.bf16.msra.mxu0 %v5056
  %5706 = vmatpush.bf16.msra.mxu0 %v5051
  %5707 = vmatpush.bf16.msra.mxu0 %v5046
  %5708 = vmatpush.bf16.msra.mxu0 %v5041
  %5709 = vmatpush.bf16.msra.mxu0 %v5036
  %5710 = vmatpush.bf16.msra.mxu0 %v5031
  %5711 = vmatpush.bf16.msra.mxu0 %v5026
  %5712 = vmatpush.bf16.msra.mxu0 %v5021
  %5713 = vmatmul.bf16.gmra.mxu0 %v340
  %v5714 = vpop.f32.mrf.mxu0
  %v5715 = vadd.f32 %v5702, %v5714
  %v5716 = vpop.f32.mrf.mxu0
  %5717 = vdwg.mxu0
  %5718 = vmatpush.bf16.msra.mxu0 %v5096
  %5719 = vmatpush.bf16.msra.mxu0 %v5091
  %5720 = vmatpush.bf16.msra.mxu0 %v5086
  %5721 = vmatpush.bf16.msra.mxu0 %v5081
  %5722 = vmatpush.bf16.msra.mxu0 %v5076
  %5723 = vmatpush.bf16.msra.mxu0 %v5071
  %5724 = vmatpush.bf16.msra.mxu0 %v5066
  %5725 = vmatpush.bf16.msra.mxu0 %v5061
  %5726 = vmatmul.bf16.gmra.mxu0 %v341
  %v5727 = vpop.f32.mrf.mxu0
  %v5728 = vadd.f32 %v5715, %v5727
  %v5729 = vpop.f32.mrf.mxu0
  %5730 = vdwg.mxu0
  %5731 = vmatpush.bf16.msra.mxu0 %v5136
  %5732 = vmatpush.bf16.msra.mxu0 %v5131
  %5733 = vmatpush.bf16.msra.mxu0 %v5126
  %5734 = vmatpush.bf16.msra.mxu0 %v5121
  %5735 = vmatpush.bf16.msra.mxu0 %v5116
  %5736 = vmatpush.bf16.msra.mxu0 %v5111
  %5737 = vmatpush.bf16.msra.mxu0 %v5106
  %5738 = vmatpush.bf16.msra.mxu0 %v5101
  %5739 = vmatmul.bf16.gmra.mxu0 %v342
  %v5740 = vpop.f32.mrf.mxu0
  %v5741 = vadd.f32 %v5728, %v5740
  %v5742 = vpop.f32.mrf.mxu0
  %5743 = vdwg.mxu0
  %5744 = vmatpush.bf16.msra.mxu0 %v5176
  %5745 = vmatpush.bf16.msra.mxu0 %v5171
  %5746 = vmatpush.bf16.msra.mxu0 %v5166
  %5747 = vmatpush.bf16.msra.mxu0 %v5161
  %5748 = vmatpush.bf16.msra.mxu0 %v5156
  %5749 = vmatpush.bf16.msra.mxu0 %v5151
  %5750 = vmatpush.bf16.msra.mxu0 %v5146
  %5751 = vmatpush.bf16.msra.mxu0 %v5141
  %5752 = vmatmul.bf16.gmra.mxu0 %v343
  %v5753 = vpop.f32.mrf.mxu0
  %v5754 = vadd.f32 %v5741, %v5753
  %v5755 = vpop.f32.mrf.mxu0
  %5756 = vdwg.mxu0
  %5757 = vmatpush.bf16.msra.mxu0 %v5216
  %5758 = vmatpush.bf16.msra.mxu0 %v5211
  %5759 = vmatpush.bf16.msra.mxu0 %v5206
  %5760 = vmatpush.bf16.msra.mxu0 %v5201
  %5761 = vmatpush.bf16.msra.mxu0 %v5196
  %5762 = vmatpush.bf16.msra.mxu0 %v5191
  %5763 = vmatpush.bf16.msra.mxu0 %v5186
  %5764 = vmatpush.bf16.msra.mxu0 %v5181
  %5765 = vmatmul.bf16.gmra.mxu0 %v344
  %v5766 = vpop.f32.mrf.mxu0
  %v5767 = vadd.f32 %v5754, %v5766
  %v5768 = vpop.f32.mrf.mxu0
  %5769 = vdwg.mxu0
  %5770 = vmatpush.bf16.msra.mxu0 %v5017
  %5771 = vmatpush.bf16.msra.mxu0 %v5012
  %5772 = vmatpush.bf16.msra.mxu0 %v5007
  %5773 = vmatpush.bf16.msra.mxu0 %v5002
  %5774 = vmatpush.bf16.msra.mxu0 %v4997
  %5775 = vmatpush.bf16.msra.mxu0 %v4992
  %5776 = vmatpush.bf16.msra.mxu0 %v4987
  %5777 = vmatpush.bf16.msra.mxu0 %v4982
  %5778 = vmatmul.bf16.gmra.mxu0 %v339
  %v5779 = vpop.f32.mrf.mxu0
  %v5780 = vadd.f32 0.0, %v5779
  %v5781 = vpop.f32.mrf.mxu0
  %5782 = vdwg.mxu0
  %5783 = vmatpush.bf16.msra.mxu0 %v5057
  %5784 = vmatpush.bf16.msra.mxu0 %v5052
  %5785 = vmatpush.bf16.msra.mxu0 %v5047
  %5786 = vmatpush.bf16.msra.mxu0 %v5042
  %5787 = vmatpush.bf16.msra.mxu0 %v5037
  %5788 = vmatpush.bf16.msra.mxu0 %v5032
  %5789 = vmatpush.bf16.msra.mxu0 %v5027
  %5790 = vmatpush.bf16.msra.mxu0 %v5022
  %5791 = vmatmul.bf16.gmra.mxu0 %v340
  %v5792 = vpop.f32.mrf.mxu0
  %v5793 = vadd.f32 %v5780, %v5792
  %v5794 = vpop.f32.mrf.mxu0
  %5795 = vdwg.mxu0
  %5796 = vmatpush.bf16.msra.mxu0 %v5097
  %5797 = vmatpush.bf16.msra.mxu0 %v5092
  %5798 = vmatpush.bf16.msra.mxu0 %v5087
  %5799 = vmatpush.bf16.msra.mxu0 %v5082
  %5800 = vmatpush.bf16.msra.mxu0 %v5077
  %5801 = vmatpush.bf16.msra.mxu0 %v5072
  %5802 = vmatpush.bf16.msra.mxu0 %v5067
  %5803 = vmatpush.bf16.msra.mxu0 %v5062
  %5804 = vmatmul.bf16.gmra.mxu0 %v341
  %v5805 = vpop.f32.mrf.mxu0
  %v5806 = vadd.f32 %v5793, %v5805
  %v5807 = vpop.f32.mrf.mxu0
  %5808 = vdwg.mxu0
  %5809 = vmatpush.bf16.msra.mxu0 %v5137
  %5810 = vmatpush.bf16.msra.mxu0 %v5132
  %5811 = vmatpush.bf16.msra.mxu0 %v5127
  %5812 = vmatpush.bf16.msra.mxu0 %v5122
  %5813 = vmatpush.bf16.msra.mxu0 %v5117
  %5814 = vmatpush.bf16.msra.mxu0 %v5112
  %5815 = vmatpush.bf16.msra.mxu0 %v5107
  %5816 = vmatpush.bf16.msra.mxu0 %v5102
  %5817 = vmatmul.bf16.gmra.mxu0 %v342
  %v5818 = vpop.f32.mrf.mxu0
  %v5819 = vadd.f32 %v5806, %v5818
  %v5820 = vpop.f32.mrf.mxu0
  %5821 = vdwg.mxu0
  %5822 = vmatpush.bf16.msra.mxu0 %v5177
  %5823 = vmatpush.bf16.msra.mxu0 %v5172
  %5824 = vmatpush.bf16.msra.mxu0 %v5167
  %5825 = vmatpush.bf16.msra.mxu0 %v5162
  %5826 = vmatpush.bf16.msra.mxu0 %v5157
  %5827 = vmatpush.bf16.msra.mxu0 %v5152
  %5828 = vmatpush.bf16.msra.mxu0 %v5147
  %5829 = vmatpush.bf16.msra.mxu0 %v5142
  %5830 = vmatmul.bf16.gmra.mxu0 %v343
  %v5831 = vpop.f32.mrf.mxu0
  %v5832 = vadd.f32 %v5819, %v5831
  %v5833 = vpop.f32.mrf.mxu0
  %5834 = vdwg.mxu0
  %5835 = vmatpush.bf16.msra.mxu0 %v5217
  %5836 = vmatpush.bf16.msra.mxu0 %v5212
  %5837 = vmatpush.bf16.msra.mxu0 %v5207
  %5838 = vmatpush.bf16.msra.mxu0 %v5202
  %5839 = vmatpush.bf16.msra.mxu0 %v5197
  %5840 = vmatpush.bf16.msra.mxu0 %v5192
  %5841 = vmatpush.bf16.msra.mxu0 %v5187
  %5842 = vmatpush.bf16.msra.mxu0 %v5182
  %5843 = vmatmul.bf16.gmra.mxu0 %v344
  %v5844 = vpop.f32.mrf.mxu0
  %v5845 = vadd.f32 %v5832, %v5844
  %v5846 = vpop.f32.mrf.mxu0
  %5847 = vdwg.mxu0
  %v5848 = vmax.f32 %v3916, %v5533
  %v5849 = vmax.f32 %v3917, %v5611
  %v5850 = vmax.f32 %v3918, %v5689
  %v5851 = vmax.f32 %v3919, %v5767
  %v5852 = vmax.f32 %v3920, %v5845
  %s5853 = scalar_lea.vmem %s1, 5760
  %v5854 = vld [vmem:[%s5853] sm:$0xff]
  %v5855 = vld [vmem:[%s5853 + $0x8] sm:$0xff]
  %v5856 = vld [vmem:[%s5853 + $0x10] sm:$0xf]
  %v5857 = vld [vmem:[%s5853 + $0x14] sm:$0xff]
  %v5858 = vld [vmem:[%s5853 + $0x1c] sm:$0xff]
  %v5859 = vld [vmem:[%s5853 + $0x24] sm:$0xf]
  %v5860 = vld [vmem:[%s5853 + $0x28] sm:$0xff]
  %v5861 = vld [vmem:[%s5853 + $0x30] sm:$0xff]
  %v5862 = vld [vmem:[%s5853 + $0x38] sm:$0xf]
  %v5863 = vld [vmem:[%s5853 + $0x3c] sm:$0xff]
  %v5864 = vld [vmem:[%s5853 + $0x44] sm:$0xff]
  %v5865 = vld [vmem:[%s5853 + $0x4c] sm:$0xf]
  %v5866 = vld [vmem:[%s5853 + $0x50] sm:$0xff]
  %v5867 = vld [vmem:[%s5853 + $0x58] sm:$0xff]
  %v5868 = vld [vmem:[%s5853 + $0x60] sm:$0xf]
  %v5869 = vld [vmem:[%s5853 + $0x64] sm:$0xff]
  %v5870 = vld [vmem:[%s5853 + $0x6c] sm:$0xff]
  %v5871 = vld [vmem:[%s5853 + $0x74] sm:$0xf]
  %v5872 = vld [vmem:[%s5853 + $0x78] sm:$0xff]
  %v5873 = vld [vmem:[%s5853 + $0x80] sm:$0xff]
  %v5874 = vld [vmem:[%s5853 + $0x88] sm:$0xf]
  %v5875 = vld [vmem:[%s5853 + $0x8c] sm:$0xff]
  %v5876 = vld [vmem:[%s5853 + $0x94] sm:$0xff]
  %v5877 = vld [vmem:[%s5853 + $0x9c] sm:$0xf]
  %v5878 = vld [vmem:[%s5853 + $0xa0] sm:$0xff]
  %v5879 = vld [vmem:[%s5853 + $0xa8] sm:$0xff]
  %v5880 = vld [vmem:[%s5853 + $0xb0] sm:$0xf]
  %v5881 = vld [vmem:[%s5853 + $0xb4] sm:$0xff]
  %v5882 = vld [vmem:[%s5853 + $0xbc] sm:$0xff]
  %v5883 = vld [vmem:[%s5853 + $0xc4] sm:$0xf]
  %v5884 = vld [vmem:[%s5853 + $0xc8] sm:$0xff]
  %v5885 = vld [vmem:[%s5853 + $0xd0] sm:$0xff]
  %v5886 = vld [vmem:[%s5853 + $0xd8] sm:$0xf]
  %v5887 = vld [vmem:[%s5853 + $0xdc] sm:$0xff]
  %v5888 = vld [vmem:[%s5853 + $0xe4] sm:$0xff]
  %v5889 = vld [vmem:[%s5853 + $0xec] sm:$0xf]
  %v5890 = vld [vmem:[%s5853 + $0xf0] sm:$0xff]
  %v5891 = vld [vmem:[%s5853 + $0xf8] sm:$0xff]
  %v5892 = vld [vmem:[%s5853 + $0x100] sm:$0xf]
  %v5893 = vld [vmem:[%s5853 + $0x104] sm:$0xff]
  %v5894 = vld [vmem:[%s5853 + $0x10c] sm:$0xff]
  %v5895 = vld [vmem:[%s5853 + $0x114] sm:$0xf]
  %v5896 = vld [vmem:[%s5853 + $0x118] sm:$0xff]
  %v5897 = vld [vmem:[%s5853 + $0x120] sm:$0xff]
  %v5898 = vld [vmem:[%s5853 + $0x128] sm:$0xf]
  %v5899 = vld [vmem:[%s5853 + $0x12c] sm:$0xff]
  %v5900 = vld [vmem:[%s5853 + $0x134] sm:$0xff]
  %v5901 = vld [vmem:[%s5853 + $0x13c] sm:$0xf]
  %v5902 = vld [vmem:[%s5853 + $0x140] sm:$0xff]
  %v5903 = vld [vmem:[%s5853 + $0x148] sm:$0xff]
  %v5904 = vld [vmem:[%s5853 + $0x150] sm:$0xf]
  %v5905 = vld [vmem:[%s5853 + $0x154] sm:$0xff]
  %v5906 = vld [vmem:[%s5853 + $0x15c] sm:$0xff]
  %v5907 = vld [vmem:[%s5853 + $0x164] sm:$0xf]
  %v5908 = vld [vmem:[%s5853 + $0x168] sm:$0xff]
  %v5909 = vld [vmem:[%s5853 + $0x170] sm:$0xff]
  %v5910 = vld [vmem:[%s5853 + $0x178] sm:$0xf]
  %v5911 = vld [vmem:[%s5853 + $0x17c] sm:$0xff]
  %v5912 = vld [vmem:[%s5853 + $0x184] sm:$0xff]
  %v5913 = vld [vmem:[%s5853 + $0x18c] sm:$0xf]
  %v5914 = vld [vmem:[%s5853 + $0x190] sm:$0xff]
  %v5915 = vld [vmem:[%s5853 + $0x198] sm:$0xff]
  %v5916 = vld [vmem:[%s5853 + $0x1a0] sm:$0xf]
  %v5917 = vld [vmem:[%s5853 + $0x1a4] sm:$0xff]
  %v5918 = vld [vmem:[%s5853 + $0x1ac] sm:$0xff]
  %v5919 = vld [vmem:[%s5853 + $0x1b4] sm:$0xf]
  %v5920 = vld [vmem:[%s5853 + $0x1b8] sm:$0xff]
  %v5921 = vld [vmem:[%s5853 + $0x1c0] sm:$0xff]
  %v5922 = vld [vmem:[%s5853 + $0x1c8] sm:$0xf]
  %v5923 = vld [vmem:[%s5853 + $0x1cc] sm:$0xff]
  %v5924 = vld [vmem:[%s5853 + $0x1d4] sm:$0xff]
  %v5925 = vld [vmem:[%s5853 + $0x1dc] sm:$0xf]
  %v5926 = vld [vmem:[%s5853 + $0x1e0] sm:$0xff]
  %v5927 = vld [vmem:[%s5853 + $0x1e8] sm:$0xff]
  %v5928 = vld [vmem:[%s5853 + $0x1f0] sm:$0xf]
  %v5929 = vld [vmem:[%s5853 + $0x1f4] sm:$0xff]
  %v5930 = vld [vmem:[%s5853 + $0x1fc] sm:$0xff]
  %v5931 = vld [vmem:[%s5853 + $0x204] sm:$0xf]
  %v5932 = vld [vmem:[%s5853 + $0x208] sm:$0xff]
  %v5933 = vld [vmem:[%s5853 + $0x210] sm:$0xff]
  %v5934 = vld [vmem:[%s5853 + $0x218] sm:$0xf]
  %v5935 = vld [vmem:[%s5853 + $0x21c] sm:$0xff]
  %v5936 = vld [vmem:[%s5853 + $0x224] sm:$0xff]
  %v5937 = vld [vmem:[%s5853 + $0x22c] sm:$0xf]
  %v5938 = vld [vmem:[%s5853 + $0x230] sm:$0xff]
  %v5939 = vld [vmem:[%s5853 + $0x238] sm:$0xff]
  %v5940 = vld [vmem:[%s5853 + $0x240] sm:$0xf]
  %v5941 = vld [vmem:[%s5853 + $0x244] sm:$0xff]
  %v5942 = vld [vmem:[%s5853 + $0x24c] sm:$0xff]
  %v5943 = vld [vmem:[%s5853 + $0x254] sm:$0xf]
  %v5944 = vld [vmem:[%s5853 + $0x258] sm:$0xff]
  %v5945 = vld [vmem:[%s5853 + $0x260] sm:$0xff]
  %v5946 = vld [vmem:[%s5853 + $0x268] sm:$0xf]
  %v5947 = vld [vmem:[%s5853 + $0x26c] sm:$0xff]
  %v5948 = vld [vmem:[%s5853 + $0x274] sm:$0xff]
  %v5949 = vld [vmem:[%s5853 + $0x27c] sm:$0xf]
  %v5950 = vld [vmem:[%s5853 + $0x280] sm:$0xff]
  %v5951 = vld [vmem:[%s5853 + $0x288] sm:$0xff]
  %v5952 = vld [vmem:[%s5853 + $0x290] sm:$0xf]
  %v5953 = vld [vmem:[%s5853 + $0x294] sm:$0xff]
  %v5954 = vld [vmem:[%s5853 + $0x29c] sm:$0xff]
  %v5955 = vld [vmem:[%s5853 + $0x2a4] sm:$0xf]
  %v5956 = vld [vmem:[%s5853 + $0x2a8] sm:$0xff]
  %v5957 = vld [vmem:[%s5853 + $0x2b0] sm:$0xff]
  %v5958 = vld [vmem:[%s5853 + $0x2b8] sm:$0xf]
  %v5959 = vld [vmem:[%s5853 + $0x2bc] sm:$0xff]
  %v5960 = vld [vmem:[%s5853 + $0x2c4] sm:$0xff]
  %v5961 = vld [vmem:[%s5853 + $0x2cc] sm:$0xf]
  %v5962 = vld [vmem:[%s5853 + $0x2d0] sm:$0xff]
  %v5963 = vld [vmem:[%s5853 + $0x2d8] sm:$0xff]
  %v5964 = vld [vmem:[%s5853 + $0x2e0] sm:$0xf]
  %v5965 = vld [vmem:[%s5853 + $0x2e4] sm:$0xff]
  %v5966 = vld [vmem:[%s5853 + $0x2ec] sm:$0xff]
  %v5967 = vld [vmem:[%s5853 + $0x2f4] sm:$0xf]
  %v5968 = vld [vmem:[%s5853 + $0x2f8] sm:$0xff]
  %v5969 = vld [vmem:[%s5853 + $0x300] sm:$0xff]
  %v5970 = vld [vmem:[%s5853 + $0x308] sm:$0xf]
  %v5971 = vld [vmem:[%s5853 + $0x30c] sm:$0xff]
  %v5972 = vld [vmem:[%s5853 + $0x314] sm:$0xff]
  %v5973 = vld [vmem:[%s5853 + $0x31c] sm:$0xf]
  %v5974 = vld [vmem:[%s5853 + $0x320] sm:$0xff]
  %v5975 = vld [vmem:[%s5853 + $0x328] sm:$0xff]
  %v5976 = vld [vmem:[%s5853 + $0x330] sm:$0xf]
  %v5977 = vld [vmem:[%s5853 + $0x334] sm:$0xff]
  %v5978 = vld [vmem:[%s5853 + $0x33c] sm:$0xff]
  %v5979 = vld [vmem:[%s5853 + $0x344] sm:$0xf]
  %v5980 = vld [vmem:[%s5853 + $0x348] sm:$0xff]
  %v5981 = vld [vmem:[%s5853 + $0x350] sm:$0xff]
  %v5982 = vld [vmem:[%s5853 + $0x358] sm:$0xf]
  %v5983 = vld [vmem:[%s5853 + $0x35c] sm:$0xff]
  %v5984 = vld [vmem:[%s5853 + $0x364] sm:$0xff]
  %v5985 = vld [vmem:[%s5853 + $0x36c] sm:$0xf]
  %v5986 = vld [vmem:[%s5853 + $0x370] sm:$0xff]
  %v5987 = vld [vmem:[%s5853 + $0x378] sm:$0xff]
  %v5988 = vld [vmem:[%s5853 + $0x380] sm:$0xf]
  %v5989 = vld [vmem:[%s5853 + $0x384] sm:$0xff]
  %v5990 = vld [vmem:[%s5853 + $0x38c] sm:$0xff]
  %v5991 = vld [vmem:[%s5853 + $0x394] sm:$0xf]
  %v5992 = vld [vmem:[%s5853 + $0x398] sm:$0xff]
  %v5993 = vld [vmem:[%s5853 + $0x3a0] sm:$0xff]
  %v5994 = vld [vmem:[%s5853 + $0x3a8] sm:$0xf]
  %v5995 = vld [vmem:[%s5853 + $0x3ac] sm:$0xff]
  %v5996 = vld [vmem:[%s5853 + $0x3b4] sm:$0xff]
  %v5997 = vld [vmem:[%s5853 + $0x3bc] sm:$0xf]
  %v5998 = vld [vmem:[%s5853 + $0x3c0] sm:$0xff]
  %v5999 = vld [vmem:[%s5853 + $0x3c8] sm:$0xff]
  %v6000 = vld [vmem:[%s5853 + $0x3d0] sm:$0xf]
  %v6001 = vld [vmem:[%s5853 + $0x3d4] sm:$0xff]
  %v6002 = vld [vmem:[%s5853 + $0x3dc] sm:$0xff]
  %v6003 = vld [vmem:[%s5853 + $0x3e4] sm:$0xf]
  %v6004 = vld [vmem:[%s5853 + $0x3e8] sm:$0xff]
  %v6005 = vld [vmem:[%s5853 + $0x3f0] sm:$0xff]
  %v6006 = vld [vmem:[%s5853 + $0x3f8] sm:$0xf]
  %v6007 = vld [vmem:[%s5853 + $0x3fc] sm:$0xff]
  %v6008 = vld [vmem:[%s5853 + $0x404] sm:$0xff]
  %v6009 = vld [vmem:[%s5853 + $0x40c] sm:$0xf]
  %v6010 = vld [vmem:[%s5853 + $0x410] sm:$0xff]
  %v6011 = vld [vmem:[%s5853 + $0x418] sm:$0xff]
  %v6012 = vld [vmem:[%s5853 + $0x420] sm:$0xf]
  %v6013 = vld [vmem:[%s5853 + $0x424] sm:$0xff]
  %v6014 = vld [vmem:[%s5853 + $0x42c] sm:$0xff]
  %v6015 = vld [vmem:[%s5853 + $0x434] sm:$0xf]
  %v6016 = vld [vmem:[%s5853 + $0x438] sm:$0xff]
  %v6017 = vld [vmem:[%s5853 + $0x440] sm:$0xff]
  %v6018 = vld [vmem:[%s5853 + $0x448] sm:$0xf]
  %v6019 = vld [vmem:[%s5853 + $0x44c] sm:$0xff]
  %v6020 = vld [vmem:[%s5853 + $0x454] sm:$0xff]
  %v6021 = vld [vmem:[%s5853 + $0x45c] sm:$0xf]
  %v6022 = vld [vmem:[%s5853 + $0x460] sm:$0xff]
  %v6023 = vld [vmem:[%s5853 + $0x468] sm:$0xff]
  %v6024 = vld [vmem:[%s5853 + $0x470] sm:$0xf]
  %v6025 = vld [vmem:[%s5853 + $0x474] sm:$0xff]
  %v6026 = vld [vmem:[%s5853 + $0x47c] sm:$0xff]
  %v6027 = vld [vmem:[%s5853 + $0x484] sm:$0xf]
  %v6028 = vld [vmem:[%s5853 + $0x488] sm:$0xff]
  %v6029 = vld [vmem:[%s5853 + $0x490] sm:$0xff]
  %v6030 = vld [vmem:[%s5853 + $0x498] sm:$0xf]
  %v6031 = vld [vmem:[%s5853 + $0x49c] sm:$0xff]
  %v6032 = vld [vmem:[%s5853 + $0x4a4] sm:$0xff]
  %v6033 = vld [vmem:[%s5853 + $0x4ac] sm:$0xf]
  %v6034 = vld [vmem:[%s5853 + $0x4b0] sm:$0xff]
  %v6035 = vld [vmem:[%s5853 + $0x4b8] sm:$0xff]
  %v6036 = vld [vmem:[%s5853 + $0x4c0] sm:$0xf]
  %v6037 = vld [vmem:[%s5853 + $0x4c4] sm:$0xff]
  %v6038 = vld [vmem:[%s5853 + $0x4cc] sm:$0xff]
  %v6039 = vld [vmem:[%s5853 + $0x4d4] sm:$0xf]
  %v6040 = vld [vmem:[%s5853 + $0x4d8] sm:$0xff]
  %v6041 = vld [vmem:[%s5853 + $0x4e0] sm:$0xff]
  %v6042 = vld [vmem:[%s5853 + $0x4e8] sm:$0xf]
  %v6043 = vld [vmem:[%s5853 + $0x4ec] sm:$0xff]
  %v6044 = vld [vmem:[%s5853 + $0x4f4] sm:$0xff]
  %v6045 = vld [vmem:[%s5853 + $0x4fc] sm:$0xf]
  %v6046 = vld [vmem:[%s5853 + $0x500] sm:$0xff]
  %v6047 = vld [vmem:[%s5853 + $0x508] sm:$0xff]
  %v6048 = vld [vmem:[%s5853 + $0x510] sm:$0xf]
  %v6049 = vld [vmem:[%s5853 + $0x514] sm:$0xff]
  %v6050 = vld [vmem:[%s5853 + $0x51c] sm:$0xff]
  %v6051 = vld [vmem:[%s5853 + $0x524] sm:$0xf]
  %v6052 = vld [vmem:[%s5853 + $0x528] sm:$0xff]
  %v6053 = vld [vmem:[%s5853 + $0x530] sm:$0xff]
  %v6054 = vld [vmem:[%s5853 + $0x538] sm:$0xf]
  %v6055 = vld [vmem:[%s5853 + $0x53c] sm:$0xff]
  %v6056 = vld [vmem:[%s5853 + $0x544] sm:$0xff]
  %v6057 = vld [vmem:[%s5853 + $0x54c] sm:$0xf]
  %v6058 = vld [vmem:[%s5853 + $0x550] sm:$0xff]
  %v6059 = vld [vmem:[%s5853 + $0x558] sm:$0xff]
  %v6060 = vld [vmem:[%s5853 + $0x560] sm:$0xf]
  %v6061 = vld [vmem:[%s5853 + $0x564] sm:$0xff]
  %v6062 = vld [vmem:[%s5853 + $0x56c] sm:$0xff]
  %v6063 = vld [vmem:[%s5853 + $0x574] sm:$0xf]
  %v6064 = vld [vmem:[%s5853 + $0x578] sm:$0xff]
  %v6065 = vld [vmem:[%s5853 + $0x580] sm:$0xff]
  %v6066 = vld [vmem:[%s5853 + $0x588] sm:$0xf]
  %v6067 = vld [vmem:[%s5853 + $0x58c] sm:$0xff]
  %v6068 = vld [vmem:[%s5853 + $0x594] sm:$0xff]
  %v6069 = vld [vmem:[%s5853 + $0x59c] sm:$0xf]
  %v6070 = vld [vmem:[%s5853 + $0x5a0] sm:$0xff]
  %v6071 = vld [vmem:[%s5853 + $0x5a8] sm:$0xff]
  %v6072 = vld [vmem:[%s5853 + $0x5b0] sm:$0xf]
  %v6073 = vld [vmem:[%s5853 + $0x5b4] sm:$0xff]
  %v6074 = vld [vmem:[%s5853 + $0x5bc] sm:$0xff]
  %v6075 = vld [vmem:[%s5853 + $0x5c4] sm:$0xf]
  %v6076 = vld [vmem:[%s5853 + $0x5c8] sm:$0xff]
  %v6077 = vld [vmem:[%s5853 + $0x5d0] sm:$0xff]
  %v6078 = vld [vmem:[%s5853 + $0x5d8] sm:$0xf]
  %v6079 = vld [vmem:[%s5853 + $0x5dc] sm:$0xff]
  %v6080 = vld [vmem:[%s5853 + $0x5e4] sm:$0xff]
  %v6081 = vld [vmem:[%s5853 + $0x5ec] sm:$0xf]
  %v6082 = vld [vmem:[%s5853 + $0x5f0] sm:$0xff]
  %v6083 = vld [vmem:[%s5853 + $0x5f8] sm:$0xff]
  %v6084 = vld [vmem:[%s5853 + $0x600] sm:$0xf]
  %v6085 = vld [vmem:[%s5853 + $0x604] sm:$0xff]
  %v6086 = vld [vmem:[%s5853 + $0x60c] sm:$0xff]
  %v6087 = vld [vmem:[%s5853 + $0x614] sm:$0xf]
  %v6088 = vld [vmem:[%s5853 + $0x618] sm:$0xff]
  %v6089 = vld [vmem:[%s5853 + $0x620] sm:$0xff]
  %v6090 = vld [vmem:[%s5853 + $0x628] sm:$0xf]
  %v6091 = vld [vmem:[%s5853 + $0x62c] sm:$0xff]
  %v6092 = vld [vmem:[%s5853 + $0x634] sm:$0xff]
  %v6093 = vld [vmem:[%s5853 + $0x63c] sm:$0xf]
  %v6094 = vld [vmem:[%s5853 + $0x640] sm:$0xff]
  %v6095 = vld [vmem:[%s5853 + $0x648] sm:$0xff]
  %v6096 = vld [vmem:[%s5853 + $0x650] sm:$0xf]
  %v6097 = vld [vmem:[%s5853 + $0x654] sm:$0xff]
  %v6098 = vld [vmem:[%s5853 + $0x65c] sm:$0xff]
  %v6099 = vld [vmem:[%s5853 + $0x664] sm:$0xf]
  %v6100 = vld [vmem:[%s5853 + $0x668] sm:$0xff]
  %v6101 = vld [vmem:[%s5853 + $0x670] sm:$0xff]
  %v6102 = vld [vmem:[%s5853 + $0x678] sm:$0xf]
  %v6103 = vld [vmem:[%s5853 + $0x67c] sm:$0xff]
  %v6104 = vld [vmem:[%s5853 + $0x684] sm:$0xff]
  %v6105 = vld [vmem:[%s5853 + $0x68c] sm:$0xf]
  %v6106 = vld [vmem:[%s5853 + $0x690] sm:$0xff]
  %v6107 = vld [vmem:[%s5853 + $0x698] sm:$0xff]
  %v6108 = vld [vmem:[%s5853 + $0x6a0] sm:$0xf]
  %v6109 = vld [vmem:[%s5853 + $0x6a4] sm:$0xff]
  %v6110 = vld [vmem:[%s5853 + $0x6ac] sm:$0xff]
  %v6111 = vld [vmem:[%s5853 + $0x6b4] sm:$0xf]
  %v6112 = vld [vmem:[%s5853 + $0x6b8] sm:$0xff]
  %v6113 = vld [vmem:[%s5853 + $0x6c0] sm:$0xff]
  %v6114 = vld [vmem:[%s5853 + $0x6c8] sm:$0xf]
  %v6115 = vld [vmem:[%s5853 + $0x6cc] sm:$0xff]
  %v6116 = vld [vmem:[%s5853 + $0x6d4] sm:$0xff]
  %v6117 = vld [vmem:[%s5853 + $0x6dc] sm:$0xf]
  %v6118 = vld [vmem:[%s5853 + $0x6e0] sm:$0xff]
  %v6119 = vld [vmem:[%s5853 + $0x6e8] sm:$0xff]
  %v6120 = vld [vmem:[%s5853 + $0x6f0] sm:$0xf]
  %v6121 = vld [vmem:[%s5853 + $0x6f4] sm:$0xff]
  %v6122 = vld [vmem:[%s5853 + $0x6fc] sm:$0xff]
  %v6123 = vld [vmem:[%s5853 + $0x704] sm:$0xf]
  %v6124 = vld [vmem:[%s5853 + $0x708] sm:$0xff]
  %v6125 = vld [vmem:[%s5853 + $0x710] sm:$0xff]
  %v6126 = vld [vmem:[%s5853 + $0x718] sm:$0xf]
  %v6127 = vld [vmem:[%s5853 + $0x71c] sm:$0xff]
  %v6128 = vld [vmem:[%s5853 + $0x724] sm:$0xff]
  %v6129 = vld [vmem:[%s5853 + $0x72c] sm:$0xf]
  %v6130 = vld [vmem:[%s5853 + $0x730] sm:$0xff]
  %v6131 = vld [vmem:[%s5853 + $0x738] sm:$0xff]
  %v6132 = vld [vmem:[%s5853 + $0x740] sm:$0xf]
  %v6133 = vld [vmem:[%s5853 + $0x744] sm:$0xff]
  %v6134 = vld [vmem:[%s5853 + $0x74c] sm:$0xff]
  %v6135 = vld [vmem:[%s5853 + $0x754] sm:$0xf]
  %v6136 = vld [vmem:[%s5853 + $0x758] sm:$0xff]
  %v6137 = vld [vmem:[%s5853 + $0x760] sm:$0xff]
  %v6138 = vld [vmem:[%s5853 + $0x768] sm:$0xf]
  %v6139 = vld [vmem:[%s5853 + $0x76c] sm:$0xff]
  %v6140 = vld [vmem:[%s5853 + $0x774] sm:$0xff]
  %v6141 = vld [vmem:[%s5853 + $0x77c] sm:$0xf]
  %v6430 = vunpack.c.l.b16 %v5854
  %v6431 = vunpack.c.h.b16 %v5854
  %v6432 = vunpack.c.l.b16 %v5855
  %v6433 = vunpack.c.h.b16 %v5855
  %v6434 = vunpack.c.l.b16 %v5856
  %v6435 = vunpack.c.l.b16 %v5857
  %v6436 = vunpack.c.h.b16 %v5857
  %v6437 = vunpack.c.l.b16 %v5858
  %v6438 = vunpack.c.h.b16 %v5858
  %v6439 = vunpack.c.l.b16 %v5859
  %v6440 = vunpack.c.l.b16 %v5860
  %v6441 = vunpack.c.h.b16 %v5860
  %v6442 = vunpack.c.l.b16 %v5861
  %v6443 = vunpack.c.h.b16 %v5861
  %v6444 = vunpack.c.l.b16 %v5862
  %v6445 = vunpack.c.l.b16 %v5863
  %v6446 = vunpack.c.h.b16 %v5863
  %v6447 = vunpack.c.l.b16 %v5864
  %v6448 = vunpack.c.h.b16 %v5864
  %v6449 = vunpack.c.l.b16 %v5865
  %v6450 = vunpack.c.l.b16 %v5866
  %v6451 = vunpack.c.h.b16 %v5866
  %v6452 = vunpack.c.l.b16 %v5867
  %v6453 = vunpack.c.h.b16 %v5867
  %v6454 = vunpack.c.l.b16 %v5868
  %v6455 = vunpack.c.l.b16 %v5869
  %v6456 = vunpack.c.h.b16 %v5869
  %v6457 = vunpack.c.l.b16 %v5870
  %v6458 = vunpack.c.h.b16 %v5870
  %v6459 = vunpack.c.l.b16 %v5871
  %v6460 = vunpack.c.l.b16 %v5872
  %v6461 = vunpack.c.h.b16 %v5872
  %v6462 = vunpack.c.l.b16 %v5873
  %v6463 = vunpack.c.h.b16 %v5873
  %v6464 = vunpack.c.l.b16 %v5874
  %v6465 = vunpack.c.l.b16 %v5875
  %v6466 = vunpack.c.h.b16 %v5875
  %v6467 = vunpack.c.l.b16 %v5876
  %v6468 = vunpack.c.h.b16 %v5876
  %v6469 = vunpack.c.l.b16 %v5877
  %v6470 = vunpack.c.l.b16 %v5878
  %v6471 = vunpack.c.h.b16 %v5878
  %v6472 = vunpack.c.l.b16 %v5879
  %v6473 = vunpack.c.h.b16 %v5879
  %v6474 = vunpack.c.l.b16 %v5880
  %v6475 = vunpack.c.l.b16 %v5881
  %v6476 = vunpack.c.h.b16 %v5881
  %v6477 = vunpack.c.l.b16 %v5882
  %v6478 = vunpack.c.h.b16 %v5882
  %v6479 = vunpack.c.l.b16 %v5883
  %v6480 = vunpack.c.l.b16 %v5884
  %v6481 = vunpack.c.h.b16 %v5884
  %v6482 = vunpack.c.l.b16 %v5885
  %v6483 = vunpack.c.h.b16 %v5885
  %v6484 = vunpack.c.l.b16 %v5886
  %v6485 = vunpack.c.l.b16 %v5887
  %v6486 = vunpack.c.h.b16 %v5887
  %v6487 = vunpack.c.l.b16 %v5888
  %v6488 = vunpack.c.h.b16 %v5888
  %v6489 = vunpack.c.l.b16 %v5889
  %v6490 = vunpack.c.l.b16 %v5890
  %v6491 = vunpack.c.h.b16 %v5890
  %v6492 = vunpack.c.l.b16 %v5891
  %v6493 = vunpack.c.h.b16 %v5891
  %v6494 = vunpack.c.l.b16 %v5892
  %v6495 = vunpack.c.l.b16 %v5893
  %v6496 = vunpack.c.h.b16 %v5893
  %v6497 = vunpack.c.l.b16 %v5894
  %v6498 = vunpack.c.h.b16 %v5894
  %v6499 = vunpack.c.l.b16 %v5895
  %v6500 = vunpack.c.l.b16 %v5896
  %v6501 = vunpack.c.h.b16 %v5896
  %v6502 = vunpack.c.l.b16 %v5897
  %v6503 = vunpack.c.h.b16 %v5897
  %v6504 = vunpack.c.l.b16 %v5898
  %v6505 = vunpack.c.l.b16 %v5899
  %v6506 = vunpack.c.h.b16 %v5899
  %v6507 = vunpack.c.l.b16 %v5900
  %v6508 = vunpack.c.h.b16 %v5900
  %v6509 = vunpack.c.l.b16 %v5901
  %v6510 = vunpack.c.l.b16 %v5902
  %v6511 = vunpack.c.h.b16 %v5902
  %v6512 = vunpack.c.l.b16 %v5903
  %v6513 = vunpack.c.h.b16 %v5903
  %v6514 = vunpack.c.l.b16 %v5904
  %v6515 = vunpack.c.l.b16 %v5905
  %v6516 = vunpack.c.h.b16 %v5905
  %v6517 = vunpack.c.l.b16 %v5906
  %v6518 = vunpack.c.h.b16 %v5906
  %v6519 = vunpack.c.l.b16 %v5907
  %v6520 = vunpack.c.l.b16 %v5908
  %v6521 = vunpack.c.h.b16 %v5908
  %v6522 = vunpack.c.l.b16 %v5909
  %v6523 = vunpack.c.h.b16 %v5909
  %v6524 = vunpack.c.l.b16 %v5910
  %v6525 = vunpack.c.l.b16 %v5911
  %v6526 = vunpack.c.h.b16 %v5911
  %v6527 = vunpack.c.l.b16 %v5912
  %v6528 = vunpack.c.h.b16 %v5912
  %v6529 = vunpack.c.l.b16 %v5913
  %v6530 = vunpack.c.l.b16 %v5914
  %v6531 = vunpack.c.h.b16 %v5914
  %v6532 = vunpack.c.l.b16 %v5915
  %v6533 = vunpack.c.h.b16 %v5915
  %v6534 = vunpack.c.l.b16 %v5916
  %v6535 = vunpack.c.l.b16 %v5917
  %v6536 = vunpack.c.h.b16 %v5917
  %v6537 = vunpack.c.l.b16 %v5918
  %v6538 = vunpack.c.h.b16 %v5918
  %v6539 = vunpack.c.l.b16 %v5919
  %v6540 = vunpack.c.l.b16 %v5920
  %v6541 = vunpack.c.h.b16 %v5920
  %v6542 = vunpack.c.l.b16 %v5921
  %v6543 = vunpack.c.h.b16 %v5921
  %v6544 = vunpack.c.l.b16 %v5922
  %v6545 = vunpack.c.l.b16 %v5923
  %v6546 = vunpack.c.h.b16 %v5923
  %v6547 = vunpack.c.l.b16 %v5924
  %v6548 = vunpack.c.h.b16 %v5924
  %v6549 = vunpack.c.l.b16 %v5925
  %v6550 = vunpack.c.l.b16 %v5926
  %v6551 = vunpack.c.h.b16 %v5926
  %v6552 = vunpack.c.l.b16 %v5927
  %v6553 = vunpack.c.h.b16 %v5927
  %v6554 = vunpack.c.l.b16 %v5928
  %v6555 = vunpack.c.l.b16 %v5929
  %v6556 = vunpack.c.h.b16 %v5929
  %v6557 = vunpack.c.l.b16 %v5930
  %v6558 = vunpack.c.h.b16 %v5930
  %v6559 = vunpack.c.l.b16 %v5931
  %v6560 = vunpack.c.l.b16 %v5932
  %v6561 = vunpack.c.h.b16 %v5932
  %v6562 = vunpack.c.l.b16 %v5933
  %v6563 = vunpack.c.h.b16 %v5933
  %v6564 = vunpack.c.l.b16 %v5934
  %v6565 = vunpack.c.l.b16 %v5935
  %v6566 = vunpack.c.h.b16 %v5935
  %v6567 = vunpack.c.l.b16 %v5936
  %v6568 = vunpack.c.h.b16 %v5936
  %v6569 = vunpack.c.l.b16 %v5937
  %v6570 = vunpack.c.l.b16 %v5938
  %v6571 = vunpack.c.h.b16 %v5938
  %v6572 = vunpack.c.l.b16 %v5939
  %v6573 = vunpack.c.h.b16 %v5939
  %v6574 = vunpack.c.l.b16 %v5940
  %v6575 = vunpack.c.l.b16 %v5941
  %v6576 = vunpack.c.h.b16 %v5941
  %v6577 = vunpack.c.l.b16 %v5942
  %v6578 = vunpack.c.h.b16 %v5942
  %v6579 = vunpack.c.l.b16 %v5943
  %v6580 = vunpack.c.l.b16 %v5944
  %v6581 = vunpack.c.h.b16 %v5944
  %v6582 = vunpack.c.l.b16 %v5945
  %v6583 = vunpack.c.h.b16 %v5945
  %v6584 = vunpack.c.l.b16 %v5946
  %v6585 = vunpack.c.l.b16 %v5947
  %v6586 = vunpack.c.h.b16 %v5947
  %v6587 = vunpack.c.l.b16 %v5948
  %v6588 = vunpack.c.h.b16 %v5948
  %v6589 = vunpack.c.l.b16 %v5949
  %v6590 = vunpack.c.l.b16 %v5950
  %v6591 = vunpack.c.h.b16 %v5950
  %v6592 = vunpack.c.l.b16 %v5951
  %v6593 = vunpack.c.h.b16 %v5951
  %v6594 = vunpack.c.l.b16 %v5952
  %v6595 = vunpack.c.l.b16 %v5953
  %v6596 = vunpack.c.h.b16 %v5953
  %v6597 = vunpack.c.l.b16 %v5954
  %v6598 = vunpack.c.h.b16 %v5954
  %v6599 = vunpack.c.l.b16 %v5955
  %v6600 = vunpack.c.l.b16 %v5956
  %v6601 = vunpack.c.h.b16 %v5956
  %v6602 = vunpack.c.l.b16 %v5957
  %v6603 = vunpack.c.h.b16 %v5957
  %v6604 = vunpack.c.l.b16 %v5958
  %v6605 = vunpack.c.l.b16 %v5959
  %v6606 = vunpack.c.h.b16 %v5959
  %v6607 = vunpack.c.l.b16 %v5960
  %v6608 = vunpack.c.h.b16 %v5960
  %v6609 = vunpack.c.l.b16 %v5961
  %v6610 = vunpack.c.l.b16 %v5962
  %v6611 = vunpack.c.h.b16 %v5962
  %v6612 = vunpack.c.l.b16 %v5963
  %v6613 = vunpack.c.h.b16 %v5963
  %v6614 = vunpack.c.l.b16 %v5964
  %v6615 = vunpack.c.l.b16 %v5965
  %v6616 = vunpack.c.h.b16 %v5965
  %v6617 = vunpack.c.l.b16 %v5966
  %v6618 = vunpack.c.h.b16 %v5966
  %v6619 = vunpack.c.l.b16 %v5967
  %v6620 = vunpack.c.l.b16 %v5968
  %v6621 = vunpack.c.h.b16 %v5968
  %v6622 = vunpack.c.l.b16 %v5969
  %v6623 = vunpack.c.h.b16 %v5969
  %v6624 = vunpack.c.l.b16 %v5970
  %v6625 = vunpack.c.l.b16 %v5971
  %v6626 = vunpack.c.h.b16 %v5971
  %v6627 = vunpack.c.l.b16 %v5972
  %v6628 = vunpack.c.h.b16 %v5972
  %v6629 = vunpack.c.l.b16 %v5973
  %v6630 = vunpack.c.l.b16 %v5974
  %v6631 = vunpack.c.h.b16 %v5974
  %v6632 = vunpack.c.l.b16 %v5975
  %v6633 = vunpack.c.h.b16 %v5975
  %v6634 = vunpack.c.l.b16 %v5976
  %v6635 = vunpack.c.l.b16 %v5977
  %v6636 = vunpack.c.h.b16 %v5977
  %v6637 = vunpack.c.l.b16 %v5978
  %v6638 = vunpack.c.h.b16 %v5978
  %v6639 = vunpack.c.l.b16 %v5979
  %v6640 = vunpack.c.l.b16 %v5980
  %v6641 = vunpack.c.h.b16 %v5980
  %v6642 = vunpack.c.l.b16 %v5981
  %v6643 = vunpack.c.h.b16 %v5981
  %v6644 = vunpack.c.l.b16 %v5982
  %v6645 = vunpack.c.l.b16 %v5983
  %v6646 = vunpack.c.h.b16 %v5983
  %v6647 = vunpack.c.l.b16 %v5984
  %v6648 = vunpack.c.h.b16 %v5984
  %v6649 = vunpack.c.l.b16 %v5985
  %v6650 = vunpack.c.l.b16 %v5986
  %v6651 = vunpack.c.h.b16 %v5986
  %v6652 = vunpack.c.l.b16 %v5987
  %v6653 = vunpack.c.h.b16 %v5987
  %v6654 = vunpack.c.l.b16 %v5988
  %v6655 = vunpack.c.l.b16 %v5989
  %v6656 = vunpack.c.h.b16 %v5989
  %v6657 = vunpack.c.l.b16 %v5990
  %v6658 = vunpack.c.h.b16 %v5990
  %v6659 = vunpack.c.l.b16 %v5991
  %v6660 = vunpack.c.l.b16 %v5992
  %v6661 = vunpack.c.h.b16 %v5992
  %v6662 = vunpack.c.l.b16 %v5993
  %v6663 = vunpack.c.h.b16 %v5993
  %v6664 = vunpack.c.l.b16 %v5994
  %v6665 = vunpack.c.l.b16 %v5995
  %v6666 = vunpack.c.h.b16 %v5995
  %v6667 = vunpack.c.l.b16 %v5996
  %v6668 = vunpack.c.h.b16 %v5996
  %v6669 = vunpack.c.l.b16 %v5997
  %v6670 = vunpack.c.l.b16 %v5998
  %v6671 = vunpack.c.h.b16 %v5998
  %v6672 = vunpack.c.l.b16 %v5999
  %v6673 = vunpack.c.h.b16 %v5999
  %v6674 = vunpack.c.l.b16 %v6000
  %v6675 = vunpack.c.l.b16 %v6001
  %v6676 = vunpack.c.h.b16 %v6001
  %v6677 = vunpack.c.l.b16 %v6002
  %v6678 = vunpack.c.h.b16 %v6002
  %v6679 = vunpack.c.l.b16 %v6003
  %v6680 = vunpack.c.l.b16 %v6004
  %v6681 = vunpack.c.h.b16 %v6004
  %v6682 = vunpack.c.l.b16 %v6005
  %v6683 = vunpack.c.h.b16 %v6005
  %v6684 = vunpack.c.l.b16 %v6006
  %v6685 = vunpack.c.l.b16 %v6007
  %v6686 = vunpack.c.h.b16 %v6007
  %v6687 = vunpack.c.l.b16 %v6008
  %v6688 = vunpack.c.h.b16 %v6008
  %v6689 = vunpack.c.l.b16 %v6009
  %v6690 = vunpack.c.l.b16 %v6010
  %v6691 = vunpack.c.h.b16 %v6010
  %v6692 = vunpack.c.l.b16 %v6011
  %v6693 = vunpack.c.h.b16 %v6011
  %v6694 = vunpack.c.l.b16 %v6012
  %v6695 = vunpack.c.l.b16 %v6013
  %v6696 = vunpack.c.h.b16 %v6013
  %v6697 = vunpack.c.l.b16 %v6014
  %v6698 = vunpack.c.h.b16 %v6014
  %v6699 = vunpack.c.l.b16 %v6015
  %v6700 = vunpack.c.l.b16 %v6016
  %v6701 = vunpack.c.h.b16 %v6016
  %v6702 = vunpack.c.l.b16 %v6017
  %v6703 = vunpack.c.h.b16 %v6017
  %v6704 = vunpack.c.l.b16 %v6018
  %v6705 = vunpack.c.l.b16 %v6019
  %v6706 = vunpack.c.h.b16 %v6019
  %v6707 = vunpack.c.l.b16 %v6020
  %v6708 = vunpack.c.h.b16 %v6020
  %v6709 = vunpack.c.l.b16 %v6021
  %v6710 = vunpack.c.l.b16 %v6022
  %v6711 = vunpack.c.h.b16 %v6022
  %v6712 = vunpack.c.l.b16 %v6023
  %v6713 = vunpack.c.h.b16 %v6023
  %v6714 = vunpack.c.l.b16 %v6024
  %v6715 = vunpack.c.l.b16 %v6025
  %v6716 = vunpack.c.h.b16 %v6025
  %v6717 = vunpack.c.l.b16 %v6026
  %v6718 = vunpack.c.h.b16 %v6026
  %v6719 = vunpack.c.l.b16 %v6027
  %v6720 = vunpack.c.l.b16 %v6028
  %v6721 = vunpack.c.h.b16 %v6028
  %v6722 = vunpack.c.l.b16 %v6029
  %v6723 = vunpack.c.h.b16 %v6029
  %v6724 = vunpack.c.l.b16 %v6030
  %v6725 = vunpack.c.l.b16 %v6031
  %v6726 = vunpack.c.h.b16 %v6031
  %v6727 = vunpack.c.l.b16 %v6032
  %v6728 = vunpack.c.h.b16 %v6032
  %v6729 = vunpack.c.l.b16 %v6033
  %v6730 = vunpack.c.l.b16 %v6034
  %v6731 = vunpack.c.h.b16 %v6034
  %v6732 = vunpack.c.l.b16 %v6035
  %v6733 = vunpack.c.h.b16 %v6035
  %v6734 = vunpack.c.l.b16 %v6036
  %v6735 = vunpack.c.l.b16 %v6037
  %v6736 = vunpack.c.h.b16 %v6037
  %v6737 = vunpack.c.l.b16 %v6038
  %v6738 = vunpack.c.h.b16 %v6038
  %v6739 = vunpack.c.l.b16 %v6039
  %v6740 = vunpack.c.l.b16 %v6040
  %v6741 = vunpack.c.h.b16 %v6040
  %v6742 = vunpack.c.l.b16 %v6041
  %v6743 = vunpack.c.h.b16 %v6041
  %v6744 = vunpack.c.l.b16 %v6042
  %v6745 = vunpack.c.l.b16 %v6043
  %v6746 = vunpack.c.h.b16 %v6043
  %v6747 = vunpack.c.l.b16 %v6044
  %v6748 = vunpack.c.h.b16 %v6044
  %v6749 = vunpack.c.l.b16 %v6045
  %v6750 = vunpack.c.l.b16 %v6046
  %v6751 = vunpack.c.h.b16 %v6046
  %v6752 = vunpack.c.l.b16 %v6047
  %v6753 = vunpack.c.h.b16 %v6047
  %v6754 = vunpack.c.l.b16 %v6048
  %v6755 = vunpack.c.l.b16 %v6049
  %v6756 = vunpack.c.h.b16 %v6049
  %v6757 = vunpack.c.l.b16 %v6050
  %v6758 = vunpack.c.h.b16 %v6050
  %v6759 = vunpack.c.l.b16 %v6051
  %v6760 = vunpack.c.l.b16 %v6052
  %v6761 = vunpack.c.h.b16 %v6052
  %v6762 = vunpack.c.l.b16 %v6053
  %v6763 = vunpack.c.h.b16 %v6053
  %v6764 = vunpack.c.l.b16 %v6054
  %v6765 = vunpack.c.l.b16 %v6055
  %v6766 = vunpack.c.h.b16 %v6055
  %v6767 = vunpack.c.l.b16 %v6056
  %v6768 = vunpack.c.h.b16 %v6056
  %v6769 = vunpack.c.l.b16 %v6057
  %v6770 = vunpack.c.l.b16 %v6058
  %v6771 = vunpack.c.h.b16 %v6058
  %v6772 = vunpack.c.l.b16 %v6059
  %v6773 = vunpack.c.h.b16 %v6059
  %v6774 = vunpack.c.l.b16 %v6060
  %v6775 = vunpack.c.l.b16 %v6061
  %v6776 = vunpack.c.h.b16 %v6061
  %v6777 = vunpack.c.l.b16 %v6062
  %v6778 = vunpack.c.h.b16 %v6062
  %v6779 = vunpack.c.l.b16 %v6063
  %v6780 = vunpack.c.l.b16 %v6064
  %v6781 = vunpack.c.h.b16 %v6064
  %v6782 = vunpack.c.l.b16 %v6065
  %v6783 = vunpack.c.h.b16 %v6065
  %v6784 = vunpack.c.l.b16 %v6066
  %v6785 = vunpack.c.l.b16 %v6067
  %v6786 = vunpack.c.h.b16 %v6067
  %v6787 = vunpack.c.l.b16 %v6068
  %v6788 = vunpack.c.h.b16 %v6068
  %v6789 = vunpack.c.l.b16 %v6069
  %v6790 = vunpack.c.l.b16 %v6070
  %v6791 = vunpack.c.h.b16 %v6070
  %v6792 = vunpack.c.l.b16 %v6071
  %v6793 = vunpack.c.h.b16 %v6071
  %v6794 = vunpack.c.l.b16 %v6072
  %v6795 = vunpack.c.l.b16 %v6073
  %v6796 = vunpack.c.h.b16 %v6073
  %v6797 = vunpack.c.l.b16 %v6074
  %v6798 = vunpack.c.h.b16 %v6074
  %v6799 = vunpack.c.l.b16 %v6075
  %v6800 = vunpack.c.l.b16 %v6076
  %v6801 = vunpack.c.h.b16 %v6076
  %v6802 = vunpack.c.l.b16 %v6077
  %v6803 = vunpack.c.h.b16 %v6077
  %v6804 = vunpack.c.l.b16 %v6078
  %v6805 = vunpack.c.l.b16 %v6079
  %v6806 = vunpack.c.h.b16 %v6079
  %v6807 = vunpack.c.l.b16 %v6080
  %v6808 = vunpack.c.h.b16 %v6080
  %v6809 = vunpack.c.l.b16 %v6081
  %v6810 = vunpack.c.l.b16 %v6082
  %v6811 = vunpack.c.h.b16 %v6082
  %v6812 = vunpack.c.l.b16 %v6083
  %v6813 = vunpack.c.h.b16 %v6083
  %v6814 = vunpack.c.l.b16 %v6084
  %v6815 = vunpack.c.l.b16 %v6085
  %v6816 = vunpack.c.h.b16 %v6085
  %v6817 = vunpack.c.l.b16 %v6086
  %v6818 = vunpack.c.h.b16 %v6086
  %v6819 = vunpack.c.l.b16 %v6087
  %v6820 = vunpack.c.l.b16 %v6088
  %v6821 = vunpack.c.h.b16 %v6088
  %v6822 = vunpack.c.l.b16 %v6089
  %v6823 = vunpack.c.h.b16 %v6089
  %v6824 = vunpack.c.l.b16 %v6090
  %v6825 = vunpack.c.l.b16 %v6091
  %v6826 = vunpack.c.h.b16 %v6091
  %v6827 = vunpack.c.l.b16 %v6092
  %v6828 = vunpack.c.h.b16 %v6092
  %v6829 = vunpack.c.l.b16 %v6093
  %v6830 = vunpack.c.l.b16 %v6094
  %v6831 = vunpack.c.h.b16 %v6094
  %v6832 = vunpack.c.l.b16 %v6095
  %v6833 = vunpack.c.h.b16 %v6095
  %v6834 = vunpack.c.l.b16 %v6096
  %v6835 = vunpack.c.l.b16 %v6097
  %v6836 = vunpack.c.h.b16 %v6097
  %v6837 = vunpack.c.l.b16 %v6098
  %v6838 = vunpack.c.h.b16 %v6098
  %v6839 = vunpack.c.l.b16 %v6099
  %v6840 = vunpack.c.l.b16 %v6100
  %v6841 = vunpack.c.h.b16 %v6100
  %v6842 = vunpack.c.l.b16 %v6101
  %v6843 = vunpack.c.h.b16 %v6101
  %v6844 = vunpack.c.l.b16 %v6102
  %v6845 = vunpack.c.l.b16 %v6103
  %v6846 = vunpack.c.h.b16 %v6103
  %v6847 = vunpack.c.l.b16 %v6104
  %v6848 = vunpack.c.h.b16 %v6104
  %v6849 = vunpack.c.l.b16 %v6105
  %v6850 = vunpack.c.l.b16 %v6106
  %v6851 = vunpack.c.h.b16 %v6106
  %v6852 = vunpack.c.l.b16 %v6107
  %v6853 = vunpack.c.h.b16 %v6107
  %v6854 = vunpack.c.l.b16 %v6108
  %v6855 = vunpack.c.l.b16 %v6109
  %v6856 = vunpack.c.h.b16 %v6109
  %v6857 = vunpack.c.l.b16 %v6110
  %v6858 = vunpack.c.h.b16 %v6110
  %v6859 = vunpack.c.l.b16 %v6111
  %v6860 = vunpack.c.l.b16 %v6112
  %v6861 = vunpack.c.h.b16 %v6112
  %v6862 = vunpack.c.l.b16 %v6113
  %v6863 = vunpack.c.h.b16 %v6113
  %v6864 = vunpack.c.l.b16 %v6114
  %v6865 = vunpack.c.l.b16 %v6115
  %v6866 = vunpack.c.h.b16 %v6115
  %v6867 = vunpack.c.l.b16 %v6116
  %v6868 = vunpack.c.h.b16 %v6116
  %v6869 = vunpack.c.l.b16 %v6117
  %v6870 = vunpack.c.l.b16 %v6118
  %v6871 = vunpack.c.h.b16 %v6118
  %v6872 = vunpack.c.l.b16 %v6119
  %v6873 = vunpack.c.h.b16 %v6119
  %v6874 = vunpack.c.l.b16 %v6120
  %v6875 = vunpack.c.l.b16 %v6121
  %v6876 = vunpack.c.h.b16 %v6121
  %v6877 = vunpack.c.l.b16 %v6122
  %v6878 = vunpack.c.h.b16 %v6122
  %v6879 = vunpack.c.l.b16 %v6123
  %v6880 = vunpack.c.l.b16 %v6124
  %v6881 = vunpack.c.h.b16 %v6124
  %v6882 = vunpack.c.l.b16 %v6125
  %v6883 = vunpack.c.h.b16 %v6125
  %v6884 = vunpack.c.l.b16 %v6126
  %v6885 = vunpack.c.l.b16 %v6127
  %v6886 = vunpack.c.h.b16 %v6127
  %v6887 = vunpack.c.l.b16 %v6128
  %v6888 = vunpack.c.h.b16 %v6128
  %v6889 = vunpack.c.l.b16 %v6129
  %v6890 = vunpack.c.l.b16 %v6130
  %v6891 = vunpack.c.h.b16 %v6130
  %v6892 = vunpack.c.l.b16 %v6131
  %v6893 = vunpack.c.h.b16 %v6131
  %v6894 = vunpack.c.l.b16 %v6132
  %v6895 = vunpack.c.l.b16 %v6133
  %v6896 = vunpack.c.h.b16 %v6133
  %v6897 = vunpack.c.l.b16 %v6134
  %v6898 = vunpack.c.h.b16 %v6134
  %v6899 = vunpack.c.l.b16 %v6135
  %v6900 = vunpack.c.l.b16 %v6136
  %v6901 = vunpack.c.h.b16 %v6136
  %v6902 = vunpack.c.l.b16 %v6137
  %v6903 = vunpack.c.h.b16 %v6137
  %v6904 = vunpack.c.l.b16 %v6138
  %v6905 = vunpack.c.l.b16 %v6139
  %v6906 = vunpack.c.h.b16 %v6139
  %v6907 = vunpack.c.l.b16 %v6140
  %v6908 = vunpack.c.h.b16 %v6140
  %v6909 = vunpack.c.l.b16 %v6141
  %v6910 = vpack.c.b16 %v6435, %v6430
  %v6911 = vpack.c.b16 %v6436, %v6431
  %v6912 = vpack.c.b16 %v6437, %v6432
  %v6913 = vpack.c.b16 %v6438, %v6433
  %v6914 = vpack.c.b16 %v6439, %v6434
  %v6915 = vpack.c.b16 %v6445, %v6440
  %v6916 = vpack.c.b16 %v6446, %v6441
  %v6917 = vpack.c.b16 %v6447, %v6442
  %v6918 = vpack.c.b16 %v6448, %v6443
  %v6919 = vpack.c.b16 %v6449, %v6444
  %v6920 = vpack.c.b16 %v6455, %v6450
  %v6921 = vpack.c.b16 %v6456, %v6451
  %v6922 = vpack.c.b16 %v6457, %v6452
  %v6923 = vpack.c.b16 %v6458, %v6453
  %v6924 = vpack.c.b16 %v6459, %v6454
  %v6925 = vpack.c.b16 %v6465, %v6460
  %v6926 = vpack.c.b16 %v6466, %v6461
  %v6927 = vpack.c.b16 %v6467, %v6462
  %v6928 = vpack.c.b16 %v6468, %v6463
  %v6929 = vpack.c.b16 %v6469, %v6464
  %v6930 = vpack.c.b16 %v6475, %v6470
  %v6931 = vpack.c.b16 %v6476, %v6471
  %v6932 = vpack.c.b16 %v6477, %v6472
  %v6933 = vpack.c.b16 %v6478, %v6473
  %v6934 = vpack.c.b16 %v6479, %v6474
  %v6935 = vpack.c.b16 %v6485, %v6480
  %v6936 = vpack.c.b16 %v6486, %v6481
  %v6937 = vpack.c.b16 %v6487, %v6482
  %v6938 = vpack.c.b16 %v6488, %v6483
  %v6939 = vpack.c.b16 %v6489, %v6484
  %v6940 = vpack.c.b16 %v6495, %v6490
  %v6941 = vpack.c.b16 %v6496, %v6491
  %v6942 = vpack.c.b16 %v6497, %v6492
  %v6943 = vpack.c.b16 %v6498, %v6493
  %v6944 = vpack.c.b16 %v6499, %v6494
  %v6945 = vpack.c.b16 %v6505, %v6500
  %v6946 = vpack.c.b16 %v6506, %v6501
  %v6947 = vpack.c.b16 %v6507, %v6502
  %v6948 = vpack.c.b16 %v6508, %v6503
  %v6949 = vpack.c.b16 %v6509, %v6504
  %v6950 = vpack.c.b16 %v6515, %v6510
  %v6951 = vpack.c.b16 %v6516, %v6511
  %v6952 = vpack.c.b16 %v6517, %v6512
  %v6953 = vpack.c.b16 %v6518, %v6513
  %v6954 = vpack.c.b16 %v6519, %v6514
  %v6955 = vpack.c.b16 %v6525, %v6520
  %v6956 = vpack.c.b16 %v6526, %v6521
  %v6957 = vpack.c.b16 %v6527, %v6522
  %v6958 = vpack.c.b16 %v6528, %v6523
  %v6959 = vpack.c.b16 %v6529, %v6524
  %v6960 = vpack.c.b16 %v6535, %v6530
  %v6961 = vpack.c.b16 %v6536, %v6531
  %v6962 = vpack.c.b16 %v6537, %v6532
  %v6963 = vpack.c.b16 %v6538, %v6533
  %v6964 = vpack.c.b16 %v6539, %v6534
  %v6965 = vpack.c.b16 %v6545, %v6540
  %v6966 = vpack.c.b16 %v6546, %v6541
  %v6967 = vpack.c.b16 %v6547, %v6542
  %v6968 = vpack.c.b16 %v6548, %v6543
  %v6969 = vpack.c.b16 %v6549, %v6544
  %v6970 = vpack.c.b16 %v6555, %v6550
  %v6971 = vpack.c.b16 %v6556, %v6551
  %v6972 = vpack.c.b16 %v6557, %v6552
  %v6973 = vpack.c.b16 %v6558, %v6553
  %v6974 = vpack.c.b16 %v6559, %v6554
  %v6975 = vpack.c.b16 %v6565, %v6560
  %v6976 = vpack.c.b16 %v6566, %v6561
  %v6977 = vpack.c.b16 %v6567, %v6562
  %v6978 = vpack.c.b16 %v6568, %v6563
  %v6979 = vpack.c.b16 %v6569, %v6564
  %v6980 = vpack.c.b16 %v6575, %v6570
  %v6981 = vpack.c.b16 %v6576, %v6571
  %v6982 = vpack.c.b16 %v6577, %v6572
  %v6983 = vpack.c.b16 %v6578, %v6573
  %v6984 = vpack.c.b16 %v6579, %v6574
  %v6985 = vpack.c.b16 %v6585, %v6580
  %v6986 = vpack.c.b16 %v6586, %v6581
  %v6987 = vpack.c.b16 %v6587, %v6582
  %v6988 = vpack.c.b16 %v6588, %v6583
  %v6989 = vpack.c.b16 %v6589, %v6584
  %v6990 = vpack.c.b16 %v6595, %v6590
  %v6991 = vpack.c.b16 %v6596, %v6591
  %v6992 = vpack.c.b16 %v6597, %v6592
  %v6993 = vpack.c.b16 %v6598, %v6593
  %v6994 = vpack.c.b16 %v6599, %v6594
  %v6995 = vpack.c.b16 %v6605, %v6600
  %v6996 = vpack.c.b16 %v6606, %v6601
  %v6997 = vpack.c.b16 %v6607, %v6602
  %v6998 = vpack.c.b16 %v6608, %v6603
  %v6999 = vpack.c.b16 %v6609, %v6604
  %v7000 = vpack.c.b16 %v6615, %v6610
  %v7001 = vpack.c.b16 %v6616, %v6611
  %v7002 = vpack.c.b16 %v6617, %v6612
  %v7003 = vpack.c.b16 %v6618, %v6613
  %v7004 = vpack.c.b16 %v6619, %v6614
  %v7005 = vpack.c.b16 %v6625, %v6620
  %v7006 = vpack.c.b16 %v6626, %v6621
  %v7007 = vpack.c.b16 %v6627, %v6622
  %v7008 = vpack.c.b16 %v6628, %v6623
  %v7009 = vpack.c.b16 %v6629, %v6624
  %v7010 = vpack.c.b16 %v6635, %v6630
  %v7011 = vpack.c.b16 %v6636, %v6631
  %v7012 = vpack.c.b16 %v6637, %v6632
  %v7013 = vpack.c.b16 %v6638, %v6633
  %v7014 = vpack.c.b16 %v6639, %v6634
  %v7015 = vpack.c.b16 %v6645, %v6640
  %v7016 = vpack.c.b16 %v6646, %v6641
  %v7017 = vpack.c.b16 %v6647, %v6642
  %v7018 = vpack.c.b16 %v6648, %v6643
  %v7019 = vpack.c.b16 %v6649, %v6644
  %v7020 = vpack.c.b16 %v6655, %v6650
  %v7021 = vpack.c.b16 %v6656, %v6651
  %v7022 = vpack.c.b16 %v6657, %v6652
  %v7023 = vpack.c.b16 %v6658, %v6653
  %v7024 = vpack.c.b16 %v6659, %v6654
  %v7025 = vpack.c.b16 %v6665, %v6660
  %v7026 = vpack.c.b16 %v6666, %v6661
  %v7027 = vpack.c.b16 %v6667, %v6662
  %v7028 = vpack.c.b16 %v6668, %v6663
  %v7029 = vpack.c.b16 %v6669, %v6664
  %v7030 = vpack.c.b16 %v6675, %v6670
  %v7031 = vpack.c.b16 %v6676, %v6671
  %v7032 = vpack.c.b16 %v6677, %v6672
  %v7033 = vpack.c.b16 %v6678, %v6673
  %v7034 = vpack.c.b16 %v6679, %v6674
  %v7035 = vpack.c.b16 %v6685, %v6680
  %v7036 = vpack.c.b16 %v6686, %v6681
  %v7037 = vpack.c.b16 %v6687, %v6682
  %v7038 = vpack.c.b16 %v6688, %v6683
  %v7039 = vpack.c.b16 %v6689, %v6684
  %v7040 = vpack.c.b16 %v6695, %v6690
  %v7041 = vpack.c.b16 %v6696, %v6691
  %v7042 = vpack.c.b16 %v6697, %v6692
  %v7043 = vpack.c.b16 %v6698, %v6693
  %v7044 = vpack.c.b16 %v6699, %v6694
  %v7045 = vpack.c.b16 %v6705, %v6700
  %v7046 = vpack.c.b16 %v6706, %v6701
  %v7047 = vpack.c.b16 %v6707, %v6702
  %v7048 = vpack.c.b16 %v6708, %v6703
  %v7049 = vpack.c.b16 %v6709, %v6704
  %v7050 = vpack.c.b16 %v6715, %v6710
  %v7051 = vpack.c.b16 %v6716, %v6711
  %v7052 = vpack.c.b16 %v6717, %v6712
  %v7053 = vpack.c.b16 %v6718, %v6713
  %v7054 = vpack.c.b16 %v6719, %v6714
  %v7055 = vpack.c.b16 %v6725, %v6720
  %v7056 = vpack.c.b16 %v6726, %v6721
  %v7057 = vpack.c.b16 %v6727, %v6722
  %v7058 = vpack.c.b16 %v6728, %v6723
  %v7059 = vpack.c.b16 %v6729, %v6724
  %v7060 = vpack.c.b16 %v6735, %v6730
  %v7061 = vpack.c.b16 %v6736, %v6731
  %v7062 = vpack.c.b16 %v6737, %v6732
  %v7063 = vpack.c.b16 %v6738, %v6733
  %v7064 = vpack.c.b16 %v6739, %v6734
  %v7065 = vpack.c.b16 %v6745, %v6740
  %v7066 = vpack.c.b16 %v6746, %v6741
  %v7067 = vpack.c.b16 %v6747, %v6742
  %v7068 = vpack.c.b16 %v6748, %v6743
  %v7069 = vpack.c.b16 %v6749, %v6744
  %v7070 = vpack.c.b16 %v6755, %v6750
  %v7071 = vpack.c.b16 %v6756, %v6751
  %v7072 = vpack.c.b16 %v6757, %v6752
  %v7073 = vpack.c.b16 %v6758, %v6753
  %v7074 = vpack.c.b16 %v6759, %v6754
  %v7075 = vpack.c.b16 %v6765, %v6760
  %v7076 = vpack.c.b16 %v6766, %v6761
  %v7077 = vpack.c.b16 %v6767, %v6762
  %v7078 = vpack.c.b16 %v6768, %v6763
  %v7079 = vpack.c.b16 %v6769, %v6764
  %v7080 = vpack.c.b16 %v6775, %v6770
  %v7081 = vpack.c.b16 %v6776, %v6771
  %v7082 = vpack.c.b16 %v6777, %v6772
  %v7083 = vpack.c.b16 %v6778, %v6773
  %v7084 = vpack.c.b16 %v6779, %v6774
  %v7085 = vpack.c.b16 %v6785, %v6780
  %v7086 = vpack.c.b16 %v6786, %v6781
  %v7087 = vpack.c.b16 %v6787, %v6782
  %v7088 = vpack.c.b16 %v6788, %v6783
  %v7089 = vpack.c.b16 %v6789, %v6784
  %v7090 = vpack.c.b16 %v6795, %v6790
  %v7091 = vpack.c.b16 %v6796, %v6791
  %v7092 = vpack.c.b16 %v6797, %v6792
  %v7093 = vpack.c.b16 %v6798, %v6793
  %v7094 = vpack.c.b16 %v6799, %v6794
  %v7095 = vpack.c.b16 %v6805, %v6800
  %v7096 = vpack.c.b16 %v6806, %v6801
  %v7097 = vpack.c.b16 %v6807, %v6802
  %v7098 = vpack.c.b16 %v6808, %v6803
  %v7099 = vpack.c.b16 %v6809, %v6804
  %v7100 = vpack.c.b16 %v6815, %v6810
  %v7101 = vpack.c.b16 %v6816, %v6811
  %v7102 = vpack.c.b16 %v6817, %v6812
  %v7103 = vpack.c.b16 %v6818, %v6813
  %v7104 = vpack.c.b16 %v6819, %v6814
  %v7105 = vpack.c.b16 %v6825, %v6820
  %v7106 = vpack.c.b16 %v6826, %v6821
  %v7107 = vpack.c.b16 %v6827, %v6822
  %v7108 = vpack.c.b16 %v6828, %v6823
  %v7109 = vpack.c.b16 %v6829, %v6824
  %v7110 = vpack.c.b16 %v6835, %v6830
  %v7111 = vpack.c.b16 %v6836, %v6831
  %v7112 = vpack.c.b16 %v6837, %v6832
  %v7113 = vpack.c.b16 %v6838, %v6833
  %v7114 = vpack.c.b16 %v6839, %v6834
  %v7115 = vpack.c.b16 %v6845, %v6840
  %v7116 = vpack.c.b16 %v6846, %v6841
  %v7117 = vpack.c.b16 %v6847, %v6842
  %v7118 = vpack.c.b16 %v6848, %v6843
  %v7119 = vpack.c.b16 %v6849, %v6844
  %v7120 = vpack.c.b16 %v6855, %v6850
  %v7121 = vpack.c.b16 %v6856, %v6851
  %v7122 = vpack.c.b16 %v6857, %v6852
  %v7123 = vpack.c.b16 %v6858, %v6853
  %v7124 = vpack.c.b16 %v6859, %v6854
  %v7125 = vpack.c.b16 %v6865, %v6860
  %v7126 = vpack.c.b16 %v6866, %v6861
  %v7127 = vpack.c.b16 %v6867, %v6862
  %v7128 = vpack.c.b16 %v6868, %v6863
  %v7129 = vpack.c.b16 %v6869, %v6864
  %v7130 = vpack.c.b16 %v6875, %v6870
  %v7131 = vpack.c.b16 %v6876, %v6871
  %v7132 = vpack.c.b16 %v6877, %v6872
  %v7133 = vpack.c.b16 %v6878, %v6873
  %v7134 = vpack.c.b16 %v6879, %v6874
  %v7135 = vpack.c.b16 %v6885, %v6880
  %v7136 = vpack.c.b16 %v6886, %v6881
  %v7137 = vpack.c.b16 %v6887, %v6882
  %v7138 = vpack.c.b16 %v6888, %v6883
  %v7139 = vpack.c.b16 %v6889, %v6884
  %v7140 = vpack.c.b16 %v6895, %v6890
  %v7141 = vpack.c.b16 %v6896, %v6891
  %v7142 = vpack.c.b16 %v6897, %v6892
  %v7143 = vpack.c.b16 %v6898, %v6893
  %v7144 = vpack.c.b16 %v6899, %v6894
  %v7145 = vpack.c.b16 %v6905, %v6900
  %v7146 = vpack.c.b16 %v6906, %v6901
  %v7147 = vpack.c.b16 %v6907, %v6902
  %v7148 = vpack.c.b16 %v6908, %v6903
  %v7149 = vpack.c.b16 %v6909, %v6904
  %7390 = vmatpush.bf16.msra.mxu0 %v6945
  %7391 = vmatpush.bf16.msra.mxu0 %v6940
  %7392 = vmatpush.bf16.msra.mxu0 %v6935
  %7393 = vmatpush.bf16.msra.mxu0 %v6930
  %7394 = vmatpush.bf16.msra.mxu0 %v6925
  %7395 = vmatpush.bf16.msra.mxu0 %v6920
  %7396 = vmatpush.bf16.msra.mxu0 %v6915
  %7397 = vmatpush.bf16.msra.mxu0 %v6910
  %7398 = vmatmul.bf16.gmra.mxu0 %v339
  %v7399 = vpop.f32.mrf.mxu0
  %v7400 = vadd.f32 0.0, %v7399
  %v7401 = vpop.f32.mrf.mxu0
  %7402 = vdwg.mxu0
  %7403 = vmatpush.bf16.msra.mxu0 %v6985
  %7404 = vmatpush.bf16.msra.mxu0 %v6980
  %7405 = vmatpush.bf16.msra.mxu0 %v6975
  %7406 = vmatpush.bf16.msra.mxu0 %v6970
  %7407 = vmatpush.bf16.msra.mxu0 %v6965
  %7408 = vmatpush.bf16.msra.mxu0 %v6960
  %7409 = vmatpush.bf16.msra.mxu0 %v6955
  %7410 = vmatpush.bf16.msra.mxu0 %v6950
  %7411 = vmatmul.bf16.gmra.mxu0 %v340
  %v7412 = vpop.f32.mrf.mxu0
  %v7413 = vadd.f32 %v7400, %v7412
  %v7414 = vpop.f32.mrf.mxu0
  %7415 = vdwg.mxu0
  %7416 = vmatpush.bf16.msra.mxu0 %v7025
  %7417 = vmatpush.bf16.msra.mxu0 %v7020
  %7418 = vmatpush.bf16.msra.mxu0 %v7015
  %7419 = vmatpush.bf16.msra.mxu0 %v7010
  %7420 = vmatpush.bf16.msra.mxu0 %v7005
  %7421 = vmatpush.bf16.msra.mxu0 %v7000
  %7422 = vmatpush.bf16.msra.mxu0 %v6995
  %7423 = vmatpush.bf16.msra.mxu0 %v6990
  %7424 = vmatmul.bf16.gmra.mxu0 %v341
  %v7425 = vpop.f32.mrf.mxu0
  %v7426 = vadd.f32 %v7413, %v7425
  %v7427 = vpop.f32.mrf.mxu0
  %7428 = vdwg.mxu0
  %7429 = vmatpush.bf16.msra.mxu0 %v7065
  %7430 = vmatpush.bf16.msra.mxu0 %v7060
  %7431 = vmatpush.bf16.msra.mxu0 %v7055
  %7432 = vmatpush.bf16.msra.mxu0 %v7050
  %7433 = vmatpush.bf16.msra.mxu0 %v7045
  %7434 = vmatpush.bf16.msra.mxu0 %v7040
  %7435 = vmatpush.bf16.msra.mxu0 %v7035
  %7436 = vmatpush.bf16.msra.mxu0 %v7030
  %7437 = vmatmul.bf16.gmra.mxu0 %v342
  %v7438 = vpop.f32.mrf.mxu0
  %v7439 = vadd.f32 %v7426, %v7438
  %v7440 = vpop.f32.mrf.mxu0
  %7441 = vdwg.mxu0
  %7442 = vmatpush.bf16.msra.mxu0 %v7105
  %7443 = vmatpush.bf16.msra.mxu0 %v7100
  %7444 = vmatpush.bf16.msra.mxu0 %v7095
  %7445 = vmatpush.bf16.msra.mxu0 %v7090
  %7446 = vmatpush.bf16.msra.mxu0 %v7085
  %7447 = vmatpush.bf16.msra.mxu0 %v7080
  %7448 = vmatpush.bf16.msra.mxu0 %v7075
  %7449 = vmatpush.bf16.msra.mxu0 %v7070
  %7450 = vmatmul.bf16.gmra.mxu0 %v343
  %v7451 = vpop.f32.mrf.mxu0
  %v7452 = vadd.f32 %v7439, %v7451
  %v7453 = vpop.f32.mrf.mxu0
  %7454 = vdwg.mxu0
  %7455 = vmatpush.bf16.msra.mxu0 %v7145
  %7456 = vmatpush.bf16.msra.mxu0 %v7140
  %7457 = vmatpush.bf16.msra.mxu0 %v7135
  %7458 = vmatpush.bf16.msra.mxu0 %v7130
  %7459 = vmatpush.bf16.msra.mxu0 %v7125
  %7460 = vmatpush.bf16.msra.mxu0 %v7120
  %7461 = vmatpush.bf16.msra.mxu0 %v7115
  %7462 = vmatpush.bf16.msra.mxu0 %v7110
  %7463 = vmatmul.bf16.gmra.mxu0 %v344
  %v7464 = vpop.f32.mrf.mxu0
  %v7465 = vadd.f32 %v7452, %v7464
  %v7466 = vpop.f32.mrf.mxu0
  %7467 = vdwg.mxu0
  %7468 = vmatpush.bf16.msra.mxu0 %v6946
  %7469 = vmatpush.bf16.msra.mxu0 %v6941
  %7470 = vmatpush.bf16.msra.mxu0 %v6936
  %7471 = vmatpush.bf16.msra.mxu0 %v6931
  %7472 = vmatpush.bf16.msra.mxu0 %v6926
  %7473 = vmatpush.bf16.msra.mxu0 %v6921
  %7474 = vmatpush.bf16.msra.mxu0 %v6916
  %7475 = vmatpush.bf16.msra.mxu0 %v6911
  %7476 = vmatmul.bf16.gmra.mxu0 %v339
  %v7477 = vpop.f32.mrf.mxu0
  %v7478 = vadd.f32 0.0, %v7477
  %v7479 = vpop.f32.mrf.mxu0
  %7480 = vdwg.mxu0
  %7481 = vmatpush.bf16.msra.mxu0 %v6986
  %7482 = vmatpush.bf16.msra.mxu0 %v6981
  %7483 = vmatpush.bf16.msra.mxu0 %v6976
  %7484 = vmatpush.bf16.msra.mxu0 %v6971
  %7485 = vmatpush.bf16.msra.mxu0 %v6966
  %7486 = vmatpush.bf16.msra.mxu0 %v6961
  %7487 = vmatpush.bf16.msra.mxu0 %v6956
  %7488 = vmatpush.bf16.msra.mxu0 %v6951
  %7489 = vmatmul.bf16.gmra.mxu0 %v340
  %v7490 = vpop.f32.mrf.mxu0
  %v7491 = vadd.f32 %v7478, %v7490
  %v7492 = vpop.f32.mrf.mxu0
  %7493 = vdwg.mxu0
  %7494 = vmatpush.bf16.msra.mxu0 %v7026
  %7495 = vmatpush.bf16.msra.mxu0 %v7021
  %7496 = vmatpush.bf16.msra.mxu0 %v7016
  %7497 = vmatpush.bf16.msra.mxu0 %v7011
  %7498 = vmatpush.bf16.msra.mxu0 %v7006
  %7499 = vmatpush.bf16.msra.mxu0 %v7001
  %7500 = vmatpush.bf16.msra.mxu0 %v6996
  %7501 = vmatpush.bf16.msra.mxu0 %v6991
  %7502 = vmatmul.bf16.gmra.mxu0 %v341
  %v7503 = vpop.f32.mrf.mxu0
  %v7504 = vadd.f32 %v7491, %v7503
  %v7505 = vpop.f32.mrf.mxu0
  %7506 = vdwg.mxu0
  %7507 = vmatpush.bf16.msra.mxu0 %v7066
  %7508 = vmatpush.bf16.msra.mxu0 %v7061
  %7509 = vmatpush.bf16.msra.mxu0 %v7056
  %7510 = vmatpush.bf16.msra.mxu0 %v7051
  %7511 = vmatpush.bf16.msra.mxu0 %v7046
  %7512 = vmatpush.bf16.msra.mxu0 %v7041
  %7513 = vmatpush.bf16.msra.mxu0 %v7036
  %7514 = vmatpush.bf16.msra.mxu0 %v7031
  %7515 = vmatmul.bf16.gmra.mxu0 %v342
  %v7516 = vpop.f32.mrf.mxu0
  %v7517 = vadd.f32 %v7504, %v7516
  %v7518 = vpop.f32.mrf.mxu0
  %7519 = vdwg.mxu0
  %7520 = vmatpush.bf16.msra.mxu0 %v7106
  %7521 = vmatpush.bf16.msra.mxu0 %v7101
  %7522 = vmatpush.bf16.msra.mxu0 %v7096
  %7523 = vmatpush.bf16.msra.mxu0 %v7091
  %7524 = vmatpush.bf16.msra.mxu0 %v7086
  %7525 = vmatpush.bf16.msra.mxu0 %v7081
  %7526 = vmatpush.bf16.msra.mxu0 %v7076
  %7527 = vmatpush.bf16.msra.mxu0 %v7071
  %7528 = vmatmul.bf16.gmra.mxu0 %v343
  %v7529 = vpop.f32.mrf.mxu0
  %v7530 = vadd.f32 %v7517, %v7529
  %v7531 = vpop.f32.mrf.mxu0
  %7532 = vdwg.mxu0
  %7533 = vmatpush.bf16.msra.mxu0 %v7146
  %7534 = vmatpush.bf16.msra.mxu0 %v7141
  %7535 = vmatpush.bf16.msra.mxu0 %v7136
  %7536 = vmatpush.bf16.msra.mxu0 %v7131
  %7537 = vmatpush.bf16.msra.mxu0 %v7126
  %7538 = vmatpush.bf16.msra.mxu0 %v7121
  %7539 = vmatpush.bf16.msra.mxu0 %v7116
  %7540 = vmatpush.bf16.msra.mxu0 %v7111
  %7541 = vmatmul.bf16.gmra.mxu0 %v344
  %v7542 = vpop.f32.mrf.mxu0
  %v7543 = vadd.f32 %v7530, %v7542
  %v7544 = vpop.f32.mrf.mxu0
  %7545 = vdwg.mxu0
  %7546 = vmatpush.bf16.msra.mxu0 %v6947
  %7547 = vmatpush.bf16.msra.mxu0 %v6942
  %7548 = vmatpush.bf16.msra.mxu0 %v6937
  %7549 = vmatpush.bf16.msra.mxu0 %v6932
  %7550 = vmatpush.bf16.msra.mxu0 %v6927
  %7551 = vmatpush.bf16.msra.mxu0 %v6922
  %7552 = vmatpush.bf16.msra.mxu0 %v6917
  %7553 = vmatpush.bf16.msra.mxu0 %v6912
  %7554 = vmatmul.bf16.gmra.mxu0 %v339
  %v7555 = vpop.f32.mrf.mxu0
  %v7556 = vadd.f32 0.0, %v7555
  %v7557 = vpop.f32.mrf.mxu0
  %7558 = vdwg.mxu0
  %7559 = vmatpush.bf16.msra.mxu0 %v6987
  %7560 = vmatpush.bf16.msra.mxu0 %v6982
  %7561 = vmatpush.bf16.msra.mxu0 %v6977
  %7562 = vmatpush.bf16.msra.mxu0 %v6972
  %7563 = vmatpush.bf16.msra.mxu0 %v6967
  %7564 = vmatpush.bf16.msra.mxu0 %v6962
  %7565 = vmatpush.bf16.msra.mxu0 %v6957
  %7566 = vmatpush.bf16.msra.mxu0 %v6952
  %7567 = vmatmul.bf16.gmra.mxu0 %v340
  %v7568 = vpop.f32.mrf.mxu0
  %v7569 = vadd.f32 %v7556, %v7568
  %v7570 = vpop.f32.mrf.mxu0
  %7571 = vdwg.mxu0
  %7572 = vmatpush.bf16.msra.mxu0 %v7027
  %7573 = vmatpush.bf16.msra.mxu0 %v7022
  %7574 = vmatpush.bf16.msra.mxu0 %v7017
  %7575 = vmatpush.bf16.msra.mxu0 %v7012
  %7576 = vmatpush.bf16.msra.mxu0 %v7007
  %7577 = vmatpush.bf16.msra.mxu0 %v7002
  %7578 = vmatpush.bf16.msra.mxu0 %v6997
  %7579 = vmatpush.bf16.msra.mxu0 %v6992
  %7580 = vmatmul.bf16.gmra.mxu0 %v341
  %v7581 = vpop.f32.mrf.mxu0
  %v7582 = vadd.f32 %v7569, %v7581
  %v7583 = vpop.f32.mrf.mxu0
  %7584 = vdwg.mxu0
  %7585 = vmatpush.bf16.msra.mxu0 %v7067
  %7586 = vmatpush.bf16.msra.mxu0 %v7062
  %7587 = vmatpush.bf16.msra.mxu0 %v7057
  %7588 = vmatpush.bf16.msra.mxu0 %v7052
  %7589 = vmatpush.bf16.msra.mxu0 %v7047
  %7590 = vmatpush.bf16.msra.mxu0 %v7042
  %7591 = vmatpush.bf16.msra.mxu0 %v7037
  %7592 = vmatpush.bf16.msra.mxu0 %v7032
  %7593 = vmatmul.bf16.gmra.mxu0 %v342
  %v7594 = vpop.f32.mrf.mxu0
  %v7595 = vadd.f32 %v7582, %v7594
  %v7596 = vpop.f32.mrf.mxu0
  %7597 = vdwg.mxu0
  %7598 = vmatpush.bf16.msra.mxu0 %v7107
  %7599 = vmatpush.bf16.msra.mxu0 %v7102
  %7600 = vmatpush.bf16.msra.mxu0 %v7097
  %7601 = vmatpush.bf16.msra.mxu0 %v7092
  %7602 = vmatpush.bf16.msra.mxu0 %v7087
  %7603 = vmatpush.bf16.msra.mxu0 %v7082
  %7604 = vmatpush.bf16.msra.mxu0 %v7077
  %7605 = vmatpush.bf16.msra.mxu0 %v7072
  %7606 = vmatmul.bf16.gmra.mxu0 %v343
  %v7607 = vpop.f32.mrf.mxu0
  %v7608 = vadd.f32 %v7595, %v7607
  %v7609 = vpop.f32.mrf.mxu0
  %7610 = vdwg.mxu0
  %7611 = vmatpush.bf16.msra.mxu0 %v7147
  %7612 = vmatpush.bf16.msra.mxu0 %v7142
  %7613 = vmatpush.bf16.msra.mxu0 %v7137
  %7614 = vmatpush.bf16.msra.mxu0 %v7132
  %7615 = vmatpush.bf16.msra.mxu0 %v7127
  %7616 = vmatpush.bf16.msra.mxu0 %v7122
  %7617 = vmatpush.bf16.msra.mxu0 %v7117
  %7618 = vmatpush.bf16.msra.mxu0 %v7112
  %7619 = vmatmul.bf16.gmra.mxu0 %v344
  %v7620 = vpop.f32.mrf.mxu0
  %v7621 = vadd.f32 %v7608, %v7620
  %v7622 = vpop.f32.mrf.mxu0
  %7623 = vdwg.mxu0
  %7624 = vmatpush.bf16.msra.mxu0 %v6948
  %7625 = vmatpush.bf16.msra.mxu0 %v6943
  %7626 = vmatpush.bf16.msra.mxu0 %v6938
  %7627 = vmatpush.bf16.msra.mxu0 %v6933
  %7628 = vmatpush.bf16.msra.mxu0 %v6928
  %7629 = vmatpush.bf16.msra.mxu0 %v6923
  %7630 = vmatpush.bf16.msra.mxu0 %v6918
  %7631 = vmatpush.bf16.msra.mxu0 %v6913
  %7632 = vmatmul.bf16.gmra.mxu0 %v339
  %v7633 = vpop.f32.mrf.mxu0
  %v7634 = vadd.f32 0.0, %v7633
  %v7635 = vpop.f32.mrf.mxu0
  %7636 = vdwg.mxu0
  %7637 = vmatpush.bf16.msra.mxu0 %v6988
  %7638 = vmatpush.bf16.msra.mxu0 %v6983
  %7639 = vmatpush.bf16.msra.mxu0 %v6978
  %7640 = vmatpush.bf16.msra.mxu0 %v6973
  %7641 = vmatpush.bf16.msra.mxu0 %v6968
  %7642 = vmatpush.bf16.msra.mxu0 %v6963
  %7643 = vmatpush.bf16.msra.mxu0 %v6958
  %7644 = vmatpush.bf16.msra.mxu0 %v6953
  %7645 = vmatmul.bf16.gmra.mxu0 %v340
  %v7646 = vpop.f32.mrf.mxu0
  %v7647 = vadd.f32 %v7634, %v7646
  %v7648 = vpop.f32.mrf.mxu0
  %7649 = vdwg.mxu0
  %7650 = vmatpush.bf16.msra.mxu0 %v7028
  %7651 = vmatpush.bf16.msra.mxu0 %v7023
  %7652 = vmatpush.bf16.msra.mxu0 %v7018
  %7653 = vmatpush.bf16.msra.mxu0 %v7013
  %7654 = vmatpush.bf16.msra.mxu0 %v7008
  %7655 = vmatpush.bf16.msra.mxu0 %v7003
  %7656 = vmatpush.bf16.msra.mxu0 %v6998
  %7657 = vmatpush.bf16.msra.mxu0 %v6993
  %7658 = vmatmul.bf16.gmra.mxu0 %v341
  %v7659 = vpop.f32.mrf.mxu0
  %v7660 = vadd.f32 %v7647, %v7659
  %v7661 = vpop.f32.mrf.mxu0
  %7662 = vdwg.mxu0
  %7663 = vmatpush.bf16.msra.mxu0 %v7068
  %7664 = vmatpush.bf16.msra.mxu0 %v7063
  %7665 = vmatpush.bf16.msra.mxu0 %v7058
  %7666 = vmatpush.bf16.msra.mxu0 %v7053
  %7667 = vmatpush.bf16.msra.mxu0 %v7048
  %7668 = vmatpush.bf16.msra.mxu0 %v7043
  %7669 = vmatpush.bf16.msra.mxu0 %v7038
  %7670 = vmatpush.bf16.msra.mxu0 %v7033
  %7671 = vmatmul.bf16.gmra.mxu0 %v342
  %v7672 = vpop.f32.mrf.mxu0
  %v7673 = vadd.f32 %v7660, %v7672
  %v7674 = vpop.f32.mrf.mxu0
  %7675 = vdwg.mxu0
  %7676 = vmatpush.bf16.msra.mxu0 %v7108
  %7677 = vmatpush.bf16.msra.mxu0 %v7103
  %7678 = vmatpush.bf16.msra.mxu0 %v7098
  %7679 = vmatpush.bf16.msra.mxu0 %v7093
  %7680 = vmatpush.bf16.msra.mxu0 %v7088
  %7681 = vmatpush.bf16.msra.mxu0 %v7083
  %7682 = vmatpush.bf16.msra.mxu0 %v7078
  %7683 = vmatpush.bf16.msra.mxu0 %v7073
  %7684 = vmatmul.bf16.gmra.mxu0 %v343
  %v7685 = vpop.f32.mrf.mxu0
  %v7686 = vadd.f32 %v7673, %v7685
  %v7687 = vpop.f32.mrf.mxu0
  %7688 = vdwg.mxu0
  %7689 = vmatpush.bf16.msra.mxu0 %v7148
  %7690 = vmatpush.bf16.msra.mxu0 %v7143
  %7691 = vmatpush.bf16.msra.mxu0 %v7138
  %7692 = vmatpush.bf16.msra.mxu0 %v7133
  %7693 = vmatpush.bf16.msra.mxu0 %v7128
  %7694 = vmatpush.bf16.msra.mxu0 %v7123
  %7695 = vmatpush.bf16.msra.mxu0 %v7118
  %7696 = vmatpush.bf16.msra.mxu0 %v7113
  %7697 = vmatmul.bf16.gmra.mxu0 %v344
  %v7698 = vpop.f32.mrf.mxu0
  %v7699 = vadd.f32 %v7686, %v7698
  %v7700 = vpop.f32.mrf.mxu0
  %7701 = vdwg.mxu0
  %7702 = vmatpush.bf16.msra.mxu0 %v6949
  %7703 = vmatpush.bf16.msra.mxu0 %v6944
  %7704 = vmatpush.bf16.msra.mxu0 %v6939
  %7705 = vmatpush.bf16.msra.mxu0 %v6934
  %7706 = vmatpush.bf16.msra.mxu0 %v6929
  %7707 = vmatpush.bf16.msra.mxu0 %v6924
  %7708 = vmatpush.bf16.msra.mxu0 %v6919
  %7709 = vmatpush.bf16.msra.mxu0 %v6914
  %7710 = vmatmul.bf16.gmra.mxu0 %v339
  %v7711 = vpop.f32.mrf.mxu0
  %v7712 = vadd.f32 0.0, %v7711
  %v7713 = vpop.f32.mrf.mxu0
  %7714 = vdwg.mxu0
  %7715 = vmatpush.bf16.msra.mxu0 %v6989
  %7716 = vmatpush.bf16.msra.mxu0 %v6984
  %7717 = vmatpush.bf16.msra.mxu0 %v6979
  %7718 = vmatpush.bf16.msra.mxu0 %v6974
  %7719 = vmatpush.bf16.msra.mxu0 %v6969
  %7720 = vmatpush.bf16.msra.mxu0 %v6964
  %7721 = vmatpush.bf16.msra.mxu0 %v6959
  %7722 = vmatpush.bf16.msra.mxu0 %v6954
  %7723 = vmatmul.bf16.gmra.mxu0 %v340
  %v7724 = vpop.f32.mrf.mxu0
  %v7725 = vadd.f32 %v7712, %v7724
  %v7726 = vpop.f32.mrf.mxu0
  %7727 = vdwg.mxu0
  %7728 = vmatpush.bf16.msra.mxu0 %v7029
  %7729 = vmatpush.bf16.msra.mxu0 %v7024
  %7730 = vmatpush.bf16.msra.mxu0 %v7019
  %7731 = vmatpush.bf16.msra.mxu0 %v7014
  %7732 = vmatpush.bf16.msra.mxu0 %v7009
  %7733 = vmatpush.bf16.msra.mxu0 %v7004
  %7734 = vmatpush.bf16.msra.mxu0 %v6999
  %7735 = vmatpush.bf16.msra.mxu0 %v6994
  %7736 = vmatmul.bf16.gmra.mxu0 %v341
  %v7737 = vpop.f32.mrf.mxu0
  %v7738 = vadd.f32 %v7725, %v7737
  %v7739 = vpop.f32.mrf.mxu0
  %7740 = vdwg.mxu0
  %7741 = vmatpush.bf16.msra.mxu0 %v7069
  %7742 = vmatpush.bf16.msra.mxu0 %v7064
  %7743 = vmatpush.bf16.msra.mxu0 %v7059
  %7744 = vmatpush.bf16.msra.mxu0 %v7054
  %7745 = vmatpush.bf16.msra.mxu0 %v7049
  %7746 = vmatpush.bf16.msra.mxu0 %v7044
  %7747 = vmatpush.bf16.msra.mxu0 %v7039
  %7748 = vmatpush.bf16.msra.mxu0 %v7034
  %7749 = vmatmul.bf16.gmra.mxu0 %v342
  %v7750 = vpop.f32.mrf.mxu0
  %v7751 = vadd.f32 %v7738, %v7750
  %v7752 = vpop.f32.mrf.mxu0
  %7753 = vdwg.mxu0
  %7754 = vmatpush.bf16.msra.mxu0 %v7109
  %7755 = vmatpush.bf16.msra.mxu0 %v7104
  %7756 = vmatpush.bf16.msra.mxu0 %v7099
  %7757 = vmatpush.bf16.msra.mxu0 %v7094
  %7758 = vmatpush.bf16.msra.mxu0 %v7089
  %7759 = vmatpush.bf16.msra.mxu0 %v7084
  %7760 = vmatpush.bf16.msra.mxu0 %v7079
  %7761 = vmatpush.bf16.msra.mxu0 %v7074
  %7762 = vmatmul.bf16.gmra.mxu0 %v343
  %v7763 = vpop.f32.mrf.mxu0
  %v7764 = vadd.f32 %v7751, %v7763
  %v7765 = vpop.f32.mrf.mxu0
  %7766 = vdwg.mxu0
  %7767 = vmatpush.bf16.msra.mxu0 %v7149
  %7768 = vmatpush.bf16.msra.mxu0 %v7144
  %7769 = vmatpush.bf16.msra.mxu0 %v7139
  %7770 = vmatpush.bf16.msra.mxu0 %v7134
  %7771 = vmatpush.bf16.msra.mxu0 %v7129
  %7772 = vmatpush.bf16.msra.mxu0 %v7124
  %7773 = vmatpush.bf16.msra.mxu0 %v7119
  %7774 = vmatpush.bf16.msra.mxu0 %v7114
  %7775 = vmatmul.bf16.gmra.mxu0 %v344
  %v7776 = vpop.f32.mrf.mxu0
  %v7777 = vadd.f32 %v7764, %v7776
  %v7778 = vpop.f32.mrf.mxu0
  %7779 = vdwg.mxu0
  %v7780 = vmax.f32 %v5848, %v7465
  %v7781 = vmax.f32 %v5849, %v7543
  %v7782 = vmax.f32 %v5850, %v7621
  %v7783 = vmax.f32 %v5851, %v7699
  %v7784 = vmax.f32 %v5852, %v7777
  %v7785 = vld [vmem:[%s2] sm:$0x1f]
  %v7787 = vperm.slane %v7785, 0
  %v7788 = vperm.slane %v7785, 1
  %v7789 = vperm.slane %v7785, 2
  %v7790 = vperm.slane %v7785, 3
  %v7791 = vperm.slane %v7785, 4
  %v7797 = vadd.f32 %v7780, %v7787
  %v7798 = vadd.f32 %v7781, %v7788
  %v7799 = vadd.f32 %v7782, %v7789
  %v7800 = vadd.f32 %v7783, %v7790
  %v7801 = vadd.f32 %v7784, %v7791
  %v7802 = vmax.f32 %v7797, 0.0
  %v7803 = vmax.f32 %v7798, 0.0
  %v7804 = vmax.f32 %v7799, 0.0
  %v7805 = vmax.f32 %v7800, 0.0
  %v7806 = vmax.f32 %v7801, 0.0
  %v7807 = vpack.c.bf16 %v7802, %v7802
  %v7808 = vpack.c.bf16 %v7803, %v7803
  %v7809 = vpack.c.bf16 %v7804, %v7804
  %v7810 = vpack.c.bf16 %v7805, %v7805
  %v7811 = vpack.c.bf16 %v7806, %v7806
  %v7812 = vld [vmem:[%s3] sm:$0xf]
  %v7813 = vld [vmem:[%s3 + $0x4] sm:$0xf]
  %v7814 = vld [vmem:[%s3 + $0x8] sm:$0xf]
  %v7815 = vld [vmem:[%s3 + $0xc] sm:$0xf]
  %v7816 = vld [vmem:[%s3 + $0x10] sm:$0xf]
  %v7817 = vld [vmem:[%s3 + $0x14] sm:$0xf]
  %v7818 = vld [vmem:[%s3 + $0x18] sm:$0xf]
  %v7819 = vld [vmem:[%s3 + $0x1c] sm:$0xf]
  %v7820 = vld [vmem:[%s3 + $0x20] sm:$0xf]
  %v7821 = vld [vmem:[%s3 + $0x24] sm:$0xf]
  %v7822 = vld [vmem:[%s3 + $0x28] sm:$0xf]
  %v7823 = vld [vmem:[%s3 + $0x2c] sm:$0xf]
  %v7824 = vld [vmem:[%s3 + $0x30] sm:$0xf]
  %v7825 = vld [vmem:[%s3 + $0x34] sm:$0xf]
  %v7826 = vld [vmem:[%s3 + $0x38] sm:$0xf]
  %v7827 = vld [vmem:[%s3 + $0x3c] sm:$0xf]
  %v7828 = vld [vmem:[%s3 + $0x40] sm:$0xf]
  %v7829 = vld [vmem:[%s3 + $0x44] sm:$0xf]
  %v7830 = vld [vmem:[%s3 + $0x48] sm:$0xf]
  %v7831 = vld [vmem:[%s3 + $0x4c] sm:$0xf]
  %v7832 = vld [vmem:[%s3 + $0x50] sm:$0xf]
  %v7833 = vld [vmem:[%s3 + $0x54] sm:$0xf]
  %v7834 = vld [vmem:[%s3 + $0x58] sm:$0xf]
  %v7835 = vld [vmem:[%s3 + $0x5c] sm:$0xf]
  %v7836 = vld [vmem:[%s3 + $0x60] sm:$0xf]
  %v7837 = vld [vmem:[%s3 + $0x64] sm:$0xf]
  %v7838 = vld [vmem:[%s3 + $0x68] sm:$0xf]
  %v7839 = vld [vmem:[%s3 + $0x6c] sm:$0xf]
  %v7840 = vld [vmem:[%s3 + $0x70] sm:$0xf]
  %v7841 = vld [vmem:[%s3 + $0x74] sm:$0xf]
  %v7842 = vld [vmem:[%s3 + $0x78] sm:$0xf]
  %v7843 = vld [vmem:[%s3 + $0x7c] sm:$0xf]
  %v7844 = vld [vmem:[%s3 + $0x80] sm:$0xf]
  %v7845 = vld [vmem:[%s3 + $0x84] sm:$0xf]
  %v7846 = vld [vmem:[%s3 + $0x88] sm:$0xf]
  %v7847 = vld [vmem:[%s3 + $0x8c] sm:$0xf]
  %v7848 = vld [vmem:[%s3 + $0x90] sm:$0xf]
  %v7849 = vld [vmem:[%s3 + $0x94] sm:$0xf]
  %v7850 = vld [vmem:[%s3 + $0x98] sm:$0xf]
  %v7851 = vld [vmem:[%s3 + $0x9c] sm:$0xf]
  %v7852 = vld [vmem:[%s3 + $0xa0] sm:$0xf]
  %v7853 = vld [vmem:[%s3 + $0xa4] sm:$0xf]
  %v7854 = vld [vmem:[%s3 + $0xa8] sm:$0xf]
  %v7855 = vld [vmem:[%s3 + $0xac] sm:$0xf]
  %v7856 = vld [vmem:[%s3 + $0xb0] sm:$0xf]
  %v7857 = vld [vmem:[%s3 + $0xb4] sm:$0xf]
  %v7858 = vld [vmem:[%s3 + $0xb8] sm:$0xf]
  %v7859 = vld [vmem:[%s3 + $0xbc] sm:$0xf]
  %v7860 = vld [vmem:[%s3 + $0xc0] sm:$0xf]
  %v7861 = vld [vmem:[%s3 + $0xc4] sm:$0xf]
  %v7862 = vld [vmem:[%s3 + $0xc8] sm:$0xf]
  %v7863 = vld [vmem:[%s3 + $0xcc] sm:$0xf]
  %v7864 = vld [vmem:[%s3 + $0xd0] sm:$0xf]
  %v7865 = vld [vmem:[%s3 + $0xd4] sm:$0xf]
  %v7866 = vld [vmem:[%s3 + $0xd8] sm:$0xf]
  %v7867 = vld [vmem:[%s3 + $0xdc] sm:$0xf]
  %v7868 = vld [vmem:[%s3 + $0xe0] sm:$0xf]
  %v7869 = vld [vmem:[%s3 + $0xe4] sm:$0xf]
  %v7870 = vld [vmem:[%s3 + $0xe8] sm:$0xf]
  %v7871 = vld [vmem:[%s3 + $0xec] sm:$0xf]
  %v7872 = vld [vmem:[%s3 + $0xf0] sm:$0xf]
  %v7873 = vld [vmem:[%s3 + $0xf4] sm:$0xf]
  %v7874 = vld [vmem:[%s3 + $0xf8] sm:$0xf]
  %v7875 = vld [vmem:[%s3 + $0xfc] sm:$0xf]
  %v7876 = vld [vmem:[%s3 + $0x100] sm:$0xf]
  %v7877 = vld [vmem:[%s3 + $0x104] sm:$0xf]
  %v7878 = vld [vmem:[%s3 + $0x108] sm:$0xf]
  %v7879 = vld [vmem:[%s3 + $0x10c] sm:$0xf]
  %v7880 = vld [vmem:[%s3 + $0x110] sm:$0xf]
  %v7881 = vld [vmem:[%s3 + $0x114] sm:$0xf]
  %v7882 = vld [vmem:[%s3 + $0x118] sm:$0xf]
  %v7883 = vld [vmem:[%s3 + $0x11c] sm:$0xf]
  %v7956 = vunpack.c.l.b16 %v7812
  %v7957 = vunpack.c.l.b16 %v7813
  %v7958 = vunpack.c.l.b16 %v7814
  %v7959 = vunpack.c.l.b16 %v7815
  %v7960 = vunpack.c.l.b16 %v7816
  %v7961 = vunpack.c.l.b16 %v7817
  %v7962 = vunpack.c.l.b16 %v7818
  %v7963 = vunpack.c.l.b16 %v7819
  %v7964 = vunpack.c.l.b16 %v7820
  %v7965 = vunpack.c.l.b16 %v7821
  %v7966 = vunpack.c.l.b16 %v7822
  %v7967 = vunpack.c.l.b16 %v7823
  %v7968 = vunpack.c.l.b16 %v7824
  %v7969 = vunpack.c.l.b16 %v7825
  %v7970 = vunpack.c.l.b16 %v7826
  %v7971 = vunpack.c.l.b16 %v7827
  %v7972 = vunpack.c.l.b16 %v7828
  %v7973 = vunpack.c.l.b16 %v7829
  %v7974 = vunpack.c.l.b16 %v7830
  %v7975 = vunpack.c.l.b16 %v7831
  %v7976 = vunpack.c.l.b16 %v7832
  %v7977 = vunpack.c.l.b16 %v7833
  %v7978 = vunpack.c.l.b16 %v7834
  %v7979 = vunpack.c.l.b16 %v7835
  %v7980 = vunpack.c.l.b16 %v7836
  %v7981 = vunpack.c.l.b16 %v7837
  %v7982 = vunpack.c.l.b16 %v7838
  %v7983 = vunpack.c.l.b16 %v7839
  %v7984 = vunpack.c.l.b16 %v7840
  %v7985 = vunpack.c.l.b16 %v7841
  %v7986 = vunpack.c.l.b16 %v7842
  %v7987 = vunpack.c.l.b16 %v7843
  %v7988 = vunpack.c.l.b16 %v7844
  %v7989 = vunpack.c.l.b16 %v7845
  %v7990 = vunpack.c.l.b16 %v7846
  %v7991 = vunpack.c.l.b16 %v7847
  %v7992 = vunpack.c.l.b16 %v7848
  %v7993 = vunpack.c.l.b16 %v7849
  %v7994 = vunpack.c.l.b16 %v7850
  %v7995 = vunpack.c.l.b16 %v7851
  %v7996 = vunpack.c.l.b16 %v7852
  %v7997 = vunpack.c.l.b16 %v7853
  %v7998 = vunpack.c.l.b16 %v7854
  %v7999 = vunpack.c.l.b16 %v7855
  %v8000 = vunpack.c.l.b16 %v7856
  %v8001 = vunpack.c.l.b16 %v7857
  %v8002 = vunpack.c.l.b16 %v7858
  %v8003 = vunpack.c.l.b16 %v7859
  %v8004 = vunpack.c.l.b16 %v7860
  %v8005 = vunpack.c.l.b16 %v7861
  %v8006 = vunpack.c.l.b16 %v7862
  %v8007 = vunpack.c.l.b16 %v7863
  %v8008 = vunpack.c.l.b16 %v7864
  %v8009 = vunpack.c.l.b16 %v7865
  %v8010 = vunpack.c.l.b16 %v7866
  %v8011 = vunpack.c.l.b16 %v7867
  %v8012 = vunpack.c.l.b16 %v7868
  %v8013 = vunpack.c.l.b16 %v7869
  %v8014 = vunpack.c.l.b16 %v7870
  %v8015 = vunpack.c.l.b16 %v7871
  %v8016 = vunpack.c.l.b16 %v7872
  %v8017 = vunpack.c.l.b16 %v7873
  %v8018 = vunpack.c.l.b16 %v7874
  %v8019 = vunpack.c.l.b16 %v7875
  %v8020 = vunpack.c.l.b16 %v7876
  %v8021 = vunpack.c.l.b16 %v7877
  %v8022 = vunpack.c.l.b16 %v7878
  %v8023 = vunpack.c.l.b16 %v7879
  %v8024 = vunpack.c.l.b16 %v7880
  %v8025 = vunpack.c.l.b16 %v7881
  %v8026 = vunpack.c.l.b16 %v7882
  %v8027 = vunpack.c.l.b16 %v7883
  %v8028 = vpack.c.b16 %v7957, %v7956
  %v8029 = vpack.c.b16 %v7959, %v7958
  %v8030 = vpack.c.b16 %v7961, %v7960
  %v8031 = vpack.c.b16 %v7963, %v7962
  %v8032 = vpack.c.b16 %v7965, %v7964
  %v8033 = vpack.c.b16 %v7967, %v7966
  %v8034 = vpack.c.b16 %v7969, %v7968
  %v8035 = vpack.c.b16 %v7971, %v7970
  %v8036 = vpack.c.b16 %v7973, %v7972
  %v8037 = vpack.c.b16 %v7975, %v7974
  %v8038 = vpack.c.b16 %v7977, %v7976
  %v8039 = vpack.c.b16 %v7979, %v7978
  %v8040 = vpack.c.b16 %v7981, %v7980
  %v8041 = vpack.c.b16 %v7983, %v7982
  %v8042 = vpack.c.b16 %v7985, %v7984
  %v8043 = vpack.c.b16 %v7987, %v7986
  %v8044 = vpack.c.b16 %v7989, %v7988
  %v8045 = vpack.c.b16 %v7991, %v7990
  %v8046 = vpack.c.b16 %v7993, %v7992
  %v8047 = vpack.c.b16 %v7995, %v7994
  %v8048 = vpack.c.b16 %v7997, %v7996
  %v8049 = vpack.c.b16 %v7999, %v7998
  %v8050 = vpack.c.b16 %v8001, %v8000
  %v8051 = vpack.c.b16 %v8003, %v8002
  %v8052 = vpack.c.b16 %v8005, %v8004
  %v8053 = vpack.c.b16 %v8007, %v8006
  %v8054 = vpack.c.b16 %v8009, %v8008
  %v8055 = vpack.c.b16 %v8011, %v8010
  %v8056 = vpack.c.b16 %v8013, %v8012
  %v8057 = vpack.c.b16 %v8015, %v8014
  %v8058 = vpack.c.b16 %v8017, %v8016
  %v8059 = vpack.c.b16 %v8019, %v8018
  %v8060 = vpack.c.b16 %v8021, %v8020
  %v8061 = vpack.c.b16 %v8023, %v8022
  %v8062 = vpack.c.b16 %v8025, %v8024
  %v8063 = vpack.c.b16 %v8027, %v8026
  %vm8100 = vcmask 523264
  %v8102 = vsel %vm8100, %v7811, 0
  %8104 = vmatpush.bf16.msra.mxu0 %v8035
  %8105 = vmatpush.bf16.msra.mxu0 %v8034
  %8106 = vmatpush.bf16.msra.mxu0 %v8033
  %8107 = vmatpush.bf16.msra.mxu0 %v8032
  %8108 = vmatpush.bf16.msra.mxu0 %v8031
  %8109 = vmatpush.bf16.msra.mxu0 %v8030
  %8110 = vmatpush.bf16.msra.mxu0 %v8029
  %8111 = vmatpush.bf16.msra.mxu0 %v8028
  %8112 = vmatmul.bf16.gmra.mxu0 %v7807
  %v8113 = vpop.f32.mrf.mxu0
  %v8114 = vadd.f32 0.0, %v8113
  %v8115 = vpop.f32.mrf.mxu0
  %8116 = vdwg.mxu0
  %8117 = vmatpush.bf16.msra.mxu0 %v8043
  %8118 = vmatpush.bf16.msra.mxu0 %v8042
  %8119 = vmatpush.bf16.msra.mxu0 %v8041
  %8120 = vmatpush.bf16.msra.mxu0 %v8040
  %8121 = vmatpush.bf16.msra.mxu0 %v8039
  %8122 = vmatpush.bf16.msra.mxu0 %v8038
  %8123 = vmatpush.bf16.msra.mxu0 %v8037
  %8124 = vmatpush.bf16.msra.mxu0 %v8036
  %8125 = vmatmul.bf16.gmra.mxu0 %v7808
  %v8126 = vpop.f32.mrf.mxu0
  %v8127 = vadd.f32 %v8114, %v8126
  %v8128 = vpop.f32.mrf.mxu0
  %8129 = vdwg.mxu0
  %8130 = vmatpush.bf16.msra.mxu0 %v8051
  %8131 = vmatpush.bf16.msra.mxu0 %v8050
  %8132 = vmatpush.bf16.msra.mxu0 %v8049
  %8133 = vmatpush.bf16.msra.mxu0 %v8048
  %8134 = vmatpush.bf16.msra.mxu0 %v8047
  %8135 = vmatpush.bf16.msra.mxu0 %v8046
  %8136 = vmatpush.bf16.msra.mxu0 %v8045
  %8137 = vmatpush.bf16.msra.mxu0 %v8044
  %8138 = vmatmul.bf16.gmra.mxu0 %v7809
  %v8139 = vpop.f32.mrf.mxu0
  %v8140 = vadd.f32 %v8127, %v8139
  %v8141 = vpop.f32.mrf.mxu0
  %8142 = vdwg.mxu0
  %8143 = vmatpush.bf16.msra.mxu0 %v8059
  %8144 = vmatpush.bf16.msra.mxu0 %v8058
  %8145 = vmatpush.bf16.msra.mxu0 %v8057
  %8146 = vmatpush.bf16.msra.mxu0 %v8056
  %8147 = vmatpush.bf16.msra.mxu0 %v8055
  %8148 = vmatpush.bf16.msra.mxu0 %v8054
  %8149 = vmatpush.bf16.msra.mxu0 %v8053
  %8150 = vmatpush.bf16.msra.mxu0 %v8052
  %8151 = vmatmul.bf16.gmra.mxu0 %v7810
  %v8152 = vpop.f32.mrf.mxu0
  %v8153 = vadd.f32 %v8140, %v8152
  %v8154 = vpop.f32.mrf.mxu0
  %8155 = vdwg.mxu0
  %8156 = vmatpush.bf16.msra.mxu0 0
  %8157 = vmatpush.bf16.msra.mxu0 0
  %8158 = vmatpush.bf16.msra.mxu0 0
  %8159 = vmatpush.bf16.msra.mxu0 0
  %8160 = vmatpush.bf16.msra.mxu0 %v8063
  %8161 = vmatpush.bf16.msra.mxu0 %v8062
  %8162 = vmatpush.bf16.msra.mxu0 %v8061
  %8163 = vmatpush.bf16.msra.mxu0 %v8060
  %8164 = vmatmul.bf16.gmra.mxu0 %v8102
  %v8165 = vpop.f32.mrf.mxu0
  %v8166 = vadd.f32 %v8153, %v8165
  %v8167 = vpop.f32.mrf.mxu0
  %8168 = vdwg.mxu0
  %s8169 = scalar_lea.vmem %s3, 288
  %v8170 = vld [vmem:[%s8169] sm:$0xf]
  %v8171 = vld [vmem:[%s8169 + $0x4] sm:$0xf]
  %v8172 = vld [vmem:[%s8169 + $0x8] sm:$0xf]
  %v8173 = vld [vmem:[%s8169 + $0xc] sm:$0xf]
  %v8174 = vld [vmem:[%s8169 + $0x10] sm:$0xf]
  %v8175 = vld [vmem:[%s8169 + $0x14] sm:$0xf]
  %v8176 = vld [vmem:[%s8169 + $0x18] sm:$0xf]
  %v8177 = vld [vmem:[%s8169 + $0x1c] sm:$0xf]
  %v8178 = vld [vmem:[%s8169 + $0x20] sm:$0xf]
  %v8179 = vld [vmem:[%s8169 + $0x24] sm:$0xf]
  %v8180 = vld [vmem:[%s8169 + $0x28] sm:$0xf]
  %v8181 = vld [vmem:[%s8169 + $0x2c] sm:$0xf]
  %v8182 = vld [vmem:[%s8169 + $0x30] sm:$0xf]
  %v8183 = vld [vmem:[%s8169 + $0x34] sm:$0xf]
  %v8184 = vld [vmem:[%s8169 + $0x38] sm:$0xf]
  %v8185 = vld [vmem:[%s8169 + $0x3c] sm:$0xf]
  %v8186 = vld [vmem:[%s8169 + $0x40] sm:$0xf]
  %v8187 = vld [vmem:[%s8169 + $0x44] sm:$0xf]
  %v8188 = vld [vmem:[%s8169 + $0x48] sm:$0xf]
  %v8189 = vld [vmem:[%s8169 + $0x4c] sm:$0xf]
  %v8190 = vld [vmem:[%s8169 + $0x50] sm:$0xf]
  %v8191 = vld [vmem:[%s8169 + $0x54] sm:$0xf]
  %v8192 = vld [vmem:[%s8169 + $0x58] sm:$0xf]
  %v8193 = vld [vmem:[%s8169 + $0x5c] sm:$0xf]
  %v8194 = vld [vmem:[%s8169 + $0x60] sm:$0xf]
  %v8195 = vld [vmem:[%s8169 + $0x64] sm:$0xf]
  %v8196 = vld [vmem:[%s8169 + $0x68] sm:$0xf]
  %v8197 = vld [vmem:[%s8169 + $0x6c] sm:$0xf]
  %v8198 = vld [vmem:[%s8169 + $0x70] sm:$0xf]
  %v8199 = vld [vmem:[%s8169 + $0x74] sm:$0xf]
  %v8200 = vld [vmem:[%s8169 + $0x78] sm:$0xf]
  %v8201 = vld [vmem:[%s8169 + $0x7c] sm:$0xf]
  %v8202 = vld [vmem:[%s8169 + $0x80] sm:$0xf]
  %v8203 = vld [vmem:[%s8169 + $0x84] sm:$0xf]
  %v8204 = vld [vmem:[%s8169 + $0x88] sm:$0xf]
  %v8205 = vld [vmem:[%s8169 + $0x8c] sm:$0xf]
  %v8206 = vld [vmem:[%s8169 + $0x90] sm:$0xf]
  %v8207 = vld [vmem:[%s8169 + $0x94] sm:$0xf]
  %v8208 = vld [vmem:[%s8169 + $0x98] sm:$0xf]
  %v8209 = vld [vmem:[%s8169 + $0x9c] sm:$0xf]
  %v8210 = vld [vmem:[%s8169 + $0xa0] sm:$0xf]
  %v8211 = vld [vmem:[%s8169 + $0xa4] sm:$0xf]
  %v8212 = vld [vmem:[%s8169 + $0xa8] sm:$0xf]
  %v8213 = vld [vmem:[%s8169 + $0xac] sm:$0xf]
  %v8214 = vld [vmem:[%s8169 + $0xb0] sm:$0xf]
  %v8215 = vld [vmem:[%s8169 + $0xb4] sm:$0xf]
  %v8216 = vld [vmem:[%s8169 + $0xb8] sm:$0xf]
  %v8217 = vld [vmem:[%s8169 + $0xbc] sm:$0xf]
  %v8218 = vld [vmem:[%s8169 + $0xc0] sm:$0xf]
  %v8219 = vld [vmem:[%s8169 + $0xc4] sm:$0xf]
  %v8220 = vld [vmem:[%s8169 + $0xc8] sm:$0xf]
  %v8221 = vld [vmem:[%s8169 + $0xcc] sm:$0xf]
  %v8222 = vld [vmem:[%s8169 + $0xd0] sm:$0xf]
  %v8223 = vld [vmem:[%s8169 + $0xd4] sm:$0xf]
  %v8224 = vld [vmem:[%s8169 + $0xd8] sm:$0xf]
  %v8225 = vld [vmem:[%s8169 + $0xdc] sm:$0xf]
  %v8226 = vld [vmem:[%s8169 + $0xe0] sm:$0xf]
  %v8227 = vld [vmem:[%s8169 + $0xe4] sm:$0xf]
  %v8228 = vld [vmem:[%s8169 + $0xe8] sm:$0xf]
  %v8229 = vld [vmem:[%s8169 + $0xec] sm:$0xf]
  %v8230 = vld [vmem:[%s8169 + $0xf0] sm:$0xf]
  %v8231 = vld [vmem:[%s8169 + $0xf4] sm:$0xf]
  %v8232 = vld [vmem:[%s8169 + $0xf8] sm:$0xf]
  %v8233 = vld [vmem:[%s8169 + $0xfc] sm:$0xf]
  %v8234 = vld [vmem:[%s8169 + $0x100] sm:$0xf]
  %v8235 = vld [vmem:[%s8169 + $0x104] sm:$0xf]
  %v8236 = vld [vmem:[%s8169 + $0x108] sm:$0xf]
  %v8237 = vld [vmem:[%s8169 + $0x10c] sm:$0xf]
  %v8238 = vld [vmem:[%s8169 + $0x110] sm:$0xf]
  %v8239 = vld [vmem:[%s8169 + $0x114] sm:$0xf]
  %v8240 = vld [vmem:[%s8169 + $0x118] sm:$0xf]
  %v8241 = vld [vmem:[%s8169 + $0x11c] sm:$0xf]
  %v8314 = vunpack.c.l.b16 %v8170
  %v8315 = vunpack.c.l.b16 %v8171
  %v8316 = vunpack.c.l.b16 %v8172
  %v8317 = vunpack.c.l.b16 %v8173
  %v8318 = vunpack.c.l.b16 %v8174
  %v8319 = vunpack.c.l.b16 %v8175
  %v8320 = vunpack.c.l.b16 %v8176
  %v8321 = vunpack.c.l.b16 %v8177
  %v8322 = vunpack.c.l.b16 %v8178
  %v8323 = vunpack.c.l.b16 %v8179
  %v8324 = vunpack.c.l.b16 %v8180
  %v8325 = vunpack.c.l.b16 %v8181
  %v8326 = vunpack.c.l.b16 %v8182
  %v8327 = vunpack.c.l.b16 %v8183
  %v8328 = vunpack.c.l.b16 %v8184
  %v8329 = vunpack.c.l.b16 %v8185
  %v8330 = vunpack.c.l.b16 %v8186
  %v8331 = vunpack.c.l.b16 %v8187
  %v8332 = vunpack.c.l.b16 %v8188
  %v8333 = vunpack.c.l.b16 %v8189
  %v8334 = vunpack.c.l.b16 %v8190
  %v8335 = vunpack.c.l.b16 %v8191
  %v8336 = vunpack.c.l.b16 %v8192
  %v8337 = vunpack.c.l.b16 %v8193
  %v8338 = vunpack.c.l.b16 %v8194
  %v8339 = vunpack.c.l.b16 %v8195
  %v8340 = vunpack.c.l.b16 %v8196
  %v8341 = vunpack.c.l.b16 %v8197
  %v8342 = vunpack.c.l.b16 %v8198
  %v8343 = vunpack.c.l.b16 %v8199
  %v8344 = vunpack.c.l.b16 %v8200
  %v8345 = vunpack.c.l.b16 %v8201
  %v8346 = vunpack.c.l.b16 %v8202
  %v8347 = vunpack.c.l.b16 %v8203
  %v8348 = vunpack.c.l.b16 %v8204
  %v8349 = vunpack.c.l.b16 %v8205
  %v8350 = vunpack.c.l.b16 %v8206
  %v8351 = vunpack.c.l.b16 %v8207
  %v8352 = vunpack.c.l.b16 %v8208
  %v8353 = vunpack.c.l.b16 %v8209
  %v8354 = vunpack.c.l.b16 %v8210
  %v8355 = vunpack.c.l.b16 %v8211
  %v8356 = vunpack.c.l.b16 %v8212
  %v8357 = vunpack.c.l.b16 %v8213
  %v8358 = vunpack.c.l.b16 %v8214
  %v8359 = vunpack.c.l.b16 %v8215
  %v8360 = vunpack.c.l.b16 %v8216
  %v8361 = vunpack.c.l.b16 %v8217
  %v8362 = vunpack.c.l.b16 %v8218
  %v8363 = vunpack.c.l.b16 %v8219
  %v8364 = vunpack.c.l.b16 %v8220
  %v8365 = vunpack.c.l.b16 %v8221
  %v8366 = vunpack.c.l.b16 %v8222
  %v8367 = vunpack.c.l.b16 %v8223
  %v8368 = vunpack.c.l.b16 %v8224
  %v8369 = vunpack.c.l.b16 %v8225
  %v8370 = vunpack.c.l.b16 %v8226
  %v8371 = vunpack.c.l.b16 %v8227
  %v8372 = vunpack.c.l.b16 %v8228
  %v8373 = vunpack.c.l.b16 %v8229
  %v8374 = vunpack.c.l.b16 %v8230
  %v8375 = vunpack.c.l.b16 %v8231
  %v8376 = vunpack.c.l.b16 %v8232
  %v8377 = vunpack.c.l.b16 %v8233
  %v8378 = vunpack.c.l.b16 %v8234
  %v8379 = vunpack.c.l.b16 %v8235
  %v8380 = vunpack.c.l.b16 %v8236
  %v8381 = vunpack.c.l.b16 %v8237
  %v8382 = vunpack.c.l.b16 %v8238
  %v8383 = vunpack.c.l.b16 %v8239
  %v8384 = vunpack.c.l.b16 %v8240
  %v8385 = vunpack.c.l.b16 %v8241
  %v8386 = vpack.c.b16 %v8315, %v8314
  %v8387 = vpack.c.b16 %v8317, %v8316
  %v8388 = vpack.c.b16 %v8319, %v8318
  %v8389 = vpack.c.b16 %v8321, %v8320
  %v8390 = vpack.c.b16 %v8323, %v8322
  %v8391 = vpack.c.b16 %v8325, %v8324
  %v8392 = vpack.c.b16 %v8327, %v8326
  %v8393 = vpack.c.b16 %v8329, %v8328
  %v8394 = vpack.c.b16 %v8331, %v8330
  %v8395 = vpack.c.b16 %v8333, %v8332
  %v8396 = vpack.c.b16 %v8335, %v8334
  %v8397 = vpack.c.b16 %v8337, %v8336
  %v8398 = vpack.c.b16 %v8339, %v8338
  %v8399 = vpack.c.b16 %v8341, %v8340
  %v8400 = vpack.c.b16 %v8343, %v8342
  %v8401 = vpack.c.b16 %v8345, %v8344
  %v8402 = vpack.c.b16 %v8347, %v8346
  %v8403 = vpack.c.b16 %v8349, %v8348
  %v8404 = vpack.c.b16 %v8351, %v8350
  %v8405 = vpack.c.b16 %v8353, %v8352
  %v8406 = vpack.c.b16 %v8355, %v8354
  %v8407 = vpack.c.b16 %v8357, %v8356
  %v8408 = vpack.c.b16 %v8359, %v8358
  %v8409 = vpack.c.b16 %v8361, %v8360
  %v8410 = vpack.c.b16 %v8363, %v8362
  %v8411 = vpack.c.b16 %v8365, %v8364
  %v8412 = vpack.c.b16 %v8367, %v8366
  %v8413 = vpack.c.b16 %v8369, %v8368
  %v8414 = vpack.c.b16 %v8371, %v8370
  %v8415 = vpack.c.b16 %v8373, %v8372
  %v8416 = vpack.c.b16 %v8375, %v8374
  %v8417 = vpack.c.b16 %v8377, %v8376
  %v8418 = vpack.c.b16 %v8379, %v8378
  %v8419 = vpack.c.b16 %v8381, %v8380
  %v8420 = vpack.c.b16 %v8383, %v8382
  %v8421 = vpack.c.b16 %v8385, %v8384
  %8458 = vmatpush.bf16.msra.mxu0 %v8393
  %8459 = vmatpush.bf16.msra.mxu0 %v8392
  %8460 = vmatpush.bf16.msra.mxu0 %v8391
  %8461 = vmatpush.bf16.msra.mxu0 %v8390
  %8462 = vmatpush.bf16.msra.mxu0 %v8389
  %8463 = vmatpush.bf16.msra.mxu0 %v8388
  %8464 = vmatpush.bf16.msra.mxu0 %v8387
  %8465 = vmatpush.bf16.msra.mxu0 %v8386
  %8466 = vmatmul.bf16.gmra.mxu0 %v7807
  %v8467 = vpop.f32.mrf.mxu0
  %v8468 = vadd.f32 0.0, %v8467
  %v8469 = vpop.f32.mrf.mxu0
  %8470 = vdwg.mxu0
  %8471 = vmatpush.bf16.msra.mxu0 %v8401
  %8472 = vmatpush.bf16.msra.mxu0 %v8400
  %8473 = vmatpush.bf16.msra.mxu0 %v8399
  %8474 = vmatpush.bf16.msra.mxu0 %v8398
  %8475 = vmatpush.bf16.msra.mxu0 %v8397
  %8476 = vmatpush.bf16.msra.mxu0 %v8396
  %8477 = vmatpush.bf16.msra.mxu0 %v8395
  %8478 = vmatpush.bf16.msra.mxu0 %v8394
  %8479 = vmatmul.bf16.gmra.mxu0 %v7808
  %v8480 = vpop.f32.mrf.mxu0
  %v8481 = vadd.f32 %v8468, %v8480
  %v8482 = vpop.f32.mrf.mxu0
  %8483 = vdwg.mxu0
  %8484 = vmatpush.bf16.msra.mxu0 %v8409
  %8485 = vmatpush.bf16.msra.mxu0 %v8408
  %8486 = vmatpush.bf16.msra.mxu0 %v8407
  %8487 = vmatpush.bf16.msra.mxu0 %v8406
  %8488 = vmatpush.bf16.msra.mxu0 %v8405
  %8489 = vmatpush.bf16.msra.mxu0 %v8404
  %8490 = vmatpush.bf16.msra.mxu0 %v8403
  %8491 = vmatpush.bf16.msra.mxu0 %v8402
  %8492 = vmatmul.bf16.gmra.mxu0 %v7809
  %v8493 = vpop.f32.mrf.mxu0
  %v8494 = vadd.f32 %v8481, %v8493
  %v8495 = vpop.f32.mrf.mxu0
  %8496 = vdwg.mxu0
  %8497 = vmatpush.bf16.msra.mxu0 %v8417
  %8498 = vmatpush.bf16.msra.mxu0 %v8416
  %8499 = vmatpush.bf16.msra.mxu0 %v8415
  %8500 = vmatpush.bf16.msra.mxu0 %v8414
  %8501 = vmatpush.bf16.msra.mxu0 %v8413
  %8502 = vmatpush.bf16.msra.mxu0 %v8412
  %8503 = vmatpush.bf16.msra.mxu0 %v8411
  %8504 = vmatpush.bf16.msra.mxu0 %v8410
  %8505 = vmatmul.bf16.gmra.mxu0 %v7810
  %v8506 = vpop.f32.mrf.mxu0
  %v8507 = vadd.f32 %v8494, %v8506
  %v8508 = vpop.f32.mrf.mxu0
  %8509 = vdwg.mxu0
  %8510 = vmatpush.bf16.msra.mxu0 0
  %8511 = vmatpush.bf16.msra.mxu0 0
  %8512 = vmatpush.bf16.msra.mxu0 0
  %8513 = vmatpush.bf16.msra.mxu0 0
  %8514 = vmatpush.bf16.msra.mxu0 %v8421
  %8515 = vmatpush.bf16.msra.mxu0 %v8420
  %8516 = vmatpush.bf16.msra.mxu0 %v8419
  %8517 = vmatpush.bf16.msra.mxu0 %v8418
  %8518 = vmatmul.bf16.gmra.mxu0 %v8102
  %v8519 = vpop.f32.mrf.mxu0
  %v8520 = vadd.f32 %v8507, %v8519
  %v8521 = vpop.f32.mrf.mxu0
  %8522 = vdwg.mxu0
  %v8523 = vmax.f32 %v8166, %v8520
  %s8524 = scalar_lea.vmem %s3, 576
  %v8525 = vld [vmem:[%s8524] sm:$0xf]
  %v8526 = vld [vmem:[%s8524 + $0x4] sm:$0xf]
  %v8527 = vld [vmem:[%s8524 + $0x8] sm:$0xf]
  %v8528 = vld [vmem:[%s8524 + $0xc] sm:$0xf]
  %v8529 = vld [vmem:[%s8524 + $0x10] sm:$0xf]
  %v8530 = vld [vmem:[%s8524 + $0x14] sm:$0xf]
  %v8531 = vld [vmem:[%s8524 + $0x18] sm:$0xf]
  %v8532 = vld [vmem:[%s8524 + $0x1c] sm:$0xf]
  %v8533 = vld [vmem:[%s8524 + $0x20] sm:$0xf]
  %v8534 = vld [vmem:[%s8524 + $0x24] sm:$0xf]
  %v8535 = vld [vmem:[%s8524 + $0x28] sm:$0xf]
  %v8536 = vld [vmem:[%s8524 + $0x2c] sm:$0xf]
  %v8537 = vld [vmem:[%s8524 + $0x30] sm:$0xf]
  %v8538 = vld [vmem:[%s8524 + $0x34] sm:$0xf]
  %v8539 = vld [vmem:[%s8524 + $0x38] sm:$0xf]
  %v8540 = vld [vmem:[%s8524 + $0x3c] sm:$0xf]
  %v8541 = vld [vmem:[%s8524 + $0x40] sm:$0xf]
  %v8542 = vld [vmem:[%s8524 + $0x44] sm:$0xf]
  %v8543 = vld [vmem:[%s8524 + $0x48] sm:$0xf]
  %v8544 = vld [vmem:[%s8524 + $0x4c] sm:$0xf]
  %v8545 = vld [vmem:[%s8524 + $0x50] sm:$0xf]
  %v8546 = vld [vmem:[%s8524 + $0x54] sm:$0xf]
  %v8547 = vld [vmem:[%s8524 + $0x58] sm:$0xf]
  %v8548 = vld [vmem:[%s8524 + $0x5c] sm:$0xf]
  %v8549 = vld [vmem:[%s8524 + $0x60] sm:$0xf]
  %v8550 = vld [vmem:[%s8524 + $0x64] sm:$0xf]
  %v8551 = vld [vmem:[%s8524 + $0x68] sm:$0xf]
  %v8552 = vld [vmem:[%s8524 + $0x6c] sm:$0xf]
  %v8553 = vld [vmem:[%s8524 + $0x70] sm:$0xf]
  %v8554 = vld [vmem:[%s8524 + $0x74] sm:$0xf]
  %v8555 = vld [vmem:[%s8524 + $0x78] sm:$0xf]
  %v8556 = vld [vmem:[%s8524 + $0x7c] sm:$0xf]
  %v8557 = vld [vmem:[%s8524 + $0x80] sm:$0xf]
  %v8558 = vld [vmem:[%s8524 + $0x84] sm:$0xf]
  %v8559 = vld [vmem:[%s8524 + $0x88] sm:$0xf]
  %v8560 = vld [vmem:[%s8524 + $0x8c] sm:$0xf]
  %v8561 = vld [vmem:[%s8524 + $0x90] sm:$0xf]
  %v8562 = vld [vmem:[%s8524 + $0x94] sm:$0xf]
  %v8563 = vld [vmem:[%s8524 + $0x98] sm:$0xf]
  %v8564 = vld [vmem:[%s8524 + $0x9c] sm:$0xf]
  %v8565 = vld [vmem:[%s8524 + $0xa0] sm:$0xf]
  %v8566 = vld [vmem:[%s8524 + $0xa4] sm:$0xf]
  %v8567 = vld [vmem:[%s8524 + $0xa8] sm:$0xf]
  %v8568 = vld [vmem:[%s8524 + $0xac] sm:$0xf]
  %v8569 = vld [vmem:[%s8524 + $0xb0] sm:$0xf]
  %v8570 = vld [vmem:[%s8524 + $0xb4] sm:$0xf]
  %v8571 = vld [vmem:[%s8524 + $0xb8] sm:$0xf]
  %v8572 = vld [vmem:[%s8524 + $0xbc] sm:$0xf]
  %v8573 = vld [vmem:[%s8524 + $0xc0] sm:$0xf]
  %v8574 = vld [vmem:[%s8524 + $0xc4] sm:$0xf]
  %v8575 = vld [vmem:[%s8524 + $0xc8] sm:$0xf]
  %v8576 = vld [vmem:[%s8524 + $0xcc] sm:$0xf]
  %v8577 = vld [vmem:[%s8524 + $0xd0] sm:$0xf]
  %v8578 = vld [vmem:[%s8524 + $0xd4] sm:$0xf]
  %v8579 = vld [vmem:[%s8524 + $0xd8] sm:$0xf]
  %v8580 = vld [vmem:[%s8524 + $0xdc] sm:$0xf]
  %v8581 = vld [vmem:[%s8524 + $0xe0] sm:$0xf]
  %v8582 = vld [vmem:[%s8524 + $0xe4] sm:$0xf]
  %v8583 = vld [vmem:[%s8524 + $0xe8] sm:$0xf]
  %v8584 = vld [vmem:[%s8524 + $0xec] sm:$0xf]
  %v8585 = vld [vmem:[%s8524 + $0xf0] sm:$0xf]
  %v8586 = vld [vmem:[%s8524 + $0xf4] sm:$0xf]
  %v8587 = vld [vmem:[%s8524 + $0xf8] sm:$0xf]
  %v8588 = vld [vmem:[%s8524 + $0xfc] sm:$0xf]
  %v8589 = vld [vmem:[%s8524 + $0x100] sm:$0xf]
  %v8590 = vld [vmem:[%s8524 + $0x104] sm:$0xf]
  %v8591 = vld [vmem:[%s8524 + $0x108] sm:$0xf]
  %v8592 = vld [vmem:[%s8524 + $0x10c] sm:$0xf]
  %v8593 = vld [vmem:[%s8524 + $0x110] sm:$0xf]
  %v8594 = vld [vmem:[%s8524 + $0x114] sm:$0xf]
  %v8595 = vld [vmem:[%s8524 + $0x118] sm:$0xf]
  %v8596 = vld [vmem:[%s8524 + $0x11c] sm:$0xf]
  %v8669 = vunpack.c.l.b16 %v8525
  %v8670 = vunpack.c.l.b16 %v8526
  %v8671 = vunpack.c.l.b16 %v8527
  %v8672 = vunpack.c.l.b16 %v8528
  %v8673 = vunpack.c.l.b16 %v8529
  %v8674 = vunpack.c.l.b16 %v8530
  %v8675 = vunpack.c.l.b16 %v8531
  %v8676 = vunpack.c.l.b16 %v8532
  %v8677 = vunpack.c.l.b16 %v8533
  %v8678 = vunpack.c.l.b16 %v8534
  %v8679 = vunpack.c.l.b16 %v8535
  %v8680 = vunpack.c.l.b16 %v8536
  %v8681 = vunpack.c.l.b16 %v8537
  %v8682 = vunpack.c.l.b16 %v8538
  %v8683 = vunpack.c.l.b16 %v8539
  %v8684 = vunpack.c.l.b16 %v8540
  %v8685 = vunpack.c.l.b16 %v8541
  %v8686 = vunpack.c.l.b16 %v8542
  %v8687 = vunpack.c.l.b16 %v8543
  %v8688 = vunpack.c.l.b16 %v8544
  %v8689 = vunpack.c.l.b16 %v8545
  %v8690 = vunpack.c.l.b16 %v8546
  %v8691 = vunpack.c.l.b16 %v8547
  %v8692 = vunpack.c.l.b16 %v8548
  %v8693 = vunpack.c.l.b16 %v8549
  %v8694 = vunpack.c.l.b16 %v8550
  %v8695 = vunpack.c.l.b16 %v8551
  %v8696 = vunpack.c.l.b16 %v8552
  %v8697 = vunpack.c.l.b16 %v8553
  %v8698 = vunpack.c.l.b16 %v8554
  %v8699 = vunpack.c.l.b16 %v8555
  %v8700 = vunpack.c.l.b16 %v8556
  %v8701 = vunpack.c.l.b16 %v8557
  %v8702 = vunpack.c.l.b16 %v8558
  %v8703 = vunpack.c.l.b16 %v8559
  %v8704 = vunpack.c.l.b16 %v8560
  %v8705 = vunpack.c.l.b16 %v8561
  %v8706 = vunpack.c.l.b16 %v8562
  %v8707 = vunpack.c.l.b16 %v8563
  %v8708 = vunpack.c.l.b16 %v8564
  %v8709 = vunpack.c.l.b16 %v8565
  %v8710 = vunpack.c.l.b16 %v8566
  %v8711 = vunpack.c.l.b16 %v8567
  %v8712 = vunpack.c.l.b16 %v8568
  %v8713 = vunpack.c.l.b16 %v8569
  %v8714 = vunpack.c.l.b16 %v8570
  %v8715 = vunpack.c.l.b16 %v8571
  %v8716 = vunpack.c.l.b16 %v8572
  %v8717 = vunpack.c.l.b16 %v8573
  %v8718 = vunpack.c.l.b16 %v8574
  %v8719 = vunpack.c.l.b16 %v8575
  %v8720 = vunpack.c.l.b16 %v8576
  %v8721 = vunpack.c.l.b16 %v8577
  %v8722 = vunpack.c.l.b16 %v8578
  %v8723 = vunpack.c.l.b16 %v8579
  %v8724 = vunpack.c.l.b16 %v8580
  %v8725 = vunpack.c.l.b16 %v8581
  %v8726 = vunpack.c.l.b16 %v8582
  %v8727 = vunpack.c.l.b16 %v8583
  %v8728 = vunpack.c.l.b16 %v8584
  %v8729 = vunpack.c.l.b16 %v8585
  %v8730 = vunpack.c.l.b16 %v8586
  %v8731 = vunpack.c.l.b16 %v8587
  %v8732 = vunpack.c.l.b16 %v8588
  %v8733 = vunpack.c.l.b16 %v8589
  %v8734 = vunpack.c.l.b16 %v8590
  %v8735 = vunpack.c.l.b16 %v8591
  %v8736 = vunpack.c.l.b16 %v8592
  %v8737 = vunpack.c.l.b16 %v8593
  %v8738 = vunpack.c.l.b16 %v8594
  %v8739 = vunpack.c.l.b16 %v8595
  %v8740 = vunpack.c.l.b16 %v8596
  %v8741 = vpack.c.b16 %v8670, %v8669
  %v8742 = vpack.c.b16 %v8672, %v8671
  %v8743 = vpack.c.b16 %v8674, %v8673
  %v8744 = vpack.c.b16 %v8676, %v8675
  %v8745 = vpack.c.b16 %v8678, %v8677
  %v8746 = vpack.c.b16 %v8680, %v8679
  %v8747 = vpack.c.b16 %v8682, %v8681
  %v8748 = vpack.c.b16 %v8684, %v8683
  %v8749 = vpack.c.b16 %v8686, %v8685
  %v8750 = vpack.c.b16 %v8688, %v8687
  %v8751 = vpack.c.b16 %v8690, %v8689
  %v8752 = vpack.c.b16 %v8692, %v8691
  %v8753 = vpack.c.b16 %v8694, %v8693
  %v8754 = vpack.c.b16 %v8696, %v8695
  %v8755 = vpack.c.b16 %v8698, %v8697
  %v8756 = vpack.c.b16 %v8700, %v8699
  %v8757 = vpack.c.b16 %v8702, %v8701
  %v8758 = vpack.c.b16 %v8704, %v8703
  %v8759 = vpack.c.b16 %v8706, %v8705
  %v8760 = vpack.c.b16 %v8708, %v8707
  %v8761 = vpack.c.b16 %v8710, %v8709
  %v8762 = vpack.c.b16 %v8712, %v8711
  %v8763 = vpack.c.b16 %v8714, %v8713
  %v8764 = vpack.c.b16 %v8716, %v8715
  %v8765 = vpack.c.b16 %v8718, %v8717
  %v8766 = vpack.c.b16 %v8720, %v8719
  %v8767 = vpack.c.b16 %v8722, %v8721
  %v8768 = vpack.c.b16 %v8724, %v8723
  %v8769 = vpack.c.b16 %v8726, %v8725
  %v8770 = vpack.c.b16 %v8728, %v8727
  %v8771 = vpack.c.b16 %v8730, %v8729
  %v8772 = vpack.c.b16 %v8732, %v8731
  %v8773 = vpack.c.b16 %v8734, %v8733
  %v8774 = vpack.c.b16 %v8736, %v8735
  %v8775 = vpack.c.b16 %v8738, %v8737
  %v8776 = vpack.c.b16 %v8740, %v8739
  %8813 = vmatpush.bf16.msra.mxu0 %v8748
  %8814 = vmatpush.bf16.msra.mxu0 %v8747
  %8815 = vmatpush.bf16.msra.mxu0 %v8746
  %8816 = vmatpush.bf16.msra.mxu0 %v8745
  %8817 = vmatpush.bf16.msra.mxu0 %v8744
  %8818 = vmatpush.bf16.msra.mxu0 %v8743
  %8819 = vmatpush.bf16.msra.mxu0 %v8742
  %8820 = vmatpush.bf16.msra.mxu0 %v8741
  %8821 = vmatmul.bf16.gmra.mxu0 %v7807
  %v8822 = vpop.f32.mrf.mxu0
  %v8823 = vadd.f32 0.0, %v8822
  %v8824 = vpop.f32.mrf.mxu0
  %8825 = vdwg.mxu0
  %8826 = vmatpush.bf16.msra.mxu0 %v8756
  %8827 = vmatpush.bf16.msra.mxu0 %v8755
  %8828 = vmatpush.bf16.msra.mxu0 %v8754
  %8829 = vmatpush.bf16.msra.mxu0 %v8753
  %8830 = vmatpush.bf16.msra.mxu0 %v8752
  %8831 = vmatpush.bf16.msra.mxu0 %v8751
  %8832 = vmatpush.bf16.msra.mxu0 %v8750
  %8833 = vmatpush.bf16.msra.mxu0 %v8749
  %8834 = vmatmul.bf16.gmra.mxu0 %v7808
  %v8835 = vpop.f32.mrf.mxu0
  %v8836 = vadd.f32 %v8823, %v8835
  %v8837 = vpop.f32.mrf.mxu0
  %8838 = vdwg.mxu0
  %8839 = vmatpush.bf16.msra.mxu0 %v8764
  %8840 = vmatpush.bf16.msra.mxu0 %v8763
  %8841 = vmatpush.bf16.msra.mxu0 %v8762
  %8842 = vmatpush.bf16.msra.mxu0 %v8761
  %8843 = vmatpush.bf16.msra.mxu0 %v8760
  %8844 = vmatpush.bf16.msra.mxu0 %v8759
  %8845 = vmatpush.bf16.msra.mxu0 %v8758
  %8846 = vmatpush.bf16.msra.mxu0 %v8757
  %8847 = vmatmul.bf16.gmra.mxu0 %v7809
  %v8848 = vpop.f32.mrf.mxu0
  %v8849 = vadd.f32 %v8836, %v8848
  %v8850 = vpop.f32.mrf.mxu0
  %8851 = vdwg.mxu0
  %8852 = vmatpush.bf16.msra.mxu0 %v8772
  %8853 = vmatpush.bf16.msra.mxu0 %v8771
  %8854 = vmatpush.bf16.msra.mxu0 %v8770
  %8855 = vmatpush.bf16.msra.mxu0 %v8769
  %8856 = vmatpush.bf16.msra.mxu0 %v8768
  %8857 = vmatpush.bf16.msra.mxu0 %v8767
  %8858 = vmatpush.bf16.msra.mxu0 %v8766
  %8859 = vmatpush.bf16.msra.mxu0 %v8765
  %8860 = vmatmul.bf16.gmra.mxu0 %v7810
  %v8861 = vpop.f32.mrf.mxu0
  %v8862 = vadd.f32 %v8849, %v8861
  %v8863 = vpop.f32.mrf.mxu0
  %8864 = vdwg.mxu0
  %8865 = vmatpush.bf16.msra.mxu0 0
  %8866 = vmatpush.bf16.msra.mxu0 0
  %8867 = vmatpush.bf16.msra.mxu0 0
  %8868 = vmatpush.bf16.msra.mxu0 0
  %8869 = vmatpush.bf16.msra.mxu0 %v8776
  %8870 = vmatpush.bf16.msra.mxu0 %v8775
  %8871 = vmatpush.bf16.msra.mxu0 %v8774
  %8872 = vmatpush.bf16.msra.mxu0 %v8773
  %8873 = vmatmul.bf16.gmra.mxu0 %v8102
  %v8874 = vpop.f32.mrf.mxu0
  %v8875 = vadd.f32 %v8862, %v8874
  %v8876 = vpop.f32.mrf.mxu0
  %8877 = vdwg.mxu0
  %v8878 = vmax.f32 %v8523, %v8875
  %s8879 = scalar_lea.vmem %s3, 864
  %v8880 = vld [vmem:[%s8879] sm:$0xf]
  %v8881 = vld [vmem:[%s8879 + $0x4] sm:$0xf]
  %v8882 = vld [vmem:[%s8879 + $0x8] sm:$0xf]
  %v8883 = vld [vmem:[%s8879 + $0xc] sm:$0xf]
  %v8884 = vld [vmem:[%s8879 + $0x10] sm:$0xf]
  %v8885 = vld [vmem:[%s8879 + $0x14] sm:$0xf]
  %v8886 = vld [vmem:[%s8879 + $0x18] sm:$0xf]
  %v8887 = vld [vmem:[%s8879 + $0x1c] sm:$0xf]
  %v8888 = vld [vmem:[%s8879 + $0x20] sm:$0xf]
  %v8889 = vld [vmem:[%s8879 + $0x24] sm:$0xf]
  %v8890 = vld [vmem:[%s8879 + $0x28] sm:$0xf]
  %v8891 = vld [vmem:[%s8879 + $0x2c] sm:$0xf]
  %v8892 = vld [vmem:[%s8879 + $0x30] sm:$0xf]
  %v8893 = vld [vmem:[%s8879 + $0x34] sm:$0xf]
  %v8894 = vld [vmem:[%s8879 + $0x38] sm:$0xf]
  %v8895 = vld [vmem:[%s8879 + $0x3c] sm:$0xf]
  %v8896 = vld [vmem:[%s8879 + $0x40] sm:$0xf]
  %v8897 = vld [vmem:[%s8879 + $0x44] sm:$0xf]
  %v8898 = vld [vmem:[%s8879 + $0x48] sm:$0xf]
  %v8899 = vld [vmem:[%s8879 + $0x4c] sm:$0xf]
  %v8900 = vld [vmem:[%s8879 + $0x50] sm:$0xf]
  %v8901 = vld [vmem:[%s8879 + $0x54] sm:$0xf]
  %v8902 = vld [vmem:[%s8879 + $0x58] sm:$0xf]
  %v8903 = vld [vmem:[%s8879 + $0x5c] sm:$0xf]
  %v8904 = vld [vmem:[%s8879 + $0x60] sm:$0xf]
  %v8905 = vld [vmem:[%s8879 + $0x64] sm:$0xf]
  %v8906 = vld [vmem:[%s8879 + $0x68] sm:$0xf]
  %v8907 = vld [vmem:[%s8879 + $0x6c] sm:$0xf]
  %v8908 = vld [vmem:[%s8879 + $0x70] sm:$0xf]
  %v8909 = vld [vmem:[%s8879 + $0x74] sm:$0xf]
  %v8910 = vld [vmem:[%s8879 + $0x78] sm:$0xf]
  %v8911 = vld [vmem:[%s8879 + $0x7c] sm:$0xf]
  %v8912 = vld [vmem:[%s8879 + $0x80] sm:$0xf]
  %v8913 = vld [vmem:[%s8879 + $0x84] sm:$0xf]
  %v8914 = vld [vmem:[%s8879 + $0x88] sm:$0xf]
  %v8915 = vld [vmem:[%s8879 + $0x8c] sm:$0xf]
  %v8916 = vld [vmem:[%s8879 + $0x90] sm:$0xf]
  %v8917 = vld [vmem:[%s8879 + $0x94] sm:$0xf]
  %v8918 = vld [vmem:[%s8879 + $0x98] sm:$0xf]
  %v8919 = vld [vmem:[%s8879 + $0x9c] sm:$0xf]
  %v8920 = vld [vmem:[%s8879 + $0xa0] sm:$0xf]
  %v8921 = vld [vmem:[%s8879 + $0xa4] sm:$0xf]
  %v8922 = vld [vmem:[%s8879 + $0xa8] sm:$0xf]
  %v8923 = vld [vmem:[%s8879 + $0xac] sm:$0xf]
  %v8924 = vld [vmem:[%s8879 + $0xb0] sm:$0xf]
  %v8925 = vld [vmem:[%s8879 + $0xb4] sm:$0xf]
  %v8926 = vld [vmem:[%s8879 + $0xb8] sm:$0xf]
  %v8927 = vld [vmem:[%s8879 + $0xbc] sm:$0xf]
  %v8928 = vld [vmem:[%s8879 + $0xc0] sm:$0xf]
  %v8929 = vld [vmem:[%s8879 + $0xc4] sm:$0xf]
  %v8930 = vld [vmem:[%s8879 + $0xc8] sm:$0xf]
  %v8931 = vld [vmem:[%s8879 + $0xcc] sm:$0xf]
  %v8932 = vld [vmem:[%s8879 + $0xd0] sm:$0xf]
  %v8933 = vld [vmem:[%s8879 + $0xd4] sm:$0xf]
  %v8934 = vld [vmem:[%s8879 + $0xd8] sm:$0xf]
  %v8935 = vld [vmem:[%s8879 + $0xdc] sm:$0xf]
  %v8936 = vld [vmem:[%s8879 + $0xe0] sm:$0xf]
  %v8937 = vld [vmem:[%s8879 + $0xe4] sm:$0xf]
  %v8938 = vld [vmem:[%s8879 + $0xe8] sm:$0xf]
  %v8939 = vld [vmem:[%s8879 + $0xec] sm:$0xf]
  %v8940 = vld [vmem:[%s8879 + $0xf0] sm:$0xf]
  %v8941 = vld [vmem:[%s8879 + $0xf4] sm:$0xf]
  %v8942 = vld [vmem:[%s8879 + $0xf8] sm:$0xf]
  %v8943 = vld [vmem:[%s8879 + $0xfc] sm:$0xf]
  %v8944 = vld [vmem:[%s8879 + $0x100] sm:$0xf]
  %v8945 = vld [vmem:[%s8879 + $0x104] sm:$0xf]
  %v8946 = vld [vmem:[%s8879 + $0x108] sm:$0xf]
  %v8947 = vld [vmem:[%s8879 + $0x10c] sm:$0xf]
  %v8948 = vld [vmem:[%s8879 + $0x110] sm:$0xf]
  %v8949 = vld [vmem:[%s8879 + $0x114] sm:$0xf]
  %v8950 = vld [vmem:[%s8879 + $0x118] sm:$0xf]
  %v8951 = vld [vmem:[%s8879 + $0x11c] sm:$0xf]
  %v9024 = vunpack.c.l.b16 %v8880
  %v9025 = vunpack.c.l.b16 %v8881
  %v9026 = vunpack.c.l.b16 %v8882
  %v9027 = vunpack.c.l.b16 %v8883
  %v9028 = vunpack.c.l.b16 %v8884
  %v9029 = vunpack.c.l.b16 %v8885
  %v9030 = vunpack.c.l.b16 %v8886
  %v9031 = vunpack.c.l.b16 %v8887
  %v9032 = vunpack.c.l.b16 %v8888
  %v9033 = vunpack.c.l.b16 %v8889
  %v9034 = vunpack.c.l.b16 %v8890
  %v9035 = vunpack.c.l.b16 %v8891
  %v9036 = vunpack.c.l.b16 %v8892
  %v9037 = vunpack.c.l.b16 %v8893
  %v9038 = vunpack.c.l.b16 %v8894
  %v9039 = vunpack.c.l.b16 %v8895
  %v9040 = vunpack.c.l.b16 %v8896
  %v9041 = vunpack.c.l.b16 %v8897
  %v9042 = vunpack.c.l.b16 %v8898
  %v9043 = vunpack.c.l.b16 %v8899
  %v9044 = vunpack.c.l.b16 %v8900
  %v9045 = vunpack.c.l.b16 %v8901
  %v9046 = vunpack.c.l.b16 %v8902
  %v9047 = vunpack.c.l.b16 %v8903
  %v9048 = vunpack.c.l.b16 %v8904
  %v9049 = vunpack.c.l.b16 %v8905
  %v9050 = vunpack.c.l.b16 %v8906
  %v9051 = vunpack.c.l.b16 %v8907
  %v9052 = vunpack.c.l.b16 %v8908
  %v9053 = vunpack.c.l.b16 %v8909
  %v9054 = vunpack.c.l.b16 %v8910
  %v9055 = vunpack.c.l.b16 %v8911
  %v9056 = vunpack.c.l.b16 %v8912
  %v9057 = vunpack.c.l.b16 %v8913
  %v9058 = vunpack.c.l.b16 %v8914
  %v9059 = vunpack.c.l.b16 %v8915
  %v9060 = vunpack.c.l.b16 %v8916
  %v9061 = vunpack.c.l.b16 %v8917
  %v9062 = vunpack.c.l.b16 %v8918
  %v9063 = vunpack.c.l.b16 %v8919
  %v9064 = vunpack.c.l.b16 %v8920
  %v9065 = vunpack.c.l.b16 %v8921
  %v9066 = vunpack.c.l.b16 %v8922
  %v9067 = vunpack.c.l.b16 %v8923
  %v9068 = vunpack.c.l.b16 %v8924
  %v9069 = vunpack.c.l.b16 %v8925
  %v9070 = vunpack.c.l.b16 %v8926
  %v9071 = vunpack.c.l.b16 %v8927
  %v9072 = vunpack.c.l.b16 %v8928
  %v9073 = vunpack.c.l.b16 %v8929
  %v9074 = vunpack.c.l.b16 %v8930
  %v9075 = vunpack.c.l.b16 %v8931
  %v9076 = vunpack.c.l.b16 %v8932
  %v9077 = vunpack.c.l.b16 %v8933
  %v9078 = vunpack.c.l.b16 %v8934
  %v9079 = vunpack.c.l.b16 %v8935
  %v9080 = vunpack.c.l.b16 %v8936
  %v9081 = vunpack.c.l.b16 %v8937
  %v9082 = vunpack.c.l.b16 %v8938
  %v9083 = vunpack.c.l.b16 %v8939
  %v9084 = vunpack.c.l.b16 %v8940
  %v9085 = vunpack.c.l.b16 %v8941
  %v9086 = vunpack.c.l.b16 %v8942
  %v9087 = vunpack.c.l.b16 %v8943
  %v9088 = vunpack.c.l.b16 %v8944
  %v9089 = vunpack.c.l.b16 %v8945
  %v9090 = vunpack.c.l.b16 %v8946
  %v9091 = vunpack.c.l.b16 %v8947
  %v9092 = vunpack.c.l.b16 %v8948
  %v9093 = vunpack.c.l.b16 %v8949
  %v9094 = vunpack.c.l.b16 %v8950
  %v9095 = vunpack.c.l.b16 %v8951
  %v9096 = vpack.c.b16 %v9025, %v9024
  %v9097 = vpack.c.b16 %v9027, %v9026
  %v9098 = vpack.c.b16 %v9029, %v9028
  %v9099 = vpack.c.b16 %v9031, %v9030
  %v9100 = vpack.c.b16 %v9033, %v9032
  %v9101 = vpack.c.b16 %v9035, %v9034
  %v9102 = vpack.c.b16 %v9037, %v9036
  %v9103 = vpack.c.b16 %v9039, %v9038
  %v9104 = vpack.c.b16 %v9041, %v9040
  %v9105 = vpack.c.b16 %v9043, %v9042
  %v9106 = vpack.c.b16 %v9045, %v9044
  %v9107 = vpack.c.b16 %v9047, %v9046
  %v9108 = vpack.c.b16 %v9049, %v9048
  %v9109 = vpack.c.b16 %v9051, %v9050
  %v9110 = vpack.c.b16 %v9053, %v9052
  %v9111 = vpack.c.b16 %v9055, %v9054
  %v9112 = vpack.c.b16 %v9057, %v9056
  %v9113 = vpack.c.b16 %v9059, %v9058
  %v9114 = vpack.c.b16 %v9061, %v9060
  %v9115 = vpack.c.b16 %v9063, %v9062
  %v9116 = vpack.c.b16 %v9065, %v9064
  %v9117 = vpack.c.b16 %v9067, %v9066
  %v9118 = vpack.c.b16 %v9069, %v9068
  %v9119 = vpack.c.b16 %v9071, %v9070
  %v9120 = vpack.c.b16 %v9073, %v9072
  %v9121 = vpack.c.b16 %v9075, %v9074
  %v9122 = vpack.c.b16 %v9077, %v9076
  %v9123 = vpack.c.b16 %v9079, %v9078
  %v9124 = vpack.c.b16 %v9081, %v9080
  %v9125 = vpack.c.b16 %v9083, %v9082
  %v9126 = vpack.c.b16 %v9085, %v9084
  %v9127 = vpack.c.b16 %v9087, %v9086
  %v9128 = vpack.c.b16 %v9089, %v9088
  %v9129 = vpack.c.b16 %v9091, %v9090
  %v9130 = vpack.c.b16 %v9093, %v9092
  %v9131 = vpack.c.b16 %v9095, %v9094
  %9168 = vmatpush.bf16.msra.mxu0 %v9103
  %9169 = vmatpush.bf16.msra.mxu0 %v9102
  %9170 = vmatpush.bf16.msra.mxu0 %v9101
  %9171 = vmatpush.bf16.msra.mxu0 %v9100
  %9172 = vmatpush.bf16.msra.mxu0 %v9099
  %9173 = vmatpush.bf16.msra.mxu0 %v9098
  %9174 = vmatpush.bf16.msra.mxu0 %v9097
  %9175 = vmatpush.bf16.msra.mxu0 %v9096
  %9176 = vmatmul.bf16.gmra.mxu0 %v7807
  %v9177 = vpop.f32.mrf.mxu0
  %v9178 = vadd.f32 0.0, %v9177
  %v9179 = vpop.f32.mrf.mxu0
  %9180 = vdwg.mxu0
  %9181 = vmatpush.bf16.msra.mxu0 %v9111
  %9182 = vmatpush.bf16.msra.mxu0 %v9110
  %9183 = vmatpush.bf16.msra.mxu0 %v9109
  %9184 = vmatpush.bf16.msra.mxu0 %v9108
  %9185 = vmatpush.bf16.msra.mxu0 %v9107
  %9186 = vmatpush.bf16.msra.mxu0 %v9106
  %9187 = vmatpush.bf16.msra.mxu0 %v9105
  %9188 = vmatpush.bf16.msra.mxu0 %v9104
  %9189 = vmatmul.bf16.gmra.mxu0 %v7808
  %v9190 = vpop.f32.mrf.mxu0
  %v9191 = vadd.f32 %v9178, %v9190
  %v9192 = vpop.f32.mrf.mxu0
  %9193 = vdwg.mxu0
  %9194 = vmatpush.bf16.msra.mxu0 %v9119
  %9195 = vmatpush.bf16.msra.mxu0 %v9118
  %9196 = vmatpush.bf16.msra.mxu0 %v9117
  %9197 = vmatpush.bf16.msra.mxu0 %v9116
  %9198 = vmatpush.bf16.msra.mxu0 %v9115
  %9199 = vmatpush.bf16.msra.mxu0 %v9114
  %9200 = vmatpush.bf16.msra.mxu0 %v9113
  %9201 = vmatpush.bf16.msra.mxu0 %v9112
  %9202 = vmatmul.bf16.gmra.mxu0 %v7809
  %v9203 = vpop.f32.mrf.mxu0
  %v9204 = vadd.f32 %v9191, %v9203
  %v9205 = vpop.f32.mrf.mxu0
  %9206 = vdwg.mxu0
  %9207 = vmatpush.bf16.msra.mxu0 %v9127
  %9208 = vmatpush.bf16.msra.mxu0 %v9126
  %9209 = vmatpush.bf16.msra.mxu0 %v9125
  %9210 = vmatpush.bf16.msra.mxu0 %v9124
  %9211 = vmatpush.bf16.msra.mxu0 %v9123
  %9212 = vmatpush.bf16.msra.mxu0 %v9122
  %9213 = vmatpush.bf16.msra.mxu0 %v9121
  %9214 = vmatpush.bf16.msra.mxu0 %v9120
  %9215 = vmatmul.bf16.gmra.mxu0 %v7810
  %v9216 = vpop.f32.mrf.mxu0
  %v9217 = vadd.f32 %v9204, %v9216
  %v9218 = vpop.f32.mrf.mxu0
  %9219 = vdwg.mxu0
  %9220 = vmatpush.bf16.msra.mxu0 0
  %9221 = vmatpush.bf16.msra.mxu0 0
  %9222 = vmatpush.bf16.msra.mxu0 0
  %9223 = vmatpush.bf16.msra.mxu0 0
  %9224 = vmatpush.bf16.msra.mxu0 %v9131
  %9225 = vmatpush.bf16.msra.mxu0 %v9130
  %9226 = vmatpush.bf16.msra.mxu0 %v9129
  %9227 = vmatpush.bf16.msra.mxu0 %v9128
  %9228 = vmatmul.bf16.gmra.mxu0 %v8102
  %v9229 = vpop.f32.mrf.mxu0
  %v9230 = vadd.f32 %v9217, %v9229
  %v9231 = vpop.f32.mrf.mxu0
  %9232 = vdwg.mxu0
  %v9233 = vmax.f32 %v8878, %v9230
  %v9234 = vld [vmem:[%s4] sm:$0x1]
  %v9236 = vperm.slane %v9234, 0
  %v9238 = vadd.f32 %v9233, %v9236
  %v9239 = vmax.f32 %v9238, 0.0
  %v9240 = vld [vmem:[%s5] sm:$0xff]
  %v9241 = vmul.f32 %v9239, %v9240
  %v9242 = vpack.c.bf16 %v9241, %v9241
  %v9243 = vld [vmem:[%s6] sm:$0xf]
  %v9244 = vld [vmem:[%s6 + $0x4] sm:$0xf]
  %v9245 = vld [vmem:[%s6 + $0x8] sm:$0xf]
  %v9246 = vld [vmem:[%s6 + $0xc] sm:$0xf]
  %v9247 = vld [vmem:[%s7] sm:$0x1]
  %v9249 = vperm.slane %v9247, 0
  %v9255 = vunpack.c.l.b16 %v9243
  %v9256 = vunpack.c.l.b16 %v9244
  %v9257 = vunpack.c.l.b16 %v9245
  %v9258 = vunpack.c.l.b16 %v9246
  %v9259 = vpack.c.b16 %v9256, %v9255
  %v9260 = vpack.c.b16 %v9258, %v9257
  %vm9263 = vcmask 261120
  %v9265 = vsel %vm9263, %v9242, 0
  %9267 = vmatpush.bf16.msra.mxu0 0
  %9268 = vmatpush.bf16.msra.mxu0 0
  %9269 = vmatpush.bf16.msra.mxu0 0
  %9270 = vmatpush.bf16.msra.mxu0 0
  %9271 = vmatpush.bf16.msra.mxu0 0
  %9272 = vmatpush.bf16.msra.mxu0 0
  %9273 = vmatpush.bf16.msra.mxu0 %v9260
  %9274 = vmatpush.bf16.msra.mxu0 %v9259
  %9275 = vmatmul.bf16.gmra.mxu0 %v9265
  %v9276 = vpop.f32.mrf.mxu0
  %v9277 = vadd.f32 %v9249, %v9276
  %v9278 = vpop.f32.mrf.mxu0
  %9279 = vdwg.mxu0
  %v9280 = vmax.f32 %v9277, 0.0
  %v9281 = vld [vmem:[%s8] sm:$0xff]
  %v9282 = vmul.f32 %v9280, %v9281
  %v9283 = vpack.c.bf16 %v9282, %v9282
  %v9284 = vld [vmem:[%s9] sm:$0xf]
  %v9285 = vld [vmem:[%s9 + $0x4] sm:$0xf]
  %v9286 = vld [vmem:[%s9 + $0x8] sm:$0xf]
  %v9287 = vld [vmem:[%s9 + $0xc] sm:$0xf]
  %v9288 = vld [vmem:[%s10] sm:$0x1]
  %v9290 = vperm.slane %v9288, 0
  %v9296 = vunpack.c.l.b16 %v9284
  %v9297 = vunpack.c.l.b16 %v9285
  %v9298 = vunpack.c.l.b16 %v9286
  %v9299 = vunpack.c.l.b16 %v9287
  %v9300 = vpack.c.b16 %v9297, %v9296
  %v9301 = vpack.c.b16 %v9299, %v9298
  %v9305 = vsel %vm9263, %v9283, 0
  %9307 = vmatpush.bf16.msra.mxu0 0
  %9308 = vmatpush.bf16.msra.mxu0 0
  %9309 = vmatpush.bf16.msra.mxu0 0
  %9310 = vmatpush.bf16.msra.mxu0 0
  %9311 = vmatpush.bf16.msra.mxu0 0
  %9312 = vmatpush.bf16.msra.mxu0 0
  %9313 = vmatpush.bf16.msra.mxu0 %v9301
  %9314 = vmatpush.bf16.msra.mxu0 %v9300
  %9315 = vmatmul.bf16.gmra.mxu0 %v9305
  %v9316 = vpop.f32.mrf.mxu0
  %v9317 = vadd.f32 %v9290, %v9316
  %v9318 = vpop.f32.mrf.mxu0
  %9319 = vdwg.mxu0
  %vm9320 = vcmask 80896
  %v9321 = vsel %vm9320, %v9317, -inf
  %9322 = vmax.xlane.f32.xlu0 %v9321
  %v9323 = vpop.xlane.xlu0 %9322
  %v9324 = vsub.f32 %v9317, %v9323
  %v9325 = vmul.f32 %v9324, 1.442695
  %v9326 = vpow.pop %v9325
  %v9327 = vsel %vm9320, %v9326, 0.0
  %9328 = vadd.xlane.f32.xlu0 %v9327
  %v9329 = vpop.xlane.xlu0 %9328
  %v9330 = vlog2.pop %v9329
  %v9331 = vmul.f32 %v9330, 0.6931472
  %v9332 = vsub.f32 %v9324, %v9331
  %9333 = vst.msk [vmem:[%s11] sm:$0xff] %vm9320, %v9332
  // Predicated region
  $region46: #{bayesian_mnist_forward.3} parent=0 // pred_check
    _
  $region47: #{bayesian_mnist_forward.3} parent=0 // pred_check_branch
    %9335 = sbr.rel (0) target = $region49
  $region48: #{bayesian_mnist_forward.3} parent=0 // pred_region
    _
  $region49: #{bayesian_mnist_forward.3} parent=0 // pred_fallthru
    _
  // Predicated region
  $region50: #{bayesian_mnist_forward.3} parent=0 // pred_check
    _
  $region51: #{bayesian_mnist_forward.3} parent=0 // pred_check_branch
    %9337 = sbr.rel (0) target = $region53
  $region52: #{bayesian_mnist_forward.3} parent=0 // pred_region
    _
  $region53: #{bayesian_mnist_forward.3} parent=0 // pred_fallthru
    _

</llo_original>
